<compile_context>
chip_gen: v5e
topology: v5e:2x2
jax: 0.10.0
libtpu: 0.0.40
codegen_flags: <defaults>
</compile_context>

<pallas_src>
import numpy as np
import jax
import jax.numpy as jnp
from jax.experimental import pallas as pl
from jax.experimental.pallas import tpu as pltpu

_BN_EPS = 1e-5


# ----------------------------------------------------------------------------- kernel

def _gelu_exact(x):
    # F.gelu (erf form). erf via Abramowitz & Stegun 7.1.26, max abs err 1.5e-7.
    z = jnp.abs(x) * 0.7071067811865476
    t = 1.0 / (1.0 + 0.3275911 * z)
    poly = ((((1.061405429 * t - 1.453152027) * t + 1.421413741) * t
             - 0.284496736) * t + 0.254829592) * t
    erf_z = 1.0 - poly * jnp.exp(-z * z)
    erf_x = jnp.where(x >= 0.0, erf_z, -erf_z)
    return 0.5 * x * (1.0 + erf_x)


def _feedforward_kernel(
    x_ref, kc_ref, ks_ref, shift_ref, pswap_ref,
    dw1_t_ref, dw1_b_ref, dw2_s_ref, dw2_c_ref, dw2_b_ref,
    wa1_ref, ba1_ref, wa2_ref, ba2_ref,
    wb1_ref, bb1_ref, wb2_ref, bb2_ref,
    wp_ref, bp_ref,
    o_ref,
):
    f32 = jnp.float32

    def mm(a, b):
        return jnp.dot(a, b, preferred_element_type=f32)

    def gate_expand(w2, h, b2):
        # (Cout, hid) "matmul" with tiny hid done as broadcasted outer products.
        out = b2                                   # (Cout, 1)
        for j in range(w2.shape[1]):
            out = out + w2[:, j:j + 1] * h[j:j + 1, :]
        return out                                 # (Cout, HW)

    x = x_ref[0].astype(f32)                       # (C, HW)
    kc = kc_ref[...]                               # (HW, HW)  Re of flattened 2-D DFT
    ks = ks_ref[...]                               # (HW, HW)  "sin" part (fft2 = x @ (kc - i*ks))
    hw = x.shape[-1]
    inv_hw = 1.0 / hw

    # ---- spectral gate branch: x_f = |weight(Re fft2(x)) * fft2(x)| ----------
    re1 = mm(x, kc)
    im1 = -mm(x, ks)
    h_a = jnp.maximum(mm(wa1_ref[...], re1) + ba1_ref[...], 0.0)
    gate_a = jax.nn.sigmoid(gate_expand(wa2_ref[...], h_a, ba2_ref[...]))
    x_f = gate_a * jnp.sqrt(re1 * re1 + im1 * im1)      # gate_a > 0, so == |gate*fft|
    x_f_gelu = _gelu_exact(x_f) * x_f

    # ---- depthwise 3x3 branch: x_s = dwconv1(x) -------------------------------
    dw1_t = dw1_t_ref[...]                         # (C, 9)
    acc1 = jnp.zeros_like(x)
    for t in range(9):
        acc1 = acc1 + dw1_t[:, t:t + 1] * mm(x, shift_ref[t])
    x_s = acc1 + dw1_b_ref[...]
    x_s_gelu = _gelu_exact(x_s) * x_s

    cat = jnp.concatenate([x_f_gelu, x_s_gelu], axis=0)       # (2C, HW)

    # ---- second spectral path: |ifft2(weight1(Re fft2(cat)) * fft2(cat))| -----
    re2 = mm(cat, kc)
    im2 = -mm(cat, ks)
    h_b = jnp.maximum(mm(wb1_ref[...], re2) + bb1_ref[...], 0.0)
    gate_b = jax.nn.sigmoid(gate_expand(wb2_ref[...], h_b, bb2_ref[...]))
    yr = gate_b * re2
    yi = gate_b * im2
    rr = mm(yr, kc) - mm(yi, ks)                   # ifft2 = (1/HW) * Y @ (kc + i*ks)
    ri = mm(yr, ks) + mm(yi, kc)
    x_f2 = inv_hw * jnp.sqrt(rr * rr + ri * ri)

    # ---- grouped (groups=dim, 2-in/2-out) 3x3 conv on cat ----------------------
    cat_sw = mm(pswap_ref[...], cat)               # adjacent channel pairs swapped
    dw2_s = dw2_s_ref[...]                         # (2C, 9) taps on the channel itself
    dw2_c = dw2_c_ref[...]                         # (2C, 9) taps on the pair partner
    acc2 = jnp.zeros_like(cat)
    for t in range(9):
        sh = shift_ref[t]
        acc2 = acc2 + dw2_s[:, t:t + 1] * mm(cat, sh) \
                    + dw2_c[:, t:t + 1] * mm(cat_sw, sh)
    x_s2 = acc2 + dw2_b_ref[...]

    # ---- project_out 1x1 conv ---------------------------------------------------
    cat2 = jnp.concatenate([x_f2, x_s2], axis=0)               # (4C, HW)
    out = mm(wp_ref[...], cat2) + bp_ref[...]
    o_ref[0] = out.astype(o_ref.dtype)


# ----------------------------------------------------------------------------- constants

def _dft_cos_sin(n):
    k = np.arange(n)
    ang = 2.0 * np.pi * np.outer(k, k) / n
    return np.cos(ang), np.sin(ang)


def make_consts(dim, H, W):
    # Flattened 2-D DFT operator (spatial index p = h*W + w):
    #   fft2(x)_flat = x_flat @ (KC - i*KS),   ifft2(Y)_flat = Y_flat @ (KC + i*KS)/(H*W)
    ch, sh = _dft_cos_sin(H)
    cw, sw = _dft_cos_sin(W)
    kc = np.kron(ch, cw) - np.kron(sh, sw)
    ks = np.kron(sh, cw) + np.kron(ch, sw)

    # 3x3 shift matrices with zero padding baked in:
    #   (x_flat @ shift[t])[h*W+w] = x[h+oy, w+ox]  (0 outside), t = (oy+1)*3 + (ox+1)
    hw = H * W
    shift = np.zeros((9, hw, hw), np.float32)
    taps = [(oy, ox) for oy in (-1, 0, 1) for ox in (-1, 0, 1)]
    for t, (oy, ox) in enumerate(taps):
        for h in range(H):
            hs = h + oy
            if not (0 <= hs < H):
                continue
            for w in range(W):
                ws = w + ox
                if 0 <= ws < W:
                    shift[t, hs * W + ws, h * W + w] = 1.0

    # Permutation swapping adjacent channel pairs (groups=dim, 2 channels/group).
    pswap = np.zeros((2 * dim, 2 * dim), np.float32)
    idx = np.arange(2 * dim)
    pswap[idx, idx ^ 1] = 1.0

    return dict(
        kc=jnp.asarray(kc, jnp.float32),
        ks=jnp.asarray(ks, jnp.float32),
        shift=jnp.asarray(shift, jnp.float32),
        pswap=jnp.asarray(pswap, jnp.float32),
    )


# ----------------------------------------------------------------------------- parameters

def init_params(key, dim, bias=True):
    assert dim >= 16 and dim % 2 == 0, "dim//16 must be >= 1 (as in the PyTorch module)"
    hid = dim // 16
    ks = jax.random.split(key, 8)

    def nrm(k, shape, s=0.1):
        return s * jax.random.normal(k, shape, jnp.float32)

    def maybe_bias(k, n):
        return nrm(k, (n,), 0.05) if bias else jnp.zeros((n,), jnp.float32)

    # dwconv1: Conv2d(dim, dim, 3, padding=1, groups=dim)        -> weight (dim, 1, 3, 3)
    w_dw1 = nrm(ks[0], (dim, 1, 3, 3))
    b_dw1 = maybe_bias(ks[1], dim)
    # dwconv2: Conv2d(2*dim, 2*dim, 3, padding=1, groups=dim)    -> weight (2*dim, 2, 3, 3)
    w_dw2 = nrm(ks[2], (2 * dim, 2, 3, 3))
    b_dw2 = maybe_bias(ks[3], 2 * dim)
    # project_out: Conv2d(4*dim, dim, 1)
    w_po = nrm(ks[4], (dim, 4 * dim))
    b_po = maybe_bias(ks[5], dim)

    def gate_params(kk, cin, cout):
        # Conv1x1(cin->hid, bias) + BN(hid) [inference, folded] + ReLU
        # + Conv1x1(hid->cout, bias) + Sigmoid
        k = jax.random.split(kk, 8)
        w1 = nrm(k[0], (hid, cin))
        b1 = nrm(k[1], (hid,), 0.05)
        gamma = 1.0 + 0.1 * jax.random.normal(k[2], (hid,), jnp.float32)
        beta = nrm(k[3], (hid,), 0.05)
        rmean = nrm(k[4], (hid,), 0.05)
        rvar = 0.9 + 0.1 * jnp.abs(jax.random.normal(k[5], (hid,), jnp.float32))
        w2 = nrm(k[6], (cout, hid))
        b2 = nrm(k[7], (cout,), 0.05)
        s = gamma / jnp.sqrt(rvar + _BN_EPS)
        w1f = w1 * s[:, None]
        b1f = (b1 - rmean) * s + beta
        return w1f, b1f.reshape(hid, 1), w2, b2.reshape(cout, 1)

    wa1, ba1, wa2, ba2 = gate_params(ks[6], dim, dim)           # self.weight
    wb1, bb1, wb2, bb2 = gate_params(ks[7], 2 * dim, 2 * dim)   # self.weight1

    # grouped conv (groups=dim): split the (2, 3, 3) per-output-channel weight into
    # the tap acting on the channel itself and the tap acting on its pair partner.
    idx = jnp.arange(2 * dim)
    same_i = idx % 2
    dw2_same = w_dw2[idx, same_i].reshape(2 * dim, 9)
    dw2_cross = w_dw2[idx, 1 - same_i].reshape(2 * dim, 9)

    return dict(
        dw1_taps=w_dw1[:, 0].reshape(dim, 9),
        dw1_bias=b_dw1.reshape(dim, 1),
        dw2_same=dw2_same,
        dw2_cross=dw2_cross,
        dw2_bias=b_dw2.reshape(2 * dim, 1),
        wa1=wa1, ba1=ba1, wa2=wa2, ba2=ba2,
        wb1=wb1, bb1=bb1, wb2=wb2, bb2=bb2,
        wp=w_po, bp=b_po.reshape(dim, 1),
    )


# ----------------------------------------------------------------------------- forward

def feedforward_forward(params, consts, x):
    # x: (N, dim, H, W) -> (N, dim, H, W)
    N, C, H, W = x.shape
    HW = H * W
    x_flat = x.reshape(N, C, HW).astype(jnp.float32)

    operands = [
        consts["kc"], consts["ks"], consts["shift"], consts["pswap"],
        params["dw1_taps"], params["dw1_bias"],
        params["dw2_same"], params["dw2_cross"], params["dw2_bias"],
        params["wa1"], params["ba1"], params["wa2"], params["ba2"],
        params["wb1"], params["bb1"], params["wb2"], params["bb2"],
        params["wp"], params["bp"],
    ]

    def const_spec(a):
        nd = a.ndim
        return pl.BlockSpec(a.shape, lambda n, _nd=nd: (0,) * _nd)

    in_specs = [pl.BlockSpec((1, C, HW), lambda n: (n, 0, 0))] + \
               [const_spec(a) for a in operands]

    out = pl.pallas_call(
        _feedforward_kernel,
        out_shape=jax.ShapeDtypeStruct((N, C, HW), jnp.float32),
        grid=(N,),
        in_specs=in_specs,
        out_specs=pl.BlockSpec((1, C, HW), lambda n: (n, 0, 0)),
        compiler_params=pltpu.CompilerParams(
            dimension_semantics=("parallel",),          # v7x: batch sharded across TCs
            vmem_limit_bytes=32 * 1024 * 1024,          # raises v5e's 16 MiB default
        ),
    )(x_flat, *operands)
    return out.reshape(N, C, H, W)


# ----------------------------------------------------------------------------- main

if __name__ == "__main__":
    N, dim, H, W = 2, 16, 16, 16

    key = jax.random.PRNGKey(0)
    kx, kp = jax.random.split(key)
    x = jax.random.normal(kx, (N, dim, H, W), jnp.float32)
    params = init_params(kp, dim, bias=True)
    consts = make_consts(dim, H, W)

    fwd = jax.jit(feedforward_forward)
    y = fwd(params, consts, x)
    y = jax.block_until_ready(y)

    assert y.shape == (N, dim, H, W), y.shape
    assert bool(jnp.all(jnp.isfinite(y)))
    print("KERNEL_OK")
</pallas_src>

<mosaic_0001>
module attributes {stable_mosaic.version = 11 : i64} {
  func.func @_feedforward_kernel(%arg0: i32, %arg1: memref<1x16x256xf32, #tpu.memory_space<vmem>>, %arg2: memref<256x256xf32, #tpu.memory_space<vmem>>, %arg3: memref<256x256xf32, #tpu.memory_space<vmem>>, %arg4: memref<9x256x256xf32, #tpu.memory_space<vmem>>, %arg5: memref<32x32xf32, #tpu.memory_space<vmem>>, %arg6: memref<16x9xf32, #tpu.memory_space<vmem>>, %arg7: memref<16x1xf32, #tpu.memory_space<vmem>>, %arg8: memref<32x9xf32, #tpu.memory_space<vmem>>, %arg9: memref<32x9xf32, #tpu.memory_space<vmem>>, %arg10: memref<32x1xf32, #tpu.memory_space<vmem>>, %arg11: memref<1x16xf32, #tpu.memory_space<vmem>>, %arg12: memref<1x1xf32, #tpu.memory_space<vmem>>, %arg13: memref<16x1xf32, #tpu.memory_space<vmem>>, %arg14: memref<16x1xf32, #tpu.memory_space<vmem>>, %arg15: memref<1x32xf32, #tpu.memory_space<vmem>>, %arg16: memref<1x1xf32, #tpu.memory_space<vmem>>, %arg17: memref<32x1xf32, #tpu.memory_space<vmem>>, %arg18: memref<32x1xf32, #tpu.memory_space<vmem>>, %arg19: memref<16x64xf32, #tpu.memory_space<vmem>>, %arg20: memref<16x1xf32, #tpu.memory_space<vmem>>, %arg21: memref<1x16x256xf32, #tpu.memory_space<vmem>>) attributes {dimension_semantics = [#tpu.dimension_semantics<parallel>], iteration_bounds = array<i64: 2>, scalar_prefetch = 0 : i64, scratch_operands = 0 : i64, tpu.core_type = #tpu.core_type<tc>, window_params = [{transform_indices = @transform_0, window_bounds = array<i64: 1, 16, 256>}, {pipeline_mode = #tpu.pipeline_mode<synchronous>, transform_indices = @transform_1, window_bounds = array<i64: 256, 256>}, {pipeline_mode = #tpu.pipeline_mode<synchronous>, transform_indices = @transform_2, window_bounds = array<i64: 256, 256>}, {pipeline_mode = #tpu.pipeline_mode<synchronous>, transform_indices = @transform_3, window_bounds = array<i64: 9, 256, 256>}, {pipeline_mode = #tpu.pipeline_mode<synchronous>, transform_indices = @transform_4, window_bounds = array<i64: 32, 32>}, {pipeline_mode = #tpu.pipeline_mode<synchronous>, transform_indices = @transform_5, window_bounds = array<i64: 16, 9>}, {pipeline_mode = #tpu.pipeline_mode<synchronous>, transform_indices = @transform_6, window_bounds = array<i64: 16, 1>}, {pipeline_mode = #tpu.pipeline_mode<synchronous>, transform_indices = @transform_7, window_bounds = array<i64: 32, 9>}, {pipeline_mode = #tpu.pipeline_mode<synchronous>, transform_indices = @transform_8, window_bounds = array<i64: 32, 9>}, {pipeline_mode = #tpu.pipeline_mode<synchronous>, transform_indices = @transform_9, window_bounds = array<i64: 32, 1>}, {pipeline_mode = #tpu.pipeline_mode<synchronous>, transform_indices = @transform_10, window_bounds = array<i64: 1, 16>}, {pipeline_mode = #tpu.pipeline_mode<synchronous>, transform_indices = @transform_11, window_bounds = array<i64: 1, 1>}, {pipeline_mode = #tpu.pipeline_mode<synchronous>, transform_indices = @transform_12, window_bounds = array<i64: 16, 1>}, {pipeline_mode = #tpu.pipeline_mode<synchronous>, transform_indices = @transform_13, window_bounds = array<i64: 16, 1>}, {pipeline_mode = #tpu.pipeline_mode<synchronous>, transform_indices = @transform_14, window_bounds = array<i64: 1, 32>}, {pipeline_mode = #tpu.pipeline_mode<synchronous>, transform_indices = @transform_15, window_bounds = array<i64: 1, 1>}, {pipeline_mode = #tpu.pipeline_mode<synchronous>, transform_indices = @transform_16, window_bounds = array<i64: 32, 1>}, {pipeline_mode = #tpu.pipeline_mode<synchronous>, transform_indices = @transform_17, window_bounds = array<i64: 32, 1>}, {pipeline_mode = #tpu.pipeline_mode<synchronous>, transform_indices = @transform_18, window_bounds = array<i64: 16, 64>}, {pipeline_mode = #tpu.pipeline_mode<synchronous>, transform_indices = @transform_19, window_bounds = array<i64: 16, 1>}, {transform_indices = @transform_20, window_bounds = array<i64: 1, 16, 256>}]} {
    %c0 = arith.constant 0 : index
    %c0_0 = arith.constant 0 : index
    %c0_1 = arith.constant 0 : index
    %0 = vector.load %arg1[%c0, %c0_0, %c0_1] : memref<1x16x256xf32, #tpu.memory_space<vmem>>, vector<1x16x256xf32>
    %1 = vector.shape_cast %0 : vector<1x16x256xf32> to vector<16x256xf32>
    %c0_2 = arith.constant 0 : index
    %c0_3 = arith.constant 0 : index
    %2 = vector.load %arg2[%c0_2, %c0_3] : memref<256x256xf32, #tpu.memory_space<vmem>>, vector<256x256xf32>
    %c0_4 = arith.constant 0 : index
    %c0_5 = arith.constant 0 : index
    %3 = vector.load %arg3[%c0_4, %c0_5] : memref<256x256xf32, #tpu.memory_space<vmem>>, vector<256x256xf32>
    %cst = arith.constant dense<0.000000e+00> : vector<16x256xf32>
    %4 = tpu.matmul %1, %2, %cst {dimension_numbers = #tpu.dot_dimension_numbers<[1], [0], [0], [1], [0, 0, 1, 1], [], []>} : vector<16x256xf32>, vector<256x256xf32>, vector<16x256xf32> -> vector<16x256xf32>
    %cst_6 = arith.constant dense<0.000000e+00> : vector<16x256xf32>
    %5 = tpu.matmul %1, %3, %cst_6 {dimension_numbers = #tpu.dot_dimension_numbers<[1], [0], [0], [1], [0, 0, 1, 1], [], []>} : vector<16x256xf32>, vector<256x256xf32>, vector<16x256xf32> -> vector<16x256xf32>
    %cst_7 = arith.constant 0.000000e+00 : f32
    %6 = vector.broadcast %cst_7 : f32 to vector<16x256xf32>
    %7 = arith.subf %6, %5 : vector<16x256xf32>
    %c0_8 = arith.constant 0 : index
    %c0_9 = arith.constant 0 : index
    %8 = vector.load %arg11[%c0_8, %c0_9] : memref<1x16xf32, #tpu.memory_space<vmem>>, vector<1x16xf32>
    %cst_10 = arith.constant dense<0.000000e+00> : vector<1x256xf32>
    %9 = tpu.matmul %8, %4, %cst_10 {dimension_numbers = #tpu.dot_dimension_numbers<[1], [0], [0], [1], [0, 0, 1, 1], [], []>} : vector<1x16xf32>, vector<16x256xf32>, vector<1x256xf32> -> vector<1x256xf32>
    %c0_11 = arith.constant 0 : index
    %c0_12 = arith.constant 0 : index
    %10 = vector.load %arg12[%c0_11, %c0_12] : memref<1x1xf32, #tpu.memory_space<vmem>>, vector<1x1xf32>
    %11 = vector.broadcast %10 : vector<1x1xf32> to vector<1x256xf32>
    %12 = arith.addf %9, %11 : vector<1x256xf32>
    %cst_13 = arith.constant 0.000000e+00 : f32
    %13 = vector.broadcast %cst_13 : f32 to vector<1x256xf32>
    %14 = arith.maximumf %12, %13 : vector<1x256xf32>
    %c0_14 = arith.constant 0 : index
    %c0_15 = arith.constant 0 : index
    %15 = vector.load %arg13[%c0_14, %c0_15] : memref<16x1xf32, #tpu.memory_space<vmem>>, vector<16x1xf32>
    %c0_16 = arith.constant 0 : index
    %c0_17 = arith.constant 0 : index
    %16 = vector.load %arg14[%c0_16, %c0_17] : memref<16x1xf32, #tpu.memory_space<vmem>>, vector<16x1xf32>
    %17 = vector.broadcast %15 : vector<16x1xf32> to vector<16x256xf32>
    %18 = vector.broadcast %14 : vector<1x256xf32> to vector<16x256xf32>
    %19 = arith.mulf %17, %18 : vector<16x256xf32>
    %20 = vector.broadcast %16 : vector<16x1xf32> to vector<16x256xf32>
    %21 = arith.addf %20, %19 : vector<16x256xf32>
    %22 = arith.negf %21 : vector<16x256xf32>
    %23 = math.exp %22 : vector<16x256xf32>
    %cst_18 = arith.constant 1.000000e+00 : f32
    %24 = vector.broadcast %cst_18 : f32 to vector<16x256xf32>
    %25 = arith.addf %24, %23 : vector<16x256xf32>
    %26 = arith.divf %24, %25 : vector<16x256xf32>
    %27 = arith.mulf %4, %4 : vector<16x256xf32>
    %28 = arith.mulf %7, %7 : vector<16x256xf32>
    %29 = arith.addf %27, %28 : vector<16x256xf32>
    %30 = math.sqrt %29 : vector<16x256xf32>
    %31 = arith.mulf %26, %30 : vector<16x256xf32>
    %32 = math.absf %31 : vector<16x256xf32>
    %cst_19 = arith.constant 0.707106769 : f32
    %33 = vector.broadcast %cst_19 : f32 to vector<16x256xf32>
    %34 = arith.mulf %32, %33 : vector<16x256xf32>
    %cst_20 = arith.constant 0.327591091 : f32
    %35 = vector.broadcast %cst_20 : f32 to vector<16x256xf32>
    %36 = arith.mulf %35, %34 : vector<16x256xf32>
    %cst_21 = arith.constant 1.000000e+00 : f32
    %37 = vector.broadcast %cst_21 : f32 to vector<16x256xf32>
    %38 = arith.addf %37, %36 : vector<16x256xf32>
    %cst_22 = arith.constant 1.000000e+00 : f32
    %39 = vector.broadcast %cst_22 : f32 to vector<16x256xf32>
    %40 = arith.divf %39, %38 : vector<16x256xf32>
    %cst_23 = arith.constant 1.06140542 : f32
    %41 = vector.broadcast %cst_23 : f32 to vector<16x256xf32>
    %42 = arith.mulf %41, %40 : vector<16x256xf32>
    %cst_24 = arith.constant 1.45315206 : f32
    %43 = vector.broadcast %cst_24 : f32 to vector<16x256xf32>
    %44 = arith.subf %42, %43 : vector<16x256xf32>
    %45 = arith.mulf %44, %40 : vector<16x256xf32>
    %cst_25 = arith.constant 1.42141378 : f32
    %46 = vector.broadcast %cst_25 : f32 to vector<16x256xf32>
    %47 = arith.addf %45, %46 : vector<16x256xf32>
    %48 = arith.mulf %47, %40 : vector<16x256xf32>
    %cst_26 = arith.constant 0.284496725 : f32
    %49 = vector.broadcast %cst_26 : f32 to vector<16x256xf32>
    %50 = arith.subf %48, %49 : vector<16x256xf32>
    %51 = arith.mulf %50, %40 : vector<16x256xf32>
    %cst_27 = arith.constant 0.254829586 : f32
    %52 = vector.broadcast %cst_27 : f32 to vector<16x256xf32>
    %53 = arith.addf %51, %52 : vector<16x256xf32>
    %54 = arith.mulf %53, %40 : vector<16x256xf32>
    %cst_28 = arith.constant 0.000000e+00 : f32
    %55 = vector.broadcast %cst_28 : f32 to vector<16x256xf32>
    %56 = arith.subf %55, %34 : vector<16x256xf32>
    %57 = arith.mulf %56, %34 : vector<16x256xf32>
    %58 = math.exp %57 : vector<16x256xf32>
    %59 = arith.mulf %54, %58 : vector<16x256xf32>
    %cst_29 = arith.constant 1.000000e+00 : f32
    %60 = vector.broadcast %cst_29 : f32 to vector<16x256xf32>
    %61 = arith.subf %60, %59 : vector<16x256xf32>
    %cst_30 = arith.constant 0.000000e+00 : f32
    %62 = vector.broadcast %cst_30 : f32 to vector<16x256xf32>
    %63 = arith.cmpf oge, %31, %62 : vector<16x256xf32>
    %cst_31 = arith.constant 0.000000e+00 : f32
    %64 = vector.broadcast %cst_31 : f32 to vector<16x256xf32>
    %65 = arith.subf %64, %61 : vector<16x256xf32>
    %66 = arith.select %63, %61, %65 : vector<16x256xi1>, vector<16x256xf32>
    %cst_32 = arith.constant 5.000000e-01 : f32
    %67 = vector.broadcast %cst_32 : f32 to vector<16x256xf32>
    %68 = arith.mulf %67, %31 : vector<16x256xf32>
    %cst_33 = arith.constant 1.000000e+00 : f32
    %69 = vector.broadcast %cst_33 : f32 to vector<16x256xf32>
    %70 = arith.addf %69, %66 : vector<16x256xf32>
    %71 = arith.mulf %68, %70 : vector<16x256xf32>
    %72 = arith.mulf %71, %31 : vector<16x256xf32>
    %c0_34 = arith.constant 0 : index
    %c0_35 = arith.constant 0 : index
    %73 = vector.load %arg6[%c0_34, %c0_35] : memref<16x9xf32, #tpu.memory_space<vmem>>, vector<16x9xf32>
    %cst_36 = arith.constant 0.000000e+00 : f32
    %74 = vector.broadcast %cst_36 : f32 to vector<16x256xf32>
    %75 = vector.extract_strided_slice %73 {offsets = [0, 0], sizes = [16, 1], strides = [1, 1]} : vector<16x9xf32> to vector<16x1xf32>
    %c0_37 = arith.constant 0 : index
    %c0_38 = arith.constant 0 : index
    %c0_39 = arith.constant 0 : index
    %76 = vector.load %arg4[%c0_37, %c0_38, %c0_39] : memref<9x256x256xf32, #tpu.memory_space<vmem>>, vector<1x256x256xf32>
    %77 = vector.shape_cast %76 : vector<1x256x256xf32> to vector<256x256xf32>
    %cst_40 = arith.constant dense<0.000000e+00> : vector<16x256xf32>
    %78 = tpu.matmul %1, %77, %cst_40 {dimension_numbers = #tpu.dot_dimension_numbers<[1], [0], [0], [1], [0, 0, 1, 1], [], []>} : vector<16x256xf32>, vector<256x256xf32>, vector<16x256xf32> -> vector<16x256xf32>
    %79 = vector.broadcast %75 : vector<16x1xf32> to vector<16x256xf32>
    %80 = arith.mulf %79, %78 : vector<16x256xf32>
    %81 = arith.addf %74, %80 : vector<16x256xf32>
    %82 = vector.extract_strided_slice %73 {offsets = [0, 1], sizes = [16, 1], strides = [1, 1]} : vector<16x9xf32> to vector<16x1xf32>
    %c1 = arith.constant 1 : index
    %c0_41 = arith.constant 0 : index
    %c0_42 = arith.constant 0 : index
    %83 = vector.load %arg4[%c1, %c0_41, %c0_42] : memref<9x256x256xf32, #tpu.memory_space<vmem>>, vector<1x256x256xf32>
    %84 = vector.shape_cast %83 : vector<1x256x256xf32> to vector<256x256xf32>
    %cst_43 = arith.constant dense<0.000000e+00> : vector<16x256xf32>
    %85 = tpu.matmul %1, %84, %cst_43 {dimension_numbers = #tpu.dot_dimension_numbers<[1], [0], [0], [1], [0, 0, 1, 1], [], []>} : vector<16x256xf32>, vector<256x256xf32>, vector<16x256xf32> -> vector<16x256xf32>
    %86 = vector.broadcast %82 : vector<16x1xf32> to vector<16x256xf32>
    %87 = arith.mulf %86, %85 : vector<16x256xf32>
    %88 = arith.addf %81, %87 : vector<16x256xf32>
    %89 = vector.extract_strided_slice %73 {offsets = [0, 2], sizes = [16, 1], strides = [1, 1]} : vector<16x9xf32> to vector<16x1xf32>
    %c2 = arith.constant 2 : index
    %c0_44 = arith.constant 0 : index
    %c0_45 = arith.constant 0 : index
    %90 = vector.load %arg4[%c2, %c0_44, %c0_45] : memref<9x256x256xf32, #tpu.memory_space<vmem>>, vector<1x256x256xf32>
    %91 = vector.shape_cast %90 : vector<1x256x256xf32> to vector<256x256xf32>
    %cst_46 = arith.constant dense<0.000000e+00> : vector<16x256xf32>
    %92 = tpu.matmul %1, %91, %cst_46 {dimension_numbers = #tpu.dot_dimension_numbers<[1], [0], [0], [1], [0, 0, 1, 1], [], []>} : vector<16x256xf32>, vector<256x256xf32>, vector<16x256xf32> -> vector<16x256xf32>
    %93 = vector.broadcast %89 : vector<16x1xf32> to vector<16x256xf32>
    %94 = arith.mulf %93, %92 : vector<16x256xf32>
    %95 = arith.addf %88, %94 : vector<16x256xf32>
    %96 = vector.extract_strided_slice %73 {offsets = [0, 3], sizes = [16, 1], strides = [1, 1]} : vector<16x9xf32> to vector<16x1xf32>
    %c3 = arith.constant 3 : index
    %c0_47 = arith.constant 0 : index
    %c0_48 = arith.constant 0 : index
    %97 = vector.load %arg4[%c3, %c0_47, %c0_48] : memref<9x256x256xf32, #tpu.memory_space<vmem>>, vector<1x256x256xf32>
    %98 = vector.shape_cast %97 : vector<1x256x256xf32> to vector<256x256xf32>
    %cst_49 = arith.constant dense<0.000000e+00> : vector<16x256xf32>
    %99 = tpu.matmul %1, %98, %cst_49 {dimension_numbers = #tpu.dot_dimension_numbers<[1], [0], [0], [1], [0, 0, 1, 1], [], []>} : vector<16x256xf32>, vector<256x256xf32>, vector<16x256xf32> -> vector<16x256xf32>
    %100 = vector.broadcast %96 : vector<16x1xf32> to vector<16x256xf32>
    %101 = arith.mulf %100, %99 : vector<16x256xf32>
    %102 = arith.addf %95, %101 : vector<16x256xf32>
    %103 = vector.extract_strided_slice %73 {offsets = [0, 4], sizes = [16, 1], strides = [1, 1]} : vector<16x9xf32> to vector<16x1xf32>
    %c4 = arith.constant 4 : index
    %c0_50 = arith.constant 0 : index
    %c0_51 = arith.constant 0 : index
    %104 = vector.load %arg4[%c4, %c0_50, %c0_51] : memref<9x256x256xf32, #tpu.memory_space<vmem>>, vector<1x256x256xf32>
    %105 = vector.shape_cast %104 : vector<1x256x256xf32> to vector<256x256xf32>
    %cst_52 = arith.constant dense<0.000000e+00> : vector<16x256xf32>
    %106 = tpu.matmul %1, %105, %cst_52 {dimension_numbers = #tpu.dot_dimension_numbers<[1], [0], [0], [1], [0, 0, 1, 1], [], []>} : vector<16x256xf32>, vector<256x256xf32>, vector<16x256xf32> -> vector<16x256xf32>
    %107 = vector.broadcast %103 : vector<16x1xf32> to vector<16x256xf32>
    %108 = arith.mulf %107, %106 : vector<16x256xf32>
    %109 = arith.addf %102, %108 : vector<16x256xf32>
    %110 = vector.extract_strided_slice %73 {offsets = [0, 5], sizes = [16, 1], strides = [1, 1]} : vector<16x9xf32> to vector<16x1xf32>
    %c5 = arith.constant 5 : index
    %c0_53 = arith.constant 0 : index
    %c0_54 = arith.constant 0 : index
    %111 = vector.load %arg4[%c5, %c0_53, %c0_54] : memref<9x256x256xf32, #tpu.memory_space<vmem>>, vector<1x256x256xf32>
    %112 = vector.shape_cast %111 : vector<1x256x256xf32> to vector<256x256xf32>
    %cst_55 = arith.constant dense<0.000000e+00> : vector<16x256xf32>
    %113 = tpu.matmul %1, %112, %cst_55 {dimension_numbers = #tpu.dot_dimension_numbers<[1], [0], [0], [1], [0, 0, 1, 1], [], []>} : vector<16x256xf32>, vector<256x256xf32>, vector<16x256xf32> -> vector<16x256xf32>
    %114 = vector.broadcast %110 : vector<16x1xf32> to vector<16x256xf32>
    %115 = arith.mulf %114, %113 : vector<16x256xf32>
    %116 = arith.addf %109, %115 : vector<16x256xf32>
    %117 = vector.extract_strided_slice %73 {offsets = [0, 6], sizes = [16, 1], strides = [1, 1]} : vector<16x9xf32> to vector<16x1xf32>
    %c6 = arith.constant 6 : index
    %c0_56 = arith.constant 0 : index
    %c0_57 = arith.constant 0 : index
    %118 = vector.load %arg4[%c6, %c0_56, %c0_57] : memref<9x256x256xf32, #tpu.memory_space<vmem>>, vector<1x256x256xf32>
    %119 = vector.shape_cast %118 : vector<1x256x256xf32> to vector<256x256xf32>
    %cst_58 = arith.constant dense<0.000000e+00> : vector<16x256xf32>
    %120 = tpu.matmul %1, %119, %cst_58 {dimension_numbers = #tpu.dot_dimension_numbers<[1], [0], [0], [1], [0, 0, 1, 1], [], []>} : vector<16x256xf32>, vector<256x256xf32>, vector<16x256xf32> -> vector<16x256xf32>
    %121 = vector.broadcast %117 : vector<16x1xf32> to vector<16x256xf32>
    %122 = arith.mulf %121, %120 : vector<16x256xf32>
    %123 = arith.addf %116, %122 : vector<16x256xf32>
    %124 = vector.extract_strided_slice %73 {offsets = [0, 7], sizes = [16, 1], strides = [1, 1]} : vector<16x9xf32> to vector<16x1xf32>
    %c7 = arith.constant 7 : index
    %c0_59 = arith.constant 0 : index
    %c0_60 = arith.constant 0 : index
    %125 = vector.load %arg4[%c7, %c0_59, %c0_60] : memref<9x256x256xf32, #tpu.memory_space<vmem>>, vector<1x256x256xf32>
    %126 = vector.shape_cast %125 : vector<1x256x256xf32> to vector<256x256xf32>
    %cst_61 = arith.constant dense<0.000000e+00> : vector<16x256xf32>
    %127 = tpu.matmul %1, %126, %cst_61 {dimension_numbers = #tpu.dot_dimension_numbers<[1], [0], [0], [1], [0, 0, 1, 1], [], []>} : vector<16x256xf32>, vector<256x256xf32>, vector<16x256xf32> -> vector<16x256xf32>
    %128 = vector.broadcast %124 : vector<16x1xf32> to vector<16x256xf32>
    %129 = arith.mulf %128, %127 : vector<16x256xf32>
    %130 = arith.addf %123, %129 : vector<16x256xf32>
    %131 = vector.extract_strided_slice %73 {offsets = [0, 8], sizes = [16, 1], strides = [1, 1]} : vector<16x9xf32> to vector<16x1xf32>
    %c8 = arith.constant 8 : index
    %c0_62 = arith.constant 0 : index
    %c0_63 = arith.constant 0 : index
    %132 = vector.load %arg4[%c8, %c0_62, %c0_63] : memref<9x256x256xf32, #tpu.memory_space<vmem>>, vector<1x256x256xf32>
    %133 = vector.shape_cast %132 : vector<1x256x256xf32> to vector<256x256xf32>
    %cst_64 = arith.constant dense<0.000000e+00> : vector<16x256xf32>
    %134 = tpu.matmul %1, %133, %cst_64 {dimension_numbers = #tpu.dot_dimension_numbers<[1], [0], [0], [1], [0, 0, 1, 1], [], []>} : vector<16x256xf32>, vector<256x256xf32>, vector<16x256xf32> -> vector<16x256xf32>
    %135 = vector.broadcast %131 : vector<16x1xf32> to vector<16x256xf32>
    %136 = arith.mulf %135, %134 : vector<16x256xf32>
    %137 = arith.addf %130, %136 : vector<16x256xf32>
    %c0_65 = arith.constant 0 : index
    %c0_66 = arith.constant 0 : index
    %138 = vector.load %arg7[%c0_65, %c0_66] : memref<16x1xf32, #tpu.memory_space<vmem>>, vector<16x1xf32>
    %139 = vector.broadcast %138 : vector<16x1xf32> to vector<16x256xf32>
    %140 = arith.addf %137, %139 : vector<16x256xf32>
    %141 = math.absf %140 : vector<16x256xf32>
    %cst_67 = arith.constant 0.707106769 : f32
    %142 = vector.broadcast %cst_67 : f32 to vector<16x256xf32>
    %143 = arith.mulf %141, %142 : vector<16x256xf32>
    %cst_68 = arith.constant 0.327591091 : f32
    %144 = vector.broadcast %cst_68 : f32 to vector<16x256xf32>
    %145 = arith.mulf %144, %143 : vector<16x256xf32>
    %cst_69 = arith.constant 1.000000e+00 : f32
    %146 = vector.broadcast %cst_69 : f32 to vector<16x256xf32>
    %147 = arith.addf %146, %145 : vector<16x256xf32>
    %cst_70 = arith.constant 1.000000e+00 : f32
    %148 = vector.broadcast %cst_70 : f32 to vector<16x256xf32>
    %149 = arith.divf %148, %147 : vector<16x256xf32>
    %cst_71 = arith.constant 1.06140542 : f32
    %150 = vector.broadcast %cst_71 : f32 to vector<16x256xf32>
    %151 = arith.mulf %150, %149 : vector<16x256xf32>
    %cst_72 = arith.constant 1.45315206 : f32
    %152 = vector.broadcast %cst_72 : f32 to vector<16x256xf32>
    %153 = arith.subf %151, %152 : vector<16x256xf32>
    %154 = arith.mulf %153, %149 : vector<16x256xf32>
    %cst_73 = arith.constant 1.42141378 : f32
    %155 = vector.broadcast %cst_73 : f32 to vector<16x256xf32>
    %156 = arith.addf %154, %155 : vector<16x256xf32>
    %157 = arith.mulf %156, %149 : vector<16x256xf32>
    %cst_74 = arith.constant 0.284496725 : f32
    %158 = vector.broadcast %cst_74 : f32 to vector<16x256xf32>
    %159 = arith.subf %157, %158 : vector<16x256xf32>
    %160 = arith.mulf %159, %149 : vector<16x256xf32>
    %cst_75 = arith.constant 0.254829586 : f32
    %161 = vector.broadcast %cst_75 : f32 to vector<16x256xf32>
    %162 = arith.addf %160, %161 : vector<16x256xf32>
    %163 = arith.mulf %162, %149 : vector<16x256xf32>
    %cst_76 = arith.constant 0.000000e+00 : f32
    %164 = vector.broadcast %cst_76 : f32 to vector<16x256xf32>
    %165 = arith.subf %164, %143 : vector<16x256xf32>
    %166 = arith.mulf %165, %143 : vector<16x256xf32>
    %167 = math.exp %166 : vector<16x256xf32>
    %168 = arith.mulf %163, %167 : vector<16x256xf32>
    %cst_77 = arith.constant 1.000000e+00 : f32
    %169 = vector.broadcast %cst_77 : f32 to vector<16x256xf32>
    %170 = arith.subf %169, %168 : vector<16x256xf32>
    %cst_78 = arith.constant 0.000000e+00 : f32
    %171 = vector.broadcast %cst_78 : f32 to vector<16x256xf32>
    %172 = arith.cmpf oge, %140, %171 : vector<16x256xf32>
    %cst_79 = arith.constant 0.000000e+00 : f32
    %173 = vector.broadcast %cst_79 : f32 to vector<16x256xf32>
    %174 = arith.subf %173, %170 : vector<16x256xf32>
    %175 = arith.select %172, %170, %174 : vector<16x256xi1>, vector<16x256xf32>
    %cst_80 = arith.constant 5.000000e-01 : f32
    %176 = vector.broadcast %cst_80 : f32 to vector<16x256xf32>
    %177 = arith.mulf %176, %140 : vector<16x256xf32>
    %cst_81 = arith.constant 1.000000e+00 : f32
    %178 = vector.broadcast %cst_81 : f32 to vector<16x256xf32>
    %179 = arith.addf %178, %175 : vector<16x256xf32>
    %180 = arith.mulf %177, %179 : vector<16x256xf32>
    %181 = arith.mulf %180, %140 : vector<16x256xf32>
    %182 = tpu.concatenate %72, %181 in 0 : vector<16x256xf32>, vector<16x256xf32> -> vector<32x256xf32>
    %cst_82 = arith.constant dense<0.000000e+00> : vector<32x256xf32>
    %183 = tpu.matmul %182, %2, %cst_82 {dimension_numbers = #tpu.dot_dimension_numbers<[1], [0], [0], [1], [0, 0, 1, 1], [], []>} : vector<32x256xf32>, vector<256x256xf32>, vector<32x256xf32> -> vector<32x256xf32>
    %cst_83 = arith.constant dense<0.000000e+00> : vector<32x256xf32>
    %184 = tpu.matmul %182, %3, %cst_83 {dimension_numbers = #tpu.dot_dimension_numbers<[1], [0], [0], [1], [0, 0, 1, 1], [], []>} : vector<32x256xf32>, vector<256x256xf32>, vector<32x256xf32> -> vector<32x256xf32>
    %cst_84 = arith.constant 0.000000e+00 : f32
    %185 = vector.broadcast %cst_84 : f32 to vector<32x256xf32>
    %186 = arith.subf %185, %184 : vector<32x256xf32>
    %c0_85 = arith.constant 0 : index
    %c0_86 = arith.constant 0 : index
    %187 = vector.load %arg15[%c0_85, %c0_86] : memref<1x32xf32, #tpu.memory_space<vmem>>, vector<1x32xf32>
    %cst_87 = arith.constant dense<0.000000e+00> : vector<1x256xf32>
    %188 = tpu.matmul %187, %183, %cst_87 {dimension_numbers = #tpu.dot_dimension_numbers<[1], [0], [0], [1], [0, 0, 1, 1], [], []>} : vector<1x32xf32>, vector<32x256xf32>, vector<1x256xf32> -> vector<1x256xf32>
    %c0_88 = arith.constant 0 : index
    %c0_89 = arith.constant 0 : index
    %189 = vector.load %arg16[%c0_88, %c0_89] : memref<1x1xf32, #tpu.memory_space<vmem>>, vector<1x1xf32>
    %190 = vector.broadcast %189 : vector<1x1xf32> to vector<1x256xf32>
    %191 = arith.addf %188, %190 : vector<1x256xf32>
    %cst_90 = arith.constant 0.000000e+00 : f32
    %192 = vector.broadcast %cst_90 : f32 to vector<1x256xf32>
    %193 = arith.maximumf %191, %192 : vector<1x256xf32>
    %c0_91 = arith.constant 0 : index
    %c0_92 = arith.constant 0 : index
    %194 = vector.load %arg17[%c0_91, %c0_92] : memref<32x1xf32, #tpu.memory_space<vmem>>, vector<32x1xf32>
    %c0_93 = arith.constant 0 : index
    %c0_94 = arith.constant 0 : index
    %195 = vector.load %arg18[%c0_93, %c0_94] : memref<32x1xf32, #tpu.memory_space<vmem>>, vector<32x1xf32>
    %196 = vector.broadcast %194 : vector<32x1xf32> to vector<32x256xf32>
    %197 = vector.broadcast %193 : vector<1x256xf32> to vector<32x256xf32>
    %198 = arith.mulf %196, %197 : vector<32x256xf32>
    %199 = vector.broadcast %195 : vector<32x1xf32> to vector<32x256xf32>
    %200 = arith.addf %199, %198 : vector<32x256xf32>
    %201 = arith.negf %200 : vector<32x256xf32>
    %202 = math.exp %201 : vector<32x256xf32>
    %cst_95 = arith.constant 1.000000e+00 : f32
    %203 = vector.broadcast %cst_95 : f32 to vector<32x256xf32>
    %204 = arith.addf %203, %202 : vector<32x256xf32>
    %205 = arith.divf %203, %204 : vector<32x256xf32>
    %206 = arith.mulf %205, %183 : vector<32x256xf32>
    %207 = arith.mulf %205, %186 : vector<32x256xf32>
    %cst_96 = arith.constant dense<0.000000e+00> : vector<32x256xf32>
    %208 = tpu.matmul %206, %2, %cst_96 {dimension_numbers = #tpu.dot_dimension_numbers<[1], [0], [0], [1], [0, 0, 1, 1], [], []>} : vector<32x256xf32>, vector<256x256xf32>, vector<32x256xf32> -> vector<32x256xf32>
    %cst_97 = arith.constant dense<0.000000e+00> : vector<32x256xf32>
    %209 = tpu.matmul %207, %3, %cst_97 {dimension_numbers = #tpu.dot_dimension_numbers<[1], [0], [0], [1], [0, 0, 1, 1], [], []>} : vector<32x256xf32>, vector<256x256xf32>, vector<32x256xf32> -> vector<32x256xf32>
    %210 = arith.subf %208, %209 : vector<32x256xf32>
    %cst_98 = arith.constant dense<0.000000e+00> : vector<32x256xf32>
    %211 = tpu.matmul %206, %3, %cst_98 {dimension_numbers = #tpu.dot_dimension_numbers<[1], [0], [0], [1], [0, 0, 1, 1], [], []>} : vector<32x256xf32>, vector<256x256xf32>, vector<32x256xf32> -> vector<32x256xf32>
    %cst_99 = arith.constant dense<0.000000e+00> : vector<32x256xf32>
    %212 = tpu.matmul %207, %2, %cst_99 {dimension_numbers = #tpu.dot_dimension_numbers<[1], [0], [0], [1], [0, 0, 1, 1], [], []>} : vector<32x256xf32>, vector<256x256xf32>, vector<32x256xf32> -> vector<32x256xf32>
    %213 = arith.addf %211, %212 : vector<32x256xf32>
    %214 = arith.mulf %210, %210 : vector<32x256xf32>
    %215 = arith.mulf %213, %213 : vector<32x256xf32>
    %216 = arith.addf %214, %215 : vector<32x256xf32>
    %217 = math.sqrt %216 : vector<32x256xf32>
    %cst_100 = arith.constant 3.906250e-03 : f32
    %218 = vector.broadcast %cst_100 : f32 to vector<32x256xf32>
    %219 = arith.mulf %218, %217 : vector<32x256xf32>
    %c0_101 = arith.constant 0 : index
    %c0_102 = arith.constant 0 : index
    %220 = vector.load %arg5[%c0_101, %c0_102] : memref<32x32xf32, #tpu.memory_space<vmem>>, vector<32x32xf32>
    %cst_103 = arith.constant dense<0.000000e+00> : vector<32x256xf32>
    %221 = tpu.matmul %220, %182, %cst_103 {dimension_numbers = #tpu.dot_dimension_numbers<[1], [0], [0], [1], [0, 0, 1, 1], [], []>} : vector<32x32xf32>, vector<32x256xf32>, vector<32x256xf32> -> vector<32x256xf32>
    %c0_104 = arith.constant 0 : index
    %c0_105 = arith.constant 0 : index
    %222 = vector.load %arg8[%c0_104, %c0_105] : memref<32x9xf32, #tpu.memory_space<vmem>>, vector<32x9xf32>
    %c0_106 = arith.constant 0 : index
    %c0_107 = arith.constant 0 : index
    %223 = vector.load %arg9[%c0_106, %c0_107] : memref<32x9xf32, #tpu.memory_space<vmem>>, vector<32x9xf32>
    %cst_108 = arith.constant 0.000000e+00 : f32
    %224 = vector.broadcast %cst_108 : f32 to vector<32x256xf32>
    %c0_109 = arith.constant 0 : index
    %c0_110 = arith.constant 0 : index
    %c0_111 = arith.constant 0 : index
    %225 = vector.load %arg4[%c0_109, %c0_110, %c0_111] : memref<9x256x256xf32, #tpu.memory_space<vmem>>, vector<1x256x256xf32>
    %226 = vector.shape_cast %225 : vector<1x256x256xf32> to vector<256x256xf32>
    %227 = vector.extract_strided_slice %222 {offsets = [0, 0], sizes = [32, 1], strides = [1, 1]} : vector<32x9xf32> to vector<32x1xf32>
    %cst_112 = arith.constant dense<0.000000e+00> : vector<32x256xf32>
    %228 = tpu.matmul %182, %226, %cst_112 {dimension_numbers = #tpu.dot_dimension_numbers<[1], [0], [0], [1], [0, 0, 1, 1], [], []>} : vector<32x256xf32>, vector<256x256xf32>, vector<32x256xf32> -> vector<32x256xf32>
    %229 = vector.broadcast %227 : vector<32x1xf32> to vector<32x256xf32>
    %230 = arith.mulf %229, %228 : vector<32x256xf32>
    %231 = arith.addf %224, %230 : vector<32x256xf32>
    %232 = vector.extract_strided_slice %223 {offsets = [0, 0], sizes = [32, 1], strides = [1, 1]} : vector<32x9xf32> to vector<32x1xf32>
    %cst_113 = arith.constant dense<0.000000e+00> : vector<32x256xf32>
    %233 = tpu.matmul %221, %226, %cst_113 {dimension_numbers = #tpu.dot_dimension_numbers<[1], [0], [0], [1], [0, 0, 1, 1], [], []>} : vector<32x256xf32>, vector<256x256xf32>, vector<32x256xf32> -> vector<32x256xf32>
    %234 = vector.broadcast %232 : vector<32x1xf32> to vector<32x256xf32>
    %235 = arith.mulf %234, %233 : vector<32x256xf32>
    %236 = arith.addf %231, %235 : vector<32x256xf32>
    %c1_114 = arith.constant 1 : index
    %c0_115 = arith.constant 0 : index
    %c0_116 = arith.constant 0 : index
    %237 = vector.load %arg4[%c1_114, %c0_115, %c0_116] : memref<9x256x256xf32, #tpu.memory_space<vmem>>, vector<1x256x256xf32>
    %238 = vector.shape_cast %237 : vector<1x256x256xf32> to vector<256x256xf32>
    %239 = vector.extract_strided_slice %222 {offsets = [0, 1], sizes = [32, 1], strides = [1, 1]} : vector<32x9xf32> to vector<32x1xf32>
    %cst_117 = arith.constant dense<0.000000e+00> : vector<32x256xf32>
    %240 = tpu.matmul %182, %238, %cst_117 {dimension_numbers = #tpu.dot_dimension_numbers<[1], [0], [0], [1], [0, 0, 1, 1], [], []>} : vector<32x256xf32>, vector<256x256xf32>, vector<32x256xf32> -> vector<32x256xf32>
    %241 = vector.broadcast %239 : vector<32x1xf32> to vector<32x256xf32>
    %242 = arith.mulf %241, %240 : vector<32x256xf32>
    %243 = arith.addf %236, %242 : vector<32x256xf32>
    %244 = vector.extract_strided_slice %223 {offsets = [0, 1], sizes = [32, 1], strides = [1, 1]} : vector<32x9xf32> to vector<32x1xf32>
    %cst_118 = arith.constant dense<0.000000e+00> : vector<32x256xf32>
    %245 = tpu.matmul %221, %238, %cst_118 {dimension_numbers = #tpu.dot_dimension_numbers<[1], [0], [0], [1], [0, 0, 1, 1], [], []>} : vector<32x256xf32>, vector<256x256xf32>, vector<32x256xf32> -> vector<32x256xf32>
    %246 = vector.broadcast %244 : vector<32x1xf32> to vector<32x256xf32>
    %247 = arith.mulf %246, %245 : vector<32x256xf32>
    %248 = arith.addf %243, %247 : vector<32x256xf32>
    %c2_119 = arith.constant 2 : index
    %c0_120 = arith.constant 0 : index
    %c0_121 = arith.constant 0 : index
    %249 = vector.load %arg4[%c2_119, %c0_120, %c0_121] : memref<9x256x256xf32, #tpu.memory_space<vmem>>, vector<1x256x256xf32>
    %250 = vector.shape_cast %249 : vector<1x256x256xf32> to vector<256x256xf32>
    %251 = vector.extract_strided_slice %222 {offsets = [0, 2], sizes = [32, 1], strides = [1, 1]} : vector<32x9xf32> to vector<32x1xf32>
    %cst_122 = arith.constant dense<0.000000e+00> : vector<32x256xf32>
    %252 = tpu.matmul %182, %250, %cst_122 {dimension_numbers = #tpu.dot_dimension_numbers<[1], [0], [0], [1], [0, 0, 1, 1], [], []>} : vector<32x256xf32>, vector<256x256xf32>, vector<32x256xf32> -> vector<32x256xf32>
    %253 = vector.broadcast %251 : vector<32x1xf32> to vector<32x256xf32>
    %254 = arith.mulf %253, %252 : vector<32x256xf32>
    %255 = arith.addf %248, %254 : vector<32x256xf32>
    %256 = vector.extract_strided_slice %223 {offsets = [0, 2], sizes = [32, 1], strides = [1, 1]} : vector<32x9xf32> to vector<32x1xf32>
    %cst_123 = arith.constant dense<0.000000e+00> : vector<32x256xf32>
    %257 = tpu.matmul %221, %250, %cst_123 {dimension_numbers = #tpu.dot_dimension_numbers<[1], [0], [0], [1], [0, 0, 1, 1], [], []>} : vector<32x256xf32>, vector<256x256xf32>, vector<32x256xf32> -> vector<32x256xf32>
    %258 = vector.broadcast %256 : vector<32x1xf32> to vector<32x256xf32>
    %259 = arith.mulf %258, %257 : vector<32x256xf32>
    %260 = arith.addf %255, %259 : vector<32x256xf32>
    %c3_124 = arith.constant 3 : index
    %c0_125 = arith.constant 0 : index
    %c0_126 = arith.constant 0 : index
    %261 = vector.load %arg4[%c3_124, %c0_125, %c0_126] : memref<9x256x256xf32, #tpu.memory_space<vmem>>, vector<1x256x256xf32>
    %262 = vector.shape_cast %261 : vector<1x256x256xf32> to vector<256x256xf32>
    %263 = vector.extract_strided_slice %222 {offsets = [0, 3], sizes = [32, 1], strides = [1, 1]} : vector<32x9xf32> to vector<32x1xf32>
    %cst_127 = arith.constant dense<0.000000e+00> : vector<32x256xf32>
    %264 = tpu.matmul %182, %262, %cst_127 {dimension_numbers = #tpu.dot_dimension_numbers<[1], [0], [0], [1], [0, 0, 1, 1], [], []>} : vector<32x256xf32>, vector<256x256xf32>, vector<32x256xf32> -> vector<32x256xf32>
    %265 = vector.broadcast %263 : vector<32x1xf32> to vector<32x256xf32>
    %266 = arith.mulf %265, %264 : vector<32x256xf32>
    %267 = arith.addf %260, %266 : vector<32x256xf32>
    %268 = vector.extract_strided_slice %223 {offsets = [0, 3], sizes = [32, 1], strides = [1, 1]} : vector<32x9xf32> to vector<32x1xf32>
    %cst_128 = arith.constant dense<0.000000e+00> : vector<32x256xf32>
    %269 = tpu.matmul %221, %262, %cst_128 {dimension_numbers = #tpu.dot_dimension_numbers<[1], [0], [0], [1], [0, 0, 1, 1], [], []>} : vector<32x256xf32>, vector<256x256xf32>, vector<32x256xf32> -> vector<32x256xf32>
    %270 = vector.broadcast %268 : vector<32x1xf32> to vector<32x256xf32>
    %271 = arith.mulf %270, %269 : vector<32x256xf32>
    %272 = arith.addf %267, %271 : vector<32x256xf32>
    %c4_129 = arith.constant 4 : index
    %c0_130 = arith.constant 0 : index
    %c0_131 = arith.constant 0 : index
    %273 = vector.load %arg4[%c4_129, %c0_130, %c0_131] : memref<9x256x256xf32, #tpu.memory_space<vmem>>, vector<1x256x256xf32>
    %274 = vector.shape_cast %273 : vector<1x256x256xf32> to vector<256x256xf32>
    %275 = vector.extract_strided_slice %222 {offsets = [0, 4], sizes = [32, 1], strides = [1, 1]} : vector<32x9xf32> to vector<32x1xf32>
    %cst_132 = arith.constant dense<0.000000e+00> : vector<32x256xf32>
    %276 = tpu.matmul %182, %274, %cst_132 {dimension_numbers = #tpu.dot_dimension_numbers<[1], [0], [0], [1], [0, 0, 1, 1], [], []>} : vector<32x256xf32>, vector<256x256xf32>, vector<32x256xf32> -> vector<32x256xf32>
    %277 = vector.broadcast %275 : vector<32x1xf32> to vector<32x256xf32>
    %278 = arith.mulf %277, %276 : vector<32x256xf32>
    %279 = arith.addf %272, %278 : vector<32x256xf32>
    %280 = vector.extract_strided_slice %223 {offsets = [0, 4], sizes = [32, 1], strides = [1, 1]} : vector<32x9xf32> to vector<32x1xf32>
    %cst_133 = arith.constant dense<0.000000e+00> : vector<32x256xf32>
    %281 = tpu.matmul %221, %274, %cst_133 {dimension_numbers = #tpu.dot_dimension_numbers<[1], [0], [0], [1], [0, 0, 1, 1], [], []>} : vector<32x256xf32>, vector<256x256xf32>, vector<32x256xf32> -> vector<32x256xf32>
    %282 = vector.broadcast %280 : vector<32x1xf32> to vector<32x256xf32>
    %283 = arith.mulf %282, %281 : vector<32x256xf32>
    %284 = arith.addf %279, %283 : vector<32x256xf32>
    %c5_134 = arith.constant 5 : index
    %c0_135 = arith.constant 0 : index
    %c0_136 = arith.constant 0 : index
    %285 = vector.load %arg4[%c5_134, %c0_135, %c0_136] : memref<9x256x256xf32, #tpu.memory_space<vmem>>, vector<1x256x256xf32>
    %286 = vector.shape_cast %285 : vector<1x256x256xf32> to vector<256x256xf32>
    %287 = vector.extract_strided_slice %222 {offsets = [0, 5], sizes = [32, 1], strides = [1, 1]} : vector<32x9xf32> to vector<32x1xf32>
    %cst_137 = arith.constant dense<0.000000e+00> : vector<32x256xf32>
    %288 = tpu.matmul %182, %286, %cst_137 {dimension_numbers = #tpu.dot_dimension_numbers<[1], [0], [0], [1], [0, 0, 1, 1], [], []>} : vector<32x256xf32>, vector<256x256xf32>, vector<32x256xf32> -> vector<32x256xf32>
    %289 = vector.broadcast %287 : vector<32x1xf32> to vector<32x256xf32>
    %290 = arith.mulf %289, %288 : vector<32x256xf32>
    %291 = arith.addf %284, %290 : vector<32x256xf32>
    %292 = vector.extract_strided_slice %223 {offsets = [0, 5], sizes = [32, 1], strides = [1, 1]} : vector<32x9xf32> to vector<32x1xf32>
    %cst_138 = arith.constant dense<0.000000e+00> : vector<32x256xf32>
    %293 = tpu.matmul %221, %286, %cst_138 {dimension_numbers = #tpu.dot_dimension_numbers<[1], [0], [0], [1], [0, 0, 1, 1], [], []>} : vector<32x256xf32>, vector<256x256xf32>, vector<32x256xf32> -> vector<32x256xf32>
    %294 = vector.broadcast %292 : vector<32x1xf32> to vector<32x256xf32>
    %295 = arith.mulf %294, %293 : vector<32x256xf32>
    %296 = arith.addf %291, %295 : vector<32x256xf32>
    %c6_139 = arith.constant 6 : index
    %c0_140 = arith.constant 0 : index
    %c0_141 = arith.constant 0 : index
    %297 = vector.load %arg4[%c6_139, %c0_140, %c0_141] : memref<9x256x256xf32, #tpu.memory_space<vmem>>, vector<1x256x256xf32>
    %298 = vector.shape_cast %297 : vector<1x256x256xf32> to vector<256x256xf32>
    %299 = vector.extract_strided_slice %222 {offsets = [0, 6], sizes = [32, 1], strides = [1, 1]} : vector<32x9xf32> to vector<32x1xf32>
    %cst_142 = arith.constant dense<0.000000e+00> : vector<32x256xf32>
    %300 = tpu.matmul %182, %298, %cst_142 {dimension_numbers = #tpu.dot_dimension_numbers<[1], [0], [0], [1], [0, 0, 1, 1], [], []>} : vector<32x256xf32>, vector<256x256xf32>, vector<32x256xf32> -> vector<32x256xf32>
    %301 = vector.broadcast %299 : vector<32x1xf32> to vector<32x256xf32>
    %302 = arith.mulf %301, %300 : vector<32x256xf32>
    %303 = arith.addf %296, %302 : vector<32x256xf32>
    %304 = vector.extract_strided_slice %223 {offsets = [0, 6], sizes = [32, 1], strides = [1, 1]} : vector<32x9xf32> to vector<32x1xf32>
    %cst_143 = arith.constant dense<0.000000e+00> : vector<32x256xf32>
    %305 = tpu.matmul %221, %298, %cst_143 {dimension_numbers = #tpu.dot_dimension_numbers<[1], [0], [0], [1], [0, 0, 1, 1], [], []>} : vector<32x256xf32>, vector<256x256xf32>, vector<32x256xf32> -> vector<32x256xf32>
    %306 = vector.broadcast %304 : vector<32x1xf32> to vector<32x256xf32>
    %307 = arith.mulf %306, %305 : vector<32x256xf32>
    %308 = arith.addf %303, %307 : vector<32x256xf32>
    %c7_144 = arith.constant 7 : index
    %c0_145 = arith.constant 0 : index
    %c0_146 = arith.constant 0 : index
    %309 = vector.load %arg4[%c7_144, %c0_145, %c0_146] : memref<9x256x256xf32, #tpu.memory_space<vmem>>, vector<1x256x256xf32>
    %310 = vector.shape_cast %309 : vector<1x256x256xf32> to vector<256x256xf32>
    %311 = vector.extract_strided_slice %222 {offsets = [0, 7], sizes = [32, 1], strides = [1, 1]} : vector<32x9xf32> to vector<32x1xf32>
    %cst_147 = arith.constant dense<0.000000e+00> : vector<32x256xf32>
    %312 = tpu.matmul %182, %310, %cst_147 {dimension_numbers = #tpu.dot_dimension_numbers<[1], [0], [0], [1], [0, 0, 1, 1], [], []>} : vector<32x256xf32>, vector<256x256xf32>, vector<32x256xf32> -> vector<32x256xf32>
    %313 = vector.broadcast %311 : vector<32x1xf32> to vector<32x256xf32>
    %314 = arith.mulf %313, %312 : vector<32x256xf32>
    %315 = arith.addf %308, %314 : vector<32x256xf32>
    %316 = vector.extract_strided_slice %223 {offsets = [0, 7], sizes = [32, 1], strides = [1, 1]} : vector<32x9xf32> to vector<32x1xf32>
    %cst_148 = arith.constant dense<0.000000e+00> : vector<32x256xf32>
    %317 = tpu.matmul %221, %310, %cst_148 {dimension_numbers = #tpu.dot_dimension_numbers<[1], [0], [0], [1], [0, 0, 1, 1], [], []>} : vector<32x256xf32>, vector<256x256xf32>, vector<32x256xf32> -> vector<32x256xf32>
    %318 = vector.broadcast %316 : vector<32x1xf32> to vector<32x256xf32>
    %319 = arith.mulf %318, %317 : vector<32x256xf32>
    %320 = arith.addf %315, %319 : vector<32x256xf32>
    %c8_149 = arith.constant 8 : index
    %c0_150 = arith.constant 0 : index
    %c0_151 = arith.constant 0 : index
    %321 = vector.load %arg4[%c8_149, %c0_150, %c0_151] : memref<9x256x256xf32, #tpu.memory_space<vmem>>, vector<1x256x256xf32>
    %322 = vector.shape_cast %321 : vector<1x256x256xf32> to vector<256x256xf32>
    %323 = vector.extract_strided_slice %222 {offsets = [0, 8], sizes = [32, 1], strides = [1, 1]} : vector<32x9xf32> to vector<32x1xf32>
    %cst_152 = arith.constant dense<0.000000e+00> : vector<32x256xf32>
    %324 = tpu.matmul %182, %322, %cst_152 {dimension_numbers = #tpu.dot_dimension_numbers<[1], [0], [0], [1], [0, 0, 1, 1], [], []>} : vector<32x256xf32>, vector<256x256xf32>, vector<32x256xf32> -> vector<32x256xf32>
    %325 = vector.broadcast %323 : vector<32x1xf32> to vector<32x256xf32>
    %326 = arith.mulf %325, %324 : vector<32x256xf32>
    %327 = arith.addf %320, %326 : vector<32x256xf32>
    %328 = vector.extract_strided_slice %223 {offsets = [0, 8], sizes = [32, 1], strides = [1, 1]} : vector<32x9xf32> to vector<32x1xf32>
    %cst_153 = arith.constant dense<0.000000e+00> : vector<32x256xf32>
    %329 = tpu.matmul %221, %322, %cst_153 {dimension_numbers = #tpu.dot_dimension_numbers<[1], [0], [0], [1], [0, 0, 1, 1], [], []>} : vector<32x256xf32>, vector<256x256xf32>, vector<32x256xf32> -> vector<32x256xf32>
    %330 = vector.broadcast %328 : vector<32x1xf32> to vector<32x256xf32>
    %331 = arith.mulf %330, %329 : vector<32x256xf32>
    %332 = arith.addf %327, %331 : vector<32x256xf32>
    %c0_154 = arith.constant 0 : index
    %c0_155 = arith.constant 0 : index
    %333 = vector.load %arg10[%c0_154, %c0_155] : memref<32x1xf32, #tpu.memory_space<vmem>>, vector<32x1xf32>
    %334 = vector.broadcast %333 : vector<32x1xf32> to vector<32x256xf32>
    %335 = arith.addf %332, %334 : vector<32x256xf32>
    %336 = tpu.concatenate %219, %335 in 0 : vector<32x256xf32>, vector<32x256xf32> -> vector<64x256xf32>
    %c0_156 = arith.constant 0 : index
    %c0_157 = arith.constant 0 : index
    %337 = vector.load %arg19[%c0_156, %c0_157] : memref<16x64xf32, #tpu.memory_space<vmem>>, vector<16x64xf32>
    %cst_158 = arith.constant dense<0.000000e+00> : vector<16x256xf32>
    %338 = tpu.matmul %337, %336, %cst_158 {dimension_numbers = #tpu.dot_dimension_numbers<[1], [0], [0], [1], [0, 0, 1, 1], [], []>} : vector<16x64xf32>, vector<64x256xf32>, vector<16x256xf32> -> vector<16x256xf32>
    %c0_159 = arith.constant 0 : index
    %c0_160 = arith.constant 0 : index
    %339 = vector.load %arg20[%c0_159, %c0_160] : memref<16x1xf32, #tpu.memory_space<vmem>>, vector<16x1xf32>
    %340 = vector.broadcast %339 : vector<16x1xf32> to vector<16x256xf32>
    %341 = arith.addf %338, %340 : vector<16x256xf32>
    %c0_161 = arith.constant 0 : index
    %c0_162 = arith.constant 0 : index
    %c0_163 = arith.constant 0 : index
    %342 = vector.load %arg21[%c0_161, %c0_162, %c0_163] : memref<1x16x256xf32, #tpu.memory_space<vmem>>, vector<1x16x256xf32>
    %343 = vector.shape_cast %342 : vector<1x16x256xf32> to vector<16x256xf32>
    %344 = vector.shape_cast %341 : vector<16x256xf32> to vector<1x16x256xf32>
    tpu.vector_store %arg21[%c0_161, %c0_162, %c0_163], %344 {strides = array<i32>} : memref<1x16x256xf32, #tpu.memory_space<vmem>>, vector<1x16x256xf32>,
    return
  }
  func.func @transform_0(%arg0: i32) -> (i32, i32, i32) {
    %c0_i32 = arith.constant 0 : i32
    %c0_i32_0 = arith.constant 0 : i32
    %c0_i32_1 = arith.constant 0 : i32
    return %arg0, %c0_i32, %c0_i32_0 : i32, i32, i32
  }
  func.func @transform_1(%arg0: i32) -> (i32, i32) {
    %c0_i32 = arith.constant 0 : i32
    %c0_i32_0 = arith.constant 0 : i32
    %c0_i32_1 = arith.constant 0 : i32
    return %c0_i32, %c0_i32_0 : i32, i32
  }
  func.func @transform_2(%arg0: i32) -> (i32, i32) {
    %c0_i32 = arith.constant 0 : i32
    %c0_i32_0 = arith.constant 0 : i32
    %c0_i32_1 = arith.constant 0 : i32
    return %c0_i32, %c0_i32_0 : i32, i32
  }
  func.func @transform_3(%arg0: i32) -> (i32, i32, i32) {
    %c0_i32 = arith.constant 0 : i32
    %c0_i32_0 = arith.constant 0 : i32
    %c0_i32_1 = arith.constant 0 : i32
    %c0_i32_2 = arith.constant 0 : i32
    return %c0_i32, %c0_i32_0, %c0_i32_1 : i32, i32, i32
  }
  func.func @transform_4(%arg0: i32) -> (i32, i32) {
    %c0_i32 = arith.constant 0 : i32
    %c0_i32_0 = arith.constant 0 : i32
    %c0_i32_1 = arith.constant 0 : i32
    return %c0_i32, %c0_i32_0 : i32, i32
  }
  func.func @transform_5(%arg0: i32) -> (i32, i32) {
    %c0_i32 = arith.constant 0 : i32
    %c0_i32_0 = arith.constant 0 : i32
    %c0_i32_1 = arith.constant 0 : i32
    return %c0_i32, %c0_i32_0 : i32, i32
  }
  func.func @transform_6(%arg0: i32) -> (i32, i32) {
    %c0_i32 = arith.constant 0 : i32
    %c0_i32_0 = arith.constant 0 : i32
    %c0_i32_1 = arith.constant 0 : i32
    return %c0_i32, %c0_i32_0 : i32, i32
  }
  func.func @transform_7(%arg0: i32) -> (i32, i32) {
    %c0_i32 = arith.constant 0 : i32
    %c0_i32_0 = arith.constant 0 : i32
    %c0_i32_1 = arith.constant 0 : i32
    return %c0_i32, %c0_i32_0 : i32, i32
  }
  func.func @transform_8(%arg0: i32) -> (i32, i32) {
    %c0_i32 = arith.constant 0 : i32
    %c0_i32_0 = arith.constant 0 : i32
    %c0_i32_1 = arith.constant 0 : i32
    return %c0_i32, %c0_i32_0 : i32, i32
  }
  func.func @transform_9(%arg0: i32) -> (i32, i32) {
    %c0_i32 = arith.constant 0 : i32
    %c0_i32_0 = arith.constant 0 : i32
    %c0_i32_1 = arith.constant 0 : i32
    return %c0_i32, %c0_i32_0 : i32, i32
  }
  func.func @transform_10(%arg0: i32) -> (i32, i32) {
    %c0_i32 = arith.constant 0 : i32
    %c0_i32_0 = arith.constant 0 : i32
    %c0_i32_1 = arith.constant 0 : i32
    return %c0_i32, %c0_i32_0 : i32, i32
  }
  func.func @transform_11(%arg0: i32) -> (i32, i32) {
    %c0_i32 = arith.constant 0 : i32
    %c0_i32_0 = arith.constant 0 : i32
    %c0_i32_1 = arith.constant 0 : i32
    return %c0_i32, %c0_i32_0 : i32, i32
  }
  func.func @transform_12(%arg0: i32) -> (i32, i32) {
    %c0_i32 = arith.constant 0 : i32
    %c0_i32_0 = arith.constant 0 : i32
    %c0_i32_1 = arith.constant 0 : i32
    return %c0_i32, %c0_i32_0 : i32, i32
  }
  func.func @transform_13(%arg0: i32) -> (i32, i32) {
    %c0_i32 = arith.constant 0 : i32
    %c0_i32_0 = arith.constant 0 : i32
    %c0_i32_1 = arith.constant 0 : i32
    return %c0_i32, %c0_i32_0 : i32, i32
  }
  func.func @transform_14(%arg0: i32) -> (i32, i32) {
    %c0_i32 = arith.constant 0 : i32
    %c0_i32_0 = arith.constant 0 : i32
    %c0_i32_1 = arith.constant 0 : i32
    return %c0_i32, %c0_i32_0 : i32, i32
  }
  func.func @transform_15(%arg0: i32) -> (i32, i32) {
    %c0_i32 = arith.constant 0 : i32
    %c0_i32_0 = arith.constant 0 : i32
    %c0_i32_1 = arith.constant 0 : i32
    return %c0_i32, %c0_i32_0 : i32, i32
  }
  func.func @transform_16(%arg0: i32) -> (i32, i32) {
    %c0_i32 = arith.constant 0 : i32
    %c0_i32_0 = arith.constant 0 : i32
    %c0_i32_1 = arith.constant 0 : i32
    return %c0_i32, %c0_i32_0 : i32, i32
  }
  func.func @transform_17(%arg0: i32) -> (i32, i32) {
    %c0_i32 = arith.constant 0 : i32
    %c0_i32_0 = arith.constant 0 : i32
    %c0_i32_1 = arith.constant 0 : i32
    return %c0_i32, %c0_i32_0 : i32, i32
  }
  func.func @transform_18(%arg0: i32) -> (i32, i32) {
    %c0_i32 = arith.constant 0 : i32
    %c0_i32_0 = arith.constant 0 : i32
    %c0_i32_1 = arith.constant 0 : i32
    return %c0_i32, %c0_i32_0 : i32, i32
  }
  func.func @transform_19(%arg0: i32) -> (i32, i32) {
    %c0_i32 = arith.constant 0 : i32
    %c0_i32_0 = arith.constant 0 : i32
    %c0_i32_1 = arith.constant 0 : i32
    return %c0_i32, %c0_i32_0 : i32, i32
  }
  func.func @transform_20(%arg0: i32) -> (i32, i32, i32) {
    %c0_i32 = arith.constant 0 : i32
    %c0_i32_0 = arith.constant 0 : i32
    %c0_i32_1 = arith.constant 0 : i32
    return %arg0, %c0_i32, %c0_i32_0 : i32, i32, i32
  }
}

</mosaic_0001>

<llo_original>
// kernel: feedforward_forward.1
$region0: #{feedforward_forward.1}
  #allocation0 [shape = 'u32[]', space=smem, size = 0x4, offset = 0x4, fixed_abs, tag = 'smem constant byte address 0x4 - core index']
  #allocation1 [shape = 'u32[72,128]{1,0:T(1,128)}', space=vmem, size = 0x9000, scoped, tag = 'internal scratch']
  #allocation2 [shape = 'f32[1,1]{1,0:T(1,128)S(1)}', space=vmem, size = 0x200, scoped, tag = 'scoped memory for feedforward_forward.1']
  #allocation3 [shape = 'f32[1,1]{1,0:T(1,128)S(1)}', space=vmem, size = 0x200, scoped, tag = 'scoped memory for feedforward_forward.1']
  %s0 = inlined_call_operand.vmem [shape: f32[2,16,256], index: 0, kind: input, shape index: {}]
  %s1 = inlined_call_operand.hbm [shape: f32[256,256], index: 1, kind: input, shape index: {}]
  %s2 = inlined_call_operand.hbm [shape: f32[256,256], index: 2, kind: input, shape index: {}]
  %s3 = inlined_call_operand.hbm [shape: f32[9,256,256], index: 3, kind: input, shape index: {}]
  %s4 = inlined_call_operand.hbm [shape: f32[32,32], index: 4, kind: input, shape index: {}]
  %s5 = inlined_call_operand.hbm [shape: f32[16,9], index: 5, kind: input, shape index: {}]
  %s6 = inlined_call_operand.vmem [shape: f32[16,1], index: 6, kind: input, shape index: {}]
  %s7 = inlined_call_operand.vmem [shape: f32[32,9], index: 7, kind: input, shape index: {}]
  %s8 = inlined_call_operand.vmem [shape: f32[32,9], index: 8, kind: input, shape index: {}]
  %s9 = inlined_call_operand.vmem [shape: f32[32,1], index: 9, kind: input, shape index: {}]
  %s10 = inlined_call_operand.hbm [shape: f32[1,16], index: 10, kind: input, shape index: {}]
  %s11 = inlined_call_operand.<no memory space> [shape: f32[1,1], index: 11, kind: input, shape index: {}]
  %s12 = inlined_call_operand.vmem [shape: f32[16,1], index: 12, kind: input, shape index: {}]
  %s13 = inlined_call_operand.vmem [shape: f32[16,1], index: 13, kind: input, shape index: {}]
  %s14 = inlined_call_operand.hbm [shape: f32[1,32], index: 14, kind: input, shape index: {}]
  %s15 = inlined_call_operand.<no memory space> [shape: f32[1,1], index: 15, kind: input, shape index: {}]
  %s16 = inlined_call_operand.vmem [shape: f32[32,1], index: 16, kind: input, shape index: {}]
  %s17 = inlined_call_operand.vmem [shape: f32[32,1], index: 17, kind: input, shape index: {}]
  %s18 = inlined_call_operand.hbm [shape: f32[16,64], index: 18, kind: input, shape index: {}]
  %s19 = inlined_call_operand.vmem [shape: f32[16,1], index: 19, kind: input, shape index: {}]
  %s20 = inlined_call_operand.vmem [shape: f32[2,16,256], index: 20, kind: output, shape index: {}]
  %s21 = sld [smem:[#allocation0]]
  $region145: #{feedforward_forward.1} parent=0
    _
  %s23 = ssub.s32 1, %s21
  %s24 = scalar_select 0, %s23, %s21
  %v25 = vstv %s11
  %26 = vst [vmem:[#allocation2] sm:$0x1] %v25
  %v27 = vstv %s15
  %28 = vst [vmem:[#allocation3] sm:$0x1] %v27
  $region1: #{feedforward_forward.1} parent=0
    #allocation4 [shape = 'u8[262144]{0}', space=vmem, size = 0x40000, scoped, tag = 'input window, operand 1, single buffered']
    #allocation5 [shape = 's32[2]{0}', space=sflag, size = 0x8, scoped, tag = 'scoped memory for feedforward_forward.1']
    #allocation6 [shape = 'u8[262144]{0}', space=vmem, size = 0x40000, scoped, tag = 'input window, operand 2, single buffered']
    #allocation7 [shape = 's32[1]{0}', space=sflag, size = 0x4, scoped, tag = 'scoped memory for feedforward_forward.1']
    #allocation8 [shape = 'u8[2359296]{0}', space=vmem, size = 0x240000, scoped, tag = 'input window, operand 3, single buffered']
    #allocation9 [shape = 'u8[16384]{0}', space=vmem, size = 0x4000, scoped, tag = 'input window, operand 4, single buffered']
    #allocation10 [shape = 's32[1]{0}', space=sflag, size = 0x4, scoped, tag = 'scoped memory for feedforward_forward.1']
    #allocation11 [shape = 'u8[8192]{0}', space=vmem, size = 0x2000, scoped, tag = 'input window, operand 5, single buffered']
    #allocation12 [shape = 'u8[512]{0}', space=vmem, size = 0x400, scoped, tag = 'input window, operand 10, single buffered']
    #allocation13 [shape = 's32[1]{0}', space=sflag, size = 0x4, scoped, tag = 'scoped memory for feedforward_forward.1']
    #allocation14 [shape = 'u8[512]{0}', space=vmem, size = 0x400, scoped, tag = 'input window, operand 14, single buffered']
    #allocation15 [shape = 'u8[8192]{0}', space=vmem, size = 0x2000, scoped, tag = 'input window, operand 18, single buffered']
    #allocation16 [shape = 's32[1]{0}', space=sflag, size = 0x4, scoped, tag = 'scoped memory for feedforward_forward.1']
    %29 = vsyncpa [#allocation5], 0
    %30 = vsyncpa [#allocation7], 0
    %31 = vsyncpa [#allocation10], 0
    %32 = vsyncpa [#allocation13], 0
    %33 = vsyncpa [#allocation16], 0
    loop: start=0, step=1, limit=4
    $region2: #{feedforward_forward.1} parent=1 // loop_pre_header
      _
    $region3: #{feedforward_forward.1} parent=1 // loop_header
      %s35 = sphi 0, %s39
      %p36 = scmp.ge.s32.totalorder %s35, 4
      %s45 = sphi 0, %s47
      %s48 = sphi 0, %s45
      %s49 = sphi 0, %s48
      %s65 = sphi 0, %s49
      %s69 = sphi 0, %s69
      %s71 = sphi 0, %s69
      %s72 = sphi 0, %s71
      %s86 = sphi 0, %s72
      %s90 = sphi 0, %s90
      %s92 = sphi 0, %s90
      %s93 = sphi 0, %s92
      %s107 = sphi 0, %s93
      %s111 = sphi 0, %s111
      %s113 = sphi 0, %s111
      %s114 = sphi 0, %s113
      %s128 = sphi 0, %s114
      %s132 = sphi 0, %s132
      %s134 = sphi 0, %s132
      %s135 = sphi 0, %s134
      %s149 = sphi 0, %s135
      %s153 = sphi 0, %s153
      %s155 = sphi 0, %s153
      %s156 = sphi 0, %s155
      %s170 = sphi 0, %s156
      %s174 = sphi 0, %s174
      %s176 = sphi 0, %s174
      %s177 = sphi 0, %s176
      %s191 = sphi 0, %s177
      %s195 = sphi 0, %s195
      %s197 = sphi 0, %s195
      %s198 = sphi 0, %s197
      %s212 = sphi 0, %s198
      %s216 = sphi 0, %s216
      %s218 = sphi 0, %s216
      %s219 = sphi 0, %s218
      %s233 = sphi 0, %s219
      %s237 = sphi 0, %s237
      %s239 = sphi 0, %s237
      %s240 = sphi 0, %s239
      %s254 = sphi 0, %s240
      %s258 = sphi 0, %s258
      %s260 = sphi 0, %s258
      %s261 = sphi 0, %s260
      %s275 = sphi 0, %s261
      %s279 = sphi 0, %s279
      %s281 = sphi 0, %s279
      %s282 = sphi 0, %s281
      %s296 = sphi 0, %s282
      %s300 = sphi 0, %s300
      %s302 = sphi 0, %s300
      %s303 = sphi 0, %s302
      %s317 = sphi 0, %s303
      %s321 = sphi 0, %s321
      %s323 = sphi 0, %s321
      %s324 = sphi 0, %s323
      %s338 = sphi 0, %s324
      %s342 = sphi 0, %s342
      %s344 = sphi 0, %s342
      %s345 = sphi 0, %s344
      %s359 = sphi 0, %s345
      %s363 = sphi 0, %s363
      %s365 = sphi 0, %s363
      %s366 = sphi 0, %s365
      %s380 = sphi 0, %s366
      %s384 = sphi 0, %s384
      %s386 = sphi 0, %s384
      %s387 = sphi 0, %s386
      %s401 = sphi 0, %s387
      %s405 = sphi 0, %s405
      %s407 = sphi 0, %s405
      %s408 = sphi 0, %s407
      %s422 = sphi 0, %s408
      %s426 = sphi 0, %s426
      %s428 = sphi 0, %s426
      %s429 = sphi 0, %s428
      %s443 = sphi 0, %s429
      %s447 = sphi 0, %s447
      %s449 = sphi 0, %s447
      %s450 = sphi 0, %s449
      %s464 = sphi 0, %s450
      %s470 = sphi 0, %s472
      %s473 = sphi 0, %s470
      %s474 = sphi 0, %s473
      %s490 = sphi 0, %s474
    $region4: #{feedforward_forward.1} parent=1 // loop_header_branch
      %38 = sbr.rel (%p36) target = $region8
    $region5: #{feedforward_forward.1} parent=1 // loop_body
      %s40 = ssub.s32 %s35, 1
      %s41 = ssub.s32 %s35, 2
      %s42 = sadd.s32 %s35, 1
      %s43 = ssub.s32 %s35, %s42
      %p44 = scmp.eq.s32.totalorder %s43, 0
      %s46 = sadd.s32 %s45, 1
      %s47 = scalar_select %p44, %s45, %s46
      %p50 = pneg %p44
      %p51 = scmp.eq.s32.totalorder %s35, 1
      %p52 = por %p50, %p51
      %p53 = scmp.ne.s32.totalorder %s45, %s48
      %p54 = scmp.eq.s32.totalorder %s35, 0
      %p55 = por %p53, %p54
      %p56 = scmp.ne.s32.totalorder %s45, %s48
      %p57 = scmp.eq.s32.totalorder %s40, 1
      %p58 = por %p56, %p57
      %p59 = scmp.ne.s32.totalorder %s48, %s49
      %p60 = scmp.eq.s32.totalorder %s40, 0
      %p61 = por %p59, %p60
      %p62 = scmp.ne.s32.totalorder %s48, %s49
      %p63 = scmp.eq.s32.totalorder %s41, 1
      %p64 = por %p62, %p63
      %p66 = scmp.ne.s32.totalorder %s49, %s65
      %p67 = scmp.eq.s32.totalorder %s41, 0
      %p68 = por %p66, %p67
      %s70 = sadd.s32 %s69, 1
      %p73 = scmp.eq.s32.totalorder %s35, 1
      %p74 = scmp.ne.s32.totalorder %s69, %s71
      %p75 = scmp.eq.s32.totalorder %s35, 0
      %p76 = por %p74, %p75
      %p77 = scmp.ne.s32.totalorder %s69, %s71
      %p78 = scmp.eq.s32.totalorder %s40, 1
      %p79 = por %p77, %p78
      %p80 = scmp.ne.s32.totalorder %s71, %s72
      %p81 = scmp.eq.s32.totalorder %s40, 0
      %p82 = por %p80, %p81
      %p83 = scmp.ne.s32.totalorder %s71, %s72
      %p84 = scmp.eq.s32.totalorder %s41, 1
      %p85 = por %p83, %p84
      %p87 = scmp.ne.s32.totalorder %s72, %s86
      %p88 = scmp.eq.s32.totalorder %s41, 0
      %p89 = por %p87, %p88
      %s91 = sadd.s32 %s90, 1
      %p94 = scmp.eq.s32.totalorder %s35, 1
      %p95 = scmp.ne.s32.totalorder %s90, %s92
      %p96 = scmp.eq.s32.totalorder %s35, 0
      %p97 = por %p95, %p96
      %p98 = scmp.ne.s32.totalorder %s90, %s92
      %p99 = scmp.eq.s32.totalorder %s40, 1
      %p100 = por %p98, %p99
      %p101 = scmp.ne.s32.totalorder %s92, %s93
      %p102 = scmp.eq.s32.totalorder %s40, 0
      %p103 = por %p101, %p102
      %p104 = scmp.ne.s32.totalorder %s92, %s93
      %p105 = scmp.eq.s32.totalorder %s41, 1
      %p106 = por %p104, %p105
      %p108 = scmp.ne.s32.totalorder %s93, %s107
      %p109 = scmp.eq.s32.totalorder %s41, 0
      %p110 = por %p108, %p109
      %s112 = sadd.s32 %s111, 1
      %p115 = scmp.eq.s32.totalorder %s35, 1
      %p116 = scmp.ne.s32.totalorder %s111, %s113
      %p117 = scmp.eq.s32.totalorder %s35, 0
      %p118 = por %p116, %p117
      %p119 = scmp.ne.s32.totalorder %s111, %s113
      %p120 = scmp.eq.s32.totalorder %s40, 1
      %p121 = por %p119, %p120
      %p122 = scmp.ne.s32.totalorder %s113, %s114
      %p123 = scmp.eq.s32.totalorder %s40, 0
      %p124 = por %p122, %p123
      %p125 = scmp.ne.s32.totalorder %s113, %s114
      %p126 = scmp.eq.s32.totalorder %s41, 1
      %p127 = por %p125, %p126
      %p129 = scmp.ne.s32.totalorder %s114, %s128
      %p130 = scmp.eq.s32.totalorder %s41, 0
      %p131 = por %p129, %p130
      %s133 = sadd.s32 %s132, 1
      %p136 = scmp.eq.s32.totalorder %s35, 1
      %p137 = scmp.ne.s32.totalorder %s132, %s134
      %p138 = scmp.eq.s32.totalorder %s35, 0
      %p139 = por %p137, %p138
      %p140 = scmp.ne.s32.totalorder %s132, %s134
      %p141 = scmp.eq.s32.totalorder %s40, 1
      %p142 = por %p140, %p141
      %p143 = scmp.ne.s32.totalorder %s134, %s135
      %p144 = scmp.eq.s32.totalorder %s40, 0
      %p145 = por %p143, %p144
      %p146 = scmp.ne.s32.totalorder %s134, %s135
      %p147 = scmp.eq.s32.totalorder %s41, 1
      %p148 = por %p146, %p147
      %p150 = scmp.ne.s32.totalorder %s135, %s149
      %p151 = scmp.eq.s32.totalorder %s41, 0
      %p152 = por %p150, %p151
      %s154 = sadd.s32 %s153, 1
      %p157 = scmp.eq.s32.totalorder %s35, 1
      %p158 = scmp.ne.s32.totalorder %s153, %s155
      %p159 = scmp.eq.s32.totalorder %s35, 0
      %p160 = por %p158, %p159
      %p161 = scmp.ne.s32.totalorder %s153, %s155
      %p162 = scmp.eq.s32.totalorder %s40, 1
      %p163 = por %p161, %p162
      %p164 = scmp.ne.s32.totalorder %s155, %s156
      %p165 = scmp.eq.s32.totalorder %s40, 0
      %p166 = por %p164, %p165
      %p167 = scmp.ne.s32.totalorder %s155, %s156
      %p168 = scmp.eq.s32.totalorder %s41, 1
      %p169 = por %p167, %p168
      %p171 = scmp.ne.s32.totalorder %s156, %s170
      %p172 = scmp.eq.s32.totalorder %s41, 0
      %p173 = por %p171, %p172
      %s175 = sadd.s32 %s174, 1
      %p178 = scmp.eq.s32.totalorder %s35, 1
      %p179 = scmp.ne.s32.totalorder %s174, %s176
      %p180 = scmp.eq.s32.totalorder %s35, 0
      %p181 = por %p179, %p180
      %p182 = scmp.ne.s32.totalorder %s174, %s176
      %p183 = scmp.eq.s32.totalorder %s40, 1
      %p184 = por %p182, %p183
      %p185 = scmp.ne.s32.totalorder %s176, %s177
      %p186 = scmp.eq.s32.totalorder %s40, 0
      %p187 = por %p185, %p186
      %p188 = scmp.ne.s32.totalorder %s176, %s177
      %p189 = scmp.eq.s32.totalorder %s41, 1
      %p190 = por %p188, %p189
      %p192 = scmp.ne.s32.totalorder %s177, %s191
      %p193 = scmp.eq.s32.totalorder %s41, 0
      %p194 = por %p192, %p193
      %s196 = sadd.s32 %s195, 1
      %p199 = scmp.eq.s32.totalorder %s35, 1
      %p200 = scmp.ne.s32.totalorder %s195, %s197
      %p201 = scmp.eq.s32.totalorder %s35, 0
      %p202 = por %p200, %p201
      %p203 = scmp.ne.s32.totalorder %s195, %s197
      %p204 = scmp.eq.s32.totalorder %s40, 1
      %p205 = por %p203, %p204
      %p206 = scmp.ne.s32.totalorder %s197, %s198
      %p207 = scmp.eq.s32.totalorder %s40, 0
      %p208 = por %p206, %p207
      %p209 = scmp.ne.s32.totalorder %s197, %s198
      %p210 = scmp.eq.s32.totalorder %s41, 1
      %p211 = por %p209, %p210
      %p213 = scmp.ne.s32.totalorder %s198, %s212
      %p214 = scmp.eq.s32.totalorder %s41, 0
      %p215 = por %p213, %p214
      %s217 = sadd.s32 %s216, 1
      %p220 = scmp.eq.s32.totalorder %s35, 1
      %p221 = scmp.ne.s32.totalorder %s216, %s218
      %p222 = scmp.eq.s32.totalorder %s35, 0
      %p223 = por %p221, %p222
      %p224 = scmp.ne.s32.totalorder %s216, %s218
      %p225 = scmp.eq.s32.totalorder %s40, 1
      %p226 = por %p224, %p225
      %p227 = scmp.ne.s32.totalorder %s218, %s219
      %p228 = scmp.eq.s32.totalorder %s40, 0
      %p229 = por %p227, %p228
      %p230 = scmp.ne.s32.totalorder %s218, %s219
      %p231 = scmp.eq.s32.totalorder %s41, 1
      %p232 = por %p230, %p231
      %p234 = scmp.ne.s32.totalorder %s219, %s233
      %p235 = scmp.eq.s32.totalorder %s41, 0
      %p236 = por %p234, %p235
      %s238 = sadd.s32 %s237, 1
      %p241 = scmp.eq.s32.totalorder %s35, 1
      %p242 = scmp.ne.s32.totalorder %s237, %s239
      %p243 = scmp.eq.s32.totalorder %s35, 0
      %p244 = por %p242, %p243
      %p245 = scmp.ne.s32.totalorder %s237, %s239
      %p246 = scmp.eq.s32.totalorder %s40, 1
      %p247 = por %p245, %p246
      %p248 = scmp.ne.s32.totalorder %s239, %s240
      %p249 = scmp.eq.s32.totalorder %s40, 0
      %p250 = por %p248, %p249
      %p251 = scmp.ne.s32.totalorder %s239, %s240
      %p252 = scmp.eq.s32.totalorder %s41, 1
      %p253 = por %p251, %p252
      %p255 = scmp.ne.s32.totalorder %s240, %s254
      %p256 = scmp.eq.s32.totalorder %s41, 0
      %p257 = por %p255, %p256
      %s259 = sadd.s32 %s258, 1
      %p262 = scmp.eq.s32.totalorder %s35, 1
      %p263 = scmp.ne.s32.totalorder %s258, %s260
      %p264 = scmp.eq.s32.totalorder %s35, 0
      %p265 = por %p263, %p264
      %p266 = scmp.ne.s32.totalorder %s258, %s260
      %p267 = scmp.eq.s32.totalorder %s40, 1
      %p268 = por %p266, %p267
      %p269 = scmp.ne.s32.totalorder %s260, %s261
      %p270 = scmp.eq.s32.totalorder %s40, 0
      %p271 = por %p269, %p270
      %p272 = scmp.ne.s32.totalorder %s260, %s261
      %p273 = scmp.eq.s32.totalorder %s41, 1
      %p274 = por %p272, %p273
      %p276 = scmp.ne.s32.totalorder %s261, %s275
      %p277 = scmp.eq.s32.totalorder %s41, 0
      %p278 = por %p276, %p277
      %s280 = sadd.s32 %s279, 1
      %p283 = scmp.eq.s32.totalorder %s35, 1
      %p284 = scmp.ne.s32.totalorder %s279, %s281
      %p285 = scmp.eq.s32.totalorder %s35, 0
      %p286 = por %p284, %p285
      %p287 = scmp.ne.s32.totalorder %s279, %s281
      %p288 = scmp.eq.s32.totalorder %s40, 1
      %p289 = por %p287, %p288
      %p290 = scmp.ne.s32.totalorder %s281, %s282
      %p291 = scmp.eq.s32.totalorder %s40, 0
      %p292 = por %p290, %p291
      %p293 = scmp.ne.s32.totalorder %s281, %s282
      %p294 = scmp.eq.s32.totalorder %s41, 1
      %p295 = por %p293, %p294
      %p297 = scmp.ne.s32.totalorder %s282, %s296
      %p298 = scmp.eq.s32.totalorder %s41, 0
      %p299 = por %p297, %p298
      %s301 = sadd.s32 %s300, 1
      %p304 = scmp.eq.s32.totalorder %s35, 1
      %p305 = scmp.ne.s32.totalorder %s300, %s302
      %p306 = scmp.eq.s32.totalorder %s35, 0
      %p307 = por %p305, %p306
      %p308 = scmp.ne.s32.totalorder %s300, %s302
      %p309 = scmp.eq.s32.totalorder %s40, 1
      %p310 = por %p308, %p309
      %p311 = scmp.ne.s32.totalorder %s302, %s303
      %p312 = scmp.eq.s32.totalorder %s40, 0
      %p313 = por %p311, %p312
      %p314 = scmp.ne.s32.totalorder %s302, %s303
      %p315 = scmp.eq.s32.totalorder %s41, 1
      %p316 = por %p314, %p315
      %p318 = scmp.ne.s32.totalorder %s303, %s317
      %p319 = scmp.eq.s32.totalorder %s41, 0
      %p320 = por %p318, %p319
      %s322 = sadd.s32 %s321, 1
      %p325 = scmp.eq.s32.totalorder %s35, 1
      %p326 = scmp.ne.s32.totalorder %s321, %s323
      %p327 = scmp.eq.s32.totalorder %s35, 0
      %p328 = por %p326, %p327
      %p329 = scmp.ne.s32.totalorder %s321, %s323
      %p330 = scmp.eq.s32.totalorder %s40, 1
      %p331 = por %p329, %p330
      %p332 = scmp.ne.s32.totalorder %s323, %s324
      %p333 = scmp.eq.s32.totalorder %s40, 0
      %p334 = por %p332, %p333
      %p335 = scmp.ne.s32.totalorder %s323, %s324
      %p336 = scmp.eq.s32.totalorder %s41, 1
      %p337 = por %p335, %p336
      %p339 = scmp.ne.s32.totalorder %s324, %s338
      %p340 = scmp.eq.s32.totalorder %s41, 0
      %p341 = por %p339, %p340
      %s343 = sadd.s32 %s342, 1
      %p346 = scmp.eq.s32.totalorder %s35, 1
      %p347 = scmp.ne.s32.totalorder %s342, %s344
      %p348 = scmp.eq.s32.totalorder %s35, 0
      %p349 = por %p347, %p348
      %p350 = scmp.ne.s32.totalorder %s342, %s344
      %p351 = scmp.eq.s32.totalorder %s40, 1
      %p352 = por %p350, %p351
      %p353 = scmp.ne.s32.totalorder %s344, %s345
      %p354 = scmp.eq.s32.totalorder %s40, 0
      %p355 = por %p353, %p354
      %p356 = scmp.ne.s32.totalorder %s344, %s345
      %p357 = scmp.eq.s32.totalorder %s41, 1
      %p358 = por %p356, %p357
      %p360 = scmp.ne.s32.totalorder %s345, %s359
      %p361 = scmp.eq.s32.totalorder %s41, 0
      %p362 = por %p360, %p361
      %s364 = sadd.s32 %s363, 1
      %p367 = scmp.eq.s32.totalorder %s35, 1
      %p368 = scmp.ne.s32.totalorder %s363, %s365
      %p369 = scmp.eq.s32.totalorder %s35, 0
      %p370 = por %p368, %p369
      %p371 = scmp.ne.s32.totalorder %s363, %s365
      %p372 = scmp.eq.s32.totalorder %s40, 1
      %p373 = por %p371, %p372
      %p374 = scmp.ne.s32.totalorder %s365, %s366
      %p375 = scmp.eq.s32.totalorder %s40, 0
      %p376 = por %p374, %p375
      %p377 = scmp.ne.s32.totalorder %s365, %s366
      %p378 = scmp.eq.s32.totalorder %s41, 1
      %p379 = por %p377, %p378
      %p381 = scmp.ne.s32.totalorder %s366, %s380
      %p382 = scmp.eq.s32.totalorder %s41, 0
      %p383 = por %p381, %p382
      %s385 = sadd.s32 %s384, 1
      %p388 = scmp.eq.s32.totalorder %s35, 1
      %p389 = scmp.ne.s32.totalorder %s384, %s386
      %p390 = scmp.eq.s32.totalorder %s35, 0
      %p391 = por %p389, %p390
      %p392 = scmp.ne.s32.totalorder %s384, %s386
      %p393 = scmp.eq.s32.totalorder %s40, 1
      %p394 = por %p392, %p393
      %p395 = scmp.ne.s32.totalorder %s386, %s387
      %p396 = scmp.eq.s32.totalorder %s40, 0
      %p397 = por %p395, %p396
      %p398 = scmp.ne.s32.totalorder %s386, %s387
      %p399 = scmp.eq.s32.totalorder %s41, 1
      %p400 = por %p398, %p399
      %p402 = scmp.ne.s32.totalorder %s387, %s401
      %p403 = scmp.eq.s32.totalorder %s41, 0
      %p404 = por %p402, %p403
      %s406 = sadd.s32 %s405, 1
      %p409 = scmp.eq.s32.totalorder %s35, 1
      %p410 = scmp.ne.s32.totalorder %s405, %s407
      %p411 = scmp.eq.s32.totalorder %s35, 0
      %p412 = por %p410, %p411
      %p413 = scmp.ne.s32.totalorder %s405, %s407
      %p414 = scmp.eq.s32.totalorder %s40, 1
      %p415 = por %p413, %p414
      %p416 = scmp.ne.s32.totalorder %s407, %s408
      %p417 = scmp.eq.s32.totalorder %s40, 0
      %p418 = por %p416, %p417
      %p419 = scmp.ne.s32.totalorder %s407, %s408
      %p420 = scmp.eq.s32.totalorder %s41, 1
      %p421 = por %p419, %p420
      %p423 = scmp.ne.s32.totalorder %s408, %s422
      %p424 = scmp.eq.s32.totalorder %s41, 0
      %p425 = por %p423, %p424
      %s427 = sadd.s32 %s426, 1
      %p430 = scmp.eq.s32.totalorder %s35, 1
      %p431 = scmp.ne.s32.totalorder %s426, %s428
      %p432 = scmp.eq.s32.totalorder %s35, 0
      %p433 = por %p431, %p432
      %p434 = scmp.ne.s32.totalorder %s426, %s428
      %p435 = scmp.eq.s32.totalorder %s40, 1
      %p436 = por %p434, %p435
      %p437 = scmp.ne.s32.totalorder %s428, %s429
      %p438 = scmp.eq.s32.totalorder %s40, 0
      %p439 = por %p437, %p438
      %p440 = scmp.ne.s32.totalorder %s428, %s429
      %p441 = scmp.eq.s32.totalorder %s41, 1
      %p442 = por %p440, %p441
      %p444 = scmp.ne.s32.totalorder %s429, %s443
      %p445 = scmp.eq.s32.totalorder %s41, 0
      %p446 = por %p444, %p445
      %s448 = sadd.s32 %s447, 1
      %p451 = scmp.eq.s32.totalorder %s35, 1
      %p452 = scmp.ne.s32.totalorder %s447, %s449
      %p453 = scmp.eq.s32.totalorder %s35, 0
      %p454 = por %p452, %p453
      %p455 = scmp.ne.s32.totalorder %s447, %s449
      %p456 = scmp.eq.s32.totalorder %s40, 1
      %p457 = por %p455, %p456
      %p458 = scmp.ne.s32.totalorder %s449, %s450
      %p459 = scmp.eq.s32.totalorder %s40, 0
      %p460 = por %p458, %p459
      %p461 = scmp.ne.s32.totalorder %s449, %s450
      %p462 = scmp.eq.s32.totalorder %s41, 1
      %p463 = por %p461, %p462
      %p465 = scmp.ne.s32.totalorder %s450, %s464
      %p466 = scmp.eq.s32.totalorder %s41, 0
      %p467 = por %p465, %p466
      %s468 = ssub.s32 %s35, %s42
      %p469 = scmp.eq.s32.totalorder %s468, 0
      %s471 = sadd.s32 %s470, 1
      %s472 = scalar_select %p469, %s470, %s471
      %p475 = pneg %p469
      %p476 = scmp.eq.s32.totalorder %s35, 1
      %p477 = por %p475, %p476
      %p478 = scmp.ne.s32.totalorder %s470, %s473
      %p479 = scmp.eq.s32.totalorder %s35, 0
      %p480 = por %p478, %p479
      %p481 = scmp.ne.s32.totalorder %s470, %s473
      %p482 = scmp.eq.s32.totalorder %s40, 1
      %p483 = por %p481, %p482
      %p484 = scmp.ne.s32.totalorder %s473, %s474
      %p485 = scmp.eq.s32.totalorder %s40, 0
      %p486 = por %p484, %p485
      %p487 = scmp.ne.s32.totalorder %s473, %s474
      %p488 = scmp.eq.s32.totalorder %s41, 1
      %p489 = por %p487, %p488
      %p491 = scmp.ne.s32.totalorder %s474, %s490
      %p492 = scmp.eq.s32.totalorder %s41, 0
      %p493 = por %p491, %p492
      %p494 = scmp.le.s32.totalorder 1, %s35
      %p495 = scmp.lt.s32.totalorder %s35, 3
      %p496 = pnand %p494, %p495
      %p497 = pneg %p496
      // Predicated region
      $region9: #{feedforward_forward.1} parent=5 // pred_check
        _
      $region10: #{feedforward_forward.1} parent=5 // pred_check_branch
        %499 = sbr.rel (%p496) target = $region12
      $region11: #{feedforward_forward.1} parent=5 // pred_region
        %s500 = ssub.s32 %s35, 1
        // Predicated region
        $region13: #{feedforward_forward.1} parent=11 // pred_check
          %p501 = pneg %p82
        $region14: #{feedforward_forward.1} parent=11 // pred_check_branch
          %503 = sbr.rel (%p501) target = $region16
        $region15: #{feedforward_forward.1} parent=11 // pred_region
          %505 = vsyncadd [#allocation5], 0
          %s506 = sshll.u32 %s1, 4
          %s507 = int_to_ptr.hbm [resolvable:$true] %s506
          %s508 = sshll.u32 [#allocation4], 4
          %s509 = int_to_ptr.vmem [resolvable:$true] %s508
          %514 = dma.hbm_to_vmem [thread:$0]  %s507, 8192, %s509, [#allocation5], 256, 256, 16
        $region16: #{feedforward_forward.1} parent=11 // pred_fallthru
          _
        // Predicated region
        $region17: #{feedforward_forward.1} parent=11 // pred_check
          %p515 = pneg %p103
        $region18: #{feedforward_forward.1} parent=11 // pred_check_branch
          %517 = sbr.rel (%p515) target = $region20
        $region19: #{feedforward_forward.1} parent=11 // pred_region
          %519 = vsyncadd [#allocation7], 0
          %s520 = sshll.u32 %s2, 4
          %s521 = int_to_ptr.hbm [resolvable:$true] %s520
          %s522 = sshll.u32 [#allocation6], 4
          %s523 = int_to_ptr.vmem [resolvable:$true] %s522
          %528 = dma.hbm_to_vmem [thread:$0]  %s521, 8192, %s523, [#allocation7], 256, 256, 16
        $region20: #{feedforward_forward.1} parent=11 // pred_fallthru
          _
        // Predicated region
        $region21: #{feedforward_forward.1} parent=11 // pred_check
          %p529 = pneg %p124
        $region22: #{feedforward_forward.1} parent=11 // pred_check_branch
          %531 = sbr.rel (%p529) target = $region24
        $region23: #{feedforward_forward.1} parent=11 // pred_region
          %533 = vsyncadd [#allocation7], 0
          %s534 = sshll.u32 %s3, 4
          %s535 = int_to_ptr.hbm [resolvable:$true] %s534
          %s536 = sshll.u32 [#allocation8], 4
          %s537 = int_to_ptr.vmem [resolvable:$true] %s536
          %542 = dma.hbm_to_vmem [thread:$0]  %s535, 73728, %s537, [#allocation7], 256, 256, 16
        $region24: #{feedforward_forward.1} parent=11 // pred_fallthru
          _
        // Predicated region
        $region25: #{feedforward_forward.1} parent=11 // pred_check
          %p543 = pneg %p145
        $region26: #{feedforward_forward.1} parent=11 // pred_check_branch
          %545 = sbr.rel (%p543) target = $region28
        $region27: #{feedforward_forward.1} parent=11 // pred_region
          %547 = vsyncadd [#allocation10], 0
          %s548 = sshll.u32 %s4, 4
          %s549 = int_to_ptr.hbm [resolvable:$true] %s548
          %s550 = sshll.u32 [#allocation9], 4
          %s551 = int_to_ptr.vmem [resolvable:$true] %s550
          %556 = dma.hbm_to_vmem [thread:$0]  %s549, 512, %s551, [#allocation10], 128, 128, 8
        $region28: #{feedforward_forward.1} parent=11 // pred_fallthru
          _
        // Predicated region
        $region29: #{feedforward_forward.1} parent=11 // pred_check
          %p557 = pneg %p166
        $region30: #{feedforward_forward.1} parent=11 // pred_check_branch
          %559 = sbr.rel (%p557) target = $region32
        $region31: #{feedforward_forward.1} parent=11 // pred_region
          %561 = vsyncadd [#allocation10], 0
          %s562 = sshll.u32 %s5, 4
          %s563 = int_to_ptr.hbm [resolvable:$true] %s562
          %s564 = sshll.u32 [#allocation11], 4
          %s565 = int_to_ptr.vmem [resolvable:$true] %s564
          %570 = dma.hbm_to_vmem [thread:$0]  %s563, 256, %s565, [#allocation10], 128, 128, 8
        $region32: #{feedforward_forward.1} parent=11 // pred_fallthru
          _
        // Predicated region
        $region33: #{feedforward_forward.1} parent=11 // pred_check
          %p571 = pneg %p187
        $region34: #{feedforward_forward.1} parent=11 // pred_check_branch
          %573 = sbr.rel (%p571) target = $region36
        $region35: #{feedforward_forward.1} parent=11 // pred_region
          _
        $region36: #{feedforward_forward.1} parent=11 // pred_fallthru
          _
        // Predicated region
        $region37: #{feedforward_forward.1} parent=11 // pred_check
          %p574 = pneg %p208
        $region38: #{feedforward_forward.1} parent=11 // pred_check_branch
          %576 = sbr.rel (%p574) target = $region40
        $region39: #{feedforward_forward.1} parent=11 // pred_region
          _
        $region40: #{feedforward_forward.1} parent=11 // pred_fallthru
          _
        // Predicated region
        $region41: #{feedforward_forward.1} parent=11 // pred_check
          %p577 = pneg %p229
        $region42: #{feedforward_forward.1} parent=11 // pred_check_branch
          %579 = sbr.rel (%p577) target = $region44
        $region43: #{feedforward_forward.1} parent=11 // pred_region
          _
        $region44: #{feedforward_forward.1} parent=11 // pred_fallthru
          _
        // Predicated region
        $region45: #{feedforward_forward.1} parent=11 // pred_check
          %p580 = pneg %p250
        $region46: #{feedforward_forward.1} parent=11 // pred_check_branch
          %582 = sbr.rel (%p580) target = $region48
        $region47: #{feedforward_forward.1} parent=11 // pred_region
          _
        $region48: #{feedforward_forward.1} parent=11 // pred_fallthru
          _
        // Predicated region
        $region49: #{feedforward_forward.1} parent=11 // pred_check
          %p583 = pneg %p271
        $region50: #{feedforward_forward.1} parent=11 // pred_check_branch
          %585 = sbr.rel (%p583) target = $region52
        $region51: #{feedforward_forward.1} parent=11 // pred_region
          %587 = vsyncadd [#allocation13], 0
          %s589 = sshll.u32 %s10, 4
          %s590 = int_to_ptr.hbm [resolvable:$true] %s589
          %s591 = sshll.u32 [#allocation12], 4
          %s592 = int_to_ptr.vmem [resolvable:$true] %s591
          %594 = dma.hbm_to_vmem [thread:$0]  %s590, 16, %s592, [#allocation13]
        $region52: #{feedforward_forward.1} parent=11 // pred_fallthru
          _
        // Predicated region
        $region53: #{feedforward_forward.1} parent=11 // pred_check
          %p595 = pneg %p292
        $region54: #{feedforward_forward.1} parent=11 // pred_check_branch
          %597 = sbr.rel (%p595) target = $region56
        $region55: #{feedforward_forward.1} parent=11 // pred_region
          _
        $region56: #{feedforward_forward.1} parent=11 // pred_fallthru
          _
        // Predicated region
        $region57: #{feedforward_forward.1} parent=11 // pred_check
          %p598 = pneg %p313
        $region58: #{feedforward_forward.1} parent=11 // pred_check_branch
          %600 = sbr.rel (%p598) target = $region60
        $region59: #{feedforward_forward.1} parent=11 // pred_region
          _
        $region60: #{feedforward_forward.1} parent=11 // pred_fallthru
          _
        // Predicated region
        $region61: #{feedforward_forward.1} parent=11 // pred_check
          %p601 = pneg %p334
        $region62: #{feedforward_forward.1} parent=11 // pred_check_branch
          %603 = sbr.rel (%p601) target = $region64
        $region63: #{feedforward_forward.1} parent=11 // pred_region
          _
        $region64: #{feedforward_forward.1} parent=11 // pred_fallthru
          _
        // Predicated region
        $region65: #{feedforward_forward.1} parent=11 // pred_check
          %p604 = pneg %p355
        $region66: #{feedforward_forward.1} parent=11 // pred_check_branch
          %606 = sbr.rel (%p604) target = $region68
        $region67: #{feedforward_forward.1} parent=11 // pred_region
          %608 = vsyncadd [#allocation13], 0
          %s610 = sshll.u32 %s14, 4
          %s611 = int_to_ptr.hbm [resolvable:$true] %s610
          %s612 = sshll.u32 [#allocation14], 4
          %s613 = int_to_ptr.vmem [resolvable:$true] %s612
          %615 = dma.hbm_to_vmem [thread:$0]  %s611, 16, %s613, [#allocation13]
        $region68: #{feedforward_forward.1} parent=11 // pred_fallthru
          _
        // Predicated region
        $region69: #{feedforward_forward.1} parent=11 // pred_check
          %p616 = pneg %p376
        $region70: #{feedforward_forward.1} parent=11 // pred_check_branch
          %618 = sbr.rel (%p616) target = $region72
        $region71: #{feedforward_forward.1} parent=11 // pred_region
          _
        $region72: #{feedforward_forward.1} parent=11 // pred_fallthru
          _
        // Predicated region
        $region73: #{feedforward_forward.1} parent=11 // pred_check
          %p619 = pneg %p397
        $region74: #{feedforward_forward.1} parent=11 // pred_check_branch
          %621 = sbr.rel (%p619) target = $region76
        $region75: #{feedforward_forward.1} parent=11 // pred_region
          _
        $region76: #{feedforward_forward.1} parent=11 // pred_fallthru
          _
        // Predicated region
        $region77: #{feedforward_forward.1} parent=11 // pred_check
          %p622 = pneg %p418
        $region78: #{feedforward_forward.1} parent=11 // pred_check_branch
          %624 = sbr.rel (%p622) target = $region80
        $region79: #{feedforward_forward.1} parent=11 // pred_region
          _
        $region80: #{feedforward_forward.1} parent=11 // pred_fallthru
          _
        // Predicated region
        $region81: #{feedforward_forward.1} parent=11 // pred_check
          %p625 = pneg %p439
        $region82: #{feedforward_forward.1} parent=11 // pred_check_branch
          %627 = sbr.rel (%p625) target = $region84
        $region83: #{feedforward_forward.1} parent=11 // pred_region
          %629 = vsyncadd [#allocation16], 0
          %s630 = sshll.u32 %s18, 4
          %s631 = int_to_ptr.hbm [resolvable:$true] %s630
          %s632 = sshll.u32 [#allocation15], 4
          %s633 = int_to_ptr.vmem [resolvable:$true] %s632
          %638 = dma.hbm_to_vmem [thread:$0]  %s631, 256, %s633, [#allocation16], 128, 128, 8
        $region84: #{feedforward_forward.1} parent=11 // pred_fallthru
          _
        // Predicated region
        $region85: #{feedforward_forward.1} parent=11 // pred_check
          %p639 = pneg %p460
        $region86: #{feedforward_forward.1} parent=11 // pred_check_branch
          %641 = sbr.rel (%p639) target = $region88
        $region87: #{feedforward_forward.1} parent=11 // pred_region
          _
        $region88: #{feedforward_forward.1} parent=11 // pred_fallthru
          _
      $region12: #{feedforward_forward.1} parent=5 // pred_fallthru
        _
      %p642 = scmp.lt.s32.totalorder %s35, 2
      // Predicated region
      $region89: #{feedforward_forward.1} parent=5 // pred_check
        %p643 = pneg %p642
      $region90: #{feedforward_forward.1} parent=5 // pred_check_branch
        %645 = sbr.rel (%p643) target = $region92
      $region91: #{feedforward_forward.1} parent=5 // pred_region
        // Predicated region
        $region93: #{feedforward_forward.1} parent=91 // pred_check
          %p646 = pneg %p55
        $region94: #{feedforward_forward.1} parent=91 // pred_check_branch
          %648 = sbr.rel (%p646) target = $region96
        $region95: #{feedforward_forward.1} parent=91 // pred_region
          %p649 = scmp.lt.s32.totalorder %s35, 1
          %s650 = scalar_select %p649, %s35, 1
          %s651 = smul.addr %s650, 4
          %s652 = smul.addr %s651, 8
          %s653 = scalar_lea.vmem %s0, %s652
        $region96: #{feedforward_forward.1} parent=91 // pred_fallthru
          _
      $region92: #{feedforward_forward.1} parent=5 // pred_fallthru
        _
      %p654 = scmp.le.s32.totalorder 1, %s35
      %p655 = scmp.lt.s32.totalorder %s35, 3
      %p656 = pnand %p654, %p655
      %p657 = pneg %p656
      // Predicated region
      $region97: #{feedforward_forward.1} parent=5 // pred_check
        _
      $region98: #{feedforward_forward.1} parent=5 // pred_check_branch
        %659 = sbr.rel (%p656) target = $region100
      $region99: #{feedforward_forward.1} parent=5 // pred_region
        %s660 = ssub.s32 %s35, 1
        // Predicated region
        $region101: #{feedforward_forward.1} parent=99 // pred_check
          %p661 = pneg %p82
        $region102: #{feedforward_forward.1} parent=99 // pred_check_branch
          %663 = sbr.rel (%p661) target = $region104
        $region103: #{feedforward_forward.1} parent=99 // pred_region
          %665 = dma.done [#allocation5], 8192
        $region104: #{feedforward_forward.1} parent=99 // pred_fallthru
          _
        // Predicated region
        $region105: #{feedforward_forward.1} parent=99 // pred_check
          %p666 = pneg %p103
        $region106: #{feedforward_forward.1} parent=99 // pred_check_branch
          %668 = sbr.rel (%p666) target = $region108
        $region107: #{feedforward_forward.1} parent=99 // pred_region
          %670 = dma.done [#allocation7], 8192
        $region108: #{feedforward_forward.1} parent=99 // pred_fallthru
          _
        // Predicated region
        $region109: #{feedforward_forward.1} parent=99 // pred_check
          %p671 = pneg %p124
        $region110: #{feedforward_forward.1} parent=99 // pred_check_branch
          %673 = sbr.rel (%p671) target = $region112
        $region111: #{feedforward_forward.1} parent=99 // pred_region
          %675 = dma.done [#allocation7], 73728
        $region112: #{feedforward_forward.1} parent=99 // pred_fallthru
          _
        // Predicated region
        $region113: #{feedforward_forward.1} parent=99 // pred_check
          %p676 = pneg %p145
        $region114: #{feedforward_forward.1} parent=99 // pred_check_branch
          %678 = sbr.rel (%p676) target = $region116
        $region115: #{feedforward_forward.1} parent=99 // pred_region
          %680 = dma.done [#allocation10], 512
        $region116: #{feedforward_forward.1} parent=99 // pred_fallthru
          _
        // Predicated region
        $region117: #{feedforward_forward.1} parent=99 // pred_check
          %p681 = pneg %p166
        $region118: #{feedforward_forward.1} parent=99 // pred_check_branch
          %683 = sbr.rel (%p681) target = $region120
        $region119: #{feedforward_forward.1} parent=99 // pred_region
          %685 = dma.done [#allocation10], 256
        $region120: #{feedforward_forward.1} parent=99 // pred_fallthru
          _
        // Predicated region
        $region121: #{feedforward_forward.1} parent=99 // pred_check
          %p686 = pneg %p271
        $region122: #{feedforward_forward.1} parent=99 // pred_check_branch
          %688 = sbr.rel (%p686) target = $region124
        $region123: #{feedforward_forward.1} parent=99 // pred_region
          %690 = dma.done [#allocation13], 16
        $region124: #{feedforward_forward.1} parent=99 // pred_fallthru
          _
        // Predicated region
        $region125: #{feedforward_forward.1} parent=99 // pred_check
          %p691 = pneg %p355
        $region126: #{feedforward_forward.1} parent=99 // pred_check_branch
          %693 = sbr.rel (%p691) target = $region128
        $region127: #{feedforward_forward.1} parent=99 // pred_region
          %695 = dma.done [#allocation13], 16
        $region128: #{feedforward_forward.1} parent=99 // pred_fallthru
          _
        // Predicated region
        $region129: #{feedforward_forward.1} parent=99 // pred_check
          %p696 = pneg %p439
        $region130: #{feedforward_forward.1} parent=99 // pred_check_branch
          %698 = sbr.rel (%p696) target = $region132
        $region131: #{feedforward_forward.1} parent=99 // pred_region
          %700 = dma.done [#allocation16], 256
        $region132: #{feedforward_forward.1} parent=99 // pred_fallthru
          _
        %p701 = scmp.lt.s32.totalorder %s40, 1
        %s702 = scalar_select %p701, %s40, 1
        %s703 = smul.addr %s702, 4
        %s704 = smul.addr %s703, 8
        %s705 = scalar_lea.vmem %s0, %s704
        %p706 = pneg %p61
        %p707 = pneg %p58
        %p708 = pneg %p82
        %p709 = pneg %p79
        %p710 = pneg %p103
        %p711 = pneg %p100
        %p712 = pneg %p124
        %p713 = pneg %p121
        %p714 = pneg %p145
        %p715 = pneg %p142
        %p716 = pneg %p166
        %p717 = pneg %p163
        %p718 = pneg %p187
        %p719 = pneg %p184
        %p720 = pneg %p208
        %p721 = pneg %p205
        %p722 = pneg %p229
        %p723 = pneg %p226
        %p724 = pneg %p250
        %p725 = pneg %p247
        %p726 = pneg %p271
        %p727 = pneg %p268
        %p728 = pneg %p292
        %p729 = pneg %p289
        %p730 = pneg %p313
        %p731 = pneg %p310
        %p732 = pneg %p334
        %p733 = pneg %p331
        %p734 = pneg %p355
        %p735 = pneg %p352
        %p736 = pneg %p376
        %p737 = pneg %p373
        %p738 = pneg %p397
        %p739 = pneg %p394
        %p740 = pneg %p418
        %p741 = pneg %p415
        %p742 = pneg %p439
        %p743 = pneg %p436
        %p744 = pneg %p460
        %p745 = pneg %p457
        %p746 = pneg %p486
        %p747 = pneg %p483
        %p748 = scmp.lt.s32.totalorder %s40, 1
        %s749 = scalar_select %p748, %s40, 1
        %s750 = smul.addr %s749, 4
        %s751 = smul.addr %s750, 8
        %s752 = scalar_lea.vmem %s20, %s751
        %p753 = scmp.lt.s32.totalorder %s40, 1
        %s754 = scalar_select %p753, %s40, 1
        %s755 = smul.addr %s754, 4
        %s756 = smul.addr %s755, 8
        %s757 = scalar_lea.vmem %s0, %s756
        %p758 = scmp.lt.s32.totalorder %s40, 1
        %s759 = scalar_select %p758, %s40, 1
        %s760 = smul.addr %s759, 4
        %s761 = smul.addr %s760, 8
        %s762 = scalar_lea.vmem %s20, %s761
        %v763 = vld [vmem:[%s757] sm:$0xff]
        %v764 = vld [vmem:[%s757 + $0x8] sm:$0xff]
        %v765 = vld [vmem:[%s757 + $0x10] sm:$0xff]
        %v766 = vld [vmem:[%s757 + $0x18] sm:$0xff]
        %v767 = vld [vmem:[#allocation4] sm:$0xff]
        %v768 = vld [vmem:[#allocation4 + $0x8] sm:$0xff]
        %v769 = vld [vmem:[#allocation4 + $0x10] sm:$0xff]
        %v770 = vld [vmem:[#allocation4 + $0x18] sm:$0xff]
        %v771 = vld [vmem:[#allocation4 + $0x20] sm:$0xff]
        %v772 = vld [vmem:[#allocation4 + $0x28] sm:$0xff]
        %v773 = vld [vmem:[#allocation4 + $0x30] sm:$0xff]
        %v774 = vld [vmem:[#allocation4 + $0x38] sm:$0xff]
        %v775 = vld [vmem:[#allocation4 + $0x40] sm:$0xff]
        %v776 = vld [vmem:[#allocation4 + $0x48] sm:$0xff]
        %v777 = vld [vmem:[#allocation4 + $0x50] sm:$0xff]
        %v778 = vld [vmem:[#allocation4 + $0x58] sm:$0xff]
        %v779 = vld [vmem:[#allocation4 + $0x60] sm:$0xff]
        %v780 = vld [vmem:[#allocation4 + $0x68] sm:$0xff]
        %v781 = vld [vmem:[#allocation4 + $0x70] sm:$0xff]
        %v782 = vld [vmem:[#allocation4 + $0x78] sm:$0xff]
        %v783 = vld [vmem:[#allocation4 + $0x80] sm:$0xff]
        %v784 = vld [vmem:[#allocation4 + $0x88] sm:$0xff]
        %v785 = vld [vmem:[#allocation4 + $0x90] sm:$0xff]
        %v786 = vld [vmem:[#allocation4 + $0x98] sm:$0xff]
        %v787 = vld [vmem:[#allocation4 + $0xa0] sm:$0xff]
        %v788 = vld [vmem:[#allocation4 + $0xa8] sm:$0xff]
        %v789 = vld [vmem:[#allocation4 + $0xb0] sm:$0xff]
        %v790 = vld [vmem:[#allocation4 + $0xb8] sm:$0xff]
        %v791 = vld [vmem:[#allocation4 + $0xc0] sm:$0xff]
        %v792 = vld [vmem:[#allocation4 + $0xc8] sm:$0xff]
        %v793 = vld [vmem:[#allocation4 + $0xd0] sm:$0xff]
        %v794 = vld [vmem:[#allocation4 + $0xd8] sm:$0xff]
        %v795 = vld [vmem:[#allocation4 + $0xe0] sm:$0xff]
        %v796 = vld [vmem:[#allocation4 + $0xe8] sm:$0xff]
        %v797 = vld [vmem:[#allocation4 + $0xf0] sm:$0xff]
        %v798 = vld [vmem:[#allocation4 + $0xf8] sm:$0xff]
        %v799 = vld [vmem:[#allocation4 + $0x100] sm:$0xff]
        %v800 = vld [vmem:[#allocation4 + $0x108] sm:$0xff]
        %v801 = vld [vmem:[#allocation4 + $0x110] sm:$0xff]
        %v802 = vld [vmem:[#allocation4 + $0x118] sm:$0xff]
        %v803 = vld [vmem:[#allocation4 + $0x120] sm:$0xff]
        %v804 = vld [vmem:[#allocation4 + $0x128] sm:$0xff]
        %v805 = vld [vmem:[#allocation4 + $0x130] sm:$0xff]
        %v806 = vld [vmem:[#allocation4 + $0x138] sm:$0xff]
        %v807 = vld [vmem:[#allocation4 + $0x140] sm:$0xff]
        %v808 = vld [vmem:[#allocation4 + $0x148] sm:$0xff]
        %v809 = vld [vmem:[#allocation4 + $0x150] sm:$0xff]
        %v810 = vld [vmem:[#allocation4 + $0x158] sm:$0xff]
        %v811 = vld [vmem:[#allocation4 + $0x160] sm:$0xff]
        %v812 = vld [vmem:[#allocation4 + $0x168] sm:$0xff]
        %v813 = vld [vmem:[#allocation4 + $0x170] sm:$0xff]
        %v814 = vld [vmem:[#allocation4 + $0x178] sm:$0xff]
        %v815 = vld [vmem:[#allocation4 + $0x180] sm:$0xff]
        %v816 = vld [vmem:[#allocation4 + $0x188] sm:$0xff]
        %v817 = vld [vmem:[#allocation4 + $0x190] sm:$0xff]
        %v818 = vld [vmem:[#allocation4 + $0x198] sm:$0xff]
        %v819 = vld [vmem:[#allocation4 + $0x1a0] sm:$0xff]
        %v820 = vld [vmem:[#allocation4 + $0x1a8] sm:$0xff]
        %v821 = vld [vmem:[#allocation4 + $0x1b0] sm:$0xff]
        %v822 = vld [vmem:[#allocation4 + $0x1b8] sm:$0xff]
        %v823 = vld [vmem:[#allocation4 + $0x1c0] sm:$0xff]
        %v824 = vld [vmem:[#allocation4 + $0x1c8] sm:$0xff]
        %v825 = vld [vmem:[#allocation4 + $0x1d0] sm:$0xff]
        %v826 = vld [vmem:[#allocation4 + $0x1d8] sm:$0xff]
        %v827 = vld [vmem:[#allocation4 + $0x1e0] sm:$0xff]
        %v828 = vld [vmem:[#allocation4 + $0x1e8] sm:$0xff]
        %v829 = vld [vmem:[#allocation4 + $0x1f0] sm:$0xff]
        %v830 = vld [vmem:[#allocation4 + $0x1f8] sm:$0xff]
        %v831 = vld [vmem:[#allocation6] sm:$0xff]
        %v832 = vld [vmem:[#allocation6 + $0x8] sm:$0xff]
        %v833 = vld [vmem:[#allocation6 + $0x10] sm:$0xff]
        %v834 = vld [vmem:[#allocation6 + $0x18] sm:$0xff]
        %v835 = vld [vmem:[#allocation6 + $0x20] sm:$0xff]
        %v836 = vld [vmem:[#allocation6 + $0x28] sm:$0xff]
        %v837 = vld [vmem:[#allocation6 + $0x30] sm:$0xff]
        %v838 = vld [vmem:[#allocation6 + $0x38] sm:$0xff]
        %v839 = vld [vmem:[#allocation6 + $0x40] sm:$0xff]
        %v840 = vld [vmem:[#allocation6 + $0x48] sm:$0xff]
        %v841 = vld [vmem:[#allocation6 + $0x50] sm:$0xff]
        %v842 = vld [vmem:[#allocation6 + $0x58] sm:$0xff]
        %v843 = vld [vmem:[#allocation6 + $0x60] sm:$0xff]
        %v844 = vld [vmem:[#allocation6 + $0x68] sm:$0xff]
        %v845 = vld [vmem:[#allocation6 + $0x70] sm:$0xff]
        %v846 = vld [vmem:[#allocation6 + $0x78] sm:$0xff]
        %v847 = vld [vmem:[#allocation6 + $0x80] sm:$0xff]
        %v848 = vld [vmem:[#allocation6 + $0x88] sm:$0xff]
        %v849 = vld [vmem:[#allocation6 + $0x90] sm:$0xff]
        %v850 = vld [vmem:[#allocation6 + $0x98] sm:$0xff]
        %v851 = vld [vmem:[#allocation6 + $0xa0] sm:$0xff]
        %v852 = vld [vmem:[#allocation6 + $0xa8] sm:$0xff]
        %v853 = vld [vmem:[#allocation6 + $0xb0] sm:$0xff]
        %v854 = vld [vmem:[#allocation6 + $0xb8] sm:$0xff]
        %v855 = vld [vmem:[#allocation6 + $0xc0] sm:$0xff]
        %v856 = vld [vmem:[#allocation6 + $0xc8] sm:$0xff]
        %v857 = vld [vmem:[#allocation6 + $0xd0] sm:$0xff]
        %v858 = vld [vmem:[#allocation6 + $0xd8] sm:$0xff]
        %v859 = vld [vmem:[#allocation6 + $0xe0] sm:$0xff]
        %v860 = vld [vmem:[#allocation6 + $0xe8] sm:$0xff]
        %v861 = vld [vmem:[#allocation6 + $0xf0] sm:$0xff]
        %v862 = vld [vmem:[#allocation6 + $0xf8] sm:$0xff]
        %v863 = vld [vmem:[#allocation6 + $0x100] sm:$0xff]
        %v864 = vld [vmem:[#allocation6 + $0x108] sm:$0xff]
        %v865 = vld [vmem:[#allocation6 + $0x110] sm:$0xff]
        %v866 = vld [vmem:[#allocation6 + $0x118] sm:$0xff]
        %v867 = vld [vmem:[#allocation6 + $0x120] sm:$0xff]
        %v868 = vld [vmem:[#allocation6 + $0x128] sm:$0xff]
        %v869 = vld [vmem:[#allocation6 + $0x130] sm:$0xff]
        %v870 = vld [vmem:[#allocation6 + $0x138] sm:$0xff]
        %v871 = vld [vmem:[#allocation6 + $0x140] sm:$0xff]
        %v872 = vld [vmem:[#allocation6 + $0x148] sm:$0xff]
        %v873 = vld [vmem:[#allocation6 + $0x150] sm:$0xff]
        %v874 = vld [vmem:[#allocation6 + $0x158] sm:$0xff]
        %v875 = vld [vmem:[#allocation6 + $0x160] sm:$0xff]
        %v876 = vld [vmem:[#allocation6 + $0x168] sm:$0xff]
        %v877 = vld [vmem:[#allocation6 + $0x170] sm:$0xff]
        %v878 = vld [vmem:[#allocation6 + $0x178] sm:$0xff]
        %v879 = vld [vmem:[#allocation6 + $0x180] sm:$0xff]
        %v880 = vld [vmem:[#allocation6 + $0x188] sm:$0xff]
        %v881 = vld [vmem:[#allocation6 + $0x190] sm:$0xff]
        %v882 = vld [vmem:[#allocation6 + $0x198] sm:$0xff]
        %v883 = vld [vmem:[#allocation6 + $0x1a0] sm:$0xff]
        %v884 = vld [vmem:[#allocation6 + $0x1a8] sm:$0xff]
        %v885 = vld [vmem:[#allocation6 + $0x1b0] sm:$0xff]
        %v886 = vld [vmem:[#allocation6 + $0x1b8] sm:$0xff]
        %v887 = vld [vmem:[#allocation6 + $0x1c0] sm:$0xff]
        %v888 = vld [vmem:[#allocation6 + $0x1c8] sm:$0xff]
        %v889 = vld [vmem:[#allocation6 + $0x1d0] sm:$0xff]
        %v890 = vld [vmem:[#allocation6 + $0x1d8] sm:$0xff]
        %v891 = vld [vmem:[#allocation6 + $0x1e0] sm:$0xff]
        %v892 = vld [vmem:[#allocation6 + $0x1e8] sm:$0xff]
        %v893 = vld [vmem:[#allocation6 + $0x1f0] sm:$0xff]
        %v894 = vld [vmem:[#allocation6 + $0x1f8] sm:$0xff]
        %895 = vmatpush.msra.mxu0 %v797
        %896 = vmatpush.msra.mxu0 %v795
        %897 = vmatpush.msra.mxu0 %v793
        %898 = vmatpush.msra.mxu0 %v791
        %899 = vmatpush.msra.mxu0 %v789
        %900 = vmatpush.msra.mxu0 %v787
        %901 = vmatpush.msra.mxu0 %v785
        %902 = vmatpush.msra.mxu0 %v783
        %903 = vmatpush.msra.mxu0 %v781
        %904 = vmatpush.msra.mxu0 %v779
        %905 = vmatpush.msra.mxu0 %v777
        %906 = vmatpush.msra.mxu0 %v775
        %907 = vmatpush.msra.mxu0 %v773
        %908 = vmatpush.msra.mxu0 %v771
        %909 = vmatpush.msra.mxu0 %v769
        %910 = vmatpush.msra.mxu0 %v767
        %911 = vmatmul.f32.gmra.mxu0 %v763
        %v912 = vpop.f32.mrf.mxu0
        %v913 = vadd.f32 0.0, %v912
        %914 = vmatmul.f32.gmra.mxu0 %v765
        %v915 = vpop.f32.mrf.mxu0
        %v916 = vadd.f32 0.0, %v915
        %917 = vdwg.mxu0
        %918 = vmatpush.msra.mxu0 %v829
        %919 = vmatpush.msra.mxu0 %v827
        %920 = vmatpush.msra.mxu0 %v825
        %921 = vmatpush.msra.mxu0 %v823
        %922 = vmatpush.msra.mxu0 %v821
        %923 = vmatpush.msra.mxu0 %v819
        %924 = vmatpush.msra.mxu0 %v817
        %925 = vmatpush.msra.mxu0 %v815
        %926 = vmatpush.msra.mxu0 %v813
        %927 = vmatpush.msra.mxu0 %v811
        %928 = vmatpush.msra.mxu0 %v809
        %929 = vmatpush.msra.mxu0 %v807
        %930 = vmatpush.msra.mxu0 %v805
        %931 = vmatpush.msra.mxu0 %v803
        %932 = vmatpush.msra.mxu0 %v801
        %933 = vmatpush.msra.mxu0 %v799
        %934 = vmatmul.f32.gmra.mxu0 %v764
        %v935 = vpop.f32.mrf.mxu0
        %v936 = vadd.f32 %v913, %v935
        %937 = vmatmul.f32.gmra.mxu0 %v766
        %v938 = vpop.f32.mrf.mxu0
        %v939 = vadd.f32 %v916, %v938
        %940 = vdwg.mxu0
        %941 = vmatpush.msra.mxu0 %v798
        %942 = vmatpush.msra.mxu0 %v796
        %943 = vmatpush.msra.mxu0 %v794
        %944 = vmatpush.msra.mxu0 %v792
        %945 = vmatpush.msra.mxu0 %v790
        %946 = vmatpush.msra.mxu0 %v788
        %947 = vmatpush.msra.mxu0 %v786
        %948 = vmatpush.msra.mxu0 %v784
        %949 = vmatpush.msra.mxu0 %v782
        %950 = vmatpush.msra.mxu0 %v780
        %951 = vmatpush.msra.mxu0 %v778
        %952 = vmatpush.msra.mxu0 %v776
        %953 = vmatpush.msra.mxu0 %v774
        %954 = vmatpush.msra.mxu0 %v772
        %955 = vmatpush.msra.mxu0 %v770
        %956 = vmatpush.msra.mxu0 %v768
        %957 = vmatmul.f32.gmra.mxu0 %v763
        %v958 = vpop.f32.mrf.mxu0
        %v959 = vadd.f32 0.0, %v958
        %960 = vmatmul.f32.gmra.mxu0 %v765
        %v961 = vpop.f32.mrf.mxu0
        %v962 = vadd.f32 0.0, %v961
        %963 = vdwg.mxu0
        %964 = vmatpush.msra.mxu0 %v830
        %965 = vmatpush.msra.mxu0 %v828
        %966 = vmatpush.msra.mxu0 %v826
        %967 = vmatpush.msra.mxu0 %v824
        %968 = vmatpush.msra.mxu0 %v822
        %969 = vmatpush.msra.mxu0 %v820
        %970 = vmatpush.msra.mxu0 %v818
        %971 = vmatpush.msra.mxu0 %v816
        %972 = vmatpush.msra.mxu0 %v814
        %973 = vmatpush.msra.mxu0 %v812
        %974 = vmatpush.msra.mxu0 %v810
        %975 = vmatpush.msra.mxu0 %v808
        %976 = vmatpush.msra.mxu0 %v806
        %977 = vmatpush.msra.mxu0 %v804
        %978 = vmatpush.msra.mxu0 %v802
        %979 = vmatpush.msra.mxu0 %v800
        %980 = vmatmul.f32.gmra.mxu0 %v764
        %v981 = vpop.f32.mrf.mxu0
        %v982 = vadd.f32 %v959, %v981
        %983 = vmatmul.f32.gmra.mxu0 %v766
        %v984 = vpop.f32.mrf.mxu0
        %v985 = vadd.f32 %v962, %v984
        %986 = vdwg.mxu0
        %987 = vmatpush.msra.mxu0 %v861
        %988 = vmatpush.msra.mxu0 %v859
        %989 = vmatpush.msra.mxu0 %v857
        %990 = vmatpush.msra.mxu0 %v855
        %991 = vmatpush.msra.mxu0 %v853
        %992 = vmatpush.msra.mxu0 %v851
        %993 = vmatpush.msra.mxu0 %v849
        %994 = vmatpush.msra.mxu0 %v847
        %995 = vmatpush.msra.mxu0 %v845
        %996 = vmatpush.msra.mxu0 %v843
        %997 = vmatpush.msra.mxu0 %v841
        %998 = vmatpush.msra.mxu0 %v839
        %999 = vmatpush.msra.mxu0 %v837
        %1000 = vmatpush.msra.mxu0 %v835
        %1001 = vmatpush.msra.mxu0 %v833
        %1002 = vmatpush.msra.mxu0 %v831
        %1003 = vmatmul.f32.gmra.mxu0 %v763
        %v1004 = vpop.f32.mrf.mxu0
        %v1005 = vadd.f32 0.0, %v1004
        %1006 = vmatmul.f32.gmra.mxu0 %v765
        %v1007 = vpop.f32.mrf.mxu0
        %v1008 = vadd.f32 0.0, %v1007
        %1009 = vdwg.mxu0
        %1010 = vmatpush.msra.mxu0 %v893
        %1011 = vmatpush.msra.mxu0 %v891
        %1012 = vmatpush.msra.mxu0 %v889
        %1013 = vmatpush.msra.mxu0 %v887
        %1014 = vmatpush.msra.mxu0 %v885
        %1015 = vmatpush.msra.mxu0 %v883
        %1016 = vmatpush.msra.mxu0 %v881
        %1017 = vmatpush.msra.mxu0 %v879
        %1018 = vmatpush.msra.mxu0 %v877
        %1019 = vmatpush.msra.mxu0 %v875
        %1020 = vmatpush.msra.mxu0 %v873
        %1021 = vmatpush.msra.mxu0 %v871
        %1022 = vmatpush.msra.mxu0 %v869
        %1023 = vmatpush.msra.mxu0 %v867
        %1024 = vmatpush.msra.mxu0 %v865
        %1025 = vmatpush.msra.mxu0 %v863
        %1026 = vmatmul.f32.gmra.mxu0 %v764
        %v1027 = vpop.f32.mrf.mxu0
        %v1028 = vadd.f32 %v1005, %v1027
        %1029 = vmatmul.f32.gmra.mxu0 %v766
        %v1030 = vpop.f32.mrf.mxu0
        %v1031 = vadd.f32 %v1008, %v1030
        %1032 = vdwg.mxu0
        %1033 = vmatpush.msra.mxu0 %v862
        %1034 = vmatpush.msra.mxu0 %v860
        %1035 = vmatpush.msra.mxu0 %v858
        %1036 = vmatpush.msra.mxu0 %v856
        %1037 = vmatpush.msra.mxu0 %v854
        %1038 = vmatpush.msra.mxu0 %v852
        %1039 = vmatpush.msra.mxu0 %v850
        %1040 = vmatpush.msra.mxu0 %v848
        %1041 = vmatpush.msra.mxu0 %v846
        %1042 = vmatpush.msra.mxu0 %v844
        %1043 = vmatpush.msra.mxu0 %v842
        %1044 = vmatpush.msra.mxu0 %v840
        %1045 = vmatpush.msra.mxu0 %v838
        %1046 = vmatpush.msra.mxu0 %v836
        %1047 = vmatpush.msra.mxu0 %v834
        %1048 = vmatpush.msra.mxu0 %v832
        %1049 = vmatmul.f32.gmra.mxu0 %v763
        %v1050 = vpop.f32.mrf.mxu0
        %v1051 = vadd.f32 0.0, %v1050
        %1052 = vmatmul.f32.gmra.mxu0 %v765
        %v1053 = vpop.f32.mrf.mxu0
        %v1054 = vadd.f32 0.0, %v1053
        %1055 = vdwg.mxu0
        %1056 = vmatpush.msra.mxu0 %v894
        %1057 = vmatpush.msra.mxu0 %v892
        %1058 = vmatpush.msra.mxu0 %v890
        %1059 = vmatpush.msra.mxu0 %v888
        %1060 = vmatpush.msra.mxu0 %v886
        %1061 = vmatpush.msra.mxu0 %v884
        %1062 = vmatpush.msra.mxu0 %v882
        %1063 = vmatpush.msra.mxu0 %v880
        %1064 = vmatpush.msra.mxu0 %v878
        %1065 = vmatpush.msra.mxu0 %v876
        %1066 = vmatpush.msra.mxu0 %v874
        %1067 = vmatpush.msra.mxu0 %v872
        %1068 = vmatpush.msra.mxu0 %v870
        %1069 = vmatpush.msra.mxu0 %v868
        %1070 = vmatpush.msra.mxu0 %v866
        %1071 = vmatpush.msra.mxu0 %v864
        %1072 = vmatmul.f32.gmra.mxu0 %v764
        %v1073 = vpop.f32.mrf.mxu0
        %v1074 = vadd.f32 %v1051, %v1073
        %1075 = vmatmul.f32.gmra.mxu0 %v766
        %v1076 = vpop.f32.mrf.mxu0
        %v1077 = vadd.f32 %v1054, %v1076
        %1078 = vdwg.mxu0
        %v1079 = vsub.f32 0.0, %v1028
        %v1080 = vsub.f32 0.0, %v1074
        %v1081 = vsub.f32 0.0, %v1031
        %v1082 = vsub.f32 0.0, %v1077
        %v1083 = vld [vmem:[#allocation12] sm:$0x1]
        %v1084 = vld [vmem:[#allocation2] sm:$0x1]
        %1086 = vset.pattern.permute.xlu0 0
        %1087 = vperm.xlu0 %1086, %v1084
        %v1088 = vpop.permute.xlu0 %1087
        %v1090 = vperm.slane %v1088, 0
        %vm1091 = vcmask 130048
        %v1093 = vsel %vm1091, %v1083, 0
        %1095 = vmatpush.msra.mxu0 0.0
        %1096 = vmatpush.msra.mxu0 0.0
        %1097 = vmatpush.msra.mxu0 0.0
        %1098 = vmatpush.msra.mxu0 0.0
        %1099 = vmatpush.msra.mxu0 0.0
        %1100 = vmatpush.msra.mxu0 0.0
        %1101 = vmatpush.msra.mxu0 0.0
        %1102 = vmatpush.msra.mxu0 0.0
        %1103 = vmatpush.msra.mxu0 0.0
        %1104 = vmatpush.msra.mxu0 0.0
        %1105 = vmatpush.msra.mxu0 0.0
        %1106 = vmatpush.msra.mxu0 0.0
        %1107 = vmatpush.msra.mxu0 0.0
        %1108 = vmatpush.msra.mxu0 0.0
        %1109 = vmatpush.msra.mxu0 %v939
        %1110 = vmatpush.msra.mxu0 %v936
        %1111 = vmatmul.f32.gmra.mxu0 %v1093
        %v1112 = vpop.f32.mrf.mxu0
        %v1113 = vadd.f32 %v1090, %v1112
        %1114 = vdwg.mxu0
        %1115 = vmatpush.msra.mxu0 0.0
        %1116 = vmatpush.msra.mxu0 0.0
        %1117 = vmatpush.msra.mxu0 0.0
        %1118 = vmatpush.msra.mxu0 0.0
        %1119 = vmatpush.msra.mxu0 0.0
        %1120 = vmatpush.msra.mxu0 0.0
        %1121 = vmatpush.msra.mxu0 0.0
        %1122 = vmatpush.msra.mxu0 0.0
        %1123 = vmatpush.msra.mxu0 0.0
        %1124 = vmatpush.msra.mxu0 0.0
        %1125 = vmatpush.msra.mxu0 0.0
        %1126 = vmatpush.msra.mxu0 0.0
        %1127 = vmatpush.msra.mxu0 0.0
        %1128 = vmatpush.msra.mxu0 0.0
        %1129 = vmatpush.msra.mxu0 %v985
        %1130 = vmatpush.msra.mxu0 %v982
        %1131 = vmatmul.f32.gmra.mxu0 %v1093
        %v1132 = vpop.f32.mrf.mxu0
        %v1133 = vadd.f32 %v1090, %v1132
        %1134 = vdwg.mxu0
        %v1135 = vmax.f32 %v1113, 0.0
        %v1136 = vmax.f32 %v1133, 0.0
        %v1137 = vld [vmem:[%s12] sm:$0xff]
        %v1138 = vld [vmem:[%s12 + $0x8] sm:$0xff]
        %v1139 = vld [vmem:[%s13] sm:$0xff]
        %v1140 = vld [vmem:[%s13 + $0x8] sm:$0xff]
        %1142 = vset.pattern.permute.xlu0 0
        %1143 = vperm.xlu0 %1142, %v1137
        %v1144 = vpop.permute.xlu0 %1143
        %1147 = vset.pattern.permute.xlu0 0
        %1148 = vperm.xlu0 %1147, %v1138
        %v1149 = vpop.permute.xlu0 %1148
        %v1151 = vperm.slane %v1135, 0
        %v1152 = vperm.slane %v1136, 0
        %v1153 = vmul.f32 %v1144, %v1151
        %v1154 = vmul.f32 %v1144, %v1152
        %v1155 = vmul.f32 %v1149, %v1151
        %v1156 = vmul.f32 %v1149, %v1152
        %1158 = vset.pattern.permute.xlu0 0
        %1159 = vperm.xlu0 %1158, %v1139
        %v1160 = vpop.permute.xlu0 %1159
        %1163 = vset.pattern.permute.xlu0 0
        %1164 = vperm.xlu0 %1163, %v1140
        %v1165 = vpop.permute.xlu0 %1164
        %v1167 = vadd.f32 %v1160, %v1153
        %v1168 = vadd.f32 %v1160, %v1154
        %v1169 = vadd.f32 %v1165, %v1155
        %v1170 = vadd.f32 %v1165, %v1156
        %v1171 = vxor.u32 %v1167, 2147483648
        %v1172 = vxor.u32 %v1168, 2147483648
        %v1173 = vxor.u32 %v1169, 2147483648
        %v1174 = vxor.u32 %v1170, 2147483648
        %v1175 = vmul.f32 %v1171, 1.442695
        %v1176 = vpow.pop %v1175
        %v1177 = vmul.f32 %v1172, 1.442695
        %v1178 = vpow.pop %v1177
        %v1179 = vmul.f32 %v1173, 1.442695
        %v1180 = vpow.pop %v1179
        %v1181 = vmul.f32 %v1174, 1.442695
        %v1182 = vpow.pop %v1181
        %v1183 = vadd.f32 %v1176, 1.0
        %v1184 = vadd.f32 %v1178, 1.0
        %v1185 = vadd.f32 %v1180, 1.0
        %v1186 = vadd.f32 %v1182, 1.0
        %v1187 = vrcp.pop %v1183
        %v1188 = vmul.f32 %v1183, %v1187
        %v1189 = vsub.f32 1.0, %v1188
        %v1190 = vmul.f32 %v1187, %v1189
        %v1191 = vadd.f32 %v1187, %v1190
        %vm1192 = vweird.f32 %v1183
        %vm1193 = vweird.f32 %v1187
        %vm1194 = vmor %vm1192, %vm1193
        %v1195 = vsel %vm1194, %v1187, %v1191
        %v1196 = vand.u32 2147483647, %v1183
        %vm1197 = vcmp.eq.f32.partialorder %v1196, 8.507059e+37
        %v1198 = vand.u32 %v1183, 2147483648
        %v1199 = vor.u32 1.1754944e-38, %v1198
        %v1200 = vsel %vm1197, %v1199, %v1195
        %v1201 = vmul.f32 1.0, %v1200
        %v1202 = vrcp.pop %v1184
        %v1203 = vmul.f32 %v1184, %v1202
        %v1204 = vsub.f32 1.0, %v1203
        %v1205 = vmul.f32 %v1202, %v1204
        %v1206 = vadd.f32 %v1202, %v1205
        %vm1207 = vweird.f32 %v1184
        %vm1208 = vweird.f32 %v1202
        %vm1209 = vmor %vm1207, %vm1208
        %v1210 = vsel %vm1209, %v1202, %v1206
        %v1211 = vand.u32 2147483647, %v1184
        %vm1212 = vcmp.eq.f32.partialorder %v1211, 8.507059e+37
        %v1213 = vand.u32 %v1184, 2147483648
        %v1214 = vor.u32 1.1754944e-38, %v1213
        %v1215 = vsel %vm1212, %v1214, %v1210
        %v1216 = vmul.f32 1.0, %v1215
        %v1217 = vrcp.pop %v1185
        %v1218 = vmul.f32 %v1185, %v1217
        %v1219 = vsub.f32 1.0, %v1218
        %v1220 = vmul.f32 %v1217, %v1219
        %v1221 = vadd.f32 %v1217, %v1220
        %vm1222 = vweird.f32 %v1185
        %vm1223 = vweird.f32 %v1217
        %vm1224 = vmor %vm1222, %vm1223
        %v1225 = vsel %vm1224, %v1217, %v1221
        %v1226 = vand.u32 2147483647, %v1185
        %vm1227 = vcmp.eq.f32.partialorder %v1226, 8.507059e+37
        %v1228 = vand.u32 %v1185, 2147483648
        %v1229 = vor.u32 1.1754944e-38, %v1228
        %v1230 = vsel %vm1227, %v1229, %v1225
        %v1231 = vmul.f32 1.0, %v1230
        %v1232 = vrcp.pop %v1186
        %v1233 = vmul.f32 %v1186, %v1232
        %v1234 = vsub.f32 1.0, %v1233
        %v1235 = vmul.f32 %v1232, %v1234
        %v1236 = vadd.f32 %v1232, %v1235
        %vm1237 = vweird.f32 %v1186
        %vm1238 = vweird.f32 %v1232
        %vm1239 = vmor %vm1237, %vm1238
        %v1240 = vsel %vm1239, %v1232, %v1236
        %v1241 = vand.u32 2147483647, %v1186
        %vm1242 = vcmp.eq.f32.partialorder %v1241, 8.507059e+37
        %v1243 = vand.u32 %v1186, 2147483648
        %v1244 = vor.u32 1.1754944e-38, %v1243
        %v1245 = vsel %vm1242, %v1244, %v1240
        %v1246 = vmul.f32 1.0, %v1245
        %v1247 = vmul.f32 %v936, %v936
        %v1248 = vmul.f32 %v982, %v982
        %v1249 = vmul.f32 %v939, %v939
        %v1250 = vmul.f32 %v985, %v985
        %v1251 = vmul.f32 %v1079, %v1079
        %v1252 = vmul.f32 %v1080, %v1080
        %v1253 = vmul.f32 %v1081, %v1081
        %v1254 = vmul.f32 %v1082, %v1082
        %v1255 = vadd.f32 %v1247, %v1251
        %v1256 = vadd.f32 %v1248, %v1252
        %v1257 = vadd.f32 %v1249, %v1253
        %v1258 = vadd.f32 %v1250, %v1254
        %v1259 = vrsqrt.pop %v1255
        %v1260 = vmul.f32 %v1259, %v1255
        %v1261 = vmul.f32 %v1260, %v1259
        %v1262 = vmul.f32 0.5, %v1261
        %v1263 = vsub.f32 1.5, %v1262
        %v1264 = vmul.f32 %v1259, %v1263
        %v1265 = vmul.f32 %v1255, %v1264
        %vm1266 = vcmp.eq.f32.partialorder %v1255, inf
        %v1267 = vsel %vm1266, %v1255, %v1265
        %vm1268 = vcmp.eq.f32.partialorder %v1255, 0.0
        %v1269 = vand.u32 %v1255, 2147483648
        %v1270 = vsel %vm1268, %v1269, %v1267
        %v1271 = vrsqrt.pop %v1256
        %v1272 = vmul.f32 %v1271, %v1256
        %v1273 = vmul.f32 %v1272, %v1271
        %v1274 = vmul.f32 0.5, %v1273
        %v1275 = vsub.f32 1.5, %v1274
        %v1276 = vmul.f32 %v1271, %v1275
        %v1277 = vmul.f32 %v1256, %v1276
        %vm1278 = vcmp.eq.f32.partialorder %v1256, inf
        %v1279 = vsel %vm1278, %v1256, %v1277
        %vm1280 = vcmp.eq.f32.partialorder %v1256, 0.0
        %v1281 = vand.u32 %v1256, 2147483648
        %v1282 = vsel %vm1280, %v1281, %v1279
        %v1283 = vrsqrt.pop %v1257
        %v1284 = vmul.f32 %v1283, %v1257
        %v1285 = vmul.f32 %v1284, %v1283
        %v1286 = vmul.f32 0.5, %v1285
        %v1287 = vsub.f32 1.5, %v1286
        %v1288 = vmul.f32 %v1283, %v1287
        %v1289 = vmul.f32 %v1257, %v1288
        %vm1290 = vcmp.eq.f32.partialorder %v1257, inf
        %v1291 = vsel %vm1290, %v1257, %v1289
        %vm1292 = vcmp.eq.f32.partialorder %v1257, 0.0
        %v1293 = vand.u32 %v1257, 2147483648
        %v1294 = vsel %vm1292, %v1293, %v1291
        %v1295 = vrsqrt.pop %v1258
        %v1296 = vmul.f32 %v1295, %v1258
        %v1297 = vmul.f32 %v1296, %v1295
        %v1298 = vmul.f32 0.5, %v1297
        %v1299 = vsub.f32 1.5, %v1298
        %v1300 = vmul.f32 %v1295, %v1299
        %v1301 = vmul.f32 %v1258, %v1300
        %vm1302 = vcmp.eq.f32.partialorder %v1258, inf
        %v1303 = vsel %vm1302, %v1258, %v1301
        %vm1304 = vcmp.eq.f32.partialorder %v1258, 0.0
        %v1305 = vand.u32 %v1258, 2147483648
        %v1306 = vsel %vm1304, %v1305, %v1303
        %v1307 = vmul.f32 %v1201, %v1270
        %v1308 = vmul.f32 %v1216, %v1282
        %v1309 = vmul.f32 %v1231, %v1294
        %v1310 = vmul.f32 %v1246, %v1306
        %v1311 = vand.u32 2147483647, %v1307
        %v1312 = vand.u32 2147483647, %v1308
        %v1313 = vand.u32 2147483647, %v1309
        %v1314 = vand.u32 2147483647, %v1310
        %v1315 = vmul.f32 %v1311, 0.70710677
        %v1316 = vmul.f32 %v1312, 0.70710677
        %v1317 = vmul.f32 %v1313, 0.70710677
        %v1318 = vmul.f32 %v1314, 0.70710677
        %v1319 = vmul.f32 %v1315, 0.3275911
        %v1320 = vmul.f32 %v1316, 0.3275911
        %v1321 = vmul.f32 %v1317, 0.3275911
        %v1322 = vmul.f32 %v1318, 0.3275911
        %v1323 = vadd.f32 %v1319, 1.0
        %v1324 = vadd.f32 %v1320, 1.0
        %v1325 = vadd.f32 %v1321, 1.0
        %v1326 = vadd.f32 %v1322, 1.0
        %v1327 = vrcp.pop %v1323
        %v1328 = vmul.f32 %v1323, %v1327
        %v1329 = vsub.f32 1.0, %v1328
        %v1330 = vmul.f32 %v1327, %v1329
        %v1331 = vadd.f32 %v1327, %v1330
        %vm1332 = vweird.f32 %v1323
        %vm1333 = vweird.f32 %v1327
        %vm1334 = vmor %vm1332, %vm1333
        %v1335 = vsel %vm1334, %v1327, %v1331
        %v1336 = vand.u32 2147483647, %v1323
        %vm1337 = vcmp.eq.f32.partialorder %v1336, 8.507059e+37
        %v1338 = vand.u32 %v1323, 2147483648
        %v1339 = vor.u32 1.1754944e-38, %v1338
        %v1340 = vsel %vm1337, %v1339, %v1335
        %v1341 = vmul.f32 1.0, %v1340
        %v1342 = vrcp.pop %v1324
        %v1343 = vmul.f32 %v1324, %v1342
        %v1344 = vsub.f32 1.0, %v1343
        %v1345 = vmul.f32 %v1342, %v1344
        %v1346 = vadd.f32 %v1342, %v1345
        %vm1347 = vweird.f32 %v1324
        %vm1348 = vweird.f32 %v1342
        %vm1349 = vmor %vm1347, %vm1348
        %v1350 = vsel %vm1349, %v1342, %v1346
        %v1351 = vand.u32 2147483647, %v1324
        %vm1352 = vcmp.eq.f32.partialorder %v1351, 8.507059e+37
        %v1353 = vand.u32 %v1324, 2147483648
        %v1354 = vor.u32 1.1754944e-38, %v1353
        %v1355 = vsel %vm1352, %v1354, %v1350
        %v1356 = vmul.f32 1.0, %v1355
        %v1357 = vrcp.pop %v1325
        %v1358 = vmul.f32 %v1325, %v1357
        %v1359 = vsub.f32 1.0, %v1358
        %v1360 = vmul.f32 %v1357, %v1359
        %v1361 = vadd.f32 %v1357, %v1360
        %vm1362 = vweird.f32 %v1325
        %vm1363 = vweird.f32 %v1357
        %vm1364 = vmor %vm1362, %vm1363
        %v1365 = vsel %vm1364, %v1357, %v1361
        %v1366 = vand.u32 2147483647, %v1325
        %vm1367 = vcmp.eq.f32.partialorder %v1366, 8.507059e+37
        %v1368 = vand.u32 %v1325, 2147483648
        %v1369 = vor.u32 1.1754944e-38, %v1368
        %v1370 = vsel %vm1367, %v1369, %v1365
        %v1371 = vmul.f32 1.0, %v1370
        %v1372 = vrcp.pop %v1326
        %v1373 = vmul.f32 %v1326, %v1372
        %v1374 = vsub.f32 1.0, %v1373
        %v1375 = vmul.f32 %v1372, %v1374
        %v1376 = vadd.f32 %v1372, %v1375
        %vm1377 = vweird.f32 %v1326
        %vm1378 = vweird.f32 %v1372
        %vm1379 = vmor %vm1377, %vm1378
        %v1380 = vsel %vm1379, %v1372, %v1376
        %v1381 = vand.u32 2147483647, %v1326
        %vm1382 = vcmp.eq.f32.partialorder %v1381, 8.507059e+37
        %v1383 = vand.u32 %v1326, 2147483648
        %v1384 = vor.u32 1.1754944e-38, %v1383
        %v1385 = vsel %vm1382, %v1384, %v1380
        %v1386 = vmul.f32 1.0, %v1385
        %v1387 = vmul.f32 %v1341, 1.0614054
        %v1388 = vmul.f32 %v1356, 1.0614054
        %v1389 = vmul.f32 %v1371, 1.0614054
        %v1390 = vmul.f32 %v1386, 1.0614054
        %v1391 = vsub.f32 %v1387, 1.4531521
        %v1392 = vsub.f32 %v1388, 1.4531521
        %v1393 = vsub.f32 %v1389, 1.4531521
        %v1394 = vsub.f32 %v1390, 1.4531521
        %v1395 = vmul.f32 %v1391, %v1341
        %v1396 = vmul.f32 %v1392, %v1356
        %v1397 = vmul.f32 %v1393, %v1371
        %v1398 = vmul.f32 %v1394, %v1386
        %v1399 = vadd.f32 %v1395, 1.4214138
        %v1400 = vadd.f32 %v1396, 1.4214138
        %v1401 = vadd.f32 %v1397, 1.4214138
        %v1402 = vadd.f32 %v1398, 1.4214138
        %v1403 = vmul.f32 %v1399, %v1341
        %v1404 = vmul.f32 %v1400, %v1356
        %v1405 = vmul.f32 %v1401, %v1371
        %v1406 = vmul.f32 %v1402, %v1386
        %v1407 = vsub.f32 %v1403, 0.28449672
        %v1408 = vsub.f32 %v1404, 0.28449672
        %v1409 = vsub.f32 %v1405, 0.28449672
        %v1410 = vsub.f32 %v1406, 0.28449672
        %v1411 = vmul.f32 %v1407, %v1341
        %v1412 = vmul.f32 %v1408, %v1356
        %v1413 = vmul.f32 %v1409, %v1371
        %v1414 = vmul.f32 %v1410, %v1386
        %v1415 = vadd.f32 %v1411, 0.2548296
        %v1416 = vadd.f32 %v1412, 0.2548296
        %v1417 = vadd.f32 %v1413, 0.2548296
        %v1418 = vadd.f32 %v1414, 0.2548296
        %v1419 = vmul.f32 %v1415, %v1341
        %v1420 = vmul.f32 %v1416, %v1356
        %v1421 = vmul.f32 %v1417, %v1371
        %v1422 = vmul.f32 %v1418, %v1386
        %v1423 = vsub.f32 0.0, %v1315
        %v1424 = vsub.f32 0.0, %v1316
        %v1425 = vsub.f32 0.0, %v1317
        %v1426 = vsub.f32 0.0, %v1318
        %v1427 = vmul.f32 %v1423, %v1315
        %v1428 = vmul.f32 %v1424, %v1316
        %v1429 = vmul.f32 %v1425, %v1317
        %v1430 = vmul.f32 %v1426, %v1318
        %v1431 = vmul.f32 %v1427, 1.442695
        %v1432 = vpow.pop %v1431
        %v1433 = vmul.f32 %v1428, 1.442695
        %v1434 = vpow.pop %v1433
        %v1435 = vmul.f32 %v1429, 1.442695
        %v1436 = vpow.pop %v1435
        %v1437 = vmul.f32 %v1430, 1.442695
        %v1438 = vpow.pop %v1437
        %v1439 = vmul.f32 %v1419, %v1432
        %v1440 = vmul.f32 %v1420, %v1434
        %v1441 = vmul.f32 %v1421, %v1436
        %v1442 = vmul.f32 %v1422, %v1438
        %v1443 = vsub.f32 1.0, %v1439
        %v1444 = vsub.f32 1.0, %v1440
        %v1445 = vsub.f32 1.0, %v1441
        %v1446 = vsub.f32 1.0, %v1442
        %vm1447 = vcmp.ge.f32.partialorder %v1307, 0.0
        %vm1448 = vcmp.ge.f32.partialorder %v1308, 0.0
        %vm1449 = vcmp.ge.f32.partialorder %v1309, 0.0
        %vm1450 = vcmp.ge.f32.partialorder %v1310, 0.0
        %v1451 = vsub.f32 0.0, %v1443
        %v1452 = vsub.f32 0.0, %v1444
        %v1453 = vsub.f32 0.0, %v1445
        %v1454 = vsub.f32 0.0, %v1446
        %v1455 = vsel %vm1447, %v1443, %v1451
        %v1456 = vsel %vm1448, %v1444, %v1452
        %v1457 = vsel %vm1449, %v1445, %v1453
        %v1458 = vsel %vm1450, %v1446, %v1454
        %v1459 = vmul.f32 %v1307, 0.5
        %v1460 = vmul.f32 %v1308, 0.5
        %v1461 = vmul.f32 %v1309, 0.5
        %v1462 = vmul.f32 %v1310, 0.5
        %v1463 = vadd.f32 %v1455, 1.0
        %v1464 = vadd.f32 %v1456, 1.0
        %v1465 = vadd.f32 %v1457, 1.0
        %v1466 = vadd.f32 %v1458, 1.0
        %v1467 = vmul.f32 %v1459, %v1463
        %v1468 = vmul.f32 %v1460, %v1464
        %v1469 = vmul.f32 %v1461, %v1465
        %v1470 = vmul.f32 %v1462, %v1466
        %v1471 = vmul.f32 %v1467, %v1307
        %v1472 = vmul.f32 %v1468, %v1308
        %v1473 = vmul.f32 %v1469, %v1309
        %v1474 = vmul.f32 %v1470, %v1310
        %v1475 = vld [vmem:[#allocation11] sm:$0xff]
        %v1476 = vld [vmem:[#allocation11 + $0x8] sm:$0xff]
        %v1477 = vld [vmem:[#allocation8] sm:$0xff]
        %v1478 = vld [vmem:[#allocation8 + $0x8] sm:$0xff]
        %v1479 = vld [vmem:[#allocation8 + $0x10] sm:$0xff]
        %v1480 = vld [vmem:[#allocation8 + $0x18] sm:$0xff]
        %v1481 = vld [vmem:[#allocation8 + $0x20] sm:$0xff]
        %v1482 = vld [vmem:[#allocation8 + $0x28] sm:$0xff]
        %v1483 = vld [vmem:[#allocation8 + $0x30] sm:$0xff]
        %v1484 = vld [vmem:[#allocation8 + $0x38] sm:$0xff]
        %v1485 = vld [vmem:[#allocation8 + $0x40] sm:$0xff]
        %v1486 = vld [vmem:[#allocation8 + $0x48] sm:$0xff]
        %v1487 = vld [vmem:[#allocation8 + $0x50] sm:$0xff]
        %v1488 = vld [vmem:[#allocation8 + $0x58] sm:$0xff]
        %v1489 = vld [vmem:[#allocation8 + $0x60] sm:$0xff]
        %v1490 = vld [vmem:[#allocation8 + $0x68] sm:$0xff]
        %v1491 = vld [vmem:[#allocation8 + $0x70] sm:$0xff]
        %v1492 = vld [vmem:[#allocation8 + $0x78] sm:$0xff]
        %v1493 = vld [vmem:[#allocation8 + $0x80] sm:$0xff]
        %v1494 = vld [vmem:[#allocation8 + $0x88] sm:$0xff]
        %v1495 = vld [vmem:[#allocation8 + $0x90] sm:$0xff]
        %v1496 = vld [vmem:[#allocation8 + $0x98] sm:$0xff]
        %v1497 = vld [vmem:[#allocation8 + $0xa0] sm:$0xff]
        %v1498 = vld [vmem:[#allocation8 + $0xa8] sm:$0xff]
        %v1499 = vld [vmem:[#allocation8 + $0xb0] sm:$0xff]
        %v1500 = vld [vmem:[#allocation8 + $0xb8] sm:$0xff]
        %v1501 = vld [vmem:[#allocation8 + $0xc0] sm:$0xff]
        %v1502 = vld [vmem:[#allocation8 + $0xc8] sm:$0xff]
        %v1503 = vld [vmem:[#allocation8 + $0xd0] sm:$0xff]
        %v1504 = vld [vmem:[#allocation8 + $0xd8] sm:$0xff]
        %v1505 = vld [vmem:[#allocation8 + $0xe0] sm:$0xff]
        %v1506 = vld [vmem:[#allocation8 + $0xe8] sm:$0xff]
        %v1507 = vld [vmem:[#allocation8 + $0xf0] sm:$0xff]
        %v1508 = vld [vmem:[#allocation8 + $0xf8] sm:$0xff]
        %v1509 = vld [vmem:[#allocation8 + $0x100] sm:$0xff]
        %v1510 = vld [vmem:[#allocation8 + $0x108] sm:$0xff]
        %v1511 = vld [vmem:[#allocation8 + $0x110] sm:$0xff]
        %v1512 = vld [vmem:[#allocation8 + $0x118] sm:$0xff]
        %v1513 = vld [vmem:[#allocation8 + $0x120] sm:$0xff]
        %v1514 = vld [vmem:[#allocation8 + $0x128] sm:$0xff]
        %v1515 = vld [vmem:[#allocation8 + $0x130] sm:$0xff]
        %v1516 = vld [vmem:[#allocation8 + $0x138] sm:$0xff]
        %v1517 = vld [vmem:[#allocation8 + $0x140] sm:$0xff]
        %v1518 = vld [vmem:[#allocation8 + $0x148] sm:$0xff]
        %v1519 = vld [vmem:[#allocation8 + $0x150] sm:$0xff]
        %v1520 = vld [vmem:[#allocation8 + $0x158] sm:$0xff]
        %v1521 = vld [vmem:[#allocation8 + $0x160] sm:$0xff]
        %v1522 = vld [vmem:[#allocation8 + $0x168] sm:$0xff]
        %v1523 = vld [vmem:[#allocation8 + $0x170] sm:$0xff]
        %v1524 = vld [vmem:[#allocation8 + $0x178] sm:$0xff]
        %v1525 = vld [vmem:[#allocation8 + $0x180] sm:$0xff]
        %v1526 = vld [vmem:[#allocation8 + $0x188] sm:$0xff]
        %v1527 = vld [vmem:[#allocation8 + $0x190] sm:$0xff]
        %v1528 = vld [vmem:[#allocation8 + $0x198] sm:$0xff]
        %v1529 = vld [vmem:[#allocation8 + $0x1a0] sm:$0xff]
        %v1530 = vld [vmem:[#allocation8 + $0x1a8] sm:$0xff]
        %v1531 = vld [vmem:[#allocation8 + $0x1b0] sm:$0xff]
        %v1532 = vld [vmem:[#allocation8 + $0x1b8] sm:$0xff]
        %v1533 = vld [vmem:[#allocation8 + $0x1c0] sm:$0xff]
        %v1534 = vld [vmem:[#allocation8 + $0x1c8] sm:$0xff]
        %v1535 = vld [vmem:[#allocation8 + $0x1d0] sm:$0xff]
        %v1536 = vld [vmem:[#allocation8 + $0x1d8] sm:$0xff]
        %v1537 = vld [vmem:[#allocation8 + $0x1e0] sm:$0xff]
        %v1538 = vld [vmem:[#allocation8 + $0x1e8] sm:$0xff]
        %v1539 = vld [vmem:[#allocation8 + $0x1f0] sm:$0xff]
        %v1540 = vld [vmem:[#allocation8 + $0x1f8] sm:$0xff]
        %1541 = vmatpush.msra.mxu0 %v1507
        %1542 = vmatpush.msra.mxu0 %v1505
        %1543 = vmatpush.msra.mxu0 %v1503
        %1544 = vmatpush.msra.mxu0 %v1501
        %1545 = vmatpush.msra.mxu0 %v1499
        %1546 = vmatpush.msra.mxu0 %v1497
        %1547 = vmatpush.msra.mxu0 %v1495
        %1548 = vmatpush.msra.mxu0 %v1493
        %1549 = vmatpush.msra.mxu0 %v1491
        %1550 = vmatpush.msra.mxu0 %v1489
        %1551 = vmatpush.msra.mxu0 %v1487
        %1552 = vmatpush.msra.mxu0 %v1485
        %1553 = vmatpush.msra.mxu0 %v1483
        %1554 = vmatpush.msra.mxu0 %v1481
        %1555 = vmatpush.msra.mxu0 %v1479
        %1556 = vmatpush.msra.mxu0 %v1477
        %1557 = vmatmul.f32.gmra.mxu0 %v763
        %v1558 = vpop.f32.mrf.mxu0
        %v1559 = vadd.f32 0.0, %v1558
        %1560 = vmatmul.f32.gmra.mxu0 %v765
        %v1561 = vpop.f32.mrf.mxu0
        %v1562 = vadd.f32 0.0, %v1561
        %1563 = vdwg.mxu0
        %1564 = vmatpush.msra.mxu0 %v1539
        %1565 = vmatpush.msra.mxu0 %v1537
        %1566 = vmatpush.msra.mxu0 %v1535
        %1567 = vmatpush.msra.mxu0 %v1533
        %1568 = vmatpush.msra.mxu0 %v1531
        %1569 = vmatpush.msra.mxu0 %v1529
        %1570 = vmatpush.msra.mxu0 %v1527
        %1571 = vmatpush.msra.mxu0 %v1525
        %1572 = vmatpush.msra.mxu0 %v1523
        %1573 = vmatpush.msra.mxu0 %v1521
        %1574 = vmatpush.msra.mxu0 %v1519
        %1575 = vmatpush.msra.mxu0 %v1517
        %1576 = vmatpush.msra.mxu0 %v1515
        %1577 = vmatpush.msra.mxu0 %v1513
        %1578 = vmatpush.msra.mxu0 %v1511
        %1579 = vmatpush.msra.mxu0 %v1509
        %1580 = vmatmul.f32.gmra.mxu0 %v764
        %v1581 = vpop.f32.mrf.mxu0
        %v1582 = vadd.f32 %v1559, %v1581
        %1583 = vmatmul.f32.gmra.mxu0 %v766
        %v1584 = vpop.f32.mrf.mxu0
        %v1585 = vadd.f32 %v1562, %v1584
        %1586 = vdwg.mxu0
        %1587 = vmatpush.msra.mxu0 %v1508
        %1588 = vmatpush.msra.mxu0 %v1506
        %1589 = vmatpush.msra.mxu0 %v1504
        %1590 = vmatpush.msra.mxu0 %v1502
        %1591 = vmatpush.msra.mxu0 %v1500
        %1592 = vmatpush.msra.mxu0 %v1498
        %1593 = vmatpush.msra.mxu0 %v1496
        %1594 = vmatpush.msra.mxu0 %v1494
        %1595 = vmatpush.msra.mxu0 %v1492
        %1596 = vmatpush.msra.mxu0 %v1490
        %1597 = vmatpush.msra.mxu0 %v1488
        %1598 = vmatpush.msra.mxu0 %v1486
        %1599 = vmatpush.msra.mxu0 %v1484
        %1600 = vmatpush.msra.mxu0 %v1482
        %1601 = vmatpush.msra.mxu0 %v1480
        %1602 = vmatpush.msra.mxu0 %v1478
        %1603 = vmatmul.f32.gmra.mxu0 %v763
        %v1604 = vpop.f32.mrf.mxu0
        %v1605 = vadd.f32 0.0, %v1604
        %1606 = vmatmul.f32.gmra.mxu0 %v765
        %v1607 = vpop.f32.mrf.mxu0
        %v1608 = vadd.f32 0.0, %v1607
        %1609 = vdwg.mxu0
        %1610 = vmatpush.msra.mxu0 %v1540
        %1611 = vmatpush.msra.mxu0 %v1538
        %1612 = vmatpush.msra.mxu0 %v1536
        %1613 = vmatpush.msra.mxu0 %v1534
        %1614 = vmatpush.msra.mxu0 %v1532
        %1615 = vmatpush.msra.mxu0 %v1530
        %1616 = vmatpush.msra.mxu0 %v1528
        %1617 = vmatpush.msra.mxu0 %v1526
        %1618 = vmatpush.msra.mxu0 %v1524
        %1619 = vmatpush.msra.mxu0 %v1522
        %1620 = vmatpush.msra.mxu0 %v1520
        %1621 = vmatpush.msra.mxu0 %v1518
        %1622 = vmatpush.msra.mxu0 %v1516
        %1623 = vmatpush.msra.mxu0 %v1514
        %1624 = vmatpush.msra.mxu0 %v1512
        %1625 = vmatpush.msra.mxu0 %v1510
        %1626 = vmatmul.f32.gmra.mxu0 %v764
        %v1627 = vpop.f32.mrf.mxu0
        %v1628 = vadd.f32 %v1605, %v1627
        %1629 = vmatmul.f32.gmra.mxu0 %v766
        %v1630 = vpop.f32.mrf.mxu0
        %v1631 = vadd.f32 %v1608, %v1630
        %1632 = vdwg.mxu0
        %1634 = vset.pattern.permute.xlu0 0
        %1635 = vperm.xlu0 %1634, %v1475
        %v1636 = vpop.permute.xlu0 %1635
        %1639 = vset.pattern.permute.xlu0 0
        %1640 = vperm.xlu0 %1639, %v1476
        %v1641 = vpop.permute.xlu0 %1640
        %v1643 = vmul.f32 %v1636, %v1582
        %v1644 = vmul.f32 %v1636, %v1628
        %v1645 = vmul.f32 %v1641, %v1585
        %v1646 = vmul.f32 %v1641, %v1631
        %v1647 = vadd.f32 %v1643, 0.0
        %v1648 = vadd.f32 %v1644, 0.0
        %v1649 = vadd.f32 %v1645, 0.0
        %v1650 = vadd.f32 %v1646, 0.0
        %s1651 = scalar_lea.vmem [#allocation8], 512
        %v1652 = vld [vmem:[%s1651] sm:$0xff]
        %v1653 = vld [vmem:[%s1651 + $0x8] sm:$0xff]
        %v1654 = vld [vmem:[%s1651 + $0x10] sm:$0xff]
        %v1655 = vld [vmem:[%s1651 + $0x18] sm:$0xff]
        %v1656 = vld [vmem:[%s1651 + $0x20] sm:$0xff]
        %v1657 = vld [vmem:[%s1651 + $0x28] sm:$0xff]
        %v1658 = vld [vmem:[%s1651 + $0x30] sm:$0xff]
        %v1659 = vld [vmem:[%s1651 + $0x38] sm:$0xff]
        %v1660 = vld [vmem:[%s1651 + $0x40] sm:$0xff]
        %v1661 = vld [vmem:[%s1651 + $0x48] sm:$0xff]
        %v1662 = vld [vmem:[%s1651 + $0x50] sm:$0xff]
        %v1663 = vld [vmem:[%s1651 + $0x58] sm:$0xff]
        %v1664 = vld [vmem:[%s1651 + $0x60] sm:$0xff]
        %v1665 = vld [vmem:[%s1651 + $0x68] sm:$0xff]
        %v1666 = vld [vmem:[%s1651 + $0x70] sm:$0xff]
        %v1667 = vld [vmem:[%s1651 + $0x78] sm:$0xff]
        %v1668 = vld [vmem:[%s1651 + $0x80] sm:$0xff]
        %v1669 = vld [vmem:[%s1651 + $0x88] sm:$0xff]
        %v1670 = vld [vmem:[%s1651 + $0x90] sm:$0xff]
        %v1671 = vld [vmem:[%s1651 + $0x98] sm:$0xff]
        %v1672 = vld [vmem:[%s1651 + $0xa0] sm:$0xff]
        %v1673 = vld [vmem:[%s1651 + $0xa8] sm:$0xff]
        %v1674 = vld [vmem:[%s1651 + $0xb0] sm:$0xff]
        %v1675 = vld [vmem:[%s1651 + $0xb8] sm:$0xff]
        %v1676 = vld [vmem:[%s1651 + $0xc0] sm:$0xff]
        %v1677 = vld [vmem:[%s1651 + $0xc8] sm:$0xff]
        %v1678 = vld [vmem:[%s1651 + $0xd0] sm:$0xff]
        %v1679 = vld [vmem:[%s1651 + $0xd8] sm:$0xff]
        %v1680 = vld [vmem:[%s1651 + $0xe0] sm:$0xff]
        %v1681 = vld [vmem:[%s1651 + $0xe8] sm:$0xff]
        %v1682 = vld [vmem:[%s1651 + $0xf0] sm:$0xff]
        %v1683 = vld [vmem:[%s1651 + $0xf8] sm:$0xff]
        %v1684 = vld [vmem:[%s1651 + $0x100] sm:$0xff]
        %v1685 = vld [vmem:[%s1651 + $0x108] sm:$0xff]
        %v1686 = vld [vmem:[%s1651 + $0x110] sm:$0xff]
        %v1687 = vld [vmem:[%s1651 + $0x118] sm:$0xff]
        %v1688 = vld [vmem:[%s1651 + $0x120] sm:$0xff]
        %v1689 = vld [vmem:[%s1651 + $0x128] sm:$0xff]
        %v1690 = vld [vmem:[%s1651 + $0x130] sm:$0xff]
        %v1691 = vld [vmem:[%s1651 + $0x138] sm:$0xff]
        %v1692 = vld [vmem:[%s1651 + $0x140] sm:$0xff]
        %v1693 = vld [vmem:[%s1651 + $0x148] sm:$0xff]
        %v1694 = vld [vmem:[%s1651 + $0x150] sm:$0xff]
        %v1695 = vld [vmem:[%s1651 + $0x158] sm:$0xff]
        %v1696 = vld [vmem:[%s1651 + $0x160] sm:$0xff]
        %v1697 = vld [vmem:[%s1651 + $0x168] sm:$0xff]
        %v1698 = vld [vmem:[%s1651 + $0x170] sm:$0xff]
        %v1699 = vld [vmem:[%s1651 + $0x178] sm:$0xff]
        %v1700 = vld [vmem:[%s1651 + $0x180] sm:$0xff]
        %v1701 = vld [vmem:[%s1651 + $0x188] sm:$0xff]
        %v1702 = vld [vmem:[%s1651 + $0x190] sm:$0xff]
        %v1703 = vld [vmem:[%s1651 + $0x198] sm:$0xff]
        %v1704 = vld [vmem:[%s1651 + $0x1a0] sm:$0xff]
        %v1705 = vld [vmem:[%s1651 + $0x1a8] sm:$0xff]
        %v1706 = vld [vmem:[%s1651 + $0x1b0] sm:$0xff]
        %v1707 = vld [vmem:[%s1651 + $0x1b8] sm:$0xff]
        %v1708 = vld [vmem:[%s1651 + $0x1c0] sm:$0xff]
        %v1709 = vld [vmem:[%s1651 + $0x1c8] sm:$0xff]
        %v1710 = vld [vmem:[%s1651 + $0x1d0] sm:$0xff]
        %v1711 = vld [vmem:[%s1651 + $0x1d8] sm:$0xff]
        %v1712 = vld [vmem:[%s1651 + $0x1e0] sm:$0xff]
        %v1713 = vld [vmem:[%s1651 + $0x1e8] sm:$0xff]
        %v1714 = vld [vmem:[%s1651 + $0x1f0] sm:$0xff]
        %v1715 = vld [vmem:[%s1651 + $0x1f8] sm:$0xff]
        %1716 = vmatpush.msra.mxu0 %v1682
        %1717 = vmatpush.msra.mxu0 %v1680
        %1718 = vmatpush.msra.mxu0 %v1678
        %1719 = vmatpush.msra.mxu0 %v1676
        %1720 = vmatpush.msra.mxu0 %v1674
        %1721 = vmatpush.msra.mxu0 %v1672
        %1722 = vmatpush.msra.mxu0 %v1670
        %1723 = vmatpush.msra.mxu0 %v1668
        %1724 = vmatpush.msra.mxu0 %v1666
        %1725 = vmatpush.msra.mxu0 %v1664
        %1726 = vmatpush.msra.mxu0 %v1662
        %1727 = vmatpush.msra.mxu0 %v1660
        %1728 = vmatpush.msra.mxu0 %v1658
        %1729 = vmatpush.msra.mxu0 %v1656
        %1730 = vmatpush.msra.mxu0 %v1654
        %1731 = vmatpush.msra.mxu0 %v1652
        %1732 = vmatmul.f32.gmra.mxu0 %v763
        %v1733 = vpop.f32.mrf.mxu0
        %v1734 = vadd.f32 0.0, %v1733
        %1735 = vmatmul.f32.gmra.mxu0 %v765
        %v1736 = vpop.f32.mrf.mxu0
        %v1737 = vadd.f32 0.0, %v1736
        %1738 = vdwg.mxu0
        %1739 = vmatpush.msra.mxu0 %v1714
        %1740 = vmatpush.msra.mxu0 %v1712
        %1741 = vmatpush.msra.mxu0 %v1710
        %1742 = vmatpush.msra.mxu0 %v1708
        %1743 = vmatpush.msra.mxu0 %v1706
        %1744 = vmatpush.msra.mxu0 %v1704
        %1745 = vmatpush.msra.mxu0 %v1702
        %1746 = vmatpush.msra.mxu0 %v1700
        %1747 = vmatpush.msra.mxu0 %v1698
        %1748 = vmatpush.msra.mxu0 %v1696
        %1749 = vmatpush.msra.mxu0 %v1694
        %1750 = vmatpush.msra.mxu0 %v1692
        %1751 = vmatpush.msra.mxu0 %v1690
        %1752 = vmatpush.msra.mxu0 %v1688
        %1753 = vmatpush.msra.mxu0 %v1686
        %1754 = vmatpush.msra.mxu0 %v1684
        %1755 = vmatmul.f32.gmra.mxu0 %v764
        %v1756 = vpop.f32.mrf.mxu0
        %v1757 = vadd.f32 %v1734, %v1756
        %1758 = vmatmul.f32.gmra.mxu0 %v766
        %v1759 = vpop.f32.mrf.mxu0
        %v1760 = vadd.f32 %v1737, %v1759
        %1761 = vdwg.mxu0
        %1762 = vmatpush.msra.mxu0 %v1683
        %1763 = vmatpush.msra.mxu0 %v1681
        %1764 = vmatpush.msra.mxu0 %v1679
        %1765 = vmatpush.msra.mxu0 %v1677
        %1766 = vmatpush.msra.mxu0 %v1675
        %1767 = vmatpush.msra.mxu0 %v1673
        %1768 = vmatpush.msra.mxu0 %v1671
        %1769 = vmatpush.msra.mxu0 %v1669
        %1770 = vmatpush.msra.mxu0 %v1667
        %1771 = vmatpush.msra.mxu0 %v1665
        %1772 = vmatpush.msra.mxu0 %v1663
        %1773 = vmatpush.msra.mxu0 %v1661
        %1774 = vmatpush.msra.mxu0 %v1659
        %1775 = vmatpush.msra.mxu0 %v1657
        %1776 = vmatpush.msra.mxu0 %v1655
        %1777 = vmatpush.msra.mxu0 %v1653
        %1778 = vmatmul.f32.gmra.mxu0 %v763
        %v1779 = vpop.f32.mrf.mxu0
        %v1780 = vadd.f32 0.0, %v1779
        %1781 = vmatmul.f32.gmra.mxu0 %v765
        %v1782 = vpop.f32.mrf.mxu0
        %v1783 = vadd.f32 0.0, %v1782
        %1784 = vdwg.mxu0
        %1785 = vmatpush.msra.mxu0 %v1715
        %1786 = vmatpush.msra.mxu0 %v1713
        %1787 = vmatpush.msra.mxu0 %v1711
        %1788 = vmatpush.msra.mxu0 %v1709
        %1789 = vmatpush.msra.mxu0 %v1707
        %1790 = vmatpush.msra.mxu0 %v1705
        %1791 = vmatpush.msra.mxu0 %v1703
        %1792 = vmatpush.msra.mxu0 %v1701
        %1793 = vmatpush.msra.mxu0 %v1699
        %1794 = vmatpush.msra.mxu0 %v1697
        %1795 = vmatpush.msra.mxu0 %v1695
        %1796 = vmatpush.msra.mxu0 %v1693
        %1797 = vmatpush.msra.mxu0 %v1691
        %1798 = vmatpush.msra.mxu0 %v1689
        %1799 = vmatpush.msra.mxu0 %v1687
        %1800 = vmatpush.msra.mxu0 %v1685
        %1801 = vmatmul.f32.gmra.mxu0 %v764
        %v1802 = vpop.f32.mrf.mxu0
        %v1803 = vadd.f32 %v1780, %v1802
        %1804 = vmatmul.f32.gmra.mxu0 %v766
        %v1805 = vpop.f32.mrf.mxu0
        %v1806 = vadd.f32 %v1783, %v1805
        %1807 = vdwg.mxu0
        %1808 = vset.pattern.permute.xlu0 1
        %1809 = vperm.xlu0 %1808, %v1475
        %v1810 = vpop.permute.xlu0 %1809
        %1812 = vset.pattern.permute.xlu0 1
        %1813 = vperm.xlu0 %1812, %v1476
        %v1814 = vpop.permute.xlu0 %1813
        %v1816 = vmul.f32 %v1810, %v1757
        %v1817 = vmul.f32 %v1810, %v1803
        %v1818 = vmul.f32 %v1814, %v1760
        %v1819 = vmul.f32 %v1814, %v1806
        %v1820 = vadd.f32 %v1647, %v1816
        %v1821 = vadd.f32 %v1648, %v1817
        %v1822 = vadd.f32 %v1649, %v1818
        %v1823 = vadd.f32 %v1650, %v1819
        %s1824 = scalar_lea.vmem [#allocation8], 1024
        %v1825 = vld [vmem:[%s1824] sm:$0xff]
        %v1826 = vld [vmem:[%s1824 + $0x8] sm:$0xff]
        %v1827 = vld [vmem:[%s1824 + $0x10] sm:$0xff]
        %v1828 = vld [vmem:[%s1824 + $0x18] sm:$0xff]
        %v1829 = vld [vmem:[%s1824 + $0x20] sm:$0xff]
        %v1830 = vld [vmem:[%s1824 + $0x28] sm:$0xff]
        %v1831 = vld [vmem:[%s1824 + $0x30] sm:$0xff]
        %v1832 = vld [vmem:[%s1824 + $0x38] sm:$0xff]
        %v1833 = vld [vmem:[%s1824 + $0x40] sm:$0xff]
        %v1834 = vld [vmem:[%s1824 + $0x48] sm:$0xff]
        %v1835 = vld [vmem:[%s1824 + $0x50] sm:$0xff]
        %v1836 = vld [vmem:[%s1824 + $0x58] sm:$0xff]
        %v1837 = vld [vmem:[%s1824 + $0x60] sm:$0xff]
        %v1838 = vld [vmem:[%s1824 + $0x68] sm:$0xff]
        %v1839 = vld [vmem:[%s1824 + $0x70] sm:$0xff]
        %v1840 = vld [vmem:[%s1824 + $0x78] sm:$0xff]
        %v1841 = vld [vmem:[%s1824 + $0x80] sm:$0xff]
        %v1842 = vld [vmem:[%s1824 + $0x88] sm:$0xff]
        %v1843 = vld [vmem:[%s1824 + $0x90] sm:$0xff]
        %v1844 = vld [vmem:[%s1824 + $0x98] sm:$0xff]
        %v1845 = vld [vmem:[%s1824 + $0xa0] sm:$0xff]
        %v1846 = vld [vmem:[%s1824 + $0xa8] sm:$0xff]
        %v1847 = vld [vmem:[%s1824 + $0xb0] sm:$0xff]
        %v1848 = vld [vmem:[%s1824 + $0xb8] sm:$0xff]
        %v1849 = vld [vmem:[%s1824 + $0xc0] sm:$0xff]
        %v1850 = vld [vmem:[%s1824 + $0xc8] sm:$0xff]
        %v1851 = vld [vmem:[%s1824 + $0xd0] sm:$0xff]
        %v1852 = vld [vmem:[%s1824 + $0xd8] sm:$0xff]
        %v1853 = vld [vmem:[%s1824 + $0xe0] sm:$0xff]
        %v1854 = vld [vmem:[%s1824 + $0xe8] sm:$0xff]
        %v1855 = vld [vmem:[%s1824 + $0xf0] sm:$0xff]
        %v1856 = vld [vmem:[%s1824 + $0xf8] sm:$0xff]
        %v1857 = vld [vmem:[%s1824 + $0x100] sm:$0xff]
        %v1858 = vld [vmem:[%s1824 + $0x108] sm:$0xff]
        %v1859 = vld [vmem:[%s1824 + $0x110] sm:$0xff]
        %v1860 = vld [vmem:[%s1824 + $0x118] sm:$0xff]
        %v1861 = vld [vmem:[%s1824 + $0x120] sm:$0xff]
        %v1862 = vld [vmem:[%s1824 + $0x128] sm:$0xff]
        %v1863 = vld [vmem:[%s1824 + $0x130] sm:$0xff]
        %v1864 = vld [vmem:[%s1824 + $0x138] sm:$0xff]
        %v1865 = vld [vmem:[%s1824 + $0x140] sm:$0xff]
        %v1866 = vld [vmem:[%s1824 + $0x148] sm:$0xff]
        %v1867 = vld [vmem:[%s1824 + $0x150] sm:$0xff]
        %v1868 = vld [vmem:[%s1824 + $0x158] sm:$0xff]
        %v1869 = vld [vmem:[%s1824 + $0x160] sm:$0xff]
        %v1870 = vld [vmem:[%s1824 + $0x168] sm:$0xff]
        %v1871 = vld [vmem:[%s1824 + $0x170] sm:$0xff]
        %v1872 = vld [vmem:[%s1824 + $0x178] sm:$0xff]
        %v1873 = vld [vmem:[%s1824 + $0x180] sm:$0xff]
        %v1874 = vld [vmem:[%s1824 + $0x188] sm:$0xff]
        %v1875 = vld [vmem:[%s1824 + $0x190] sm:$0xff]
        %v1876 = vld [vmem:[%s1824 + $0x198] sm:$0xff]
        %v1877 = vld [vmem:[%s1824 + $0x1a0] sm:$0xff]
        %v1878 = vld [vmem:[%s1824 + $0x1a8] sm:$0xff]
        %v1879 = vld [vmem:[%s1824 + $0x1b0] sm:$0xff]
        %v1880 = vld [vmem:[%s1824 + $0x1b8] sm:$0xff]
        %v1881 = vld [vmem:[%s1824 + $0x1c0] sm:$0xff]
        %v1882 = vld [vmem:[%s1824 + $0x1c8] sm:$0xff]
        %v1883 = vld [vmem:[%s1824 + $0x1d0] sm:$0xff]
        %v1884 = vld [vmem:[%s1824 + $0x1d8] sm:$0xff]
        %v1885 = vld [vmem:[%s1824 + $0x1e0] sm:$0xff]
        %v1886 = vld [vmem:[%s1824 + $0x1e8] sm:$0xff]
        %v1887 = vld [vmem:[%s1824 + $0x1f0] sm:$0xff]
        %v1888 = vld [vmem:[%s1824 + $0x1f8] sm:$0xff]
        %1889 = vmatpush.msra.mxu0 %v1855
        %1890 = vmatpush.msra.mxu0 %v1853
        %1891 = vmatpush.msra.mxu0 %v1851
        %1892 = vmatpush.msra.mxu0 %v1849
        %1893 = vmatpush.msra.mxu0 %v1847
        %1894 = vmatpush.msra.mxu0 %v1845
        %1895 = vmatpush.msra.mxu0 %v1843
        %1896 = vmatpush.msra.mxu0 %v1841
        %1897 = vmatpush.msra.mxu0 %v1839
        %1898 = vmatpush.msra.mxu0 %v1837
        %1899 = vmatpush.msra.mxu0 %v1835
        %1900 = vmatpush.msra.mxu0 %v1833
        %1901 = vmatpush.msra.mxu0 %v1831
        %1902 = vmatpush.msra.mxu0 %v1829
        %1903 = vmatpush.msra.mxu0 %v1827
        %1904 = vmatpush.msra.mxu0 %v1825
        %1905 = vmatmul.f32.gmra.mxu0 %v763
        %v1906 = vpop.f32.mrf.mxu0
        %v1907 = vadd.f32 0.0, %v1906
        %1908 = vmatmul.f32.gmra.mxu0 %v765
        %v1909 = vpop.f32.mrf.mxu0
        %v1910 = vadd.f32 0.0, %v1909
        %1911 = vdwg.mxu0
        %1912 = vmatpush.msra.mxu0 %v1887
        %1913 = vmatpush.msra.mxu0 %v1885
        %1914 = vmatpush.msra.mxu0 %v1883
        %1915 = vmatpush.msra.mxu0 %v1881
        %1916 = vmatpush.msra.mxu0 %v1879
        %1917 = vmatpush.msra.mxu0 %v1877
        %1918 = vmatpush.msra.mxu0 %v1875
        %1919 = vmatpush.msra.mxu0 %v1873
        %1920 = vmatpush.msra.mxu0 %v1871
        %1921 = vmatpush.msra.mxu0 %v1869
        %1922 = vmatpush.msra.mxu0 %v1867
        %1923 = vmatpush.msra.mxu0 %v1865
        %1924 = vmatpush.msra.mxu0 %v1863
        %1925 = vmatpush.msra.mxu0 %v1861
        %1926 = vmatpush.msra.mxu0 %v1859
        %1927 = vmatpush.msra.mxu0 %v1857
        %1928 = vmatmul.f32.gmra.mxu0 %v764
        %v1929 = vpop.f32.mrf.mxu0
        %v1930 = vadd.f32 %v1907, %v1929
        %1931 = vmatmul.f32.gmra.mxu0 %v766
        %v1932 = vpop.f32.mrf.mxu0
        %v1933 = vadd.f32 %v1910, %v1932
        %1934 = vdwg.mxu0
        %1935 = vmatpush.msra.mxu0 %v1856
        %1936 = vmatpush.msra.mxu0 %v1854
        %1937 = vmatpush.msra.mxu0 %v1852
        %1938 = vmatpush.msra.mxu0 %v1850
        %1939 = vmatpush.msra.mxu0 %v1848
        %1940 = vmatpush.msra.mxu0 %v1846
        %1941 = vmatpush.msra.mxu0 %v1844
        %1942 = vmatpush.msra.mxu0 %v1842
        %1943 = vmatpush.msra.mxu0 %v1840
        %1944 = vmatpush.msra.mxu0 %v1838
        %1945 = vmatpush.msra.mxu0 %v1836
        %1946 = vmatpush.msra.mxu0 %v1834
        %1947 = vmatpush.msra.mxu0 %v1832
        %1948 = vmatpush.msra.mxu0 %v1830
        %1949 = vmatpush.msra.mxu0 %v1828
        %1950 = vmatpush.msra.mxu0 %v1826
        %1951 = vmatmul.f32.gmra.mxu0 %v763
        %v1952 = vpop.f32.mrf.mxu0
        %v1953 = vadd.f32 0.0, %v1952
        %1954 = vmatmul.f32.gmra.mxu0 %v765
        %v1955 = vpop.f32.mrf.mxu0
        %v1956 = vadd.f32 0.0, %v1955
        %1957 = vdwg.mxu0
        %1958 = vmatpush.msra.mxu0 %v1888
        %1959 = vmatpush.msra.mxu0 %v1886
        %1960 = vmatpush.msra.mxu0 %v1884
        %1961 = vmatpush.msra.mxu0 %v1882
        %1962 = vmatpush.msra.mxu0 %v1880
        %1963 = vmatpush.msra.mxu0 %v1878
        %1964 = vmatpush.msra.mxu0 %v1876
        %1965 = vmatpush.msra.mxu0 %v1874
        %1966 = vmatpush.msra.mxu0 %v1872
        %1967 = vmatpush.msra.mxu0 %v1870
        %1968 = vmatpush.msra.mxu0 %v1868
        %1969 = vmatpush.msra.mxu0 %v1866
        %1970 = vmatpush.msra.mxu0 %v1864
        %1971 = vmatpush.msra.mxu0 %v1862
        %1972 = vmatpush.msra.mxu0 %v1860
        %1973 = vmatpush.msra.mxu0 %v1858
        %1974 = vmatmul.f32.gmra.mxu0 %v764
        %v1975 = vpop.f32.mrf.mxu0
        %v1976 = vadd.f32 %v1953, %v1975
        %1977 = vmatmul.f32.gmra.mxu0 %v766
        %v1978 = vpop.f32.mrf.mxu0
        %v1979 = vadd.f32 %v1956, %v1978
        %1980 = vdwg.mxu0
        %1981 = vset.pattern.permute.xlu0 2
        %1982 = vperm.xlu0 %1981, %v1475
        %v1983 = vpop.permute.xlu0 %1982
        %1985 = vset.pattern.permute.xlu0 2
        %1986 = vperm.xlu0 %1985, %v1476
        %v1987 = vpop.permute.xlu0 %1986
        %v1989 = vmul.f32 %v1983, %v1930
        %v1990 = vmul.f32 %v1983, %v1976
        %v1991 = vmul.f32 %v1987, %v1933
        %v1992 = vmul.f32 %v1987, %v1979
        %v1993 = vadd.f32 %v1820, %v1989
        %v1994 = vadd.f32 %v1821, %v1990
        %v1995 = vadd.f32 %v1822, %v1991
        %v1996 = vadd.f32 %v1823, %v1992
        %s1997 = scalar_lea.vmem [#allocation8], 1536
        %v1998 = vld [vmem:[%s1997] sm:$0xff]
        %v1999 = vld [vmem:[%s1997 + $0x8] sm:$0xff]
        %v2000 = vld [vmem:[%s1997 + $0x10] sm:$0xff]
        %v2001 = vld [vmem:[%s1997 + $0x18] sm:$0xff]
        %v2002 = vld [vmem:[%s1997 + $0x20] sm:$0xff]
        %v2003 = vld [vmem:[%s1997 + $0x28] sm:$0xff]
        %v2004 = vld [vmem:[%s1997 + $0x30] sm:$0xff]
        %v2005 = vld [vmem:[%s1997 + $0x38] sm:$0xff]
        %v2006 = vld [vmem:[%s1997 + $0x40] sm:$0xff]
        %v2007 = vld [vmem:[%s1997 + $0x48] sm:$0xff]
        %v2008 = vld [vmem:[%s1997 + $0x50] sm:$0xff]
        %v2009 = vld [vmem:[%s1997 + $0x58] sm:$0xff]
        %v2010 = vld [vmem:[%s1997 + $0x60] sm:$0xff]
        %v2011 = vld [vmem:[%s1997 + $0x68] sm:$0xff]
        %v2012 = vld [vmem:[%s1997 + $0x70] sm:$0xff]
        %v2013 = vld [vmem:[%s1997 + $0x78] sm:$0xff]
        %v2014 = vld [vmem:[%s1997 + $0x80] sm:$0xff]
        %v2015 = vld [vmem:[%s1997 + $0x88] sm:$0xff]
        %v2016 = vld [vmem:[%s1997 + $0x90] sm:$0xff]
        %v2017 = vld [vmem:[%s1997 + $0x98] sm:$0xff]
        %v2018 = vld [vmem:[%s1997 + $0xa0] sm:$0xff]
        %v2019 = vld [vmem:[%s1997 + $0xa8] sm:$0xff]
        %v2020 = vld [vmem:[%s1997 + $0xb0] sm:$0xff]
        %v2021 = vld [vmem:[%s1997 + $0xb8] sm:$0xff]
        %v2022 = vld [vmem:[%s1997 + $0xc0] sm:$0xff]
        %v2023 = vld [vmem:[%s1997 + $0xc8] sm:$0xff]
        %v2024 = vld [vmem:[%s1997 + $0xd0] sm:$0xff]
        %v2025 = vld [vmem:[%s1997 + $0xd8] sm:$0xff]
        %v2026 = vld [vmem:[%s1997 + $0xe0] sm:$0xff]
        %v2027 = vld [vmem:[%s1997 + $0xe8] sm:$0xff]
        %v2028 = vld [vmem:[%s1997 + $0xf0] sm:$0xff]
        %v2029 = vld [vmem:[%s1997 + $0xf8] sm:$0xff]
        %v2030 = vld [vmem:[%s1997 + $0x100] sm:$0xff]
        %v2031 = vld [vmem:[%s1997 + $0x108] sm:$0xff]
        %v2032 = vld [vmem:[%s1997 + $0x110] sm:$0xff]
        %v2033 = vld [vmem:[%s1997 + $0x118] sm:$0xff]
        %v2034 = vld [vmem:[%s1997 + $0x120] sm:$0xff]
        %v2035 = vld [vmem:[%s1997 + $0x128] sm:$0xff]
        %v2036 = vld [vmem:[%s1997 + $0x130] sm:$0xff]
        %v2037 = vld [vmem:[%s1997 + $0x138] sm:$0xff]
        %v2038 = vld [vmem:[%s1997 + $0x140] sm:$0xff]
        %v2039 = vld [vmem:[%s1997 + $0x148] sm:$0xff]
        %v2040 = vld [vmem:[%s1997 + $0x150] sm:$0xff]
        %v2041 = vld [vmem:[%s1997 + $0x158] sm:$0xff]
        %v2042 = vld [vmem:[%s1997 + $0x160] sm:$0xff]
        %v2043 = vld [vmem:[%s1997 + $0x168] sm:$0xff]
        %v2044 = vld [vmem:[%s1997 + $0x170] sm:$0xff]
        %v2045 = vld [vmem:[%s1997 + $0x178] sm:$0xff]
        %v2046 = vld [vmem:[%s1997 + $0x180] sm:$0xff]
        %v2047 = vld [vmem:[%s1997 + $0x188] sm:$0xff]
        %v2048 = vld [vmem:[%s1997 + $0x190] sm:$0xff]
        %v2049 = vld [vmem:[%s1997 + $0x198] sm:$0xff]
        %v2050 = vld [vmem:[%s1997 + $0x1a0] sm:$0xff]
        %v2051 = vld [vmem:[%s1997 + $0x1a8] sm:$0xff]
        %v2052 = vld [vmem:[%s1997 + $0x1b0] sm:$0xff]
        %v2053 = vld [vmem:[%s1997 + $0x1b8] sm:$0xff]
        %v2054 = vld [vmem:[%s1997 + $0x1c0] sm:$0xff]
        %v2055 = vld [vmem:[%s1997 + $0x1c8] sm:$0xff]
        %v2056 = vld [vmem:[%s1997 + $0x1d0] sm:$0xff]
        %v2057 = vld [vmem:[%s1997 + $0x1d8] sm:$0xff]
        %v2058 = vld [vmem:[%s1997 + $0x1e0] sm:$0xff]
        %v2059 = vld [vmem:[%s1997 + $0x1e8] sm:$0xff]
        %v2060 = vld [vmem:[%s1997 + $0x1f0] sm:$0xff]
        %v2061 = vld [vmem:[%s1997 + $0x1f8] sm:$0xff]
        %2062 = vmatpush.msra.mxu0 %v2028
        %2063 = vmatpush.msra.mxu0 %v2026
        %2064 = vmatpush.msra.mxu0 %v2024
        %2065 = vmatpush.msra.mxu0 %v2022
        %2066 = vmatpush.msra.mxu0 %v2020
        %2067 = vmatpush.msra.mxu0 %v2018
        %2068 = vmatpush.msra.mxu0 %v2016
        %2069 = vmatpush.msra.mxu0 %v2014
        %2070 = vmatpush.msra.mxu0 %v2012
        %2071 = vmatpush.msra.mxu0 %v2010
        %2072 = vmatpush.msra.mxu0 %v2008
        %2073 = vmatpush.msra.mxu0 %v2006
        %2074 = vmatpush.msra.mxu0 %v2004
        %2075 = vmatpush.msra.mxu0 %v2002
        %2076 = vmatpush.msra.mxu0 %v2000
        %2077 = vmatpush.msra.mxu0 %v1998
        %2078 = vmatmul.f32.gmra.mxu0 %v763
        %v2079 = vpop.f32.mrf.mxu0
        %v2080 = vadd.f32 0.0, %v2079
        %2081 = vmatmul.f32.gmra.mxu0 %v765
        %v2082 = vpop.f32.mrf.mxu0
        %v2083 = vadd.f32 0.0, %v2082
        %2084 = vdwg.mxu0
        %2085 = vmatpush.msra.mxu0 %v2060
        %2086 = vmatpush.msra.mxu0 %v2058
        %2087 = vmatpush.msra.mxu0 %v2056
        %2088 = vmatpush.msra.mxu0 %v2054
        %2089 = vmatpush.msra.mxu0 %v2052
        %2090 = vmatpush.msra.mxu0 %v2050
        %2091 = vmatpush.msra.mxu0 %v2048
        %2092 = vmatpush.msra.mxu0 %v2046
        %2093 = vmatpush.msra.mxu0 %v2044
        %2094 = vmatpush.msra.mxu0 %v2042
        %2095 = vmatpush.msra.mxu0 %v2040
        %2096 = vmatpush.msra.mxu0 %v2038
        %2097 = vmatpush.msra.mxu0 %v2036
        %2098 = vmatpush.msra.mxu0 %v2034
        %2099 = vmatpush.msra.mxu0 %v2032
        %2100 = vmatpush.msra.mxu0 %v2030
        %2101 = vmatmul.f32.gmra.mxu0 %v764
        %v2102 = vpop.f32.mrf.mxu0
        %v2103 = vadd.f32 %v2080, %v2102
        %2104 = vmatmul.f32.gmra.mxu0 %v766
        %v2105 = vpop.f32.mrf.mxu0
        %v2106 = vadd.f32 %v2083, %v2105
        %2107 = vdwg.mxu0
        %2108 = vmatpush.msra.mxu0 %v2029
        %2109 = vmatpush.msra.mxu0 %v2027
        %2110 = vmatpush.msra.mxu0 %v2025
        %2111 = vmatpush.msra.mxu0 %v2023
        %2112 = vmatpush.msra.mxu0 %v2021
        %2113 = vmatpush.msra.mxu0 %v2019
        %2114 = vmatpush.msra.mxu0 %v2017
        %2115 = vmatpush.msra.mxu0 %v2015
        %2116 = vmatpush.msra.mxu0 %v2013
        %2117 = vmatpush.msra.mxu0 %v2011
        %2118 = vmatpush.msra.mxu0 %v2009
        %2119 = vmatpush.msra.mxu0 %v2007
        %2120 = vmatpush.msra.mxu0 %v2005
        %2121 = vmatpush.msra.mxu0 %v2003
        %2122 = vmatpush.msra.mxu0 %v2001
        %2123 = vmatpush.msra.mxu0 %v1999
        %2124 = vmatmul.f32.gmra.mxu0 %v763
        %v2125 = vpop.f32.mrf.mxu0
        %v2126 = vadd.f32 0.0, %v2125
        %2127 = vmatmul.f32.gmra.mxu0 %v765
        %v2128 = vpop.f32.mrf.mxu0
        %v2129 = vadd.f32 0.0, %v2128
        %2130 = vdwg.mxu0
        %2131 = vmatpush.msra.mxu0 %v2061
        %2132 = vmatpush.msra.mxu0 %v2059
        %2133 = vmatpush.msra.mxu0 %v2057
        %2134 = vmatpush.msra.mxu0 %v2055
        %2135 = vmatpush.msra.mxu0 %v2053
        %2136 = vmatpush.msra.mxu0 %v2051
        %2137 = vmatpush.msra.mxu0 %v2049
        %2138 = vmatpush.msra.mxu0 %v2047
        %2139 = vmatpush.msra.mxu0 %v2045
        %2140 = vmatpush.msra.mxu0 %v2043
        %2141 = vmatpush.msra.mxu0 %v2041
        %2142 = vmatpush.msra.mxu0 %v2039
        %2143 = vmatpush.msra.mxu0 %v2037
        %2144 = vmatpush.msra.mxu0 %v2035
        %2145 = vmatpush.msra.mxu0 %v2033
        %2146 = vmatpush.msra.mxu0 %v2031
        %2147 = vmatmul.f32.gmra.mxu0 %v764
        %v2148 = vpop.f32.mrf.mxu0
        %v2149 = vadd.f32 %v2126, %v2148
        %2150 = vmatmul.f32.gmra.mxu0 %v766
        %v2151 = vpop.f32.mrf.mxu0
        %v2152 = vadd.f32 %v2129, %v2151
        %2153 = vdwg.mxu0
        %2154 = vset.pattern.permute.xlu0 3
        %2155 = vperm.xlu0 %2154, %v1475
        %v2156 = vpop.permute.xlu0 %2155
        %2158 = vset.pattern.permute.xlu0 3
        %2159 = vperm.xlu0 %2158, %v1476
        %v2160 = vpop.permute.xlu0 %2159
        %v2162 = vmul.f32 %v2156, %v2103
        %v2163 = vmul.f32 %v2156, %v2149
        %v2164 = vmul.f32 %v2160, %v2106
        %v2165 = vmul.f32 %v2160, %v2152
        %v2166 = vadd.f32 %v1993, %v2162
        %v2167 = vadd.f32 %v1994, %v2163
        %v2168 = vadd.f32 %v1995, %v2164
        %v2169 = vadd.f32 %v1996, %v2165
        %s2170 = scalar_lea.vmem [#allocation8], 2048
        %v2171 = vld [vmem:[%s2170] sm:$0xff]
        %v2172 = vld [vmem:[%s2170 + $0x8] sm:$0xff]
        %v2173 = vld [vmem:[%s2170 + $0x10] sm:$0xff]
        %v2174 = vld [vmem:[%s2170 + $0x18] sm:$0xff]
        %v2175 = vld [vmem:[%s2170 + $0x20] sm:$0xff]
        %v2176 = vld [vmem:[%s2170 + $0x28] sm:$0xff]
        %v2177 = vld [vmem:[%s2170 + $0x30] sm:$0xff]
        %v2178 = vld [vmem:[%s2170 + $0x38] sm:$0xff]
        %v2179 = vld [vmem:[%s2170 + $0x40] sm:$0xff]
        %v2180 = vld [vmem:[%s2170 + $0x48] sm:$0xff]
        %v2181 = vld [vmem:[%s2170 + $0x50] sm:$0xff]
        %v2182 = vld [vmem:[%s2170 + $0x58] sm:$0xff]
        %v2183 = vld [vmem:[%s2170 + $0x60] sm:$0xff]
        %v2184 = vld [vmem:[%s2170 + $0x68] sm:$0xff]
        %v2185 = vld [vmem:[%s2170 + $0x70] sm:$0xff]
        %v2186 = vld [vmem:[%s2170 + $0x78] sm:$0xff]
        %v2187 = vld [vmem:[%s2170 + $0x80] sm:$0xff]
        %v2188 = vld [vmem:[%s2170 + $0x88] sm:$0xff]
        %v2189 = vld [vmem:[%s2170 + $0x90] sm:$0xff]
        %v2190 = vld [vmem:[%s2170 + $0x98] sm:$0xff]
        %v2191 = vld [vmem:[%s2170 + $0xa0] sm:$0xff]
        %v2192 = vld [vmem:[%s2170 + $0xa8] sm:$0xff]
        %v2193 = vld [vmem:[%s2170 + $0xb0] sm:$0xff]
        %v2194 = vld [vmem:[%s2170 + $0xb8] sm:$0xff]
        %v2195 = vld [vmem:[%s2170 + $0xc0] sm:$0xff]
        %v2196 = vld [vmem:[%s2170 + $0xc8] sm:$0xff]
        %v2197 = vld [vmem:[%s2170 + $0xd0] sm:$0xff]
        %v2198 = vld [vmem:[%s2170 + $0xd8] sm:$0xff]
        %v2199 = vld [vmem:[%s2170 + $0xe0] sm:$0xff]
        %v2200 = vld [vmem:[%s2170 + $0xe8] sm:$0xff]
        %v2201 = vld [vmem:[%s2170 + $0xf0] sm:$0xff]
        %v2202 = vld [vmem:[%s2170 + $0xf8] sm:$0xff]
        %v2203 = vld [vmem:[%s2170 + $0x100] sm:$0xff]
        %v2204 = vld [vmem:[%s2170 + $0x108] sm:$0xff]
        %v2205 = vld [vmem:[%s2170 + $0x110] sm:$0xff]
        %v2206 = vld [vmem:[%s2170 + $0x118] sm:$0xff]
        %v2207 = vld [vmem:[%s2170 + $0x120] sm:$0xff]
        %v2208 = vld [vmem:[%s2170 + $0x128] sm:$0xff]
        %v2209 = vld [vmem:[%s2170 + $0x130] sm:$0xff]
        %v2210 = vld [vmem:[%s2170 + $0x138] sm:$0xff]
        %v2211 = vld [vmem:[%s2170 + $0x140] sm:$0xff]
        %v2212 = vld [vmem:[%s2170 + $0x148] sm:$0xff]
        %v2213 = vld [vmem:[%s2170 + $0x150] sm:$0xff]
        %v2214 = vld [vmem:[%s2170 + $0x158] sm:$0xff]
        %v2215 = vld [vmem:[%s2170 + $0x160] sm:$0xff]
        %v2216 = vld [vmem:[%s2170 + $0x168] sm:$0xff]
        %v2217 = vld [vmem:[%s2170 + $0x170] sm:$0xff]
        %v2218 = vld [vmem:[%s2170 + $0x178] sm:$0xff]
        %v2219 = vld [vmem:[%s2170 + $0x180] sm:$0xff]
        %v2220 = vld [vmem:[%s2170 + $0x188] sm:$0xff]
        %v2221 = vld [vmem:[%s2170 + $0x190] sm:$0xff]
        %v2222 = vld [vmem:[%s2170 + $0x198] sm:$0xff]
        %v2223 = vld [vmem:[%s2170 + $0x1a0] sm:$0xff]
        %v2224 = vld [vmem:[%s2170 + $0x1a8] sm:$0xff]
        %v2225 = vld [vmem:[%s2170 + $0x1b0] sm:$0xff]
        %v2226 = vld [vmem:[%s2170 + $0x1b8] sm:$0xff]
        %v2227 = vld [vmem:[%s2170 + $0x1c0] sm:$0xff]
        %v2228 = vld [vmem:[%s2170 + $0x1c8] sm:$0xff]
        %v2229 = vld [vmem:[%s2170 + $0x1d0] sm:$0xff]
        %v2230 = vld [vmem:[%s2170 + $0x1d8] sm:$0xff]
        %v2231 = vld [vmem:[%s2170 + $0x1e0] sm:$0xff]
        %v2232 = vld [vmem:[%s2170 + $0x1e8] sm:$0xff]
        %v2233 = vld [vmem:[%s2170 + $0x1f0] sm:$0xff]
        %v2234 = vld [vmem:[%s2170 + $0x1f8] sm:$0xff]
        %2235 = vmatpush.msra.mxu0 %v2201
        %2236 = vmatpush.msra.mxu0 %v2199
        %2237 = vmatpush.msra.mxu0 %v2197
        %2238 = vmatpush.msra.mxu0 %v2195
        %2239 = vmatpush.msra.mxu0 %v2193
        %2240 = vmatpush.msra.mxu0 %v2191
        %2241 = vmatpush.msra.mxu0 %v2189
        %2242 = vmatpush.msra.mxu0 %v2187
        %2243 = vmatpush.msra.mxu0 %v2185
        %2244 = vmatpush.msra.mxu0 %v2183
        %2245 = vmatpush.msra.mxu0 %v2181
        %2246 = vmatpush.msra.mxu0 %v2179
        %2247 = vmatpush.msra.mxu0 %v2177
        %2248 = vmatpush.msra.mxu0 %v2175
        %2249 = vmatpush.msra.mxu0 %v2173
        %2250 = vmatpush.msra.mxu0 %v2171
        %2251 = vmatmul.f32.gmra.mxu0 %v763
        %v2252 = vpop.f32.mrf.mxu0
        %v2253 = vadd.f32 0.0, %v2252
        %2254 = vmatmul.f32.gmra.mxu0 %v765
        %v2255 = vpop.f32.mrf.mxu0
        %v2256 = vadd.f32 0.0, %v2255
        %2257 = vdwg.mxu0
        %2258 = vmatpush.msra.mxu0 %v2233
        %2259 = vmatpush.msra.mxu0 %v2231
        %2260 = vmatpush.msra.mxu0 %v2229
        %2261 = vmatpush.msra.mxu0 %v2227
        %2262 = vmatpush.msra.mxu0 %v2225
        %2263 = vmatpush.msra.mxu0 %v2223
        %2264 = vmatpush.msra.mxu0 %v2221
        %2265 = vmatpush.msra.mxu0 %v2219
        %2266 = vmatpush.msra.mxu0 %v2217
        %2267 = vmatpush.msra.mxu0 %v2215
        %2268 = vmatpush.msra.mxu0 %v2213
        %2269 = vmatpush.msra.mxu0 %v2211
        %2270 = vmatpush.msra.mxu0 %v2209
        %2271 = vmatpush.msra.mxu0 %v2207
        %2272 = vmatpush.msra.mxu0 %v2205
        %2273 = vmatpush.msra.mxu0 %v2203
        %2274 = vmatmul.f32.gmra.mxu0 %v764
        %v2275 = vpop.f32.mrf.mxu0
        %v2276 = vadd.f32 %v2253, %v2275
        %2277 = vmatmul.f32.gmra.mxu0 %v766
        %v2278 = vpop.f32.mrf.mxu0
        %v2279 = vadd.f32 %v2256, %v2278
        %2280 = vdwg.mxu0
        %2281 = vmatpush.msra.mxu0 %v2202
        %2282 = vmatpush.msra.mxu0 %v2200
        %2283 = vmatpush.msra.mxu0 %v2198
        %2284 = vmatpush.msra.mxu0 %v2196
        %2285 = vmatpush.msra.mxu0 %v2194
        %2286 = vmatpush.msra.mxu0 %v2192
        %2287 = vmatpush.msra.mxu0 %v2190
        %2288 = vmatpush.msra.mxu0 %v2188
        %2289 = vmatpush.msra.mxu0 %v2186
        %2290 = vmatpush.msra.mxu0 %v2184
        %2291 = vmatpush.msra.mxu0 %v2182
        %2292 = vmatpush.msra.mxu0 %v2180
        %2293 = vmatpush.msra.mxu0 %v2178
        %2294 = vmatpush.msra.mxu0 %v2176
        %2295 = vmatpush.msra.mxu0 %v2174
        %2296 = vmatpush.msra.mxu0 %v2172
        %2297 = vmatmul.f32.gmra.mxu0 %v763
        %v2298 = vpop.f32.mrf.mxu0
        %v2299 = vadd.f32 0.0, %v2298
        %2300 = vmatmul.f32.gmra.mxu0 %v765
        %v2301 = vpop.f32.mrf.mxu0
        %v2302 = vadd.f32 0.0, %v2301
        %2303 = vdwg.mxu0
        %2304 = vmatpush.msra.mxu0 %v2234
        %2305 = vmatpush.msra.mxu0 %v2232
        %2306 = vmatpush.msra.mxu0 %v2230
        %2307 = vmatpush.msra.mxu0 %v2228
        %2308 = vmatpush.msra.mxu0 %v2226
        %2309 = vmatpush.msra.mxu0 %v2224
        %2310 = vmatpush.msra.mxu0 %v2222
        %2311 = vmatpush.msra.mxu0 %v2220
        %2312 = vmatpush.msra.mxu0 %v2218
        %2313 = vmatpush.msra.mxu0 %v2216
        %2314 = vmatpush.msra.mxu0 %v2214
        %2315 = vmatpush.msra.mxu0 %v2212
        %2316 = vmatpush.msra.mxu0 %v2210
        %2317 = vmatpush.msra.mxu0 %v2208
        %2318 = vmatpush.msra.mxu0 %v2206
        %2319 = vmatpush.msra.mxu0 %v2204
        %2320 = vmatmul.f32.gmra.mxu0 %v764
        %v2321 = vpop.f32.mrf.mxu0
        %v2322 = vadd.f32 %v2299, %v2321
        %2323 = vmatmul.f32.gmra.mxu0 %v766
        %v2324 = vpop.f32.mrf.mxu0
        %v2325 = vadd.f32 %v2302, %v2324
        %2326 = vdwg.mxu0
        %2327 = vset.pattern.permute.xlu0 4
        %2328 = vperm.xlu0 %2327, %v1475
        %v2329 = vpop.permute.xlu0 %2328
        %2331 = vset.pattern.permute.xlu0 4
        %2332 = vperm.xlu0 %2331, %v1476
        %v2333 = vpop.permute.xlu0 %2332
        %v2335 = vmul.f32 %v2329, %v2276
        %v2336 = vmul.f32 %v2329, %v2322
        %v2337 = vmul.f32 %v2333, %v2279
        %v2338 = vmul.f32 %v2333, %v2325
        %v2339 = vadd.f32 %v2166, %v2335
        %v2340 = vadd.f32 %v2167, %v2336
        %v2341 = vadd.f32 %v2168, %v2337
        %v2342 = vadd.f32 %v2169, %v2338
        %s2343 = scalar_lea.vmem [#allocation8], 2560
        %v2344 = vld [vmem:[%s2343] sm:$0xff]
        %v2345 = vld [vmem:[%s2343 + $0x8] sm:$0xff]
        %v2346 = vld [vmem:[%s2343 + $0x10] sm:$0xff]
        %v2347 = vld [vmem:[%s2343 + $0x18] sm:$0xff]
        %v2348 = vld [vmem:[%s2343 + $0x20] sm:$0xff]
        %v2349 = vld [vmem:[%s2343 + $0x28] sm:$0xff]
        %v2350 = vld [vmem:[%s2343 + $0x30] sm:$0xff]
        %v2351 = vld [vmem:[%s2343 + $0x38] sm:$0xff]
        %v2352 = vld [vmem:[%s2343 + $0x40] sm:$0xff]
        %v2353 = vld [vmem:[%s2343 + $0x48] sm:$0xff]
        %v2354 = vld [vmem:[%s2343 + $0x50] sm:$0xff]
        %v2355 = vld [vmem:[%s2343 + $0x58] sm:$0xff]
        %v2356 = vld [vmem:[%s2343 + $0x60] sm:$0xff]
        %v2357 = vld [vmem:[%s2343 + $0x68] sm:$0xff]
        %v2358 = vld [vmem:[%s2343 + $0x70] sm:$0xff]
        %v2359 = vld [vmem:[%s2343 + $0x78] sm:$0xff]
        %v2360 = vld [vmem:[%s2343 + $0x80] sm:$0xff]
        %v2361 = vld [vmem:[%s2343 + $0x88] sm:$0xff]
        %v2362 = vld [vmem:[%s2343 + $0x90] sm:$0xff]
        %v2363 = vld [vmem:[%s2343 + $0x98] sm:$0xff]
        %v2364 = vld [vmem:[%s2343 + $0xa0] sm:$0xff]
        %v2365 = vld [vmem:[%s2343 + $0xa8] sm:$0xff]
        %v2366 = vld [vmem:[%s2343 + $0xb0] sm:$0xff]
        %v2367 = vld [vmem:[%s2343 + $0xb8] sm:$0xff]
        %v2368 = vld [vmem:[%s2343 + $0xc0] sm:$0xff]
        %v2369 = vld [vmem:[%s2343 + $0xc8] sm:$0xff]
        %v2370 = vld [vmem:[%s2343 + $0xd0] sm:$0xff]
        %v2371 = vld [vmem:[%s2343 + $0xd8] sm:$0xff]
        %v2372 = vld [vmem:[%s2343 + $0xe0] sm:$0xff]
        %v2373 = vld [vmem:[%s2343 + $0xe8] sm:$0xff]
        %v2374 = vld [vmem:[%s2343 + $0xf0] sm:$0xff]
        %v2375 = vld [vmem:[%s2343 + $0xf8] sm:$0xff]
        %v2376 = vld [vmem:[%s2343 + $0x100] sm:$0xff]
        %v2377 = vld [vmem:[%s2343 + $0x108] sm:$0xff]
        %v2378 = vld [vmem:[%s2343 + $0x110] sm:$0xff]
        %v2379 = vld [vmem:[%s2343 + $0x118] sm:$0xff]
        %v2380 = vld [vmem:[%s2343 + $0x120] sm:$0xff]
        %v2381 = vld [vmem:[%s2343 + $0x128] sm:$0xff]
        %v2382 = vld [vmem:[%s2343 + $0x130] sm:$0xff]
        %v2383 = vld [vmem:[%s2343 + $0x138] sm:$0xff]
        %v2384 = vld [vmem:[%s2343 + $0x140] sm:$0xff]
        %v2385 = vld [vmem:[%s2343 + $0x148] sm:$0xff]
        %v2386 = vld [vmem:[%s2343 + $0x150] sm:$0xff]
        %v2387 = vld [vmem:[%s2343 + $0x158] sm:$0xff]
        %v2388 = vld [vmem:[%s2343 + $0x160] sm:$0xff]
        %v2389 = vld [vmem:[%s2343 + $0x168] sm:$0xff]
        %v2390 = vld [vmem:[%s2343 + $0x170] sm:$0xff]
        %v2391 = vld [vmem:[%s2343 + $0x178] sm:$0xff]
        %v2392 = vld [vmem:[%s2343 + $0x180] sm:$0xff]
        %v2393 = vld [vmem:[%s2343 + $0x188] sm:$0xff]
        %v2394 = vld [vmem:[%s2343 + $0x190] sm:$0xff]
        %v2395 = vld [vmem:[%s2343 + $0x198] sm:$0xff]
        %v2396 = vld [vmem:[%s2343 + $0x1a0] sm:$0xff]
        %v2397 = vld [vmem:[%s2343 + $0x1a8] sm:$0xff]
        %v2398 = vld [vmem:[%s2343 + $0x1b0] sm:$0xff]
        %v2399 = vld [vmem:[%s2343 + $0x1b8] sm:$0xff]
        %v2400 = vld [vmem:[%s2343 + $0x1c0] sm:$0xff]
        %v2401 = vld [vmem:[%s2343 + $0x1c8] sm:$0xff]
        %v2402 = vld [vmem:[%s2343 + $0x1d0] sm:$0xff]
        %v2403 = vld [vmem:[%s2343 + $0x1d8] sm:$0xff]
        %v2404 = vld [vmem:[%s2343 + $0x1e0] sm:$0xff]
        %v2405 = vld [vmem:[%s2343 + $0x1e8] sm:$0xff]
        %v2406 = vld [vmem:[%s2343 + $0x1f0] sm:$0xff]
        %v2407 = vld [vmem:[%s2343 + $0x1f8] sm:$0xff]
        %2408 = vmatpush.msra.mxu0 %v2374
        %2409 = vmatpush.msra.mxu0 %v2372
        %2410 = vmatpush.msra.mxu0 %v2370
        %2411 = vmatpush.msra.mxu0 %v2368
        %2412 = vmatpush.msra.mxu0 %v2366
        %2413 = vmatpush.msra.mxu0 %v2364
        %2414 = vmatpush.msra.mxu0 %v2362
        %2415 = vmatpush.msra.mxu0 %v2360
        %2416 = vmatpush.msra.mxu0 %v2358
        %2417 = vmatpush.msra.mxu0 %v2356
        %2418 = vmatpush.msra.mxu0 %v2354
        %2419 = vmatpush.msra.mxu0 %v2352
        %2420 = vmatpush.msra.mxu0 %v2350
        %2421 = vmatpush.msra.mxu0 %v2348
        %2422 = vmatpush.msra.mxu0 %v2346
        %2423 = vmatpush.msra.mxu0 %v2344
        %2424 = vmatmul.f32.gmra.mxu0 %v763
        %v2425 = vpop.f32.mrf.mxu0
        %v2426 = vadd.f32 0.0, %v2425
        %2427 = vmatmul.f32.gmra.mxu0 %v765
        %v2428 = vpop.f32.mrf.mxu0
        %v2429 = vadd.f32 0.0, %v2428
        %2430 = vdwg.mxu0
        %2431 = vmatpush.msra.mxu0 %v2406
        %2432 = vmatpush.msra.mxu0 %v2404
        %2433 = vmatpush.msra.mxu0 %v2402
        %2434 = vmatpush.msra.mxu0 %v2400
        %2435 = vmatpush.msra.mxu0 %v2398
        %2436 = vmatpush.msra.mxu0 %v2396
        %2437 = vmatpush.msra.mxu0 %v2394
        %2438 = vmatpush.msra.mxu0 %v2392
        %2439 = vmatpush.msra.mxu0 %v2390
        %2440 = vmatpush.msra.mxu0 %v2388
        %2441 = vmatpush.msra.mxu0 %v2386
        %2442 = vmatpush.msra.mxu0 %v2384
        %2443 = vmatpush.msra.mxu0 %v2382
        %2444 = vmatpush.msra.mxu0 %v2380
        %2445 = vmatpush.msra.mxu0 %v2378
        %2446 = vmatpush.msra.mxu0 %v2376
        %2447 = vmatmul.f32.gmra.mxu0 %v764
        %v2448 = vpop.f32.mrf.mxu0
        %v2449 = vadd.f32 %v2426, %v2448
        %2450 = vmatmul.f32.gmra.mxu0 %v766
        %v2451 = vpop.f32.mrf.mxu0
        %v2452 = vadd.f32 %v2429, %v2451
        %2453 = vdwg.mxu0
        %2454 = vmatpush.msra.mxu0 %v2375
        %2455 = vmatpush.msra.mxu0 %v2373
        %2456 = vmatpush.msra.mxu0 %v2371
        %2457 = vmatpush.msra.mxu0 %v2369
        %2458 = vmatpush.msra.mxu0 %v2367
        %2459 = vmatpush.msra.mxu0 %v2365
        %2460 = vmatpush.msra.mxu0 %v2363
        %2461 = vmatpush.msra.mxu0 %v2361
        %2462 = vmatpush.msra.mxu0 %v2359
        %2463 = vmatpush.msra.mxu0 %v2357
        %2464 = vmatpush.msra.mxu0 %v2355
        %2465 = vmatpush.msra.mxu0 %v2353
        %2466 = vmatpush.msra.mxu0 %v2351
        %2467 = vmatpush.msra.mxu0 %v2349
        %2468 = vmatpush.msra.mxu0 %v2347
        %2469 = vmatpush.msra.mxu0 %v2345
        %2470 = vmatmul.f32.gmra.mxu0 %v763
        %v2471 = vpop.f32.mrf.mxu0
        %v2472 = vadd.f32 0.0, %v2471
        %2473 = vmatmul.f32.gmra.mxu0 %v765
        %v2474 = vpop.f32.mrf.mxu0
        %v2475 = vadd.f32 0.0, %v2474
        %2476 = vdwg.mxu0
        %2477 = vmatpush.msra.mxu0 %v2407
        %2478 = vmatpush.msra.mxu0 %v2405
        %2479 = vmatpush.msra.mxu0 %v2403
        %2480 = vmatpush.msra.mxu0 %v2401
        %2481 = vmatpush.msra.mxu0 %v2399
        %2482 = vmatpush.msra.mxu0 %v2397
        %2483 = vmatpush.msra.mxu0 %v2395
        %2484 = vmatpush.msra.mxu0 %v2393
        %2485 = vmatpush.msra.mxu0 %v2391
        %2486 = vmatpush.msra.mxu0 %v2389
        %2487 = vmatpush.msra.mxu0 %v2387
        %2488 = vmatpush.msra.mxu0 %v2385
        %2489 = vmatpush.msra.mxu0 %v2383
        %2490 = vmatpush.msra.mxu0 %v2381
        %2491 = vmatpush.msra.mxu0 %v2379
        %2492 = vmatpush.msra.mxu0 %v2377
        %2493 = vmatmul.f32.gmra.mxu0 %v764
        %v2494 = vpop.f32.mrf.mxu0
        %v2495 = vadd.f32 %v2472, %v2494
        %2496 = vmatmul.f32.gmra.mxu0 %v766
        %v2497 = vpop.f32.mrf.mxu0
        %v2498 = vadd.f32 %v2475, %v2497
        %2499 = vdwg.mxu0
        %2500 = vset.pattern.permute.xlu0 5
        %2501 = vperm.xlu0 %2500, %v1475
        %v2502 = vpop.permute.xlu0 %2501
        %2504 = vset.pattern.permute.xlu0 5
        %2505 = vperm.xlu0 %2504, %v1476
        %v2506 = vpop.permute.xlu0 %2505
        %v2508 = vmul.f32 %v2502, %v2449
        %v2509 = vmul.f32 %v2502, %v2495
        %v2510 = vmul.f32 %v2506, %v2452
        %v2511 = vmul.f32 %v2506, %v2498
        %v2512 = vadd.f32 %v2339, %v2508
        %v2513 = vadd.f32 %v2340, %v2509
        %v2514 = vadd.f32 %v2341, %v2510
        %v2515 = vadd.f32 %v2342, %v2511
        %s2516 = scalar_lea.vmem [#allocation8], 3072
        %v2517 = vld [vmem:[%s2516] sm:$0xff]
        %v2518 = vld [vmem:[%s2516 + $0x8] sm:$0xff]
        %v2519 = vld [vmem:[%s2516 + $0x10] sm:$0xff]
        %v2520 = vld [vmem:[%s2516 + $0x18] sm:$0xff]
        %v2521 = vld [vmem:[%s2516 + $0x20] sm:$0xff]
        %v2522 = vld [vmem:[%s2516 + $0x28] sm:$0xff]
        %v2523 = vld [vmem:[%s2516 + $0x30] sm:$0xff]
        %v2524 = vld [vmem:[%s2516 + $0x38] sm:$0xff]
        %v2525 = vld [vmem:[%s2516 + $0x40] sm:$0xff]
        %v2526 = vld [vmem:[%s2516 + $0x48] sm:$0xff]
        %v2527 = vld [vmem:[%s2516 + $0x50] sm:$0xff]
        %v2528 = vld [vmem:[%s2516 + $0x58] sm:$0xff]
        %v2529 = vld [vmem:[%s2516 + $0x60] sm:$0xff]
        %v2530 = vld [vmem:[%s2516 + $0x68] sm:$0xff]
        %v2531 = vld [vmem:[%s2516 + $0x70] sm:$0xff]
        %v2532 = vld [vmem:[%s2516 + $0x78] sm:$0xff]
        %v2533 = vld [vmem:[%s2516 + $0x80] sm:$0xff]
        %v2534 = vld [vmem:[%s2516 + $0x88] sm:$0xff]
        %v2535 = vld [vmem:[%s2516 + $0x90] sm:$0xff]
        %v2536 = vld [vmem:[%s2516 + $0x98] sm:$0xff]
        %v2537 = vld [vmem:[%s2516 + $0xa0] sm:$0xff]
        %v2538 = vld [vmem:[%s2516 + $0xa8] sm:$0xff]
        %v2539 = vld [vmem:[%s2516 + $0xb0] sm:$0xff]
        %v2540 = vld [vmem:[%s2516 + $0xb8] sm:$0xff]
        %v2541 = vld [vmem:[%s2516 + $0xc0] sm:$0xff]
        %v2542 = vld [vmem:[%s2516 + $0xc8] sm:$0xff]
        %v2543 = vld [vmem:[%s2516 + $0xd0] sm:$0xff]
        %v2544 = vld [vmem:[%s2516 + $0xd8] sm:$0xff]
        %v2545 = vld [vmem:[%s2516 + $0xe0] sm:$0xff]
        %v2546 = vld [vmem:[%s2516 + $0xe8] sm:$0xff]
        %v2547 = vld [vmem:[%s2516 + $0xf0] sm:$0xff]
        %v2548 = vld [vmem:[%s2516 + $0xf8] sm:$0xff]
        %v2549 = vld [vmem:[%s2516 + $0x100] sm:$0xff]
        %v2550 = vld [vmem:[%s2516 + $0x108] sm:$0xff]
        %v2551 = vld [vmem:[%s2516 + $0x110] sm:$0xff]
        %v2552 = vld [vmem:[%s2516 + $0x118] sm:$0xff]
        %v2553 = vld [vmem:[%s2516 + $0x120] sm:$0xff]
        %v2554 = vld [vmem:[%s2516 + $0x128] sm:$0xff]
        %v2555 = vld [vmem:[%s2516 + $0x130] sm:$0xff]
        %v2556 = vld [vmem:[%s2516 + $0x138] sm:$0xff]
        %v2557 = vld [vmem:[%s2516 + $0x140] sm:$0xff]
        %v2558 = vld [vmem:[%s2516 + $0x148] sm:$0xff]
        %v2559 = vld [vmem:[%s2516 + $0x150] sm:$0xff]
        %v2560 = vld [vmem:[%s2516 + $0x158] sm:$0xff]
        %v2561 = vld [vmem:[%s2516 + $0x160] sm:$0xff]
        %v2562 = vld [vmem:[%s2516 + $0x168] sm:$0xff]
        %v2563 = vld [vmem:[%s2516 + $0x170] sm:$0xff]
        %v2564 = vld [vmem:[%s2516 + $0x178] sm:$0xff]
        %v2565 = vld [vmem:[%s2516 + $0x180] sm:$0xff]
        %v2566 = vld [vmem:[%s2516 + $0x188] sm:$0xff]
        %v2567 = vld [vmem:[%s2516 + $0x190] sm:$0xff]
        %v2568 = vld [vmem:[%s2516 + $0x198] sm:$0xff]
        %v2569 = vld [vmem:[%s2516 + $0x1a0] sm:$0xff]
        %v2570 = vld [vmem:[%s2516 + $0x1a8] sm:$0xff]
        %v2571 = vld [vmem:[%s2516 + $0x1b0] sm:$0xff]
        %v2572 = vld [vmem:[%s2516 + $0x1b8] sm:$0xff]
        %v2573 = vld [vmem:[%s2516 + $0x1c0] sm:$0xff]
        %v2574 = vld [vmem:[%s2516 + $0x1c8] sm:$0xff]
        %v2575 = vld [vmem:[%s2516 + $0x1d0] sm:$0xff]
        %v2576 = vld [vmem:[%s2516 + $0x1d8] sm:$0xff]
        %v2577 = vld [vmem:[%s2516 + $0x1e0] sm:$0xff]
        %v2578 = vld [vmem:[%s2516 + $0x1e8] sm:$0xff]
        %v2579 = vld [vmem:[%s2516 + $0x1f0] sm:$0xff]
        %v2580 = vld [vmem:[%s2516 + $0x1f8] sm:$0xff]
        %2581 = vmatpush.msra.mxu0 %v2547
        %2582 = vmatpush.msra.mxu0 %v2545
        %2583 = vmatpush.msra.mxu0 %v2543
        %2584 = vmatpush.msra.mxu0 %v2541
        %2585 = vmatpush.msra.mxu0 %v2539
        %2586 = vmatpush.msra.mxu0 %v2537
        %2587 = vmatpush.msra.mxu0 %v2535
        %2588 = vmatpush.msra.mxu0 %v2533
        %2589 = vmatpush.msra.mxu0 %v2531
        %2590 = vmatpush.msra.mxu0 %v2529
        %2591 = vmatpush.msra.mxu0 %v2527
        %2592 = vmatpush.msra.mxu0 %v2525
        %2593 = vmatpush.msra.mxu0 %v2523
        %2594 = vmatpush.msra.mxu0 %v2521
        %2595 = vmatpush.msra.mxu0 %v2519
        %2596 = vmatpush.msra.mxu0 %v2517
        %2597 = vmatmul.f32.gmra.mxu0 %v763
        %v2598 = vpop.f32.mrf.mxu0
        %v2599 = vadd.f32 0.0, %v2598
        %2600 = vmatmul.f32.gmra.mxu0 %v765
        %v2601 = vpop.f32.mrf.mxu0
        %v2602 = vadd.f32 0.0, %v2601
        %2603 = vdwg.mxu0
        %2604 = vmatpush.msra.mxu0 %v2579
        %2605 = vmatpush.msra.mxu0 %v2577
        %2606 = vmatpush.msra.mxu0 %v2575
        %2607 = vmatpush.msra.mxu0 %v2573
        %2608 = vmatpush.msra.mxu0 %v2571
        %2609 = vmatpush.msra.mxu0 %v2569
        %2610 = vmatpush.msra.mxu0 %v2567
        %2611 = vmatpush.msra.mxu0 %v2565
        %2612 = vmatpush.msra.mxu0 %v2563
        %2613 = vmatpush.msra.mxu0 %v2561
        %2614 = vmatpush.msra.mxu0 %v2559
        %2615 = vmatpush.msra.mxu0 %v2557
        %2616 = vmatpush.msra.mxu0 %v2555
        %2617 = vmatpush.msra.mxu0 %v2553
        %2618 = vmatpush.msra.mxu0 %v2551
        %2619 = vmatpush.msra.mxu0 %v2549
        %2620 = vmatmul.f32.gmra.mxu0 %v764
        %v2621 = vpop.f32.mrf.mxu0
        %v2622 = vadd.f32 %v2599, %v2621
        %2623 = vmatmul.f32.gmra.mxu0 %v766
        %v2624 = vpop.f32.mrf.mxu0
        %v2625 = vadd.f32 %v2602, %v2624
        %2626 = vdwg.mxu0
        %2627 = vmatpush.msra.mxu0 %v2548
        %2628 = vmatpush.msra.mxu0 %v2546
        %2629 = vmatpush.msra.mxu0 %v2544
        %2630 = vmatpush.msra.mxu0 %v2542
        %2631 = vmatpush.msra.mxu0 %v2540
        %2632 = vmatpush.msra.mxu0 %v2538
        %2633 = vmatpush.msra.mxu0 %v2536
        %2634 = vmatpush.msra.mxu0 %v2534
        %2635 = vmatpush.msra.mxu0 %v2532
        %2636 = vmatpush.msra.mxu0 %v2530
        %2637 = vmatpush.msra.mxu0 %v2528
        %2638 = vmatpush.msra.mxu0 %v2526
        %2639 = vmatpush.msra.mxu0 %v2524
        %2640 = vmatpush.msra.mxu0 %v2522
        %2641 = vmatpush.msra.mxu0 %v2520
        %2642 = vmatpush.msra.mxu0 %v2518
        %2643 = vmatmul.f32.gmra.mxu0 %v763
        %v2644 = vpop.f32.mrf.mxu0
        %v2645 = vadd.f32 0.0, %v2644
        %2646 = vmatmul.f32.gmra.mxu0 %v765
        %v2647 = vpop.f32.mrf.mxu0
        %v2648 = vadd.f32 0.0, %v2647
        %2649 = vdwg.mxu0
        %2650 = vmatpush.msra.mxu0 %v2580
        %2651 = vmatpush.msra.mxu0 %v2578
        %2652 = vmatpush.msra.mxu0 %v2576
        %2653 = vmatpush.msra.mxu0 %v2574
        %2654 = vmatpush.msra.mxu0 %v2572
        %2655 = vmatpush.msra.mxu0 %v2570
        %2656 = vmatpush.msra.mxu0 %v2568
        %2657 = vmatpush.msra.mxu0 %v2566
        %2658 = vmatpush.msra.mxu0 %v2564
        %2659 = vmatpush.msra.mxu0 %v2562
        %2660 = vmatpush.msra.mxu0 %v2560
        %2661 = vmatpush.msra.mxu0 %v2558
        %2662 = vmatpush.msra.mxu0 %v2556
        %2663 = vmatpush.msra.mxu0 %v2554
        %2664 = vmatpush.msra.mxu0 %v2552
        %2665 = vmatpush.msra.mxu0 %v2550
        %2666 = vmatmul.f32.gmra.mxu0 %v764
        %v2667 = vpop.f32.mrf.mxu0
        %v2668 = vadd.f32 %v2645, %v2667
        %2669 = vmatmul.f32.gmra.mxu0 %v766
        %v2670 = vpop.f32.mrf.mxu0
        %v2671 = vadd.f32 %v2648, %v2670
        %2672 = vdwg.mxu0
        %2673 = vset.pattern.permute.xlu0 6
        %2674 = vperm.xlu0 %2673, %v1475
        %v2675 = vpop.permute.xlu0 %2674
        %2677 = vset.pattern.permute.xlu0 6
        %2678 = vperm.xlu0 %2677, %v1476
        %v2679 = vpop.permute.xlu0 %2678
        %v2681 = vmul.f32 %v2675, %v2622
        %v2682 = vmul.f32 %v2675, %v2668
        %v2683 = vmul.f32 %v2679, %v2625
        %v2684 = vmul.f32 %v2679, %v2671
        %v2685 = vadd.f32 %v2512, %v2681
        %v2686 = vadd.f32 %v2513, %v2682
        %v2687 = vadd.f32 %v2514, %v2683
        %v2688 = vadd.f32 %v2515, %v2684
        %s2689 = scalar_lea.vmem [#allocation8], 3584
        %v2690 = vld [vmem:[%s2689] sm:$0xff]
        %v2691 = vld [vmem:[%s2689 + $0x8] sm:$0xff]
        %v2692 = vld [vmem:[%s2689 + $0x10] sm:$0xff]
        %v2693 = vld [vmem:[%s2689 + $0x18] sm:$0xff]
        %v2694 = vld [vmem:[%s2689 + $0x20] sm:$0xff]
        %v2695 = vld [vmem:[%s2689 + $0x28] sm:$0xff]
        %v2696 = vld [vmem:[%s2689 + $0x30] sm:$0xff]
        %v2697 = vld [vmem:[%s2689 + $0x38] sm:$0xff]
        %v2698 = vld [vmem:[%s2689 + $0x40] sm:$0xff]
        %v2699 = vld [vmem:[%s2689 + $0x48] sm:$0xff]
        %v2700 = vld [vmem:[%s2689 + $0x50] sm:$0xff]
        %v2701 = vld [vmem:[%s2689 + $0x58] sm:$0xff]
        %v2702 = vld [vmem:[%s2689 + $0x60] sm:$0xff]
        %v2703 = vld [vmem:[%s2689 + $0x68] sm:$0xff]
        %v2704 = vld [vmem:[%s2689 + $0x70] sm:$0xff]
        %v2705 = vld [vmem:[%s2689 + $0x78] sm:$0xff]
        %v2706 = vld [vmem:[%s2689 + $0x80] sm:$0xff]
        %v2707 = vld [vmem:[%s2689 + $0x88] sm:$0xff]
        %v2708 = vld [vmem:[%s2689 + $0x90] sm:$0xff]
        %v2709 = vld [vmem:[%s2689 + $0x98] sm:$0xff]
        %v2710 = vld [vmem:[%s2689 + $0xa0] sm:$0xff]
        %v2711 = vld [vmem:[%s2689 + $0xa8] sm:$0xff]
        %v2712 = vld [vmem:[%s2689 + $0xb0] sm:$0xff]
        %v2713 = vld [vmem:[%s2689 + $0xb8] sm:$0xff]
        %v2714 = vld [vmem:[%s2689 + $0xc0] sm:$0xff]
        %v2715 = vld [vmem:[%s2689 + $0xc8] sm:$0xff]
        %v2716 = vld [vmem:[%s2689 + $0xd0] sm:$0xff]
        %v2717 = vld [vmem:[%s2689 + $0xd8] sm:$0xff]
        %v2718 = vld [vmem:[%s2689 + $0xe0] sm:$0xff]
        %v2719 = vld [vmem:[%s2689 + $0xe8] sm:$0xff]
        %v2720 = vld [vmem:[%s2689 + $0xf0] sm:$0xff]
        %v2721 = vld [vmem:[%s2689 + $0xf8] sm:$0xff]
        %v2722 = vld [vmem:[%s2689 + $0x100] sm:$0xff]
        %v2723 = vld [vmem:[%s2689 + $0x108] sm:$0xff]
        %v2724 = vld [vmem:[%s2689 + $0x110] sm:$0xff]
        %v2725 = vld [vmem:[%s2689 + $0x118] sm:$0xff]
        %v2726 = vld [vmem:[%s2689 + $0x120] sm:$0xff]
        %v2727 = vld [vmem:[%s2689 + $0x128] sm:$0xff]
        %v2728 = vld [vmem:[%s2689 + $0x130] sm:$0xff]
        %v2729 = vld [vmem:[%s2689 + $0x138] sm:$0xff]
        %v2730 = vld [vmem:[%s2689 + $0x140] sm:$0xff]
        %v2731 = vld [vmem:[%s2689 + $0x148] sm:$0xff]
        %v2732 = vld [vmem:[%s2689 + $0x150] sm:$0xff]
        %v2733 = vld [vmem:[%s2689 + $0x158] sm:$0xff]
        %v2734 = vld [vmem:[%s2689 + $0x160] sm:$0xff]
        %v2735 = vld [vmem:[%s2689 + $0x168] sm:$0xff]
        %v2736 = vld [vmem:[%s2689 + $0x170] sm:$0xff]
        %v2737 = vld [vmem:[%s2689 + $0x178] sm:$0xff]
        %v2738 = vld [vmem:[%s2689 + $0x180] sm:$0xff]
        %v2739 = vld [vmem:[%s2689 + $0x188] sm:$0xff]
        %v2740 = vld [vmem:[%s2689 + $0x190] sm:$0xff]
        %v2741 = vld [vmem:[%s2689 + $0x198] sm:$0xff]
        %v2742 = vld [vmem:[%s2689 + $0x1a0] sm:$0xff]
        %v2743 = vld [vmem:[%s2689 + $0x1a8] sm:$0xff]
        %v2744 = vld [vmem:[%s2689 + $0x1b0] sm:$0xff]
        %v2745 = vld [vmem:[%s2689 + $0x1b8] sm:$0xff]
        %v2746 = vld [vmem:[%s2689 + $0x1c0] sm:$0xff]
        %v2747 = vld [vmem:[%s2689 + $0x1c8] sm:$0xff]
        %v2748 = vld [vmem:[%s2689 + $0x1d0] sm:$0xff]
        %v2749 = vld [vmem:[%s2689 + $0x1d8] sm:$0xff]
        %v2750 = vld [vmem:[%s2689 + $0x1e0] sm:$0xff]
        %v2751 = vld [vmem:[%s2689 + $0x1e8] sm:$0xff]
        %v2752 = vld [vmem:[%s2689 + $0x1f0] sm:$0xff]
        %v2753 = vld [vmem:[%s2689 + $0x1f8] sm:$0xff]
        %2754 = vmatpush.msra.mxu0 %v2720
        %2755 = vmatpush.msra.mxu0 %v2718
        %2756 = vmatpush.msra.mxu0 %v2716
        %2757 = vmatpush.msra.mxu0 %v2714
        %2758 = vmatpush.msra.mxu0 %v2712
        %2759 = vmatpush.msra.mxu0 %v2710
        %2760 = vmatpush.msra.mxu0 %v2708
        %2761 = vmatpush.msra.mxu0 %v2706
        %2762 = vmatpush.msra.mxu0 %v2704
        %2763 = vmatpush.msra.mxu0 %v2702
        %2764 = vmatpush.msra.mxu0 %v2700
        %2765 = vmatpush.msra.mxu0 %v2698
        %2766 = vmatpush.msra.mxu0 %v2696
        %2767 = vmatpush.msra.mxu0 %v2694
        %2768 = vmatpush.msra.mxu0 %v2692
        %2769 = vmatpush.msra.mxu0 %v2690
        %2770 = vmatmul.f32.gmra.mxu0 %v763
        %v2771 = vpop.f32.mrf.mxu0
        %v2772 = vadd.f32 0.0, %v2771
        %2773 = vmatmul.f32.gmra.mxu0 %v765
        %v2774 = vpop.f32.mrf.mxu0
        %v2775 = vadd.f32 0.0, %v2774
        %2776 = vdwg.mxu0
        %2777 = vmatpush.msra.mxu0 %v2752
        %2778 = vmatpush.msra.mxu0 %v2750
        %2779 = vmatpush.msra.mxu0 %v2748
        %2780 = vmatpush.msra.mxu0 %v2746
        %2781 = vmatpush.msra.mxu0 %v2744
        %2782 = vmatpush.msra.mxu0 %v2742
        %2783 = vmatpush.msra.mxu0 %v2740
        %2784 = vmatpush.msra.mxu0 %v2738
        %2785 = vmatpush.msra.mxu0 %v2736
        %2786 = vmatpush.msra.mxu0 %v2734
        %2787 = vmatpush.msra.mxu0 %v2732
        %2788 = vmatpush.msra.mxu0 %v2730
        %2789 = vmatpush.msra.mxu0 %v2728
        %2790 = vmatpush.msra.mxu0 %v2726
        %2791 = vmatpush.msra.mxu0 %v2724
        %2792 = vmatpush.msra.mxu0 %v2722
        %2793 = vmatmul.f32.gmra.mxu0 %v764
        %v2794 = vpop.f32.mrf.mxu0
        %v2795 = vadd.f32 %v2772, %v2794
        %2796 = vmatmul.f32.gmra.mxu0 %v766
        %v2797 = vpop.f32.mrf.mxu0
        %v2798 = vadd.f32 %v2775, %v2797
        %2799 = vdwg.mxu0
        %2800 = vmatpush.msra.mxu0 %v2721
        %2801 = vmatpush.msra.mxu0 %v2719
        %2802 = vmatpush.msra.mxu0 %v2717
        %2803 = vmatpush.msra.mxu0 %v2715
        %2804 = vmatpush.msra.mxu0 %v2713
        %2805 = vmatpush.msra.mxu0 %v2711
        %2806 = vmatpush.msra.mxu0 %v2709
        %2807 = vmatpush.msra.mxu0 %v2707
        %2808 = vmatpush.msra.mxu0 %v2705
        %2809 = vmatpush.msra.mxu0 %v2703
        %2810 = vmatpush.msra.mxu0 %v2701
        %2811 = vmatpush.msra.mxu0 %v2699
        %2812 = vmatpush.msra.mxu0 %v2697
        %2813 = vmatpush.msra.mxu0 %v2695
        %2814 = vmatpush.msra.mxu0 %v2693
        %2815 = vmatpush.msra.mxu0 %v2691
        %2816 = vmatmul.f32.gmra.mxu0 %v763
        %v2817 = vpop.f32.mrf.mxu0
        %v2818 = vadd.f32 0.0, %v2817
        %2819 = vmatmul.f32.gmra.mxu0 %v765
        %v2820 = vpop.f32.mrf.mxu0
        %v2821 = vadd.f32 0.0, %v2820
        %2822 = vdwg.mxu0
        %2823 = vmatpush.msra.mxu0 %v2753
        %2824 = vmatpush.msra.mxu0 %v2751
        %2825 = vmatpush.msra.mxu0 %v2749
        %2826 = vmatpush.msra.mxu0 %v2747
        %2827 = vmatpush.msra.mxu0 %v2745
        %2828 = vmatpush.msra.mxu0 %v2743
        %2829 = vmatpush.msra.mxu0 %v2741
        %2830 = vmatpush.msra.mxu0 %v2739
        %2831 = vmatpush.msra.mxu0 %v2737
        %2832 = vmatpush.msra.mxu0 %v2735
        %2833 = vmatpush.msra.mxu0 %v2733
        %2834 = vmatpush.msra.mxu0 %v2731
        %2835 = vmatpush.msra.mxu0 %v2729
        %2836 = vmatpush.msra.mxu0 %v2727
        %2837 = vmatpush.msra.mxu0 %v2725
        %2838 = vmatpush.msra.mxu0 %v2723
        %2839 = vmatmul.f32.gmra.mxu0 %v764
        %v2840 = vpop.f32.mrf.mxu0
        %v2841 = vadd.f32 %v2818, %v2840
        %2842 = vmatmul.f32.gmra.mxu0 %v766
        %v2843 = vpop.f32.mrf.mxu0
        %v2844 = vadd.f32 %v2821, %v2843
        %2845 = vdwg.mxu0
        %2846 = vset.pattern.permute.xlu0 7
        %2847 = vperm.xlu0 %2846, %v1475
        %v2848 = vpop.permute.xlu0 %2847
        %2850 = vset.pattern.permute.xlu0 7
        %2851 = vperm.xlu0 %2850, %v1476
        %v2852 = vpop.permute.xlu0 %2851
        %v2854 = vmul.f32 %v2848, %v2795
        %v2855 = vmul.f32 %v2848, %v2841
        %v2856 = vmul.f32 %v2852, %v2798
        %v2857 = vmul.f32 %v2852, %v2844
        %v2858 = vadd.f32 %v2685, %v2854
        %v2859 = vadd.f32 %v2686, %v2855
        %v2860 = vadd.f32 %v2687, %v2856
        %v2861 = vadd.f32 %v2688, %v2857
        %s2862 = scalar_lea.vmem [#allocation8], 4096
        %v2863 = vld [vmem:[%s2862] sm:$0xff]
        %v2864 = vld [vmem:[%s2862 + $0x8] sm:$0xff]
        %v2865 = vld [vmem:[%s2862 + $0x10] sm:$0xff]
        %v2866 = vld [vmem:[%s2862 + $0x18] sm:$0xff]
        %v2867 = vld [vmem:[%s2862 + $0x20] sm:$0xff]
        %v2868 = vld [vmem:[%s2862 + $0x28] sm:$0xff]
        %v2869 = vld [vmem:[%s2862 + $0x30] sm:$0xff]
        %v2870 = vld [vmem:[%s2862 + $0x38] sm:$0xff]
        %v2871 = vld [vmem:[%s2862 + $0x40] sm:$0xff]
        %v2872 = vld [vmem:[%s2862 + $0x48] sm:$0xff]
        %v2873 = vld [vmem:[%s2862 + $0x50] sm:$0xff]
        %v2874 = vld [vmem:[%s2862 + $0x58] sm:$0xff]
        %v2875 = vld [vmem:[%s2862 + $0x60] sm:$0xff]
        %v2876 = vld [vmem:[%s2862 + $0x68] sm:$0xff]
        %v2877 = vld [vmem:[%s2862 + $0x70] sm:$0xff]
        %v2878 = vld [vmem:[%s2862 + $0x78] sm:$0xff]
        %v2879 = vld [vmem:[%s2862 + $0x80] sm:$0xff]
        %v2880 = vld [vmem:[%s2862 + $0x88] sm:$0xff]
        %v2881 = vld [vmem:[%s2862 + $0x90] sm:$0xff]
        %v2882 = vld [vmem:[%s2862 + $0x98] sm:$0xff]
        %v2883 = vld [vmem:[%s2862 + $0xa0] sm:$0xff]
        %v2884 = vld [vmem:[%s2862 + $0xa8] sm:$0xff]
        %v2885 = vld [vmem:[%s2862 + $0xb0] sm:$0xff]
        %v2886 = vld [vmem:[%s2862 + $0xb8] sm:$0xff]
        %v2887 = vld [vmem:[%s2862 + $0xc0] sm:$0xff]
        %v2888 = vld [vmem:[%s2862 + $0xc8] sm:$0xff]
        %v2889 = vld [vmem:[%s2862 + $0xd0] sm:$0xff]
        %v2890 = vld [vmem:[%s2862 + $0xd8] sm:$0xff]
        %v2891 = vld [vmem:[%s2862 + $0xe0] sm:$0xff]
        %v2892 = vld [vmem:[%s2862 + $0xe8] sm:$0xff]
        %v2893 = vld [vmem:[%s2862 + $0xf0] sm:$0xff]
        %v2894 = vld [vmem:[%s2862 + $0xf8] sm:$0xff]
        %v2895 = vld [vmem:[%s2862 + $0x100] sm:$0xff]
        %v2896 = vld [vmem:[%s2862 + $0x108] sm:$0xff]
        %v2897 = vld [vmem:[%s2862 + $0x110] sm:$0xff]
        %v2898 = vld [vmem:[%s2862 + $0x118] sm:$0xff]
        %v2899 = vld [vmem:[%s2862 + $0x120] sm:$0xff]
        %v2900 = vld [vmem:[%s2862 + $0x128] sm:$0xff]
        %v2901 = vld [vmem:[%s2862 + $0x130] sm:$0xff]
        %v2902 = vld [vmem:[%s2862 + $0x138] sm:$0xff]
        %v2903 = vld [vmem:[%s2862 + $0x140] sm:$0xff]
        %v2904 = vld [vmem:[%s2862 + $0x148] sm:$0xff]
        %v2905 = vld [vmem:[%s2862 + $0x150] sm:$0xff]
        %v2906 = vld [vmem:[%s2862 + $0x158] sm:$0xff]
        %v2907 = vld [vmem:[%s2862 + $0x160] sm:$0xff]
        %v2908 = vld [vmem:[%s2862 + $0x168] sm:$0xff]
        %v2909 = vld [vmem:[%s2862 + $0x170] sm:$0xff]
        %v2910 = vld [vmem:[%s2862 + $0x178] sm:$0xff]
        %v2911 = vld [vmem:[%s2862 + $0x180] sm:$0xff]
        %v2912 = vld [vmem:[%s2862 + $0x188] sm:$0xff]
        %v2913 = vld [vmem:[%s2862 + $0x190] sm:$0xff]
        %v2914 = vld [vmem:[%s2862 + $0x198] sm:$0xff]
        %v2915 = vld [vmem:[%s2862 + $0x1a0] sm:$0xff]
        %v2916 = vld [vmem:[%s2862 + $0x1a8] sm:$0xff]
        %v2917 = vld [vmem:[%s2862 + $0x1b0] sm:$0xff]
        %v2918 = vld [vmem:[%s2862 + $0x1b8] sm:$0xff]
        %v2919 = vld [vmem:[%s2862 + $0x1c0] sm:$0xff]
        %v2920 = vld [vmem:[%s2862 + $0x1c8] sm:$0xff]
        %v2921 = vld [vmem:[%s2862 + $0x1d0] sm:$0xff]
        %v2922 = vld [vmem:[%s2862 + $0x1d8] sm:$0xff]
        %v2923 = vld [vmem:[%s2862 + $0x1e0] sm:$0xff]
        %v2924 = vld [vmem:[%s2862 + $0x1e8] sm:$0xff]
        %v2925 = vld [vmem:[%s2862 + $0x1f0] sm:$0xff]
        %v2926 = vld [vmem:[%s2862 + $0x1f8] sm:$0xff]
        %2927 = vmatpush.msra.mxu0 %v2893
        %2928 = vmatpush.msra.mxu0 %v2891
        %2929 = vmatpush.msra.mxu0 %v2889
        %2930 = vmatpush.msra.mxu0 %v2887
        %2931 = vmatpush.msra.mxu0 %v2885
        %2932 = vmatpush.msra.mxu0 %v2883
        %2933 = vmatpush.msra.mxu0 %v2881
        %2934 = vmatpush.msra.mxu0 %v2879
        %2935 = vmatpush.msra.mxu0 %v2877
        %2936 = vmatpush.msra.mxu0 %v2875
        %2937 = vmatpush.msra.mxu0 %v2873
        %2938 = vmatpush.msra.mxu0 %v2871
        %2939 = vmatpush.msra.mxu0 %v2869
        %2940 = vmatpush.msra.mxu0 %v2867
        %2941 = vmatpush.msra.mxu0 %v2865
        %2942 = vmatpush.msra.mxu0 %v2863
        %2943 = vmatmul.f32.gmra.mxu0 %v763
        %v2944 = vpop.f32.mrf.mxu0
        %v2945 = vadd.f32 0.0, %v2944
        %2946 = vmatmul.f32.gmra.mxu0 %v765
        %v2947 = vpop.f32.mrf.mxu0
        %v2948 = vadd.f32 0.0, %v2947
        %2949 = vdwg.mxu0
        %2950 = vmatpush.msra.mxu0 %v2925
        %2951 = vmatpush.msra.mxu0 %v2923
        %2952 = vmatpush.msra.mxu0 %v2921
        %2953 = vmatpush.msra.mxu0 %v2919
        %2954 = vmatpush.msra.mxu0 %v2917
        %2955 = vmatpush.msra.mxu0 %v2915
        %2956 = vmatpush.msra.mxu0 %v2913
        %2957 = vmatpush.msra.mxu0 %v2911
        %2958 = vmatpush.msra.mxu0 %v2909
        %2959 = vmatpush.msra.mxu0 %v2907
        %2960 = vmatpush.msra.mxu0 %v2905
        %2961 = vmatpush.msra.mxu0 %v2903
        %2962 = vmatpush.msra.mxu0 %v2901
        %2963 = vmatpush.msra.mxu0 %v2899
        %2964 = vmatpush.msra.mxu0 %v2897
        %2965 = vmatpush.msra.mxu0 %v2895
        %2966 = vmatmul.f32.gmra.mxu0 %v764
        %v2967 = vpop.f32.mrf.mxu0
        %v2968 = vadd.f32 %v2945, %v2967
        %2969 = vmatmul.f32.gmra.mxu0 %v766
        %v2970 = vpop.f32.mrf.mxu0
        %v2971 = vadd.f32 %v2948, %v2970
        %2972 = vdwg.mxu0
        %2973 = vmatpush.msra.mxu0 %v2894
        %2974 = vmatpush.msra.mxu0 %v2892
        %2975 = vmatpush.msra.mxu0 %v2890
        %2976 = vmatpush.msra.mxu0 %v2888
        %2977 = vmatpush.msra.mxu0 %v2886
        %2978 = vmatpush.msra.mxu0 %v2884
        %2979 = vmatpush.msra.mxu0 %v2882
        %2980 = vmatpush.msra.mxu0 %v2880
        %2981 = vmatpush.msra.mxu0 %v2878
        %2982 = vmatpush.msra.mxu0 %v2876
        %2983 = vmatpush.msra.mxu0 %v2874
        %2984 = vmatpush.msra.mxu0 %v2872
        %2985 = vmatpush.msra.mxu0 %v2870
        %2986 = vmatpush.msra.mxu0 %v2868
        %2987 = vmatpush.msra.mxu0 %v2866
        %2988 = vmatpush.msra.mxu0 %v2864
        %2989 = vmatmul.f32.gmra.mxu0 %v763
        %v2990 = vpop.f32.mrf.mxu0
        %v2991 = vadd.f32 0.0, %v2990
        %2992 = vmatmul.f32.gmra.mxu0 %v765
        %v2993 = vpop.f32.mrf.mxu0
        %v2994 = vadd.f32 0.0, %v2993
        %2995 = vdwg.mxu0
        %2996 = vmatpush.msra.mxu0 %v2926
        %2997 = vmatpush.msra.mxu0 %v2924
        %2998 = vmatpush.msra.mxu0 %v2922
        %2999 = vmatpush.msra.mxu0 %v2920
        %3000 = vmatpush.msra.mxu0 %v2918
        %3001 = vmatpush.msra.mxu0 %v2916
        %3002 = vmatpush.msra.mxu0 %v2914
        %3003 = vmatpush.msra.mxu0 %v2912
        %3004 = vmatpush.msra.mxu0 %v2910
        %3005 = vmatpush.msra.mxu0 %v2908
        %3006 = vmatpush.msra.mxu0 %v2906
        %3007 = vmatpush.msra.mxu0 %v2904
        %3008 = vmatpush.msra.mxu0 %v2902
        %3009 = vmatpush.msra.mxu0 %v2900
        %3010 = vmatpush.msra.mxu0 %v2898
        %3011 = vmatpush.msra.mxu0 %v2896
        %3012 = vmatmul.f32.gmra.mxu0 %v764
        %v3013 = vpop.f32.mrf.mxu0
        %v3014 = vadd.f32 %v2991, %v3013
        %3015 = vmatmul.f32.gmra.mxu0 %v766
        %v3016 = vpop.f32.mrf.mxu0
        %v3017 = vadd.f32 %v2994, %v3016
        %3018 = vdwg.mxu0
        %3019 = vset.pattern.permute.xlu0 8
        %3020 = vperm.xlu0 %3019, %v1475
        %v3021 = vpop.permute.xlu0 %3020
        %3023 = vset.pattern.permute.xlu0 8
        %3024 = vperm.xlu0 %3023, %v1476
        %v3025 = vpop.permute.xlu0 %3024
        %v3027 = vmul.f32 %v3021, %v2968
        %v3028 = vmul.f32 %v3021, %v3014
        %v3029 = vmul.f32 %v3025, %v2971
        %v3030 = vmul.f32 %v3025, %v3017
        %v3031 = vadd.f32 %v2858, %v3027
        %v3032 = vadd.f32 %v2859, %v3028
        %v3033 = vadd.f32 %v2860, %v3029
        %v3034 = vadd.f32 %v2861, %v3030
        %v3035 = vld [vmem:[%s6] sm:$0xff]
        %v3036 = vld [vmem:[%s6 + $0x8] sm:$0xff]
        %3038 = vset.pattern.permute.xlu0 0
        %3039 = vperm.xlu0 %3038, %v3035
        %v3040 = vpop.permute.xlu0 %3039
        %3043 = vset.pattern.permute.xlu0 0
        %3044 = vperm.xlu0 %3043, %v3036
        %v3045 = vpop.permute.xlu0 %3044
        %v3047 = vadd.f32 %v3031, %v3040
        %v3048 = vadd.f32 %v3032, %v3040
        %v3049 = vadd.f32 %v3033, %v3045
        %v3050 = vadd.f32 %v3034, %v3045
        %v3051 = vand.u32 2147483647, %v3047
        %v3052 = vand.u32 2147483647, %v3048
        %v3053 = vand.u32 2147483647, %v3049
        %v3054 = vand.u32 2147483647, %v3050
        %v3055 = vmul.f32 %v3051, 0.70710677
        %v3056 = vmul.f32 %v3052, 0.70710677
        %v3057 = vmul.f32 %v3053, 0.70710677
        %v3058 = vmul.f32 %v3054, 0.70710677
        %v3059 = vmul.f32 %v3055, 0.3275911
        %v3060 = vmul.f32 %v3056, 0.3275911
        %v3061 = vmul.f32 %v3057, 0.3275911
        %v3062 = vmul.f32 %v3058, 0.3275911
        %v3063 = vadd.f32 %v3059, 1.0
        %v3064 = vadd.f32 %v3060, 1.0
        %v3065 = vadd.f32 %v3061, 1.0
        %v3066 = vadd.f32 %v3062, 1.0
        %v3067 = vrcp.pop %v3063
        %v3068 = vmul.f32 %v3063, %v3067
        %v3069 = vsub.f32 1.0, %v3068
        %v3070 = vmul.f32 %v3067, %v3069
        %v3071 = vadd.f32 %v3067, %v3070
        %vm3072 = vweird.f32 %v3063
        %vm3073 = vweird.f32 %v3067
        %vm3074 = vmor %vm3072, %vm3073
        %v3075 = vsel %vm3074, %v3067, %v3071
        %v3076 = vand.u32 2147483647, %v3063
        %vm3077 = vcmp.eq.f32.partialorder %v3076, 8.507059e+37
        %v3078 = vand.u32 %v3063, 2147483648
        %v3079 = vor.u32 1.1754944e-38, %v3078
        %v3080 = vsel %vm3077, %v3079, %v3075
        %v3081 = vmul.f32 1.0, %v3080
        %v3082 = vrcp.pop %v3064
        %v3083 = vmul.f32 %v3064, %v3082
        %v3084 = vsub.f32 1.0, %v3083
        %v3085 = vmul.f32 %v3082, %v3084
        %v3086 = vadd.f32 %v3082, %v3085
        %vm3087 = vweird.f32 %v3064
        %vm3088 = vweird.f32 %v3082
        %vm3089 = vmor %vm3087, %vm3088
        %v3090 = vsel %vm3089, %v3082, %v3086
        %v3091 = vand.u32 2147483647, %v3064
        %vm3092 = vcmp.eq.f32.partialorder %v3091, 8.507059e+37
        %v3093 = vand.u32 %v3064, 2147483648
        %v3094 = vor.u32 1.1754944e-38, %v3093
        %v3095 = vsel %vm3092, %v3094, %v3090
        %v3096 = vmul.f32 1.0, %v3095
        %v3097 = vrcp.pop %v3065
        %v3098 = vmul.f32 %v3065, %v3097
        %v3099 = vsub.f32 1.0, %v3098
        %v3100 = vmul.f32 %v3097, %v3099
        %v3101 = vadd.f32 %v3097, %v3100
        %vm3102 = vweird.f32 %v3065
        %vm3103 = vweird.f32 %v3097
        %vm3104 = vmor %vm3102, %vm3103
        %v3105 = vsel %vm3104, %v3097, %v3101
        %v3106 = vand.u32 2147483647, %v3065
        %vm3107 = vcmp.eq.f32.partialorder %v3106, 8.507059e+37
        %v3108 = vand.u32 %v3065, 2147483648
        %v3109 = vor.u32 1.1754944e-38, %v3108
        %v3110 = vsel %vm3107, %v3109, %v3105
        %v3111 = vmul.f32 1.0, %v3110
        %v3112 = vrcp.pop %v3066
        %v3113 = vmul.f32 %v3066, %v3112
        %v3114 = vsub.f32 1.0, %v3113
        %v3115 = vmul.f32 %v3112, %v3114
        %v3116 = vadd.f32 %v3112, %v3115
        %vm3117 = vweird.f32 %v3066
        %vm3118 = vweird.f32 %v3112
        %vm3119 = vmor %vm3117, %vm3118
        %v3120 = vsel %vm3119, %v3112, %v3116
        %v3121 = vand.u32 2147483647, %v3066
        %vm3122 = vcmp.eq.f32.partialorder %v3121, 8.507059e+37
        %v3123 = vand.u32 %v3066, 2147483648
        %v3124 = vor.u32 1.1754944e-38, %v3123
        %v3125 = vsel %vm3122, %v3124, %v3120
        %v3126 = vmul.f32 1.0, %v3125
        %v3127 = vmul.f32 %v3081, 1.0614054
        %v3128 = vmul.f32 %v3096, 1.0614054
        %v3129 = vmul.f32 %v3111, 1.0614054
        %v3130 = vmul.f32 %v3126, 1.0614054
        %v3131 = vsub.f32 %v3127, 1.4531521
        %v3132 = vsub.f32 %v3128, 1.4531521
        %v3133 = vsub.f32 %v3129, 1.4531521
        %v3134 = vsub.f32 %v3130, 1.4531521
        %v3135 = vmul.f32 %v3131, %v3081
        %v3136 = vmul.f32 %v3132, %v3096
        %v3137 = vmul.f32 %v3133, %v3111
        %v3138 = vmul.f32 %v3134, %v3126
        %v3139 = vadd.f32 %v3135, 1.4214138
        %v3140 = vadd.f32 %v3136, 1.4214138
        %v3141 = vadd.f32 %v3137, 1.4214138
        %v3142 = vadd.f32 %v3138, 1.4214138
        %v3143 = vmul.f32 %v3139, %v3081
        %v3144 = vmul.f32 %v3140, %v3096
        %v3145 = vmul.f32 %v3141, %v3111
        %v3146 = vmul.f32 %v3142, %v3126
        %v3147 = vsub.f32 %v3143, 0.28449672
        %v3148 = vsub.f32 %v3144, 0.28449672
        %v3149 = vsub.f32 %v3145, 0.28449672
        %v3150 = vsub.f32 %v3146, 0.28449672
        %v3151 = vmul.f32 %v3147, %v3081
        %v3152 = vmul.f32 %v3148, %v3096
        %v3153 = vmul.f32 %v3149, %v3111
        %v3154 = vmul.f32 %v3150, %v3126
        %v3155 = vadd.f32 %v3151, 0.2548296
        %v3156 = vadd.f32 %v3152, 0.2548296
        %v3157 = vadd.f32 %v3153, 0.2548296
        %v3158 = vadd.f32 %v3154, 0.2548296
        %v3159 = vmul.f32 %v3155, %v3081
        %v3160 = vmul.f32 %v3156, %v3096
        %v3161 = vmul.f32 %v3157, %v3111
        %v3162 = vmul.f32 %v3158, %v3126
        %v3163 = vsub.f32 0.0, %v3055
        %v3164 = vsub.f32 0.0, %v3056
        %v3165 = vsub.f32 0.0, %v3057
        %v3166 = vsub.f32 0.0, %v3058
        %v3167 = vmul.f32 %v3163, %v3055
        %v3168 = vmul.f32 %v3164, %v3056
        %v3169 = vmul.f32 %v3165, %v3057
        %v3170 = vmul.f32 %v3166, %v3058
        %v3171 = vmul.f32 %v3167, 1.442695
        %v3172 = vpow.pop %v3171
        %v3173 = vmul.f32 %v3168, 1.442695
        %v3174 = vpow.pop %v3173
        %v3175 = vmul.f32 %v3169, 1.442695
        %v3176 = vpow.pop %v3175
        %v3177 = vmul.f32 %v3170, 1.442695
        %v3178 = vpow.pop %v3177
        %v3179 = vmul.f32 %v3159, %v3172
        %v3180 = vmul.f32 %v3160, %v3174
        %v3181 = vmul.f32 %v3161, %v3176
        %v3182 = vmul.f32 %v3162, %v3178
        %v3183 = vsub.f32 1.0, %v3179
        %v3184 = vsub.f32 1.0, %v3180
        %v3185 = vsub.f32 1.0, %v3181
        %v3186 = vsub.f32 1.0, %v3182
        %vm3187 = vcmp.ge.f32.partialorder %v3047, 0.0
        %vm3188 = vcmp.ge.f32.partialorder %v3048, 0.0
        %vm3189 = vcmp.ge.f32.partialorder %v3049, 0.0
        %vm3190 = vcmp.ge.f32.partialorder %v3050, 0.0
        %v3191 = vsub.f32 0.0, %v3183
        %v3192 = vsub.f32 0.0, %v3184
        %v3193 = vsub.f32 0.0, %v3185
        %v3194 = vsub.f32 0.0, %v3186
        %v3195 = vsel %vm3187, %v3183, %v3191
        %v3196 = vsel %vm3188, %v3184, %v3192
        %v3197 = vsel %vm3189, %v3185, %v3193
        %v3198 = vsel %vm3190, %v3186, %v3194
        %v3199 = vmul.f32 %v3047, 0.5
        %v3200 = vmul.f32 %v3048, 0.5
        %v3201 = vmul.f32 %v3049, 0.5
        %v3202 = vmul.f32 %v3050, 0.5
        %v3203 = vadd.f32 %v3195, 1.0
        %v3204 = vadd.f32 %v3196, 1.0
        %v3205 = vadd.f32 %v3197, 1.0
        %v3206 = vadd.f32 %v3198, 1.0
        %v3207 = vmul.f32 %v3199, %v3203
        %v3208 = vmul.f32 %v3200, %v3204
        %v3209 = vmul.f32 %v3201, %v3205
        %v3210 = vmul.f32 %v3202, %v3206
        %v3211 = vmul.f32 %v3207, %v3047
        %v3212 = vmul.f32 %v3208, %v3048
        %v3213 = vmul.f32 %v3209, %v3049
        %v3214 = vmul.f32 %v3210, %v3050
        %3215 = vmatpush.msra.mxu0 %v797
        %3216 = vmatpush.msra.mxu0 %v795
        %3217 = vmatpush.msra.mxu0 %v793
        %3218 = vmatpush.msra.mxu0 %v791
        %3219 = vmatpush.msra.mxu0 %v789
        %3220 = vmatpush.msra.mxu0 %v787
        %3221 = vmatpush.msra.mxu0 %v785
        %3222 = vmatpush.msra.mxu0 %v783
        %3223 = vmatpush.msra.mxu0 %v781
        %3224 = vmatpush.msra.mxu0 %v779
        %3225 = vmatpush.msra.mxu0 %v777
        %3226 = vmatpush.msra.mxu0 %v775
        %3227 = vmatpush.msra.mxu0 %v773
        %3228 = vmatpush.msra.mxu0 %v771
        %3229 = vmatpush.msra.mxu0 %v769
        %3230 = vmatpush.msra.mxu0 %v767
        %3231 = vmatmul.f32.gmra.mxu0 %v1471
        %v3232 = vpop.f32.mrf.mxu0
        %v3233 = vadd.f32 0.0, %v3232
        %3234 = vmatmul.f32.gmra.mxu0 %v1473
        %v3235 = vpop.f32.mrf.mxu0
        %v3236 = vadd.f32 0.0, %v3235
        %3237 = vmatmul.f32.gmra.mxu0 %v3211
        %v3238 = vpop.f32.mrf.mxu0
        %v3239 = vadd.f32 0.0, %v3238
        %3240 = vmatmul.f32.gmra.mxu0 %v3213
        %v3241 = vpop.f32.mrf.mxu0
        %v3242 = vadd.f32 0.0, %v3241
        %3243 = vdwg.mxu0
        %3244 = vmatpush.msra.mxu0 %v829
        %3245 = vmatpush.msra.mxu0 %v827
        %3246 = vmatpush.msra.mxu0 %v825
        %3247 = vmatpush.msra.mxu0 %v823
        %3248 = vmatpush.msra.mxu0 %v821
        %3249 = vmatpush.msra.mxu0 %v819
        %3250 = vmatpush.msra.mxu0 %v817
        %3251 = vmatpush.msra.mxu0 %v815
        %3252 = vmatpush.msra.mxu0 %v813
        %3253 = vmatpush.msra.mxu0 %v811
        %3254 = vmatpush.msra.mxu0 %v809
        %3255 = vmatpush.msra.mxu0 %v807
        %3256 = vmatpush.msra.mxu0 %v805
        %3257 = vmatpush.msra.mxu0 %v803
        %3258 = vmatpush.msra.mxu0 %v801
        %3259 = vmatpush.msra.mxu0 %v799
        %3260 = vmatmul.f32.gmra.mxu0 %v1472
        %v3261 = vpop.f32.mrf.mxu0
        %v3262 = vadd.f32 %v3233, %v3261
        %3263 = vmatmul.f32.gmra.mxu0 %v1474
        %v3264 = vpop.f32.mrf.mxu0
        %v3265 = vadd.f32 %v3236, %v3264
        %3266 = vmatmul.f32.gmra.mxu0 %v3212
        %v3267 = vpop.f32.mrf.mxu0
        %v3268 = vadd.f32 %v3239, %v3267
        %3269 = vmatmul.f32.gmra.mxu0 %v3214
        %v3270 = vpop.f32.mrf.mxu0
        %v3271 = vadd.f32 %v3242, %v3270
        %3272 = vdwg.mxu0
        %3273 = vmatpush.msra.mxu0 %v798
        %3274 = vmatpush.msra.mxu0 %v796
        %3275 = vmatpush.msra.mxu0 %v794
        %3276 = vmatpush.msra.mxu0 %v792
        %3277 = vmatpush.msra.mxu0 %v790
        %3278 = vmatpush.msra.mxu0 %v788
        %3279 = vmatpush.msra.mxu0 %v786
        %3280 = vmatpush.msra.mxu0 %v784
        %3281 = vmatpush.msra.mxu0 %v782
        %3282 = vmatpush.msra.mxu0 %v780
        %3283 = vmatpush.msra.mxu0 %v778
        %3284 = vmatpush.msra.mxu0 %v776
        %3285 = vmatpush.msra.mxu0 %v774
        %3286 = vmatpush.msra.mxu0 %v772
        %3287 = vmatpush.msra.mxu0 %v770
        %3288 = vmatpush.msra.mxu0 %v768
        %3289 = vmatmul.f32.gmra.mxu0 %v1471
        %v3290 = vpop.f32.mrf.mxu0
        %v3291 = vadd.f32 0.0, %v3290
        %3292 = vmatmul.f32.gmra.mxu0 %v1473
        %v3293 = vpop.f32.mrf.mxu0
        %v3294 = vadd.f32 0.0, %v3293
        %3295 = vmatmul.f32.gmra.mxu0 %v3211
        %v3296 = vpop.f32.mrf.mxu0
        %v3297 = vadd.f32 0.0, %v3296
        %3298 = vmatmul.f32.gmra.mxu0 %v3213
        %v3299 = vpop.f32.mrf.mxu0
        %v3300 = vadd.f32 0.0, %v3299
        %3301 = vdwg.mxu0
        %3302 = vmatpush.msra.mxu0 %v830
        %3303 = vmatpush.msra.mxu0 %v828
        %3304 = vmatpush.msra.mxu0 %v826
        %3305 = vmatpush.msra.mxu0 %v824
        %3306 = vmatpush.msra.mxu0 %v822
        %3307 = vmatpush.msra.mxu0 %v820
        %3308 = vmatpush.msra.mxu0 %v818
        %3309 = vmatpush.msra.mxu0 %v816
        %3310 = vmatpush.msra.mxu0 %v814
        %3311 = vmatpush.msra.mxu0 %v812
        %3312 = vmatpush.msra.mxu0 %v810
        %3313 = vmatpush.msra.mxu0 %v808
        %3314 = vmatpush.msra.mxu0 %v806
        %3315 = vmatpush.msra.mxu0 %v804
        %3316 = vmatpush.msra.mxu0 %v802
        %3317 = vmatpush.msra.mxu0 %v800
        %3318 = vmatmul.f32.gmra.mxu0 %v1472
        %v3319 = vpop.f32.mrf.mxu0
        %v3320 = vadd.f32 %v3291, %v3319
        %3321 = vmatmul.f32.gmra.mxu0 %v1474
        %v3322 = vpop.f32.mrf.mxu0
        %v3323 = vadd.f32 %v3294, %v3322
        %3324 = vmatmul.f32.gmra.mxu0 %v3212
        %v3325 = vpop.f32.mrf.mxu0
        %v3326 = vadd.f32 %v3297, %v3325
        %3327 = vmatmul.f32.gmra.mxu0 %v3214
        %v3328 = vpop.f32.mrf.mxu0
        %v3329 = vadd.f32 %v3300, %v3328
        %3330 = vdwg.mxu0
        %3331 = vmatpush.msra.mxu0 %v861
        %3332 = vmatpush.msra.mxu0 %v859
        %3333 = vmatpush.msra.mxu0 %v857
        %3334 = vmatpush.msra.mxu0 %v855
        %3335 = vmatpush.msra.mxu0 %v853
        %3336 = vmatpush.msra.mxu0 %v851
        %3337 = vmatpush.msra.mxu0 %v849
        %3338 = vmatpush.msra.mxu0 %v847
        %3339 = vmatpush.msra.mxu0 %v845
        %3340 = vmatpush.msra.mxu0 %v843
        %3341 = vmatpush.msra.mxu0 %v841
        %3342 = vmatpush.msra.mxu0 %v839
        %3343 = vmatpush.msra.mxu0 %v837
        %3344 = vmatpush.msra.mxu0 %v835
        %3345 = vmatpush.msra.mxu0 %v833
        %3346 = vmatpush.msra.mxu0 %v831
        %3347 = vmatmul.f32.gmra.mxu0 %v1471
        %v3348 = vpop.f32.mrf.mxu0
        %v3349 = vadd.f32 0.0, %v3348
        %3350 = vmatmul.f32.gmra.mxu0 %v1473
        %v3351 = vpop.f32.mrf.mxu0
        %v3352 = vadd.f32 0.0, %v3351
        %3353 = vmatmul.f32.gmra.mxu0 %v3211
        %v3354 = vpop.f32.mrf.mxu0
        %v3355 = vadd.f32 0.0, %v3354
        %3356 = vmatmul.f32.gmra.mxu0 %v3213
        %v3357 = vpop.f32.mrf.mxu0
        %v3358 = vadd.f32 0.0, %v3357
        %3359 = vdwg.mxu0
        %3360 = vmatpush.msra.mxu0 %v893
        %3361 = vmatpush.msra.mxu0 %v891
        %3362 = vmatpush.msra.mxu0 %v889
        %3363 = vmatpush.msra.mxu0 %v887
        %3364 = vmatpush.msra.mxu0 %v885
        %3365 = vmatpush.msra.mxu0 %v883
        %3366 = vmatpush.msra.mxu0 %v881
        %3367 = vmatpush.msra.mxu0 %v879
        %3368 = vmatpush.msra.mxu0 %v877
        %3369 = vmatpush.msra.mxu0 %v875
        %3370 = vmatpush.msra.mxu0 %v873
        %3371 = vmatpush.msra.mxu0 %v871
        %3372 = vmatpush.msra.mxu0 %v869
        %3373 = vmatpush.msra.mxu0 %v867
        %3374 = vmatpush.msra.mxu0 %v865
        %3375 = vmatpush.msra.mxu0 %v863
        %3376 = vmatmul.f32.gmra.mxu0 %v1472
        %v3377 = vpop.f32.mrf.mxu0
        %v3378 = vadd.f32 %v3349, %v3377
        %3379 = vmatmul.f32.gmra.mxu0 %v1474
        %v3380 = vpop.f32.mrf.mxu0
        %v3381 = vadd.f32 %v3352, %v3380
        %3382 = vmatmul.f32.gmra.mxu0 %v3212
        %v3383 = vpop.f32.mrf.mxu0
        %v3384 = vadd.f32 %v3355, %v3383
        %3385 = vmatmul.f32.gmra.mxu0 %v3214
        %v3386 = vpop.f32.mrf.mxu0
        %v3387 = vadd.f32 %v3358, %v3386
        %3388 = vdwg.mxu0
        %3389 = vmatpush.msra.mxu0 %v862
        %3390 = vmatpush.msra.mxu0 %v860
        %3391 = vmatpush.msra.mxu0 %v858
        %3392 = vmatpush.msra.mxu0 %v856
        %3393 = vmatpush.msra.mxu0 %v854
        %3394 = vmatpush.msra.mxu0 %v852
        %3395 = vmatpush.msra.mxu0 %v850
        %3396 = vmatpush.msra.mxu0 %v848
        %3397 = vmatpush.msra.mxu0 %v846
        %3398 = vmatpush.msra.mxu0 %v844
        %3399 = vmatpush.msra.mxu0 %v842
        %3400 = vmatpush.msra.mxu0 %v840
        %3401 = vmatpush.msra.mxu0 %v838
        %3402 = vmatpush.msra.mxu0 %v836
        %3403 = vmatpush.msra.mxu0 %v834
        %3404 = vmatpush.msra.mxu0 %v832
        %3405 = vmatmul.f32.gmra.mxu0 %v1471
        %v3406 = vpop.f32.mrf.mxu0
        %v3407 = vadd.f32 0.0, %v3406
        %3408 = vmatmul.f32.gmra.mxu0 %v1473
        %v3409 = vpop.f32.mrf.mxu0
        %v3410 = vadd.f32 0.0, %v3409
        %3411 = vmatmul.f32.gmra.mxu0 %v3211
        %v3412 = vpop.f32.mrf.mxu0
        %v3413 = vadd.f32 0.0, %v3412
        %3414 = vmatmul.f32.gmra.mxu0 %v3213
        %v3415 = vpop.f32.mrf.mxu0
        %v3416 = vadd.f32 0.0, %v3415
        %3417 = vdwg.mxu0
        %3418 = vmatpush.msra.mxu0 %v894
        %3419 = vmatpush.msra.mxu0 %v892
        %3420 = vmatpush.msra.mxu0 %v890
        %3421 = vmatpush.msra.mxu0 %v888
        %3422 = vmatpush.msra.mxu0 %v886
        %3423 = vmatpush.msra.mxu0 %v884
        %3424 = vmatpush.msra.mxu0 %v882
        %3425 = vmatpush.msra.mxu0 %v880
        %3426 = vmatpush.msra.mxu0 %v878
        %3427 = vmatpush.msra.mxu0 %v876
        %3428 = vmatpush.msra.mxu0 %v874
        %3429 = vmatpush.msra.mxu0 %v872
        %3430 = vmatpush.msra.mxu0 %v870
        %3431 = vmatpush.msra.mxu0 %v868
        %3432 = vmatpush.msra.mxu0 %v866
        %3433 = vmatpush.msra.mxu0 %v864
        %3434 = vmatmul.f32.gmra.mxu0 %v1472
        %v3435 = vpop.f32.mrf.mxu0
        %v3436 = vadd.f32 %v3407, %v3435
        %3437 = vmatmul.f32.gmra.mxu0 %v1474
        %v3438 = vpop.f32.mrf.mxu0
        %v3439 = vadd.f32 %v3410, %v3438
        %3440 = vmatmul.f32.gmra.mxu0 %v3212
        %v3441 = vpop.f32.mrf.mxu0
        %v3442 = vadd.f32 %v3413, %v3441
        %3443 = vmatmul.f32.gmra.mxu0 %v3214
        %v3444 = vpop.f32.mrf.mxu0
        %v3445 = vadd.f32 %v3416, %v3444
        %3446 = vdwg.mxu0
        %v3447 = vsub.f32 0.0, %v3378
        %v3448 = vsub.f32 0.0, %v3436
        %v3449 = vsub.f32 0.0, %v3381
        %v3450 = vsub.f32 0.0, %v3439
        %v3451 = vsub.f32 0.0, %v3384
        %v3452 = vsub.f32 0.0, %v3442
        %v3453 = vsub.f32 0.0, %v3387
        %v3454 = vsub.f32 0.0, %v3445
        %v3455 = vld [vmem:[#allocation14] sm:$0x1]
        %v3456 = vld [vmem:[#allocation3] sm:$0x1]
        %3458 = vset.pattern.permute.xlu0 0
        %3459 = vperm.xlu0 %3458, %v3456
        %v3460 = vpop.permute.xlu0 %3459
        %v3462 = vperm.slane %v3460, 0
        %vm3463 = vcmask 261120
        %v3465 = vsel %vm3463, %v3455, 0
        %3467 = vmatpush.msra.mxu0 0.0
        %3468 = vmatpush.msra.mxu0 0.0
        %3469 = vmatpush.msra.mxu0 0.0
        %3470 = vmatpush.msra.mxu0 0.0
        %3471 = vmatpush.msra.mxu0 0.0
        %3472 = vmatpush.msra.mxu0 0.0
        %3473 = vmatpush.msra.mxu0 0.0
        %3474 = vmatpush.msra.mxu0 0.0
        %3475 = vmatpush.msra.mxu0 0.0
        %3476 = vmatpush.msra.mxu0 0.0
        %3477 = vmatpush.msra.mxu0 0.0
        %3478 = vmatpush.msra.mxu0 0.0
        %3479 = vmatpush.msra.mxu0 %v3271
        %3480 = vmatpush.msra.mxu0 %v3268
        %3481 = vmatpush.msra.mxu0 %v3265
        %3482 = vmatpush.msra.mxu0 %v3262
        %3483 = vmatmul.f32.gmra.mxu0 %v3465
        %v3484 = vpop.f32.mrf.mxu0
        %v3485 = vadd.f32 %v3462, %v3484
        %3486 = vdwg.mxu0
        %3487 = vmatpush.msra.mxu0 0.0
        %3488 = vmatpush.msra.mxu0 0.0
        %3489 = vmatpush.msra.mxu0 0.0
        %3490 = vmatpush.msra.mxu0 0.0
        %3491 = vmatpush.msra.mxu0 0.0
        %3492 = vmatpush.msra.mxu0 0.0
        %3493 = vmatpush.msra.mxu0 0.0
        %3494 = vmatpush.msra.mxu0 0.0
        %3495 = vmatpush.msra.mxu0 0.0
        %3496 = vmatpush.msra.mxu0 0.0
        %3497 = vmatpush.msra.mxu0 0.0
        %3498 = vmatpush.msra.mxu0 0.0
        %3499 = vmatpush.msra.mxu0 %v3329
        %3500 = vmatpush.msra.mxu0 %v3326
        %3501 = vmatpush.msra.mxu0 %v3323
        %3502 = vmatpush.msra.mxu0 %v3320
        %3503 = vmatmul.f32.gmra.mxu0 %v3465
        %v3504 = vpop.f32.mrf.mxu0
        %v3505 = vadd.f32 %v3462, %v3504
        %3506 = vdwg.mxu0
        %v3507 = vmax.f32 %v3485, 0.0
        %v3508 = vmax.f32 %v3505, 0.0
        %v3509 = vld [vmem:[%s16] sm:$0xff]
        %v3510 = vld [vmem:[%s16 + $0x8] sm:$0xff]
        %v3511 = vld [vmem:[%s16 + $0x10] sm:$0xff]
        %v3512 = vld [vmem:[%s16 + $0x18] sm:$0xff]
        %v3513 = vld [vmem:[%s17] sm:$0xff]
        %v3514 = vld [vmem:[%s17 + $0x8] sm:$0xff]
        %v3515 = vld [vmem:[%s17 + $0x10] sm:$0xff]
        %v3516 = vld [vmem:[%s17 + $0x18] sm:$0xff]
        %3518 = vset.pattern.permute.xlu0 0
        %3519 = vperm.xlu0 %3518, %v3509
        %v3520 = vpop.permute.xlu0 %3519
        %3523 = vset.pattern.permute.xlu0 0
        %3524 = vperm.xlu0 %3523, %v3510
        %v3525 = vpop.permute.xlu0 %3524
        %3528 = vset.pattern.permute.xlu0 0
        %3529 = vperm.xlu0 %3528, %v3511
        %v3530 = vpop.permute.xlu0 %3529
        %3533 = vset.pattern.permute.xlu0 0
        %3534 = vperm.xlu0 %3533, %v3512
        %v3535 = vpop.permute.xlu0 %3534
        %v3537 = vperm.slane %v3507, 0
        %v3538 = vperm.slane %v3508, 0
        %v3539 = vmul.f32 %v3520, %v3537
        %v3540 = vmul.f32 %v3520, %v3538
        %v3541 = vmul.f32 %v3525, %v3537
        %v3542 = vmul.f32 %v3525, %v3538
        %v3543 = vmul.f32 %v3530, %v3537
        %v3544 = vmul.f32 %v3530, %v3538
        %v3545 = vmul.f32 %v3535, %v3537
        %v3546 = vmul.f32 %v3535, %v3538
        %3548 = vset.pattern.permute.xlu0 0
        %3549 = vperm.xlu0 %3548, %v3513
        %v3550 = vpop.permute.xlu0 %3549
        %3553 = vset.pattern.permute.xlu0 0
        %3554 = vperm.xlu0 %3553, %v3514
        %v3555 = vpop.permute.xlu0 %3554
        %3558 = vset.pattern.permute.xlu0 0
        %3559 = vperm.xlu0 %3558, %v3515
        %v3560 = vpop.permute.xlu0 %3559
        %3563 = vset.pattern.permute.xlu0 0
        %3564 = vperm.xlu0 %3563, %v3516
        %v3565 = vpop.permute.xlu0 %3564
        %v3567 = vadd.f32 %v3550, %v3539
        %v3568 = vadd.f32 %v3550, %v3540
        %v3569 = vadd.f32 %v3555, %v3541
        %v3570 = vadd.f32 %v3555, %v3542
        %v3571 = vadd.f32 %v3560, %v3543
        %v3572 = vadd.f32 %v3560, %v3544
        %v3573 = vadd.f32 %v3565, %v3545
        %v3574 = vadd.f32 %v3565, %v3546
        %v3575 = vxor.u32 %v3567, 2147483648
        %v3576 = vxor.u32 %v3568, 2147483648
        %v3577 = vxor.u32 %v3569, 2147483648
        %v3578 = vxor.u32 %v3570, 2147483648
        %v3579 = vxor.u32 %v3571, 2147483648
        %v3580 = vxor.u32 %v3572, 2147483648
        %v3581 = vxor.u32 %v3573, 2147483648
        %v3582 = vxor.u32 %v3574, 2147483648
        %v3583 = vmul.f32 %v3575, 1.442695
        %v3584 = vpow.pop %v3583
        %v3585 = vmul.f32 %v3576, 1.442695
        %v3586 = vpow.pop %v3585
        %v3587 = vmul.f32 %v3577, 1.442695
        %v3588 = vpow.pop %v3587
        %v3589 = vmul.f32 %v3578, 1.442695
        %v3590 = vpow.pop %v3589
        %v3591 = vmul.f32 %v3579, 1.442695
        %v3592 = vpow.pop %v3591
        %v3593 = vmul.f32 %v3580, 1.442695
        %v3594 = vpow.pop %v3593
        %v3595 = vmul.f32 %v3581, 1.442695
        %v3596 = vpow.pop %v3595
        %v3597 = vmul.f32 %v3582, 1.442695
        %v3598 = vpow.pop %v3597
        %v3599 = vadd.f32 %v3584, 1.0
        %v3600 = vadd.f32 %v3586, 1.0
        %v3601 = vadd.f32 %v3588, 1.0
        %v3602 = vadd.f32 %v3590, 1.0
        %v3603 = vadd.f32 %v3592, 1.0
        %v3604 = vadd.f32 %v3594, 1.0
        %v3605 = vadd.f32 %v3596, 1.0
        %v3606 = vadd.f32 %v3598, 1.0
        %v3607 = vrcp.pop %v3599
        %v3608 = vmul.f32 %v3599, %v3607
        %v3609 = vsub.f32 1.0, %v3608
        %v3610 = vmul.f32 %v3607, %v3609
        %v3611 = vadd.f32 %v3607, %v3610
        %vm3612 = vweird.f32 %v3599
        %vm3613 = vweird.f32 %v3607
        %vm3614 = vmor %vm3612, %vm3613
        %v3615 = vsel %vm3614, %v3607, %v3611
        %v3616 = vand.u32 2147483647, %v3599
        %vm3617 = vcmp.eq.f32.partialorder %v3616, 8.507059e+37
        %v3618 = vand.u32 %v3599, 2147483648
        %v3619 = vor.u32 1.1754944e-38, %v3618
        %v3620 = vsel %vm3617, %v3619, %v3615
        %v3621 = vmul.f32 1.0, %v3620
        %v3622 = vrcp.pop %v3600
        %v3623 = vmul.f32 %v3600, %v3622
        %v3624 = vsub.f32 1.0, %v3623
        %v3625 = vmul.f32 %v3622, %v3624
        %v3626 = vadd.f32 %v3622, %v3625
        %vm3627 = vweird.f32 %v3600
        %vm3628 = vweird.f32 %v3622
        %vm3629 = vmor %vm3627, %vm3628
        %v3630 = vsel %vm3629, %v3622, %v3626
        %v3631 = vand.u32 2147483647, %v3600
        %vm3632 = vcmp.eq.f32.partialorder %v3631, 8.507059e+37
        %v3633 = vand.u32 %v3600, 2147483648
        %v3634 = vor.u32 1.1754944e-38, %v3633
        %v3635 = vsel %vm3632, %v3634, %v3630
        %v3636 = vmul.f32 1.0, %v3635
        %v3637 = vrcp.pop %v3601
        %v3638 = vmul.f32 %v3601, %v3637
        %v3639 = vsub.f32 1.0, %v3638
        %v3640 = vmul.f32 %v3637, %v3639
        %v3641 = vadd.f32 %v3637, %v3640
        %vm3642 = vweird.f32 %v3601
        %vm3643 = vweird.f32 %v3637
        %vm3644 = vmor %vm3642, %vm3643
        %v3645 = vsel %vm3644, %v3637, %v3641
        %v3646 = vand.u32 2147483647, %v3601
        %vm3647 = vcmp.eq.f32.partialorder %v3646, 8.507059e+37
        %v3648 = vand.u32 %v3601, 2147483648
        %v3649 = vor.u32 1.1754944e-38, %v3648
        %v3650 = vsel %vm3647, %v3649, %v3645
        %v3651 = vmul.f32 1.0, %v3650
        %v3652 = vrcp.pop %v3602
        %v3653 = vmul.f32 %v3602, %v3652
        %v3654 = vsub.f32 1.0, %v3653
        %v3655 = vmul.f32 %v3652, %v3654
        %v3656 = vadd.f32 %v3652, %v3655
        %vm3657 = vweird.f32 %v3602
        %vm3658 = vweird.f32 %v3652
        %vm3659 = vmor %vm3657, %vm3658
        %v3660 = vsel %vm3659, %v3652, %v3656
        %v3661 = vand.u32 2147483647, %v3602
        %vm3662 = vcmp.eq.f32.partialorder %v3661, 8.507059e+37
        %v3663 = vand.u32 %v3602, 2147483648
        %v3664 = vor.u32 1.1754944e-38, %v3663
        %v3665 = vsel %vm3662, %v3664, %v3660
        %v3666 = vmul.f32 1.0, %v3665
        %v3667 = vrcp.pop %v3603
        %v3668 = vmul.f32 %v3603, %v3667
        %v3669 = vsub.f32 1.0, %v3668
        %v3670 = vmul.f32 %v3667, %v3669
        %v3671 = vadd.f32 %v3667, %v3670
        %vm3672 = vweird.f32 %v3603
        %vm3673 = vweird.f32 %v3667
        %vm3674 = vmor %vm3672, %vm3673
        %v3675 = vsel %vm3674, %v3667, %v3671
        %v3676 = vand.u32 2147483647, %v3603
        %vm3677 = vcmp.eq.f32.partialorder %v3676, 8.507059e+37
        %v3678 = vand.u32 %v3603, 2147483648
        %v3679 = vor.u32 1.1754944e-38, %v3678
        %v3680 = vsel %vm3677, %v3679, %v3675
        %v3681 = vmul.f32 1.0, %v3680
        %v3682 = vrcp.pop %v3604
        %v3683 = vmul.f32 %v3604, %v3682
        %v3684 = vsub.f32 1.0, %v3683
        %v3685 = vmul.f32 %v3682, %v3684
        %v3686 = vadd.f32 %v3682, %v3685
        %vm3687 = vweird.f32 %v3604
        %vm3688 = vweird.f32 %v3682
        %vm3689 = vmor %vm3687, %vm3688
        %v3690 = vsel %vm3689, %v3682, %v3686
        %v3691 = vand.u32 2147483647, %v3604
        %vm3692 = vcmp.eq.f32.partialorder %v3691, 8.507059e+37
        %v3693 = vand.u32 %v3604, 2147483648
        %v3694 = vor.u32 1.1754944e-38, %v3693
        %v3695 = vsel %vm3692, %v3694, %v3690
        %v3696 = vmul.f32 1.0, %v3695
        %v3697 = vrcp.pop %v3605
        %v3698 = vmul.f32 %v3605, %v3697
        %v3699 = vsub.f32 1.0, %v3698
        %v3700 = vmul.f32 %v3697, %v3699
        %v3701 = vadd.f32 %v3697, %v3700
        %vm3702 = vweird.f32 %v3605
        %vm3703 = vweird.f32 %v3697
        %vm3704 = vmor %vm3702, %vm3703
        %v3705 = vsel %vm3704, %v3697, %v3701
        %v3706 = vand.u32 2147483647, %v3605
        %vm3707 = vcmp.eq.f32.partialorder %v3706, 8.507059e+37
        %v3708 = vand.u32 %v3605, 2147483648
        %v3709 = vor.u32 1.1754944e-38, %v3708
        %v3710 = vsel %vm3707, %v3709, %v3705
        %v3711 = vmul.f32 1.0, %v3710
        %v3712 = vrcp.pop %v3606
        %v3713 = vmul.f32 %v3606, %v3712
        %v3714 = vsub.f32 1.0, %v3713
        %v3715 = vmul.f32 %v3712, %v3714
        %v3716 = vadd.f32 %v3712, %v3715
        %vm3717 = vweird.f32 %v3606
        %vm3718 = vweird.f32 %v3712
        %vm3719 = vmor %vm3717, %vm3718
        %v3720 = vsel %vm3719, %v3712, %v3716
        %v3721 = vand.u32 2147483647, %v3606
        %vm3722 = vcmp.eq.f32.partialorder %v3721, 8.507059e+37
        %v3723 = vand.u32 %v3606, 2147483648
        %v3724 = vor.u32 1.1754944e-38, %v3723
        %v3725 = vsel %vm3722, %v3724, %v3720
        %v3726 = vmul.f32 1.0, %v3725
        %v3727 = vmul.f32 %v3621, %v3262
        %v3728 = vmul.f32 %v3636, %v3320
        %v3729 = vmul.f32 %v3651, %v3265
        %v3730 = vmul.f32 %v3666, %v3323
        %v3731 = vmul.f32 %v3681, %v3268
        %v3732 = vmul.f32 %v3696, %v3326
        %v3733 = vmul.f32 %v3711, %v3271
        %v3734 = vmul.f32 %v3726, %v3329
        %v3735 = vmul.f32 %v3621, %v3447
        %v3736 = vmul.f32 %v3636, %v3448
        %v3737 = vmul.f32 %v3651, %v3449
        %v3738 = vmul.f32 %v3666, %v3450
        %v3739 = vmul.f32 %v3681, %v3451
        %v3740 = vmul.f32 %v3696, %v3452
        %v3741 = vmul.f32 %v3711, %v3453
        %v3742 = vmul.f32 %v3726, %v3454
        %3743 = vmatpush.msra.mxu0 %v797
        %3744 = vmatpush.msra.mxu0 %v795
        %3745 = vmatpush.msra.mxu0 %v793
        %3746 = vmatpush.msra.mxu0 %v791
        %3747 = vmatpush.msra.mxu0 %v789
        %3748 = vmatpush.msra.mxu0 %v787
        %3749 = vmatpush.msra.mxu0 %v785
        %3750 = vmatpush.msra.mxu0 %v783
        %3751 = vmatpush.msra.mxu0 %v781
        %3752 = vmatpush.msra.mxu0 %v779
        %3753 = vmatpush.msra.mxu0 %v777
        %3754 = vmatpush.msra.mxu0 %v775
        %3755 = vmatpush.msra.mxu0 %v773
        %3756 = vmatpush.msra.mxu0 %v771
        %3757 = vmatpush.msra.mxu0 %v769
        %3758 = vmatpush.msra.mxu0 %v767
        %3759 = vmatmul.f32.gmra.mxu0 %v3727
        %v3760 = vpop.f32.mrf.mxu0
        %v3761 = vadd.f32 0.0, %v3760
        %3762 = vmatmul.f32.gmra.mxu0 %v3729
        %v3763 = vpop.f32.mrf.mxu0
        %v3764 = vadd.f32 0.0, %v3763
        %3765 = vmatmul.f32.gmra.mxu0 %v3731
        %v3766 = vpop.f32.mrf.mxu0
        %v3767 = vadd.f32 0.0, %v3766
        %3768 = vmatmul.f32.gmra.mxu0 %v3733
        %v3769 = vpop.f32.mrf.mxu0
        %v3770 = vadd.f32 0.0, %v3769
        %3771 = vdwg.mxu0
        %3772 = vmatpush.msra.mxu0 %v829
        %3773 = vmatpush.msra.mxu0 %v827
        %3774 = vmatpush.msra.mxu0 %v825
        %3775 = vmatpush.msra.mxu0 %v823
        %3776 = vmatpush.msra.mxu0 %v821
        %3777 = vmatpush.msra.mxu0 %v819
        %3778 = vmatpush.msra.mxu0 %v817
        %3779 = vmatpush.msra.mxu0 %v815
        %3780 = vmatpush.msra.mxu0 %v813
        %3781 = vmatpush.msra.mxu0 %v811
        %3782 = vmatpush.msra.mxu0 %v809
        %3783 = vmatpush.msra.mxu0 %v807
        %3784 = vmatpush.msra.mxu0 %v805
        %3785 = vmatpush.msra.mxu0 %v803
        %3786 = vmatpush.msra.mxu0 %v801
        %3787 = vmatpush.msra.mxu0 %v799
        %3788 = vmatmul.f32.gmra.mxu0 %v3728
        %v3789 = vpop.f32.mrf.mxu0
        %v3790 = vadd.f32 %v3761, %v3789
        %3791 = vmatmul.f32.gmra.mxu0 %v3730
        %v3792 = vpop.f32.mrf.mxu0
        %v3793 = vadd.f32 %v3764, %v3792
        %3794 = vmatmul.f32.gmra.mxu0 %v3732
        %v3795 = vpop.f32.mrf.mxu0
        %v3796 = vadd.f32 %v3767, %v3795
        %3797 = vmatmul.f32.gmra.mxu0 %v3734
        %v3798 = vpop.f32.mrf.mxu0
        %v3799 = vadd.f32 %v3770, %v3798
        %3800 = vdwg.mxu0
        %3801 = vmatpush.msra.mxu0 %v798
        %3802 = vmatpush.msra.mxu0 %v796
        %3803 = vmatpush.msra.mxu0 %v794
        %3804 = vmatpush.msra.mxu0 %v792
        %3805 = vmatpush.msra.mxu0 %v790
        %3806 = vmatpush.msra.mxu0 %v788
        %3807 = vmatpush.msra.mxu0 %v786
        %3808 = vmatpush.msra.mxu0 %v784
        %3809 = vmatpush.msra.mxu0 %v782
        %3810 = vmatpush.msra.mxu0 %v780
        %3811 = vmatpush.msra.mxu0 %v778
        %3812 = vmatpush.msra.mxu0 %v776
        %3813 = vmatpush.msra.mxu0 %v774
        %3814 = vmatpush.msra.mxu0 %v772
        %3815 = vmatpush.msra.mxu0 %v770
        %3816 = vmatpush.msra.mxu0 %v768
        %3817 = vmatmul.f32.gmra.mxu0 %v3727
        %v3818 = vpop.f32.mrf.mxu0
        %v3819 = vadd.f32 0.0, %v3818
        %3820 = vmatmul.f32.gmra.mxu0 %v3729
        %v3821 = vpop.f32.mrf.mxu0
        %v3822 = vadd.f32 0.0, %v3821
        %3823 = vmatmul.f32.gmra.mxu0 %v3731
        %v3824 = vpop.f32.mrf.mxu0
        %v3825 = vadd.f32 0.0, %v3824
        %3826 = vmatmul.f32.gmra.mxu0 %v3733
        %v3827 = vpop.f32.mrf.mxu0
        %v3828 = vadd.f32 0.0, %v3827
        %3829 = vdwg.mxu0
        %3830 = vmatpush.msra.mxu0 %v830
        %3831 = vmatpush.msra.mxu0 %v828
        %3832 = vmatpush.msra.mxu0 %v826
        %3833 = vmatpush.msra.mxu0 %v824
        %3834 = vmatpush.msra.mxu0 %v822
        %3835 = vmatpush.msra.mxu0 %v820
        %3836 = vmatpush.msra.mxu0 %v818
        %3837 = vmatpush.msra.mxu0 %v816
        %3838 = vmatpush.msra.mxu0 %v814
        %3839 = vmatpush.msra.mxu0 %v812
        %3840 = vmatpush.msra.mxu0 %v810
        %3841 = vmatpush.msra.mxu0 %v808
        %3842 = vmatpush.msra.mxu0 %v806
        %3843 = vmatpush.msra.mxu0 %v804
        %3844 = vmatpush.msra.mxu0 %v802
        %3845 = vmatpush.msra.mxu0 %v800
        %3846 = vmatmul.f32.gmra.mxu0 %v3728
        %v3847 = vpop.f32.mrf.mxu0
        %v3848 = vadd.f32 %v3819, %v3847
        %3849 = vmatmul.f32.gmra.mxu0 %v3730
        %v3850 = vpop.f32.mrf.mxu0
        %v3851 = vadd.f32 %v3822, %v3850
        %3852 = vmatmul.f32.gmra.mxu0 %v3732
        %v3853 = vpop.f32.mrf.mxu0
        %v3854 = vadd.f32 %v3825, %v3853
        %3855 = vmatmul.f32.gmra.mxu0 %v3734
        %v3856 = vpop.f32.mrf.mxu0
        %v3857 = vadd.f32 %v3828, %v3856
        %3858 = vdwg.mxu0
        %3859 = vmatpush.msra.mxu0 %v861
        %3860 = vmatpush.msra.mxu0 %v859
        %3861 = vmatpush.msra.mxu0 %v857
        %3862 = vmatpush.msra.mxu0 %v855
        %3863 = vmatpush.msra.mxu0 %v853
        %3864 = vmatpush.msra.mxu0 %v851
        %3865 = vmatpush.msra.mxu0 %v849
        %3866 = vmatpush.msra.mxu0 %v847
        %3867 = vmatpush.msra.mxu0 %v845
        %3868 = vmatpush.msra.mxu0 %v843
        %3869 = vmatpush.msra.mxu0 %v841
        %3870 = vmatpush.msra.mxu0 %v839
        %3871 = vmatpush.msra.mxu0 %v837
        %3872 = vmatpush.msra.mxu0 %v835
        %3873 = vmatpush.msra.mxu0 %v833
        %3874 = vmatpush.msra.mxu0 %v831
        %3875 = vmatmul.f32.gmra.mxu0 %v3735
        %v3876 = vpop.f32.mrf.mxu0
        %v3877 = vadd.f32 0.0, %v3876
        %3878 = vmatmul.f32.gmra.mxu0 %v3737
        %v3879 = vpop.f32.mrf.mxu0
        %v3880 = vadd.f32 0.0, %v3879
        %3881 = vmatmul.f32.gmra.mxu0 %v3739
        %v3882 = vpop.f32.mrf.mxu0
        %v3883 = vadd.f32 0.0, %v3882
        %3884 = vmatmul.f32.gmra.mxu0 %v3741
        %v3885 = vpop.f32.mrf.mxu0
        %v3886 = vadd.f32 0.0, %v3885
        %3887 = vdwg.mxu0
        %3888 = vmatpush.msra.mxu0 %v893
        %3889 = vmatpush.msra.mxu0 %v891
        %3890 = vmatpush.msra.mxu0 %v889
        %3891 = vmatpush.msra.mxu0 %v887
        %3892 = vmatpush.msra.mxu0 %v885
        %3893 = vmatpush.msra.mxu0 %v883
        %3894 = vmatpush.msra.mxu0 %v881
        %3895 = vmatpush.msra.mxu0 %v879
        %3896 = vmatpush.msra.mxu0 %v877
        %3897 = vmatpush.msra.mxu0 %v875
        %3898 = vmatpush.msra.mxu0 %v873
        %3899 = vmatpush.msra.mxu0 %v871
        %3900 = vmatpush.msra.mxu0 %v869
        %3901 = vmatpush.msra.mxu0 %v867
        %3902 = vmatpush.msra.mxu0 %v865
        %3903 = vmatpush.msra.mxu0 %v863
        %3904 = vmatmul.f32.gmra.mxu0 %v3736
        %v3905 = vpop.f32.mrf.mxu0
        %v3906 = vadd.f32 %v3877, %v3905
        %3907 = vmatmul.f32.gmra.mxu0 %v3738
        %v3908 = vpop.f32.mrf.mxu0
        %v3909 = vadd.f32 %v3880, %v3908
        %3910 = vmatmul.f32.gmra.mxu0 %v3740
        %v3911 = vpop.f32.mrf.mxu0
        %v3912 = vadd.f32 %v3883, %v3911
        %3913 = vmatmul.f32.gmra.mxu0 %v3742
        %v3914 = vpop.f32.mrf.mxu0
        %v3915 = vadd.f32 %v3886, %v3914
        %3916 = vdwg.mxu0
        %3917 = vmatpush.msra.mxu0 %v862
        %3918 = vmatpush.msra.mxu0 %v860
        %3919 = vmatpush.msra.mxu0 %v858
        %3920 = vmatpush.msra.mxu0 %v856
        %3921 = vmatpush.msra.mxu0 %v854
        %3922 = vmatpush.msra.mxu0 %v852
        %3923 = vmatpush.msra.mxu0 %v850
        %3924 = vmatpush.msra.mxu0 %v848
        %3925 = vmatpush.msra.mxu0 %v846
        %3926 = vmatpush.msra.mxu0 %v844
        %3927 = vmatpush.msra.mxu0 %v842
        %3928 = vmatpush.msra.mxu0 %v840
        %3929 = vmatpush.msra.mxu0 %v838
        %3930 = vmatpush.msra.mxu0 %v836
        %3931 = vmatpush.msra.mxu0 %v834
        %3932 = vmatpush.msra.mxu0 %v832
        %3933 = vmatmul.f32.gmra.mxu0 %v3735
        %v3934 = vpop.f32.mrf.mxu0
        %v3935 = vadd.f32 0.0, %v3934
        %3936 = vmatmul.f32.gmra.mxu0 %v3737
        %v3937 = vpop.f32.mrf.mxu0
        %v3938 = vadd.f32 0.0, %v3937
        %3939 = vmatmul.f32.gmra.mxu0 %v3739
        %v3940 = vpop.f32.mrf.mxu0
        %v3941 = vadd.f32 0.0, %v3940
        %3942 = vmatmul.f32.gmra.mxu0 %v3741
        %v3943 = vpop.f32.mrf.mxu0
        %v3944 = vadd.f32 0.0, %v3943
        %3945 = vdwg.mxu0
        %3946 = vmatpush.msra.mxu0 %v894
        %3947 = vmatpush.msra.mxu0 %v892
        %3948 = vmatpush.msra.mxu0 %v890
        %3949 = vmatpush.msra.mxu0 %v888
        %3950 = vmatpush.msra.mxu0 %v886
        %3951 = vmatpush.msra.mxu0 %v884
        %3952 = vmatpush.msra.mxu0 %v882
        %3953 = vmatpush.msra.mxu0 %v880
        %3954 = vmatpush.msra.mxu0 %v878
        %3955 = vmatpush.msra.mxu0 %v876
        %3956 = vmatpush.msra.mxu0 %v874
        %3957 = vmatpush.msra.mxu0 %v872
        %3958 = vmatpush.msra.mxu0 %v870
        %3959 = vmatpush.msra.mxu0 %v868
        %3960 = vmatpush.msra.mxu0 %v866
        %3961 = vmatpush.msra.mxu0 %v864
        %3962 = vmatmul.f32.gmra.mxu0 %v3736
        %v3963 = vpop.f32.mrf.mxu0
        %v3964 = vadd.f32 %v3935, %v3963
        %3965 = vmatmul.f32.gmra.mxu0 %v3738
        %v3966 = vpop.f32.mrf.mxu0
        %v3967 = vadd.f32 %v3938, %v3966
        %3968 = vmatmul.f32.gmra.mxu0 %v3740
        %v3969 = vpop.f32.mrf.mxu0
        %v3970 = vadd.f32 %v3941, %v3969
        %3971 = vmatmul.f32.gmra.mxu0 %v3742
        %v3972 = vpop.f32.mrf.mxu0
        %v3973 = vadd.f32 %v3944, %v3972
        %3974 = vdwg.mxu0
        %v3975 = vsub.f32 %v3790, %v3906
        %v3976 = vsub.f32 %v3848, %v3964
        %v3977 = vsub.f32 %v3793, %v3909
        %v3978 = vsub.f32 %v3851, %v3967
        %v3979 = vsub.f32 %v3796, %v3912
        %v3980 = vsub.f32 %v3854, %v3970
        %v3981 = vsub.f32 %v3799, %v3915
        %v3982 = vsub.f32 %v3857, %v3973
        %3983 = vmatpush.msra.mxu0 %v797
        %3984 = vmatpush.msra.mxu0 %v795
        %3985 = vmatpush.msra.mxu0 %v793
        %3986 = vmatpush.msra.mxu0 %v791
        %3987 = vmatpush.msra.mxu0 %v789
        %3988 = vmatpush.msra.mxu0 %v787
        %3989 = vmatpush.msra.mxu0 %v785
        %3990 = vmatpush.msra.mxu0 %v783
        %3991 = vmatpush.msra.mxu0 %v781
        %3992 = vmatpush.msra.mxu0 %v779
        %3993 = vmatpush.msra.mxu0 %v777
        %3994 = vmatpush.msra.mxu0 %v775
        %3995 = vmatpush.msra.mxu0 %v773
        %3996 = vmatpush.msra.mxu0 %v771
        %3997 = vmatpush.msra.mxu0 %v769
        %3998 = vmatpush.msra.mxu0 %v767
        %3999 = vmatmul.f32.gmra.mxu0 %v3735
        %v4000 = vpop.f32.mrf.mxu0
        %v4001 = vadd.f32 0.0, %v4000
        %4002 = vmatmul.f32.gmra.mxu0 %v3737
        %v4003 = vpop.f32.mrf.mxu0
        %v4004 = vadd.f32 0.0, %v4003
        %4005 = vmatmul.f32.gmra.mxu0 %v3739
        %v4006 = vpop.f32.mrf.mxu0
        %v4007 = vadd.f32 0.0, %v4006
        %4008 = vmatmul.f32.gmra.mxu0 %v3741
        %v4009 = vpop.f32.mrf.mxu0
        %v4010 = vadd.f32 0.0, %v4009
        %4011 = vdwg.mxu0
        %4012 = vmatpush.msra.mxu0 %v829
        %4013 = vmatpush.msra.mxu0 %v827
        %4014 = vmatpush.msra.mxu0 %v825
        %4015 = vmatpush.msra.mxu0 %v823
        %4016 = vmatpush.msra.mxu0 %v821
        %4017 = vmatpush.msra.mxu0 %v819
        %4018 = vmatpush.msra.mxu0 %v817
        %4019 = vmatpush.msra.mxu0 %v815
        %4020 = vmatpush.msra.mxu0 %v813
        %4021 = vmatpush.msra.mxu0 %v811
        %4022 = vmatpush.msra.mxu0 %v809
        %4023 = vmatpush.msra.mxu0 %v807
        %4024 = vmatpush.msra.mxu0 %v805
        %4025 = vmatpush.msra.mxu0 %v803
        %4026 = vmatpush.msra.mxu0 %v801
        %4027 = vmatpush.msra.mxu0 %v799
        %4028 = vmatmul.f32.gmra.mxu0 %v3736
        %v4029 = vpop.f32.mrf.mxu0
        %v4030 = vadd.f32 %v4001, %v4029
        %4031 = vmatmul.f32.gmra.mxu0 %v3738
        %v4032 = vpop.f32.mrf.mxu0
        %v4033 = vadd.f32 %v4004, %v4032
        %4034 = vmatmul.f32.gmra.mxu0 %v3740
        %v4035 = vpop.f32.mrf.mxu0
        %v4036 = vadd.f32 %v4007, %v4035
        %4037 = vmatmul.f32.gmra.mxu0 %v3742
        %v4038 = vpop.f32.mrf.mxu0
        %v4039 = vadd.f32 %v4010, %v4038
        %4040 = vdwg.mxu0
        %4041 = vmatpush.msra.mxu0 %v798
        %4042 = vmatpush.msra.mxu0 %v796
        %4043 = vmatpush.msra.mxu0 %v794
        %4044 = vmatpush.msra.mxu0 %v792
        %4045 = vmatpush.msra.mxu0 %v790
        %4046 = vmatpush.msra.mxu0 %v788
        %4047 = vmatpush.msra.mxu0 %v786
        %4048 = vmatpush.msra.mxu0 %v784
        %4049 = vmatpush.msra.mxu0 %v782
        %4050 = vmatpush.msra.mxu0 %v780
        %4051 = vmatpush.msra.mxu0 %v778
        %4052 = vmatpush.msra.mxu0 %v776
        %4053 = vmatpush.msra.mxu0 %v774
        %4054 = vmatpush.msra.mxu0 %v772
        %4055 = vmatpush.msra.mxu0 %v770
        %4056 = vmatpush.msra.mxu0 %v768
        %4057 = vmatmul.f32.gmra.mxu0 %v3735
        %v4058 = vpop.f32.mrf.mxu0
        %v4059 = vadd.f32 0.0, %v4058
        %4060 = vmatmul.f32.gmra.mxu0 %v3737
        %v4061 = vpop.f32.mrf.mxu0
        %v4062 = vadd.f32 0.0, %v4061
        %4063 = vmatmul.f32.gmra.mxu0 %v3739
        %v4064 = vpop.f32.mrf.mxu0
        %v4065 = vadd.f32 0.0, %v4064
        %4066 = vmatmul.f32.gmra.mxu0 %v3741
        %v4067 = vpop.f32.mrf.mxu0
        %v4068 = vadd.f32 0.0, %v4067
        %4069 = vdwg.mxu0
        %4070 = vmatpush.msra.mxu0 %v830
        %4071 = vmatpush.msra.mxu0 %v828
        %4072 = vmatpush.msra.mxu0 %v826
        %4073 = vmatpush.msra.mxu0 %v824
        %4074 = vmatpush.msra.mxu0 %v822
        %4075 = vmatpush.msra.mxu0 %v820
        %4076 = vmatpush.msra.mxu0 %v818
        %4077 = vmatpush.msra.mxu0 %v816
        %4078 = vmatpush.msra.mxu0 %v814
        %4079 = vmatpush.msra.mxu0 %v812
        %4080 = vmatpush.msra.mxu0 %v810
        %4081 = vmatpush.msra.mxu0 %v808
        %4082 = vmatpush.msra.mxu0 %v806
        %4083 = vmatpush.msra.mxu0 %v804
        %4084 = vmatpush.msra.mxu0 %v802
        %4085 = vmatpush.msra.mxu0 %v800
        %4086 = vmatmul.f32.gmra.mxu0 %v3736
        %v4087 = vpop.f32.mrf.mxu0
        %v4088 = vadd.f32 %v4059, %v4087
        %4089 = vmatmul.f32.gmra.mxu0 %v3738
        %v4090 = vpop.f32.mrf.mxu0
        %v4091 = vadd.f32 %v4062, %v4090
        %4092 = vmatmul.f32.gmra.mxu0 %v3740
        %v4093 = vpop.f32.mrf.mxu0
        %v4094 = vadd.f32 %v4065, %v4093
        %4095 = vmatmul.f32.gmra.mxu0 %v3742
        %v4096 = vpop.f32.mrf.mxu0
        %v4097 = vadd.f32 %v4068, %v4096
        %4098 = vdwg.mxu0
        %4099 = vmatpush.msra.mxu0 %v861
        %4100 = vmatpush.msra.mxu0 %v859
        %4101 = vmatpush.msra.mxu0 %v857
        %4102 = vmatpush.msra.mxu0 %v855
        %4103 = vmatpush.msra.mxu0 %v853
        %4104 = vmatpush.msra.mxu0 %v851
        %4105 = vmatpush.msra.mxu0 %v849
        %4106 = vmatpush.msra.mxu0 %v847
        %4107 = vmatpush.msra.mxu0 %v845
        %4108 = vmatpush.msra.mxu0 %v843
        %4109 = vmatpush.msra.mxu0 %v841
        %4110 = vmatpush.msra.mxu0 %v839
        %4111 = vmatpush.msra.mxu0 %v837
        %4112 = vmatpush.msra.mxu0 %v835
        %4113 = vmatpush.msra.mxu0 %v833
        %4114 = vmatpush.msra.mxu0 %v831
        %4115 = vmatmul.f32.gmra.mxu0 %v3727
        %v4116 = vpop.f32.mrf.mxu0
        %v4117 = vadd.f32 %v4030, %v4116
        %4118 = vmatmul.f32.gmra.mxu0 %v3729
        %v4119 = vpop.f32.mrf.mxu0
        %v4120 = vadd.f32 %v4033, %v4119
        %4121 = vmatmul.f32.gmra.mxu0 %v3731
        %v4122 = vpop.f32.mrf.mxu0
        %v4123 = vadd.f32 %v4036, %v4122
        %4124 = vmatmul.f32.gmra.mxu0 %v3733
        %v4125 = vpop.f32.mrf.mxu0
        %v4126 = vadd.f32 %v4039, %v4125
        %4127 = vdwg.mxu0
        %4128 = vmatpush.msra.mxu0 %v893
        %4129 = vmatpush.msra.mxu0 %v891
        %4130 = vmatpush.msra.mxu0 %v889
        %4131 = vmatpush.msra.mxu0 %v887
        %4132 = vmatpush.msra.mxu0 %v885
        %4133 = vmatpush.msra.mxu0 %v883
        %4134 = vmatpush.msra.mxu0 %v881
        %4135 = vmatpush.msra.mxu0 %v879
        %4136 = vmatpush.msra.mxu0 %v877
        %4137 = vmatpush.msra.mxu0 %v875
        %4138 = vmatpush.msra.mxu0 %v873
        %4139 = vmatpush.msra.mxu0 %v871
        %4140 = vmatpush.msra.mxu0 %v869
        %4141 = vmatpush.msra.mxu0 %v867
        %4142 = vmatpush.msra.mxu0 %v865
        %4143 = vmatpush.msra.mxu0 %v863
        %4144 = vmatmul.f32.gmra.mxu0 %v3728
        %v4145 = vpop.f32.mrf.mxu0
        %v4146 = vadd.f32 %v4117, %v4145
        %4147 = vmatmul.f32.gmra.mxu0 %v3730
        %v4148 = vpop.f32.mrf.mxu0
        %v4149 = vadd.f32 %v4120, %v4148
        %4150 = vmatmul.f32.gmra.mxu0 %v3732
        %v4151 = vpop.f32.mrf.mxu0
        %v4152 = vadd.f32 %v4123, %v4151
        %4153 = vmatmul.f32.gmra.mxu0 %v3734
        %v4154 = vpop.f32.mrf.mxu0
        %v4155 = vadd.f32 %v4126, %v4154
        %4156 = vdwg.mxu0
        %4157 = vmatpush.msra.mxu0 %v862
        %4158 = vmatpush.msra.mxu0 %v860
        %4159 = vmatpush.msra.mxu0 %v858
        %4160 = vmatpush.msra.mxu0 %v856
        %4161 = vmatpush.msra.mxu0 %v854
        %4162 = vmatpush.msra.mxu0 %v852
        %4163 = vmatpush.msra.mxu0 %v850
        %4164 = vmatpush.msra.mxu0 %v848
        %4165 = vmatpush.msra.mxu0 %v846
        %4166 = vmatpush.msra.mxu0 %v844
        %4167 = vmatpush.msra.mxu0 %v842
        %4168 = vmatpush.msra.mxu0 %v840
        %4169 = vmatpush.msra.mxu0 %v838
        %4170 = vmatpush.msra.mxu0 %v836
        %4171 = vmatpush.msra.mxu0 %v834
        %4172 = vmatpush.msra.mxu0 %v832
        %4173 = vmatmul.f32.gmra.mxu0 %v3727
        %v4174 = vpop.f32.mrf.mxu0
        %v4175 = vadd.f32 %v4088, %v4174
        %4176 = vmatmul.f32.gmra.mxu0 %v3729
        %v4177 = vpop.f32.mrf.mxu0
        %v4178 = vadd.f32 %v4091, %v4177
        %4179 = vmatmul.f32.gmra.mxu0 %v3731
        %v4180 = vpop.f32.mrf.mxu0
        %v4181 = vadd.f32 %v4094, %v4180
        %4182 = vmatmul.f32.gmra.mxu0 %v3733
        %v4183 = vpop.f32.mrf.mxu0
        %v4184 = vadd.f32 %v4097, %v4183
        %4185 = vdwg.mxu0
        %4186 = vmatpush.msra.mxu0 %v894
        %4187 = vmatpush.msra.mxu0 %v892
        %4188 = vmatpush.msra.mxu0 %v890
        %4189 = vmatpush.msra.mxu0 %v888
        %4190 = vmatpush.msra.mxu0 %v886
        %4191 = vmatpush.msra.mxu0 %v884
        %4192 = vmatpush.msra.mxu0 %v882
        %4193 = vmatpush.msra.mxu0 %v880
        %4194 = vmatpush.msra.mxu0 %v878
        %4195 = vmatpush.msra.mxu0 %v876
        %4196 = vmatpush.msra.mxu0 %v874
        %4197 = vmatpush.msra.mxu0 %v872
        %4198 = vmatpush.msra.mxu0 %v870
        %4199 = vmatpush.msra.mxu0 %v868
        %4200 = vmatpush.msra.mxu0 %v866
        %4201 = vmatpush.msra.mxu0 %v864
        %4202 = vmatmul.f32.gmra.mxu0 %v3728
        %v4203 = vpop.f32.mrf.mxu0
        %v4204 = vadd.f32 %v4175, %v4203
        %4205 = vmatmul.f32.gmra.mxu0 %v3730
        %v4206 = vpop.f32.mrf.mxu0
        %v4207 = vadd.f32 %v4178, %v4206
        %4208 = vmatmul.f32.gmra.mxu0 %v3732
        %v4209 = vpop.f32.mrf.mxu0
        %v4210 = vadd.f32 %v4181, %v4209
        %4211 = vmatmul.f32.gmra.mxu0 %v3734
        %v4212 = vpop.f32.mrf.mxu0
        %v4213 = vadd.f32 %v4184, %v4212
        %4214 = vdwg.mxu0
        %v4215 = vmul.f32 %v3975, %v3975
        %v4216 = vmul.f32 %v3976, %v3976
        %v4217 = vmul.f32 %v3977, %v3977
        %v4218 = vmul.f32 %v3978, %v3978
        %v4219 = vmul.f32 %v3979, %v3979
        %v4220 = vmul.f32 %v3980, %v3980
        %v4221 = vmul.f32 %v3981, %v3981
        %v4222 = vmul.f32 %v3982, %v3982
        %v4223 = vmul.f32 %v4146, %v4146
        %v4224 = vmul.f32 %v4204, %v4204
        %v4225 = vmul.f32 %v4149, %v4149
        %v4226 = vmul.f32 %v4207, %v4207
        %v4227 = vmul.f32 %v4152, %v4152
        %v4228 = vmul.f32 %v4210, %v4210
        %v4229 = vmul.f32 %v4155, %v4155
        %v4230 = vmul.f32 %v4213, %v4213
        %v4231 = vadd.f32 %v4215, %v4223
        %v4232 = vadd.f32 %v4216, %v4224
        %v4233 = vadd.f32 %v4217, %v4225
        %v4234 = vadd.f32 %v4218, %v4226
        %v4235 = vadd.f32 %v4219, %v4227
        %v4236 = vadd.f32 %v4220, %v4228
        %v4237 = vadd.f32 %v4221, %v4229
        %v4238 = vadd.f32 %v4222, %v4230
        %v4239 = vrsqrt.pop %v4231
        %v4240 = vmul.f32 %v4239, %v4231
        %v4241 = vmul.f32 %v4240, %v4239
        %v4242 = vmul.f32 0.5, %v4241
        %v4243 = vsub.f32 1.5, %v4242
        %v4244 = vmul.f32 %v4239, %v4243
        %v4245 = vmul.f32 %v4231, %v4244
        %vm4246 = vcmp.eq.f32.partialorder %v4231, inf
        %v4247 = vsel %vm4246, %v4231, %v4245
        %vm4248 = vcmp.eq.f32.partialorder %v4231, 0.0
        %v4249 = vand.u32 %v4231, 2147483648
        %v4250 = vsel %vm4248, %v4249, %v4247
        %v4251 = vrsqrt.pop %v4232
        %v4252 = vmul.f32 %v4251, %v4232
        %v4253 = vmul.f32 %v4252, %v4251
        %v4254 = vmul.f32 0.5, %v4253
        %v4255 = vsub.f32 1.5, %v4254
        %v4256 = vmul.f32 %v4251, %v4255
        %v4257 = vmul.f32 %v4232, %v4256
        %vm4258 = vcmp.eq.f32.partialorder %v4232, inf
        %v4259 = vsel %vm4258, %v4232, %v4257
        %vm4260 = vcmp.eq.f32.partialorder %v4232, 0.0
        %v4261 = vand.u32 %v4232, 2147483648
        %v4262 = vsel %vm4260, %v4261, %v4259
        %v4263 = vrsqrt.pop %v4233
        %v4264 = vmul.f32 %v4263, %v4233
        %v4265 = vmul.f32 %v4264, %v4263
        %v4266 = vmul.f32 0.5, %v4265
        %v4267 = vsub.f32 1.5, %v4266
        %v4268 = vmul.f32 %v4263, %v4267
        %v4269 = vmul.f32 %v4233, %v4268
        %vm4270 = vcmp.eq.f32.partialorder %v4233, inf
        %v4271 = vsel %vm4270, %v4233, %v4269
        %vm4272 = vcmp.eq.f32.partialorder %v4233, 0.0
        %v4273 = vand.u32 %v4233, 2147483648
        %v4274 = vsel %vm4272, %v4273, %v4271
        %v4275 = vrsqrt.pop %v4234
        %v4276 = vmul.f32 %v4275, %v4234
        %v4277 = vmul.f32 %v4276, %v4275
        %v4278 = vmul.f32 0.5, %v4277
        %v4279 = vsub.f32 1.5, %v4278
        %v4280 = vmul.f32 %v4275, %v4279
        %v4281 = vmul.f32 %v4234, %v4280
        %vm4282 = vcmp.eq.f32.partialorder %v4234, inf
        %v4283 = vsel %vm4282, %v4234, %v4281
        %vm4284 = vcmp.eq.f32.partialorder %v4234, 0.0
        %v4285 = vand.u32 %v4234, 2147483648
        %v4286 = vsel %vm4284, %v4285, %v4283
        %v4287 = vrsqrt.pop %v4235
        %v4288 = vmul.f32 %v4287, %v4235
        %v4289 = vmul.f32 %v4288, %v4287
        %v4290 = vmul.f32 0.5, %v4289
        %v4291 = vsub.f32 1.5, %v4290
        %v4292 = vmul.f32 %v4287, %v4291
        %v4293 = vmul.f32 %v4235, %v4292
        %vm4294 = vcmp.eq.f32.partialorder %v4235, inf
        %v4295 = vsel %vm4294, %v4235, %v4293
        %vm4296 = vcmp.eq.f32.partialorder %v4235, 0.0
        %v4297 = vand.u32 %v4235, 2147483648
        %v4298 = vsel %vm4296, %v4297, %v4295
        %v4299 = vrsqrt.pop %v4236
        %v4300 = vmul.f32 %v4299, %v4236
        %v4301 = vmul.f32 %v4300, %v4299
        %v4302 = vmul.f32 0.5, %v4301
        %v4303 = vsub.f32 1.5, %v4302
        %v4304 = vmul.f32 %v4299, %v4303
        %v4305 = vmul.f32 %v4236, %v4304
        %vm4306 = vcmp.eq.f32.partialorder %v4236, inf
        %v4307 = vsel %vm4306, %v4236, %v4305
        %vm4308 = vcmp.eq.f32.partialorder %v4236, 0.0
        %v4309 = vand.u32 %v4236, 2147483648
        %v4310 = vsel %vm4308, %v4309, %v4307
        %v4311 = vrsqrt.pop %v4237
        %v4312 = vmul.f32 %v4311, %v4237
        %v4313 = vmul.f32 %v4312, %v4311
        %v4314 = vmul.f32 0.5, %v4313
        %v4315 = vsub.f32 1.5, %v4314
        %v4316 = vmul.f32 %v4311, %v4315
        %v4317 = vmul.f32 %v4237, %v4316
        %vm4318 = vcmp.eq.f32.partialorder %v4237, inf
        %v4319 = vsel %vm4318, %v4237, %v4317
        %vm4320 = vcmp.eq.f32.partialorder %v4237, 0.0
        %v4321 = vand.u32 %v4237, 2147483648
        %v4322 = vsel %vm4320, %v4321, %v4319
        %v4323 = vrsqrt.pop %v4238
        %v4324 = vmul.f32 %v4323, %v4238
        %v4325 = vmul.f32 %v4324, %v4323
        %v4326 = vmul.f32 0.5, %v4325
        %v4327 = vsub.f32 1.5, %v4326
        %v4328 = vmul.f32 %v4323, %v4327
        %v4329 = vmul.f32 %v4238, %v4328
        %vm4330 = vcmp.eq.f32.partialorder %v4238, inf
        %v4331 = vsel %vm4330, %v4238, %v4329
        %vm4332 = vcmp.eq.f32.partialorder %v4238, 0.0
        %v4333 = vand.u32 %v4238, 2147483648
        %v4334 = vsel %vm4332, %v4333, %v4331
        %v4335 = vmul.f32 %v4250, 0.00390625
        %v4336 = vmul.f32 %v4262, 0.00390625
        %v4337 = vmul.f32 %v4274, 0.00390625
        %v4338 = vmul.f32 %v4286, 0.00390625
        %v4339 = vmul.f32 %v4298, 0.00390625
        %v4340 = vmul.f32 %v4310, 0.00390625
        %v4341 = vmul.f32 %v4322, 0.00390625
        %v4342 = vmul.f32 %v4334, 0.00390625
        %v4343 = vld [vmem:[#allocation9] sm:$0xff]
        %v4344 = vld [vmem:[#allocation9 + $0x8] sm:$0xff]
        %v4345 = vld [vmem:[#allocation9 + $0x10] sm:$0xff]
        %v4346 = vld [vmem:[#allocation9 + $0x18] sm:$0xff]
        %v4348 = vsel %vm3463, %v4343, 0
        %v4351 = vsel %vm3463, %v4344, 0
        %v4354 = vsel %vm3463, %v4345, 0
        %v4357 = vsel %vm3463, %v4346, 0
        %4359 = vmatpush.msra.mxu0 0.0
        %4360 = vmatpush.msra.mxu0 0.0
        %4361 = vmatpush.msra.mxu0 0.0
        %4362 = vmatpush.msra.mxu0 0.0
        %4363 = vmatpush.msra.mxu0 0.0
        %4364 = vmatpush.msra.mxu0 0.0
        %4365 = vmatpush.msra.mxu0 0.0
        %4366 = vmatpush.msra.mxu0 0.0
        %4367 = vmatpush.msra.mxu0 0.0
        %4368 = vmatpush.msra.mxu0 0.0
        %4369 = vmatpush.msra.mxu0 0.0
        %4370 = vmatpush.msra.mxu0 0.0
        %4371 = vmatpush.msra.mxu0 %v3213
        %4372 = vmatpush.msra.mxu0 %v3211
        %4373 = vmatpush.msra.mxu0 %v1473
        %4374 = vmatpush.msra.mxu0 %v1471
        %4375 = vmatmul.f32.gmra.mxu0 %v4348
        %v4376 = vpop.f32.mrf.mxu0
        %v4377 = vadd.f32 0.0, %v4376
        %4378 = vmatmul.f32.gmra.mxu0 %v4351
        %v4379 = vpop.f32.mrf.mxu0
        %v4380 = vadd.f32 0.0, %v4379
        %4381 = vmatmul.f32.gmra.mxu0 %v4354
        %v4382 = vpop.f32.mrf.mxu0
        %v4383 = vadd.f32 0.0, %v4382
        %4384 = vmatmul.f32.gmra.mxu0 %v4357
        %v4385 = vpop.f32.mrf.mxu0
        %v4386 = vadd.f32 0.0, %v4385
        %4387 = vdwg.mxu0
        %4388 = vmatpush.msra.mxu0 0.0
        %4389 = vmatpush.msra.mxu0 0.0
        %4390 = vmatpush.msra.mxu0 0.0
        %4391 = vmatpush.msra.mxu0 0.0
        %4392 = vmatpush.msra.mxu0 0.0
        %4393 = vmatpush.msra.mxu0 0.0
        %4394 = vmatpush.msra.mxu0 0.0
        %4395 = vmatpush.msra.mxu0 0.0
        %4396 = vmatpush.msra.mxu0 0.0
        %4397 = vmatpush.msra.mxu0 0.0
        %4398 = vmatpush.msra.mxu0 0.0
        %4399 = vmatpush.msra.mxu0 0.0
        %4400 = vmatpush.msra.mxu0 %v3214
        %4401 = vmatpush.msra.mxu0 %v3212
        %4402 = vmatpush.msra.mxu0 %v1474
        %4403 = vmatpush.msra.mxu0 %v1472
        %4404 = vmatmul.f32.gmra.mxu0 %v4348
        %v4405 = vpop.f32.mrf.mxu0
        %v4406 = vadd.f32 0.0, %v4405
        %4407 = vmatmul.f32.gmra.mxu0 %v4351
        %v4408 = vpop.f32.mrf.mxu0
        %v4409 = vadd.f32 0.0, %v4408
        %4410 = vmatmul.f32.gmra.mxu0 %v4354
        %v4411 = vpop.f32.mrf.mxu0
        %v4412 = vadd.f32 0.0, %v4411
        %4413 = vmatmul.f32.gmra.mxu0 %v4357
        %v4414 = vpop.f32.mrf.mxu0
        %v4415 = vadd.f32 0.0, %v4414
        %4416 = vdwg.mxu0
        %v4417 = vld [vmem:[%s7] sm:$0xff]
        %v4418 = vld [vmem:[%s7 + $0x8] sm:$0xff]
        %v4419 = vld [vmem:[%s7 + $0x10] sm:$0xff]
        %v4420 = vld [vmem:[%s7 + $0x18] sm:$0xff]
        %v4421 = vld [vmem:[%s8] sm:$0xff]
        %v4422 = vld [vmem:[%s8 + $0x8] sm:$0xff]
        %v4423 = vld [vmem:[%s8 + $0x10] sm:$0xff]
        %v4424 = vld [vmem:[%s8 + $0x18] sm:$0xff]
        %4425 = vmatpush.msra.mxu0 %v1507
        %4426 = vmatpush.msra.mxu0 %v1505
        %4427 = vmatpush.msra.mxu0 %v1503
        %4428 = vmatpush.msra.mxu0 %v1501
        %4429 = vmatpush.msra.mxu0 %v1499
        %4430 = vmatpush.msra.mxu0 %v1497
        %4431 = vmatpush.msra.mxu0 %v1495
        %4432 = vmatpush.msra.mxu0 %v1493
        %4433 = vmatpush.msra.mxu0 %v1491
        %4434 = vmatpush.msra.mxu0 %v1489
        %4435 = vmatpush.msra.mxu0 %v1487
        %4436 = vmatpush.msra.mxu0 %v1485
        %4437 = vmatpush.msra.mxu0 %v1483
        %4438 = vmatpush.msra.mxu0 %v1481
        %4439 = vmatpush.msra.mxu0 %v1479
        %4440 = vmatpush.msra.mxu0 %v1477
        %4441 = vmatmul.f32.gmra.mxu0 %v1471
        %v4442 = vpop.f32.mrf.mxu0
        %v4443 = vadd.f32 0.0, %v4442
        %4444 = vmatmul.f32.gmra.mxu0 %v1473
        %v4445 = vpop.f32.mrf.mxu0
        %v4446 = vadd.f32 0.0, %v4445
        %4447 = vmatmul.f32.gmra.mxu0 %v3211
        %v4448 = vpop.f32.mrf.mxu0
        %v4449 = vadd.f32 0.0, %v4448
        %4450 = vmatmul.f32.gmra.mxu0 %v3213
        %v4451 = vpop.f32.mrf.mxu0
        %v4452 = vadd.f32 0.0, %v4451
        %4453 = vdwg.mxu0
        %4454 = vmatpush.msra.mxu0 %v1539
        %4455 = vmatpush.msra.mxu0 %v1537
        %4456 = vmatpush.msra.mxu0 %v1535
        %4457 = vmatpush.msra.mxu0 %v1533
        %4458 = vmatpush.msra.mxu0 %v1531
        %4459 = vmatpush.msra.mxu0 %v1529
        %4460 = vmatpush.msra.mxu0 %v1527
        %4461 = vmatpush.msra.mxu0 %v1525
        %4462 = vmatpush.msra.mxu0 %v1523
        %4463 = vmatpush.msra.mxu0 %v1521
        %4464 = vmatpush.msra.mxu0 %v1519
        %4465 = vmatpush.msra.mxu0 %v1517
        %4466 = vmatpush.msra.mxu0 %v1515
        %4467 = vmatpush.msra.mxu0 %v1513
        %4468 = vmatpush.msra.mxu0 %v1511
        %4469 = vmatpush.msra.mxu0 %v1509
        %4470 = vmatmul.f32.gmra.mxu0 %v1472
        %v4471 = vpop.f32.mrf.mxu0
        %v4472 = vadd.f32 %v4443, %v4471
        %4473 = vmatmul.f32.gmra.mxu0 %v1474
        %v4474 = vpop.f32.mrf.mxu0
        %v4475 = vadd.f32 %v4446, %v4474
        %4476 = vmatmul.f32.gmra.mxu0 %v3212
        %v4477 = vpop.f32.mrf.mxu0
        %v4478 = vadd.f32 %v4449, %v4477
        %4479 = vmatmul.f32.gmra.mxu0 %v3214
        %v4480 = vpop.f32.mrf.mxu0
        %v4481 = vadd.f32 %v4452, %v4480
        %4482 = vdwg.mxu0
        %4483 = vmatpush.msra.mxu0 %v1508
        %4484 = vmatpush.msra.mxu0 %v1506
        %4485 = vmatpush.msra.mxu0 %v1504
        %4486 = vmatpush.msra.mxu0 %v1502
        %4487 = vmatpush.msra.mxu0 %v1500
        %4488 = vmatpush.msra.mxu0 %v1498
        %4489 = vmatpush.msra.mxu0 %v1496
        %4490 = vmatpush.msra.mxu0 %v1494
        %4491 = vmatpush.msra.mxu0 %v1492
        %4492 = vmatpush.msra.mxu0 %v1490
        %4493 = vmatpush.msra.mxu0 %v1488
        %4494 = vmatpush.msra.mxu0 %v1486
        %4495 = vmatpush.msra.mxu0 %v1484
        %4496 = vmatpush.msra.mxu0 %v1482
        %4497 = vmatpush.msra.mxu0 %v1480
        %4498 = vmatpush.msra.mxu0 %v1478
        %4499 = vmatmul.f32.gmra.mxu0 %v1471
        %v4500 = vpop.f32.mrf.mxu0
        %v4501 = vadd.f32 0.0, %v4500
        %4502 = vmatmul.f32.gmra.mxu0 %v1473
        %v4503 = vpop.f32.mrf.mxu0
        %v4504 = vadd.f32 0.0, %v4503
        %4505 = vmatmul.f32.gmra.mxu0 %v3211
        %v4506 = vpop.f32.mrf.mxu0
        %v4507 = vadd.f32 0.0, %v4506
        %4508 = vmatmul.f32.gmra.mxu0 %v3213
        %v4509 = vpop.f32.mrf.mxu0
        %v4510 = vadd.f32 0.0, %v4509
        %4511 = vdwg.mxu0
        %4512 = vmatpush.msra.mxu0 %v1540
        %4513 = vmatpush.msra.mxu0 %v1538
        %4514 = vmatpush.msra.mxu0 %v1536
        %4515 = vmatpush.msra.mxu0 %v1534
        %4516 = vmatpush.msra.mxu0 %v1532
        %4517 = vmatpush.msra.mxu0 %v1530
        %4518 = vmatpush.msra.mxu0 %v1528
        %4519 = vmatpush.msra.mxu0 %v1526
        %4520 = vmatpush.msra.mxu0 %v1524
        %4521 = vmatpush.msra.mxu0 %v1522
        %4522 = vmatpush.msra.mxu0 %v1520
        %4523 = vmatpush.msra.mxu0 %v1518
        %4524 = vmatpush.msra.mxu0 %v1516
        %4525 = vmatpush.msra.mxu0 %v1514
        %4526 = vmatpush.msra.mxu0 %v1512
        %4527 = vmatpush.msra.mxu0 %v1510
        %4528 = vmatmul.f32.gmra.mxu0 %v1472
        %v4529 = vpop.f32.mrf.mxu0
        %v4530 = vadd.f32 %v4501, %v4529
        %4531 = vmatmul.f32.gmra.mxu0 %v1474
        %v4532 = vpop.f32.mrf.mxu0
        %v4533 = vadd.f32 %v4504, %v4532
        %4534 = vmatmul.f32.gmra.mxu0 %v3212
        %v4535 = vpop.f32.mrf.mxu0
        %v4536 = vadd.f32 %v4507, %v4535
        %4537 = vmatmul.f32.gmra.mxu0 %v3214
        %v4538 = vpop.f32.mrf.mxu0
        %v4539 = vadd.f32 %v4510, %v4538
        %4540 = vdwg.mxu0
        %4542 = vset.pattern.permute.xlu0 0
        %4543 = vperm.xlu0 %4542, %v4417
        %v4544 = vpop.permute.xlu0 %4543
        %4547 = vset.pattern.permute.xlu0 0
        %4548 = vperm.xlu0 %4547, %v4418
        %v4549 = vpop.permute.xlu0 %4548
        %4552 = vset.pattern.permute.xlu0 0
        %4553 = vperm.xlu0 %4552, %v4419
        %v4554 = vpop.permute.xlu0 %4553
        %4557 = vset.pattern.permute.xlu0 0
        %4558 = vperm.xlu0 %4557, %v4420
        %v4559 = vpop.permute.xlu0 %4558
        %v4561 = vmul.f32 %v4544, %v4472
        %v4562 = vmul.f32 %v4544, %v4530
        %v4563 = vmul.f32 %v4549, %v4475
        %v4564 = vmul.f32 %v4549, %v4533
        %v4565 = vmul.f32 %v4554, %v4478
        %v4566 = vmul.f32 %v4554, %v4536
        %v4567 = vmul.f32 %v4559, %v4481
        %v4568 = vmul.f32 %v4559, %v4539
        %v4569 = vadd.f32 %v4561, 0.0
        %v4570 = vadd.f32 %v4562, 0.0
        %v4571 = vadd.f32 %v4563, 0.0
        %v4572 = vadd.f32 %v4564, 0.0
        %v4573 = vadd.f32 %v4565, 0.0
        %v4574 = vadd.f32 %v4566, 0.0
        %v4575 = vadd.f32 %v4567, 0.0
        %v4576 = vadd.f32 %v4568, 0.0
        %4577 = vmatpush.msra.mxu0 %v1507
        %4578 = vmatpush.msra.mxu0 %v1505
        %4579 = vmatpush.msra.mxu0 %v1503
        %4580 = vmatpush.msra.mxu0 %v1501
        %4581 = vmatpush.msra.mxu0 %v1499
        %4582 = vmatpush.msra.mxu0 %v1497
        %4583 = vmatpush.msra.mxu0 %v1495
        %4584 = vmatpush.msra.mxu0 %v1493
        %4585 = vmatpush.msra.mxu0 %v1491
        %4586 = vmatpush.msra.mxu0 %v1489
        %4587 = vmatpush.msra.mxu0 %v1487
        %4588 = vmatpush.msra.mxu0 %v1485
        %4589 = vmatpush.msra.mxu0 %v1483
        %4590 = vmatpush.msra.mxu0 %v1481
        %4591 = vmatpush.msra.mxu0 %v1479
        %4592 = vmatpush.msra.mxu0 %v1477
        %4593 = vmatmul.f32.gmra.mxu0 %v4377
        %v4594 = vpop.f32.mrf.mxu0
        %v4595 = vadd.f32 0.0, %v4594
        %4596 = vmatmul.f32.gmra.mxu0 %v4380
        %v4597 = vpop.f32.mrf.mxu0
        %v4598 = vadd.f32 0.0, %v4597
        %4599 = vmatmul.f32.gmra.mxu0 %v4383
        %v4600 = vpop.f32.mrf.mxu0
        %v4601 = vadd.f32 0.0, %v4600
        %4602 = vmatmul.f32.gmra.mxu0 %v4386
        %v4603 = vpop.f32.mrf.mxu0
        %v4604 = vadd.f32 0.0, %v4603
        %4605 = vdwg.mxu0
        %4606 = vmatpush.msra.mxu0 %v1539
        %4607 = vmatpush.msra.mxu0 %v1537
        %4608 = vmatpush.msra.mxu0 %v1535
        %4609 = vmatpush.msra.mxu0 %v1533
        %4610 = vmatpush.msra.mxu0 %v1531
        %4611 = vmatpush.msra.mxu0 %v1529
        %4612 = vmatpush.msra.mxu0 %v1527
        %4613 = vmatpush.msra.mxu0 %v1525
        %4614 = vmatpush.msra.mxu0 %v1523
        %4615 = vmatpush.msra.mxu0 %v1521
        %4616 = vmatpush.msra.mxu0 %v1519
        %4617 = vmatpush.msra.mxu0 %v1517
        %4618 = vmatpush.msra.mxu0 %v1515
        %4619 = vmatpush.msra.mxu0 %v1513
        %4620 = vmatpush.msra.mxu0 %v1511
        %4621 = vmatpush.msra.mxu0 %v1509
        %4622 = vmatmul.f32.gmra.mxu0 %v4406
        %v4623 = vpop.f32.mrf.mxu0
        %v4624 = vadd.f32 %v4595, %v4623
        %4625 = vmatmul.f32.gmra.mxu0 %v4409
        %v4626 = vpop.f32.mrf.mxu0
        %v4627 = vadd.f32 %v4598, %v4626
        %4628 = vmatmul.f32.gmra.mxu0 %v4412
        %v4629 = vpop.f32.mrf.mxu0
        %v4630 = vadd.f32 %v4601, %v4629
        %4631 = vmatmul.f32.gmra.mxu0 %v4415
        %v4632 = vpop.f32.mrf.mxu0
        %v4633 = vadd.f32 %v4604, %v4632
        %4634 = vdwg.mxu0
        %4635 = vmatpush.msra.mxu0 %v1508
        %4636 = vmatpush.msra.mxu0 %v1506
        %4637 = vmatpush.msra.mxu0 %v1504
        %4638 = vmatpush.msra.mxu0 %v1502
        %4639 = vmatpush.msra.mxu0 %v1500
        %4640 = vmatpush.msra.mxu0 %v1498
        %4641 = vmatpush.msra.mxu0 %v1496
        %4642 = vmatpush.msra.mxu0 %v1494
        %4643 = vmatpush.msra.mxu0 %v1492
        %4644 = vmatpush.msra.mxu0 %v1490
        %4645 = vmatpush.msra.mxu0 %v1488
        %4646 = vmatpush.msra.mxu0 %v1486
        %4647 = vmatpush.msra.mxu0 %v1484
        %4648 = vmatpush.msra.mxu0 %v1482
        %4649 = vmatpush.msra.mxu0 %v1480
        %4650 = vmatpush.msra.mxu0 %v1478
        %4651 = vmatmul.f32.gmra.mxu0 %v4377
        %v4652 = vpop.f32.mrf.mxu0
        %v4653 = vadd.f32 0.0, %v4652
        %4654 = vmatmul.f32.gmra.mxu0 %v4380
        %v4655 = vpop.f32.mrf.mxu0
        %v4656 = vadd.f32 0.0, %v4655
        %4657 = vmatmul.f32.gmra.mxu0 %v4383
        %v4658 = vpop.f32.mrf.mxu0
        %v4659 = vadd.f32 0.0, %v4658
        %4660 = vmatmul.f32.gmra.mxu0 %v4386
        %v4661 = vpop.f32.mrf.mxu0
        %v4662 = vadd.f32 0.0, %v4661
        %4663 = vdwg.mxu0
        %4664 = vmatpush.msra.mxu0 %v1540
        %4665 = vmatpush.msra.mxu0 %v1538
        %4666 = vmatpush.msra.mxu0 %v1536
        %4667 = vmatpush.msra.mxu0 %v1534
        %4668 = vmatpush.msra.mxu0 %v1532
        %4669 = vmatpush.msra.mxu0 %v1530
        %4670 = vmatpush.msra.mxu0 %v1528
        %4671 = vmatpush.msra.mxu0 %v1526
        %4672 = vmatpush.msra.mxu0 %v1524
        %4673 = vmatpush.msra.mxu0 %v1522
        %4674 = vmatpush.msra.mxu0 %v1520
        %4675 = vmatpush.msra.mxu0 %v1518
        %4676 = vmatpush.msra.mxu0 %v1516
        %4677 = vmatpush.msra.mxu0 %v1514
        %4678 = vmatpush.msra.mxu0 %v1512
        %4679 = vmatpush.msra.mxu0 %v1510
        %4680 = vmatmul.f32.gmra.mxu0 %v4406
        %v4681 = vpop.f32.mrf.mxu0
        %v4682 = vadd.f32 %v4653, %v4681
        %4683 = vmatmul.f32.gmra.mxu0 %v4409
        %v4684 = vpop.f32.mrf.mxu0
        %v4685 = vadd.f32 %v4656, %v4684
        %4686 = vmatmul.f32.gmra.mxu0 %v4412
        %v4687 = vpop.f32.mrf.mxu0
        %v4688 = vadd.f32 %v4659, %v4687
        %4689 = vmatmul.f32.gmra.mxu0 %v4415
        %v4690 = vpop.f32.mrf.mxu0
        %v4691 = vadd.f32 %v4662, %v4690
        %4692 = vdwg.mxu0
        %4694 = vset.pattern.permute.xlu0 0
        %4695 = vperm.xlu0 %4694, %v4421
        %v4696 = vpop.permute.xlu0 %4695
        %4699 = vset.pattern.permute.xlu0 0
        %4700 = vperm.xlu0 %4699, %v4422
        %v4701 = vpop.permute.xlu0 %4700
        %4704 = vset.pattern.permute.xlu0 0
        %4705 = vperm.xlu0 %4704, %v4423
        %v4706 = vpop.permute.xlu0 %4705
        %4709 = vset.pattern.permute.xlu0 0
        %4710 = vperm.xlu0 %4709, %v4424
        %v4711 = vpop.permute.xlu0 %4710
        %v4713 = vmul.f32 %v4696, %v4624
        %v4714 = vmul.f32 %v4696, %v4682
        %v4715 = vmul.f32 %v4701, %v4627
        %v4716 = vmul.f32 %v4701, %v4685
        %v4717 = vmul.f32 %v4706, %v4630
        %v4718 = vmul.f32 %v4706, %v4688
        %v4719 = vmul.f32 %v4711, %v4633
        %v4720 = vmul.f32 %v4711, %v4691
        %v4721 = vadd.f32 %v4569, %v4713
        %v4722 = vadd.f32 %v4570, %v4714
        %v4723 = vadd.f32 %v4571, %v4715
        %v4724 = vadd.f32 %v4572, %v4716
        %v4725 = vadd.f32 %v4573, %v4717
        %v4726 = vadd.f32 %v4574, %v4718
        %v4727 = vadd.f32 %v4575, %v4719
        %v4728 = vadd.f32 %v4576, %v4720
        %4729 = vmatpush.msra.mxu0 %v1682
        %4730 = vmatpush.msra.mxu0 %v1680
        %4731 = vmatpush.msra.mxu0 %v1678
        %4732 = vmatpush.msra.mxu0 %v1676
        %4733 = vmatpush.msra.mxu0 %v1674
        %4734 = vmatpush.msra.mxu0 %v1672
        %4735 = vmatpush.msra.mxu0 %v1670
        %4736 = vmatpush.msra.mxu0 %v1668
        %4737 = vmatpush.msra.mxu0 %v1666
        %4738 = vmatpush.msra.mxu0 %v1664
        %4739 = vmatpush.msra.mxu0 %v1662
        %4740 = vmatpush.msra.mxu0 %v1660
        %4741 = vmatpush.msra.mxu0 %v1658
        %4742 = vmatpush.msra.mxu0 %v1656
        %4743 = vmatpush.msra.mxu0 %v1654
        %4744 = vmatpush.msra.mxu0 %v1652
        %4745 = vmatmul.f32.gmra.mxu0 %v1471
        %v4746 = vpop.f32.mrf.mxu0
        %v4747 = vadd.f32 0.0, %v4746
        %4748 = vmatmul.f32.gmra.mxu0 %v1473
        %v4749 = vpop.f32.mrf.mxu0
        %v4750 = vadd.f32 0.0, %v4749
        %4751 = vmatmul.f32.gmra.mxu0 %v3211
        %v4752 = vpop.f32.mrf.mxu0
        %v4753 = vadd.f32 0.0, %v4752
        %4754 = vmatmul.f32.gmra.mxu0 %v3213
        %v4755 = vpop.f32.mrf.mxu0
        %v4756 = vadd.f32 0.0, %v4755
        %4757 = vdwg.mxu0
        %4758 = vmatpush.msra.mxu0 %v1714
        %4759 = vmatpush.msra.mxu0 %v1712
        %4760 = vmatpush.msra.mxu0 %v1710
        %4761 = vmatpush.msra.mxu0 %v1708
        %4762 = vmatpush.msra.mxu0 %v1706
        %4763 = vmatpush.msra.mxu0 %v1704
        %4764 = vmatpush.msra.mxu0 %v1702
        %4765 = vmatpush.msra.mxu0 %v1700
        %4766 = vmatpush.msra.mxu0 %v1698
        %4767 = vmatpush.msra.mxu0 %v1696
        %4768 = vmatpush.msra.mxu0 %v1694
        %4769 = vmatpush.msra.mxu0 %v1692
        %4770 = vmatpush.msra.mxu0 %v1690
        %4771 = vmatpush.msra.mxu0 %v1688
        %4772 = vmatpush.msra.mxu0 %v1686
        %4773 = vmatpush.msra.mxu0 %v1684
        %4774 = vmatmul.f32.gmra.mxu0 %v1472
        %v4775 = vpop.f32.mrf.mxu0
        %v4776 = vadd.f32 %v4747, %v4775
        %4777 = vmatmul.f32.gmra.mxu0 %v1474
        %v4778 = vpop.f32.mrf.mxu0
        %v4779 = vadd.f32 %v4750, %v4778
        %4780 = vmatmul.f32.gmra.mxu0 %v3212
        %v4781 = vpop.f32.mrf.mxu0
        %v4782 = vadd.f32 %v4753, %v4781
        %4783 = vmatmul.f32.gmra.mxu0 %v3214
        %v4784 = vpop.f32.mrf.mxu0
        %v4785 = vadd.f32 %v4756, %v4784
        %4786 = vdwg.mxu0
        %4787 = vmatpush.msra.mxu0 %v1683
        %4788 = vmatpush.msra.mxu0 %v1681
        %4789 = vmatpush.msra.mxu0 %v1679
        %4790 = vmatpush.msra.mxu0 %v1677
        %4791 = vmatpush.msra.mxu0 %v1675
        %4792 = vmatpush.msra.mxu0 %v1673
        %4793 = vmatpush.msra.mxu0 %v1671
        %4794 = vmatpush.msra.mxu0 %v1669
        %4795 = vmatpush.msra.mxu0 %v1667
        %4796 = vmatpush.msra.mxu0 %v1665
        %4797 = vmatpush.msra.mxu0 %v1663
        %4798 = vmatpush.msra.mxu0 %v1661
        %4799 = vmatpush.msra.mxu0 %v1659
        %4800 = vmatpush.msra.mxu0 %v1657
        %4801 = vmatpush.msra.mxu0 %v1655
        %4802 = vmatpush.msra.mxu0 %v1653
        %4803 = vmatmul.f32.gmra.mxu0 %v1471
        %v4804 = vpop.f32.mrf.mxu0
        %v4805 = vadd.f32 0.0, %v4804
        %4806 = vmatmul.f32.gmra.mxu0 %v1473
        %v4807 = vpop.f32.mrf.mxu0
        %v4808 = vadd.f32 0.0, %v4807
        %4809 = vmatmul.f32.gmra.mxu0 %v3211
        %v4810 = vpop.f32.mrf.mxu0
        %v4811 = vadd.f32 0.0, %v4810
        %4812 = vmatmul.f32.gmra.mxu0 %v3213
        %v4813 = vpop.f32.mrf.mxu0
        %v4814 = vadd.f32 0.0, %v4813
        %4815 = vdwg.mxu0
        %4816 = vmatpush.msra.mxu0 %v1715
        %4817 = vmatpush.msra.mxu0 %v1713
        %4818 = vmatpush.msra.mxu0 %v1711
        %4819 = vmatpush.msra.mxu0 %v1709
        %4820 = vmatpush.msra.mxu0 %v1707
        %4821 = vmatpush.msra.mxu0 %v1705
        %4822 = vmatpush.msra.mxu0 %v1703
        %4823 = vmatpush.msra.mxu0 %v1701
        %4824 = vmatpush.msra.mxu0 %v1699
        %4825 = vmatpush.msra.mxu0 %v1697
        %4826 = vmatpush.msra.mxu0 %v1695
        %4827 = vmatpush.msra.mxu0 %v1693
        %4828 = vmatpush.msra.mxu0 %v1691
        %4829 = vmatpush.msra.mxu0 %v1689
        %4830 = vmatpush.msra.mxu0 %v1687
        %4831 = vmatpush.msra.mxu0 %v1685
        %4832 = vmatmul.f32.gmra.mxu0 %v1472
        %v4833 = vpop.f32.mrf.mxu0
        %v4834 = vadd.f32 %v4805, %v4833
        %4835 = vmatmul.f32.gmra.mxu0 %v1474
        %v4836 = vpop.f32.mrf.mxu0
        %v4837 = vadd.f32 %v4808, %v4836
        %4838 = vmatmul.f32.gmra.mxu0 %v3212
        %v4839 = vpop.f32.mrf.mxu0
        %v4840 = vadd.f32 %v4811, %v4839
        %4841 = vmatmul.f32.gmra.mxu0 %v3214
        %v4842 = vpop.f32.mrf.mxu0
        %v4843 = vadd.f32 %v4814, %v4842
        %4844 = vdwg.mxu0
        %4845 = vset.pattern.permute.xlu0 1
        %4846 = vperm.xlu0 %4845, %v4417
        %v4847 = vpop.permute.xlu0 %4846
        %4849 = vset.pattern.permute.xlu0 1
        %4850 = vperm.xlu0 %4849, %v4418
        %v4851 = vpop.permute.xlu0 %4850
        %4853 = vset.pattern.permute.xlu0 1
        %4854 = vperm.xlu0 %4853, %v4419
        %v4855 = vpop.permute.xlu0 %4854
        %4857 = vset.pattern.permute.xlu0 1
        %4858 = vperm.xlu0 %4857, %v4420
        %v4859 = vpop.permute.xlu0 %4858
        %v4861 = vmul.f32 %v4847, %v4776
        %v4862 = vmul.f32 %v4847, %v4834
        %v4863 = vmul.f32 %v4851, %v4779
        %v4864 = vmul.f32 %v4851, %v4837
        %v4865 = vmul.f32 %v4855, %v4782
        %v4866 = vmul.f32 %v4855, %v4840
        %v4867 = vmul.f32 %v4859, %v4785
        %v4868 = vmul.f32 %v4859, %v4843
        %v4869 = vadd.f32 %v4721, %v4861
        %v4870 = vadd.f32 %v4722, %v4862
        %v4871 = vadd.f32 %v4723, %v4863
        %v4872 = vadd.f32 %v4724, %v4864
        %v4873 = vadd.f32 %v4725, %v4865
        %v4874 = vadd.f32 %v4726, %v4866
        %v4875 = vadd.f32 %v4727, %v4867
        %v4876 = vadd.f32 %v4728, %v4868
        %4877 = vmatpush.msra.mxu0 %v1682
        %4878 = vmatpush.msra.mxu0 %v1680
        %4879 = vmatpush.msra.mxu0 %v1678
        %4880 = vmatpush.msra.mxu0 %v1676
        %4881 = vmatpush.msra.mxu0 %v1674
        %4882 = vmatpush.msra.mxu0 %v1672
        %4883 = vmatpush.msra.mxu0 %v1670
        %4884 = vmatpush.msra.mxu0 %v1668
        %4885 = vmatpush.msra.mxu0 %v1666
        %4886 = vmatpush.msra.mxu0 %v1664
        %4887 = vmatpush.msra.mxu0 %v1662
        %4888 = vmatpush.msra.mxu0 %v1660
        %4889 = vmatpush.msra.mxu0 %v1658
        %4890 = vmatpush.msra.mxu0 %v1656
        %4891 = vmatpush.msra.mxu0 %v1654
        %4892 = vmatpush.msra.mxu0 %v1652
        %4893 = vmatmul.f32.gmra.mxu0 %v4377
        %v4894 = vpop.f32.mrf.mxu0
        %v4895 = vadd.f32 0.0, %v4894
        %4896 = vmatmul.f32.gmra.mxu0 %v4380
        %v4897 = vpop.f32.mrf.mxu0
        %v4898 = vadd.f32 0.0, %v4897
        %4899 = vmatmul.f32.gmra.mxu0 %v4383
        %v4900 = vpop.f32.mrf.mxu0
        %v4901 = vadd.f32 0.0, %v4900
        %4902 = vmatmul.f32.gmra.mxu0 %v4386
        %v4903 = vpop.f32.mrf.mxu0
        %v4904 = vadd.f32 0.0, %v4903
        %4905 = vdwg.mxu0
        %4906 = vmatpush.msra.mxu0 %v1714
        %4907 = vmatpush.msra.mxu0 %v1712
        %4908 = vmatpush.msra.mxu0 %v1710
        %4909 = vmatpush.msra.mxu0 %v1708
        %4910 = vmatpush.msra.mxu0 %v1706
        %4911 = vmatpush.msra.mxu0 %v1704
        %4912 = vmatpush.msra.mxu0 %v1702
        %4913 = vmatpush.msra.mxu0 %v1700
        %4914 = vmatpush.msra.mxu0 %v1698
        %4915 = vmatpush.msra.mxu0 %v1696
        %4916 = vmatpush.msra.mxu0 %v1694
        %4917 = vmatpush.msra.mxu0 %v1692
        %4918 = vmatpush.msra.mxu0 %v1690
        %4919 = vmatpush.msra.mxu0 %v1688
        %4920 = vmatpush.msra.mxu0 %v1686
        %4921 = vmatpush.msra.mxu0 %v1684
        %4922 = vmatmul.f32.gmra.mxu0 %v4406
        %v4923 = vpop.f32.mrf.mxu0
        %v4924 = vadd.f32 %v4895, %v4923
        %4925 = vmatmul.f32.gmra.mxu0 %v4409
        %v4926 = vpop.f32.mrf.mxu0
        %v4927 = vadd.f32 %v4898, %v4926
        %4928 = vmatmul.f32.gmra.mxu0 %v4412
        %v4929 = vpop.f32.mrf.mxu0
        %v4930 = vadd.f32 %v4901, %v4929
        %4931 = vmatmul.f32.gmra.mxu0 %v4415
        %v4932 = vpop.f32.mrf.mxu0
        %v4933 = vadd.f32 %v4904, %v4932
        %4934 = vdwg.mxu0
        %4935 = vmatpush.msra.mxu0 %v1683
        %4936 = vmatpush.msra.mxu0 %v1681
        %4937 = vmatpush.msra.mxu0 %v1679
        %4938 = vmatpush.msra.mxu0 %v1677
        %4939 = vmatpush.msra.mxu0 %v1675
        %4940 = vmatpush.msra.mxu0 %v1673
        %4941 = vmatpush.msra.mxu0 %v1671
        %4942 = vmatpush.msra.mxu0 %v1669
        %4943 = vmatpush.msra.mxu0 %v1667
        %4944 = vmatpush.msra.mxu0 %v1665
        %4945 = vmatpush.msra.mxu0 %v1663
        %4946 = vmatpush.msra.mxu0 %v1661
        %4947 = vmatpush.msra.mxu0 %v1659
        %4948 = vmatpush.msra.mxu0 %v1657
        %4949 = vmatpush.msra.mxu0 %v1655
        %4950 = vmatpush.msra.mxu0 %v1653
        %4951 = vmatmul.f32.gmra.mxu0 %v4377
        %v4952 = vpop.f32.mrf.mxu0
        %v4953 = vadd.f32 0.0, %v4952
        %4954 = vmatmul.f32.gmra.mxu0 %v4380
        %v4955 = vpop.f32.mrf.mxu0
        %v4956 = vadd.f32 0.0, %v4955
        %4957 = vmatmul.f32.gmra.mxu0 %v4383
        %v4958 = vpop.f32.mrf.mxu0
        %v4959 = vadd.f32 0.0, %v4958
        %4960 = vmatmul.f32.gmra.mxu0 %v4386
        %v4961 = vpop.f32.mrf.mxu0
        %v4962 = vadd.f32 0.0, %v4961
        %4963 = vdwg.mxu0
        %4964 = vmatpush.msra.mxu0 %v1715
        %4965 = vmatpush.msra.mxu0 %v1713
        %4966 = vmatpush.msra.mxu0 %v1711
        %4967 = vmatpush.msra.mxu0 %v1709
        %4968 = vmatpush.msra.mxu0 %v1707
        %4969 = vmatpush.msra.mxu0 %v1705
        %4970 = vmatpush.msra.mxu0 %v1703
        %4971 = vmatpush.msra.mxu0 %v1701
        %4972 = vmatpush.msra.mxu0 %v1699
        %4973 = vmatpush.msra.mxu0 %v1697
        %4974 = vmatpush.msra.mxu0 %v1695
        %4975 = vmatpush.msra.mxu0 %v1693
        %4976 = vmatpush.msra.mxu0 %v1691
        %4977 = vmatpush.msra.mxu0 %v1689
        %4978 = vmatpush.msra.mxu0 %v1687
        %4979 = vmatpush.msra.mxu0 %v1685
        %4980 = vmatmul.f32.gmra.mxu0 %v4406
        %v4981 = vpop.f32.mrf.mxu0
        %v4982 = vadd.f32 %v4953, %v4981
        %4983 = vmatmul.f32.gmra.mxu0 %v4409
        %v4984 = vpop.f32.mrf.mxu0
        %v4985 = vadd.f32 %v4956, %v4984
        %4986 = vmatmul.f32.gmra.mxu0 %v4412
        %v4987 = vpop.f32.mrf.mxu0
        %v4988 = vadd.f32 %v4959, %v4987
        %4989 = vmatmul.f32.gmra.mxu0 %v4415
        %v4990 = vpop.f32.mrf.mxu0
        %v4991 = vadd.f32 %v4962, %v4990
        %4992 = vdwg.mxu0
        %4993 = vset.pattern.permute.xlu0 1
        %4994 = vperm.xlu0 %4993, %v4421
        %v4995 = vpop.permute.xlu0 %4994
        %4997 = vset.pattern.permute.xlu0 1
        %4998 = vperm.xlu0 %4997, %v4422
        %v4999 = vpop.permute.xlu0 %4998
        %5001 = vset.pattern.permute.xlu0 1
        %5002 = vperm.xlu0 %5001, %v4423
        %v5003 = vpop.permute.xlu0 %5002
        %5005 = vset.pattern.permute.xlu0 1
        %5006 = vperm.xlu0 %5005, %v4424
        %v5007 = vpop.permute.xlu0 %5006
        %v5009 = vmul.f32 %v4995, %v4924
        %v5010 = vmul.f32 %v4995, %v4982
        %v5011 = vmul.f32 %v4999, %v4927
        %v5012 = vmul.f32 %v4999, %v4985
        %v5013 = vmul.f32 %v5003, %v4930
        %v5014 = vmul.f32 %v5003, %v4988
        %v5015 = vmul.f32 %v5007, %v4933
        %v5016 = vmul.f32 %v5007, %v4991
        %v5017 = vadd.f32 %v4869, %v5009
        %v5018 = vadd.f32 %v4870, %v5010
        %v5019 = vadd.f32 %v4871, %v5011
        %v5020 = vadd.f32 %v4872, %v5012
        %v5021 = vadd.f32 %v4873, %v5013
        %v5022 = vadd.f32 %v4874, %v5014
        %v5023 = vadd.f32 %v4875, %v5015
        %v5024 = vadd.f32 %v4876, %v5016
        %5025 = vmatpush.msra.mxu0 %v1855
        %5026 = vmatpush.msra.mxu0 %v1853
        %5027 = vmatpush.msra.mxu0 %v1851
        %5028 = vmatpush.msra.mxu0 %v1849
        %5029 = vmatpush.msra.mxu0 %v1847
        %5030 = vmatpush.msra.mxu0 %v1845
        %5031 = vmatpush.msra.mxu0 %v1843
        %5032 = vmatpush.msra.mxu0 %v1841
        %5033 = vmatpush.msra.mxu0 %v1839
        %5034 = vmatpush.msra.mxu0 %v1837
        %5035 = vmatpush.msra.mxu0 %v1835
        %5036 = vmatpush.msra.mxu0 %v1833
        %5037 = vmatpush.msra.mxu0 %v1831
        %5038 = vmatpush.msra.mxu0 %v1829
        %5039 = vmatpush.msra.mxu0 %v1827
        %5040 = vmatpush.msra.mxu0 %v1825
        %5041 = vmatmul.f32.gmra.mxu0 %v1471
        %v5042 = vpop.f32.mrf.mxu0
        %v5043 = vadd.f32 0.0, %v5042
        %5044 = vmatmul.f32.gmra.mxu0 %v1473
        %v5045 = vpop.f32.mrf.mxu0
        %v5046 = vadd.f32 0.0, %v5045
        %5047 = vmatmul.f32.gmra.mxu0 %v3211
        %v5048 = vpop.f32.mrf.mxu0
        %v5049 = vadd.f32 0.0, %v5048
        %5050 = vmatmul.f32.gmra.mxu0 %v3213
        %v5051 = vpop.f32.mrf.mxu0
        %v5052 = vadd.f32 0.0, %v5051
        %5053 = vdwg.mxu0
        %5054 = vmatpush.msra.mxu0 %v1887
        %5055 = vmatpush.msra.mxu0 %v1885
        %5056 = vmatpush.msra.mxu0 %v1883
        %5057 = vmatpush.msra.mxu0 %v1881
        %5058 = vmatpush.msra.mxu0 %v1879
        %5059 = vmatpush.msra.mxu0 %v1877
        %5060 = vmatpush.msra.mxu0 %v1875
        %5061 = vmatpush.msra.mxu0 %v1873
        %5062 = vmatpush.msra.mxu0 %v1871
        %5063 = vmatpush.msra.mxu0 %v1869
        %5064 = vmatpush.msra.mxu0 %v1867
        %5065 = vmatpush.msra.mxu0 %v1865
        %5066 = vmatpush.msra.mxu0 %v1863
        %5067 = vmatpush.msra.mxu0 %v1861
        %5068 = vmatpush.msra.mxu0 %v1859
        %5069 = vmatpush.msra.mxu0 %v1857
        %5070 = vmatmul.f32.gmra.mxu0 %v1472
        %v5071 = vpop.f32.mrf.mxu0
        %v5072 = vadd.f32 %v5043, %v5071
        %5073 = vmatmul.f32.gmra.mxu0 %v1474
        %v5074 = vpop.f32.mrf.mxu0
        %v5075 = vadd.f32 %v5046, %v5074
        %5076 = vmatmul.f32.gmra.mxu0 %v3212
        %v5077 = vpop.f32.mrf.mxu0
        %v5078 = vadd.f32 %v5049, %v5077
        %5079 = vmatmul.f32.gmra.mxu0 %v3214
        %v5080 = vpop.f32.mrf.mxu0
        %v5081 = vadd.f32 %v5052, %v5080
        %5082 = vdwg.mxu0
        %5083 = vmatpush.msra.mxu0 %v1856
        %5084 = vmatpush.msra.mxu0 %v1854
        %5085 = vmatpush.msra.mxu0 %v1852
        %5086 = vmatpush.msra.mxu0 %v1850
        %5087 = vmatpush.msra.mxu0 %v1848
        %5088 = vmatpush.msra.mxu0 %v1846
        %5089 = vmatpush.msra.mxu0 %v1844
        %5090 = vmatpush.msra.mxu0 %v1842
        %5091 = vmatpush.msra.mxu0 %v1840
        %5092 = vmatpush.msra.mxu0 %v1838
        %5093 = vmatpush.msra.mxu0 %v1836
        %5094 = vmatpush.msra.mxu0 %v1834
        %5095 = vmatpush.msra.mxu0 %v1832
        %5096 = vmatpush.msra.mxu0 %v1830
        %5097 = vmatpush.msra.mxu0 %v1828
        %5098 = vmatpush.msra.mxu0 %v1826
        %5099 = vmatmul.f32.gmra.mxu0 %v1471
        %v5100 = vpop.f32.mrf.mxu0
        %v5101 = vadd.f32 0.0, %v5100
        %5102 = vmatmul.f32.gmra.mxu0 %v1473
        %v5103 = vpop.f32.mrf.mxu0
        %v5104 = vadd.f32 0.0, %v5103
        %5105 = vmatmul.f32.gmra.mxu0 %v3211
        %v5106 = vpop.f32.mrf.mxu0
        %v5107 = vadd.f32 0.0, %v5106
        %5108 = vmatmul.f32.gmra.mxu0 %v3213
        %v5109 = vpop.f32.mrf.mxu0
        %v5110 = vadd.f32 0.0, %v5109
        %5111 = vdwg.mxu0
        %5112 = vmatpush.msra.mxu0 %v1888
        %5113 = vmatpush.msra.mxu0 %v1886
        %5114 = vmatpush.msra.mxu0 %v1884
        %5115 = vmatpush.msra.mxu0 %v1882
        %5116 = vmatpush.msra.mxu0 %v1880
        %5117 = vmatpush.msra.mxu0 %v1878
        %5118 = vmatpush.msra.mxu0 %v1876
        %5119 = vmatpush.msra.mxu0 %v1874
        %5120 = vmatpush.msra.mxu0 %v1872
        %5121 = vmatpush.msra.mxu0 %v1870
        %5122 = vmatpush.msra.mxu0 %v1868
        %5123 = vmatpush.msra.mxu0 %v1866
        %5124 = vmatpush.msra.mxu0 %v1864
        %5125 = vmatpush.msra.mxu0 %v1862
        %5126 = vmatpush.msra.mxu0 %v1860
        %5127 = vmatpush.msra.mxu0 %v1858
        %5128 = vmatmul.f32.gmra.mxu0 %v1472
        %v5129 = vpop.f32.mrf.mxu0
        %v5130 = vadd.f32 %v5101, %v5129
        %5131 = vmatmul.f32.gmra.mxu0 %v1474
        %v5132 = vpop.f32.mrf.mxu0
        %v5133 = vadd.f32 %v5104, %v5132
        %5134 = vmatmul.f32.gmra.mxu0 %v3212
        %v5135 = vpop.f32.mrf.mxu0
        %v5136 = vadd.f32 %v5107, %v5135
        %5137 = vmatmul.f32.gmra.mxu0 %v3214
        %v5138 = vpop.f32.mrf.mxu0
        %v5139 = vadd.f32 %v5110, %v5138
        %5140 = vdwg.mxu0
        %5141 = vset.pattern.permute.xlu0 2
        %5142 = vperm.xlu0 %5141, %v4417
        %v5143 = vpop.permute.xlu0 %5142
        %5145 = vset.pattern.permute.xlu0 2
        %5146 = vperm.xlu0 %5145, %v4418
        %v5147 = vpop.permute.xlu0 %5146
        %5149 = vset.pattern.permute.xlu0 2
        %5150 = vperm.xlu0 %5149, %v4419
        %v5151 = vpop.permute.xlu0 %5150
        %5153 = vset.pattern.permute.xlu0 2
        %5154 = vperm.xlu0 %5153, %v4420
        %v5155 = vpop.permute.xlu0 %5154
        %v5157 = vmul.f32 %v5143, %v5072
        %v5158 = vmul.f32 %v5143, %v5130
        %v5159 = vmul.f32 %v5147, %v5075
        %v5160 = vmul.f32 %v5147, %v5133
        %v5161 = vmul.f32 %v5151, %v5078
        %v5162 = vmul.f32 %v5151, %v5136
        %v5163 = vmul.f32 %v5155, %v5081
        %v5164 = vmul.f32 %v5155, %v5139
        %v5165 = vadd.f32 %v5017, %v5157
        %v5166 = vadd.f32 %v5018, %v5158
        %v5167 = vadd.f32 %v5019, %v5159
        %v5168 = vadd.f32 %v5020, %v5160
        %v5169 = vadd.f32 %v5021, %v5161
        %v5170 = vadd.f32 %v5022, %v5162
        %v5171 = vadd.f32 %v5023, %v5163
        %v5172 = vadd.f32 %v5024, %v5164
        %5173 = vmatpush.msra.mxu0 %v1855
        %5174 = vmatpush.msra.mxu0 %v1853
        %5175 = vmatpush.msra.mxu0 %v1851
        %5176 = vmatpush.msra.mxu0 %v1849
        %5177 = vmatpush.msra.mxu0 %v1847
        %5178 = vmatpush.msra.mxu0 %v1845
        %5179 = vmatpush.msra.mxu0 %v1843
        %5180 = vmatpush.msra.mxu0 %v1841
        %5181 = vmatpush.msra.mxu0 %v1839
        %5182 = vmatpush.msra.mxu0 %v1837
        %5183 = vmatpush.msra.mxu0 %v1835
        %5184 = vmatpush.msra.mxu0 %v1833
        %5185 = vmatpush.msra.mxu0 %v1831
        %5186 = vmatpush.msra.mxu0 %v1829
        %5187 = vmatpush.msra.mxu0 %v1827
        %5188 = vmatpush.msra.mxu0 %v1825
        %5189 = vmatmul.f32.gmra.mxu0 %v4377
        %v5190 = vpop.f32.mrf.mxu0
        %v5191 = vadd.f32 0.0, %v5190
        %5192 = vmatmul.f32.gmra.mxu0 %v4380
        %v5193 = vpop.f32.mrf.mxu0
        %v5194 = vadd.f32 0.0, %v5193
        %5195 = vmatmul.f32.gmra.mxu0 %v4383
        %v5196 = vpop.f32.mrf.mxu0
        %v5197 = vadd.f32 0.0, %v5196
        %5198 = vmatmul.f32.gmra.mxu0 %v4386
        %v5199 = vpop.f32.mrf.mxu0
        %v5200 = vadd.f32 0.0, %v5199
        %5201 = vdwg.mxu0
        %5202 = vmatpush.msra.mxu0 %v1887
        %5203 = vmatpush.msra.mxu0 %v1885
        %5204 = vmatpush.msra.mxu0 %v1883
        %5205 = vmatpush.msra.mxu0 %v1881
        %5206 = vmatpush.msra.mxu0 %v1879
        %5207 = vmatpush.msra.mxu0 %v1877
        %5208 = vmatpush.msra.mxu0 %v1875
        %5209 = vmatpush.msra.mxu0 %v1873
        %5210 = vmatpush.msra.mxu0 %v1871
        %5211 = vmatpush.msra.mxu0 %v1869
        %5212 = vmatpush.msra.mxu0 %v1867
        %5213 = vmatpush.msra.mxu0 %v1865
        %5214 = vmatpush.msra.mxu0 %v1863
        %5215 = vmatpush.msra.mxu0 %v1861
        %5216 = vmatpush.msra.mxu0 %v1859
        %5217 = vmatpush.msra.mxu0 %v1857
        %5218 = vmatmul.f32.gmra.mxu0 %v4406
        %v5219 = vpop.f32.mrf.mxu0
        %v5220 = vadd.f32 %v5191, %v5219
        %5221 = vmatmul.f32.gmra.mxu0 %v4409
        %v5222 = vpop.f32.mrf.mxu0
        %v5223 = vadd.f32 %v5194, %v5222
        %5224 = vmatmul.f32.gmra.mxu0 %v4412
        %v5225 = vpop.f32.mrf.mxu0
        %v5226 = vadd.f32 %v5197, %v5225
        %5227 = vmatmul.f32.gmra.mxu0 %v4415
        %v5228 = vpop.f32.mrf.mxu0
        %v5229 = vadd.f32 %v5200, %v5228
        %5230 = vdwg.mxu0
        %5231 = vmatpush.msra.mxu0 %v1856
        %5232 = vmatpush.msra.mxu0 %v1854
        %5233 = vmatpush.msra.mxu0 %v1852
        %5234 = vmatpush.msra.mxu0 %v1850
        %5235 = vmatpush.msra.mxu0 %v1848
        %5236 = vmatpush.msra.mxu0 %v1846
        %5237 = vmatpush.msra.mxu0 %v1844
        %5238 = vmatpush.msra.mxu0 %v1842
        %5239 = vmatpush.msra.mxu0 %v1840
        %5240 = vmatpush.msra.mxu0 %v1838
        %5241 = vmatpush.msra.mxu0 %v1836
        %5242 = vmatpush.msra.mxu0 %v1834
        %5243 = vmatpush.msra.mxu0 %v1832
        %5244 = vmatpush.msra.mxu0 %v1830
        %5245 = vmatpush.msra.mxu0 %v1828
        %5246 = vmatpush.msra.mxu0 %v1826
        %5247 = vmatmul.f32.gmra.mxu0 %v4377
        %v5248 = vpop.f32.mrf.mxu0
        %v5249 = vadd.f32 0.0, %v5248
        %5250 = vmatmul.f32.gmra.mxu0 %v4380
        %v5251 = vpop.f32.mrf.mxu0
        %v5252 = vadd.f32 0.0, %v5251
        %5253 = vmatmul.f32.gmra.mxu0 %v4383
        %v5254 = vpop.f32.mrf.mxu0
        %v5255 = vadd.f32 0.0, %v5254
        %5256 = vmatmul.f32.gmra.mxu0 %v4386
        %v5257 = vpop.f32.mrf.mxu0
        %v5258 = vadd.f32 0.0, %v5257
        %5259 = vdwg.mxu0
        %5260 = vmatpush.msra.mxu0 %v1888
        %5261 = vmatpush.msra.mxu0 %v1886
        %5262 = vmatpush.msra.mxu0 %v1884
        %5263 = vmatpush.msra.mxu0 %v1882
        %5264 = vmatpush.msra.mxu0 %v1880
        %5265 = vmatpush.msra.mxu0 %v1878
        %5266 = vmatpush.msra.mxu0 %v1876
        %5267 = vmatpush.msra.mxu0 %v1874
        %5268 = vmatpush.msra.mxu0 %v1872
        %5269 = vmatpush.msra.mxu0 %v1870
        %5270 = vmatpush.msra.mxu0 %v1868
        %5271 = vmatpush.msra.mxu0 %v1866
        %5272 = vmatpush.msra.mxu0 %v1864
        %5273 = vmatpush.msra.mxu0 %v1862
        %5274 = vmatpush.msra.mxu0 %v1860
        %5275 = vmatpush.msra.mxu0 %v1858
        %5276 = vmatmul.f32.gmra.mxu0 %v4406
        %v5277 = vpop.f32.mrf.mxu0
        %v5278 = vadd.f32 %v5249, %v5277
        %5279 = vmatmul.f32.gmra.mxu0 %v4409
        %v5280 = vpop.f32.mrf.mxu0
        %v5281 = vadd.f32 %v5252, %v5280
        %5282 = vmatmul.f32.gmra.mxu0 %v4412
        %v5283 = vpop.f32.mrf.mxu0
        %v5284 = vadd.f32 %v5255, %v5283
        %5285 = vmatmul.f32.gmra.mxu0 %v4415
        %v5286 = vpop.f32.mrf.mxu0
        %v5287 = vadd.f32 %v5258, %v5286
        %5288 = vdwg.mxu0
        %5289 = vset.pattern.permute.xlu0 2
        %5290 = vperm.xlu0 %5289, %v4421
        %v5291 = vpop.permute.xlu0 %5290
        %5293 = vset.pattern.permute.xlu0 2
        %5294 = vperm.xlu0 %5293, %v4422
        %v5295 = vpop.permute.xlu0 %5294
        %5297 = vset.pattern.permute.xlu0 2
        %5298 = vperm.xlu0 %5297, %v4423
        %v5299 = vpop.permute.xlu0 %5298
        %5301 = vset.pattern.permute.xlu0 2
        %5302 = vperm.xlu0 %5301, %v4424
        %v5303 = vpop.permute.xlu0 %5302
        %v5305 = vmul.f32 %v5291, %v5220
        %v5306 = vmul.f32 %v5291, %v5278
        %v5307 = vmul.f32 %v5295, %v5223
        %v5308 = vmul.f32 %v5295, %v5281
        %v5309 = vmul.f32 %v5299, %v5226
        %v5310 = vmul.f32 %v5299, %v5284
        %v5311 = vmul.f32 %v5303, %v5229
        %v5312 = vmul.f32 %v5303, %v5287
        %v5313 = vadd.f32 %v5165, %v5305
        %v5314 = vadd.f32 %v5166, %v5306
        %v5315 = vadd.f32 %v5167, %v5307
        %v5316 = vadd.f32 %v5168, %v5308
        %v5317 = vadd.f32 %v5169, %v5309
        %v5318 = vadd.f32 %v5170, %v5310
        %v5319 = vadd.f32 %v5171, %v5311
        %v5320 = vadd.f32 %v5172, %v5312
        %5321 = vmatpush.msra.mxu0 %v2028
        %5322 = vmatpush.msra.mxu0 %v2026
        %5323 = vmatpush.msra.mxu0 %v2024
        %5324 = vmatpush.msra.mxu0 %v2022
        %5325 = vmatpush.msra.mxu0 %v2020
        %5326 = vmatpush.msra.mxu0 %v2018
        %5327 = vmatpush.msra.mxu0 %v2016
        %5328 = vmatpush.msra.mxu0 %v2014
        %5329 = vmatpush.msra.mxu0 %v2012
        %5330 = vmatpush.msra.mxu0 %v2010
        %5331 = vmatpush.msra.mxu0 %v2008
        %5332 = vmatpush.msra.mxu0 %v2006
        %5333 = vmatpush.msra.mxu0 %v2004
        %5334 = vmatpush.msra.mxu0 %v2002
        %5335 = vmatpush.msra.mxu0 %v2000
        %5336 = vmatpush.msra.mxu0 %v1998
        %5337 = vmatmul.f32.gmra.mxu0 %v1471
        %v5338 = vpop.f32.mrf.mxu0
        %v5339 = vadd.f32 0.0, %v5338
        %5340 = vmatmul.f32.gmra.mxu0 %v1473
        %v5341 = vpop.f32.mrf.mxu0
        %v5342 = vadd.f32 0.0, %v5341
        %5343 = vmatmul.f32.gmra.mxu0 %v3211
        %v5344 = vpop.f32.mrf.mxu0
        %v5345 = vadd.f32 0.0, %v5344
        %5346 = vmatmul.f32.gmra.mxu0 %v3213
        %v5347 = vpop.f32.mrf.mxu0
        %v5348 = vadd.f32 0.0, %v5347
        %5349 = vdwg.mxu0
        %5350 = vmatpush.msra.mxu0 %v2060
        %5351 = vmatpush.msra.mxu0 %v2058
        %5352 = vmatpush.msra.mxu0 %v2056
        %5353 = vmatpush.msra.mxu0 %v2054
        %5354 = vmatpush.msra.mxu0 %v2052
        %5355 = vmatpush.msra.mxu0 %v2050
        %5356 = vmatpush.msra.mxu0 %v2048
        %5357 = vmatpush.msra.mxu0 %v2046
        %5358 = vmatpush.msra.mxu0 %v2044
        %5359 = vmatpush.msra.mxu0 %v2042
        %5360 = vmatpush.msra.mxu0 %v2040
        %5361 = vmatpush.msra.mxu0 %v2038
        %5362 = vmatpush.msra.mxu0 %v2036
        %5363 = vmatpush.msra.mxu0 %v2034
        %5364 = vmatpush.msra.mxu0 %v2032
        %5365 = vmatpush.msra.mxu0 %v2030
        %5366 = vmatmul.f32.gmra.mxu0 %v1472
        %v5367 = vpop.f32.mrf.mxu0
        %v5368 = vadd.f32 %v5339, %v5367
        %5369 = vmatmul.f32.gmra.mxu0 %v1474
        %v5370 = vpop.f32.mrf.mxu0
        %v5371 = vadd.f32 %v5342, %v5370
        %5372 = vmatmul.f32.gmra.mxu0 %v3212
        %v5373 = vpop.f32.mrf.mxu0
        %v5374 = vadd.f32 %v5345, %v5373
        %5375 = vmatmul.f32.gmra.mxu0 %v3214
        %v5376 = vpop.f32.mrf.mxu0
        %v5377 = vadd.f32 %v5348, %v5376
        %5378 = vdwg.mxu0
        %5379 = vmatpush.msra.mxu0 %v2029
        %5380 = vmatpush.msra.mxu0 %v2027
        %5381 = vmatpush.msra.mxu0 %v2025
        %5382 = vmatpush.msra.mxu0 %v2023
        %5383 = vmatpush.msra.mxu0 %v2021
        %5384 = vmatpush.msra.mxu0 %v2019
        %5385 = vmatpush.msra.mxu0 %v2017
        %5386 = vmatpush.msra.mxu0 %v2015
        %5387 = vmatpush.msra.mxu0 %v2013
        %5388 = vmatpush.msra.mxu0 %v2011
        %5389 = vmatpush.msra.mxu0 %v2009
        %5390 = vmatpush.msra.mxu0 %v2007
        %5391 = vmatpush.msra.mxu0 %v2005
        %5392 = vmatpush.msra.mxu0 %v2003
        %5393 = vmatpush.msra.mxu0 %v2001
        %5394 = vmatpush.msra.mxu0 %v1999
        %5395 = vmatmul.f32.gmra.mxu0 %v1471
        %v5396 = vpop.f32.mrf.mxu0
        %v5397 = vadd.f32 0.0, %v5396
        %5398 = vmatmul.f32.gmra.mxu0 %v1473
        %v5399 = vpop.f32.mrf.mxu0
        %v5400 = vadd.f32 0.0, %v5399
        %5401 = vmatmul.f32.gmra.mxu0 %v3211
        %v5402 = vpop.f32.mrf.mxu0
        %v5403 = vadd.f32 0.0, %v5402
        %5404 = vmatmul.f32.gmra.mxu0 %v3213
        %v5405 = vpop.f32.mrf.mxu0
        %v5406 = vadd.f32 0.0, %v5405
        %5407 = vdwg.mxu0
        %5408 = vmatpush.msra.mxu0 %v2061
        %5409 = vmatpush.msra.mxu0 %v2059
        %5410 = vmatpush.msra.mxu0 %v2057
        %5411 = vmatpush.msra.mxu0 %v2055
        %5412 = vmatpush.msra.mxu0 %v2053
        %5413 = vmatpush.msra.mxu0 %v2051
        %5414 = vmatpush.msra.mxu0 %v2049
        %5415 = vmatpush.msra.mxu0 %v2047
        %5416 = vmatpush.msra.mxu0 %v2045
        %5417 = vmatpush.msra.mxu0 %v2043
        %5418 = vmatpush.msra.mxu0 %v2041
        %5419 = vmatpush.msra.mxu0 %v2039
        %5420 = vmatpush.msra.mxu0 %v2037
        %5421 = vmatpush.msra.mxu0 %v2035
        %5422 = vmatpush.msra.mxu0 %v2033
        %5423 = vmatpush.msra.mxu0 %v2031
        %5424 = vmatmul.f32.gmra.mxu0 %v1472
        %v5425 = vpop.f32.mrf.mxu0
        %v5426 = vadd.f32 %v5397, %v5425
        %5427 = vmatmul.f32.gmra.mxu0 %v1474
        %v5428 = vpop.f32.mrf.mxu0
        %v5429 = vadd.f32 %v5400, %v5428
        %5430 = vmatmul.f32.gmra.mxu0 %v3212
        %v5431 = vpop.f32.mrf.mxu0
        %v5432 = vadd.f32 %v5403, %v5431
        %5433 = vmatmul.f32.gmra.mxu0 %v3214
        %v5434 = vpop.f32.mrf.mxu0
        %v5435 = vadd.f32 %v5406, %v5434
        %5436 = vdwg.mxu0
        %5437 = vset.pattern.permute.xlu0 3
        %5438 = vperm.xlu0 %5437, %v4417
        %v5439 = vpop.permute.xlu0 %5438
        %5441 = vset.pattern.permute.xlu0 3
        %5442 = vperm.xlu0 %5441, %v4418
        %v5443 = vpop.permute.xlu0 %5442
        %5445 = vset.pattern.permute.xlu0 3
        %5446 = vperm.xlu0 %5445, %v4419
        %v5447 = vpop.permute.xlu0 %5446
        %5449 = vset.pattern.permute.xlu0 3
        %5450 = vperm.xlu0 %5449, %v4420
        %v5451 = vpop.permute.xlu0 %5450
        %v5453 = vmul.f32 %v5439, %v5368
        %v5454 = vmul.f32 %v5439, %v5426
        %v5455 = vmul.f32 %v5443, %v5371
        %v5456 = vmul.f32 %v5443, %v5429
        %v5457 = vmul.f32 %v5447, %v5374
        %v5458 = vmul.f32 %v5447, %v5432
        %v5459 = vmul.f32 %v5451, %v5377
        %v5460 = vmul.f32 %v5451, %v5435
        %v5461 = vadd.f32 %v5313, %v5453
        %v5462 = vadd.f32 %v5314, %v5454
        %v5463 = vadd.f32 %v5315, %v5455
        %v5464 = vadd.f32 %v5316, %v5456
        %v5465 = vadd.f32 %v5317, %v5457
        %v5466 = vadd.f32 %v5318, %v5458
        %v5467 = vadd.f32 %v5319, %v5459
        %v5468 = vadd.f32 %v5320, %v5460
        %5469 = vmatpush.msra.mxu0 %v2028
        %5470 = vmatpush.msra.mxu0 %v2026
        %5471 = vmatpush.msra.mxu0 %v2024
        %5472 = vmatpush.msra.mxu0 %v2022
        %5473 = vmatpush.msra.mxu0 %v2020
        %5474 = vmatpush.msra.mxu0 %v2018
        %5475 = vmatpush.msra.mxu0 %v2016
        %5476 = vmatpush.msra.mxu0 %v2014
        %5477 = vmatpush.msra.mxu0 %v2012
        %5478 = vmatpush.msra.mxu0 %v2010
        %5479 = vmatpush.msra.mxu0 %v2008
        %5480 = vmatpush.msra.mxu0 %v2006
        %5481 = vmatpush.msra.mxu0 %v2004
        %5482 = vmatpush.msra.mxu0 %v2002
        %5483 = vmatpush.msra.mxu0 %v2000
        %5484 = vmatpush.msra.mxu0 %v1998
        %5485 = vmatmul.f32.gmra.mxu0 %v4377
        %v5486 = vpop.f32.mrf.mxu0
        %v5487 = vadd.f32 0.0, %v5486
        %5488 = vmatmul.f32.gmra.mxu0 %v4380
        %v5489 = vpop.f32.mrf.mxu0
        %v5490 = vadd.f32 0.0, %v5489
        %5491 = vmatmul.f32.gmra.mxu0 %v4383
        %v5492 = vpop.f32.mrf.mxu0
        %v5493 = vadd.f32 0.0, %v5492
        %5494 = vmatmul.f32.gmra.mxu0 %v4386
        %v5495 = vpop.f32.mrf.mxu0
        %v5496 = vadd.f32 0.0, %v5495
        %5497 = vdwg.mxu0
        %5498 = vmatpush.msra.mxu0 %v2060
        %5499 = vmatpush.msra.mxu0 %v2058
        %5500 = vmatpush.msra.mxu0 %v2056
        %5501 = vmatpush.msra.mxu0 %v2054
        %5502 = vmatpush.msra.mxu0 %v2052
        %5503 = vmatpush.msra.mxu0 %v2050
        %5504 = vmatpush.msra.mxu0 %v2048
        %5505 = vmatpush.msra.mxu0 %v2046
        %5506 = vmatpush.msra.mxu0 %v2044
        %5507 = vmatpush.msra.mxu0 %v2042
        %5508 = vmatpush.msra.mxu0 %v2040
        %5509 = vmatpush.msra.mxu0 %v2038
        %5510 = vmatpush.msra.mxu0 %v2036
        %5511 = vmatpush.msra.mxu0 %v2034
        %5512 = vmatpush.msra.mxu0 %v2032
        %5513 = vmatpush.msra.mxu0 %v2030
        %5514 = vmatmul.f32.gmra.mxu0 %v4406
        %v5515 = vpop.f32.mrf.mxu0
        %v5516 = vadd.f32 %v5487, %v5515
        %5517 = vmatmul.f32.gmra.mxu0 %v4409
        %v5518 = vpop.f32.mrf.mxu0
        %v5519 = vadd.f32 %v5490, %v5518
        %5520 = vmatmul.f32.gmra.mxu0 %v4412
        %v5521 = vpop.f32.mrf.mxu0
        %v5522 = vadd.f32 %v5493, %v5521
        %5523 = vmatmul.f32.gmra.mxu0 %v4415
        %v5524 = vpop.f32.mrf.mxu0
        %v5525 = vadd.f32 %v5496, %v5524
        %5526 = vdwg.mxu0
        %5527 = vmatpush.msra.mxu0 %v2029
        %5528 = vmatpush.msra.mxu0 %v2027
        %5529 = vmatpush.msra.mxu0 %v2025
        %5530 = vmatpush.msra.mxu0 %v2023
        %5531 = vmatpush.msra.mxu0 %v2021
        %5532 = vmatpush.msra.mxu0 %v2019
        %5533 = vmatpush.msra.mxu0 %v2017
        %5534 = vmatpush.msra.mxu0 %v2015
        %5535 = vmatpush.msra.mxu0 %v2013
        %5536 = vmatpush.msra.mxu0 %v2011
        %5537 = vmatpush.msra.mxu0 %v2009
        %5538 = vmatpush.msra.mxu0 %v2007
        %5539 = vmatpush.msra.mxu0 %v2005
        %5540 = vmatpush.msra.mxu0 %v2003
        %5541 = vmatpush.msra.mxu0 %v2001
        %5542 = vmatpush.msra.mxu0 %v1999
        %5543 = vmatmul.f32.gmra.mxu0 %v4377
        %v5544 = vpop.f32.mrf.mxu0
        %v5545 = vadd.f32 0.0, %v5544
        %5546 = vmatmul.f32.gmra.mxu0 %v4380
        %v5547 = vpop.f32.mrf.mxu0
        %v5548 = vadd.f32 0.0, %v5547
        %5549 = vmatmul.f32.gmra.mxu0 %v4383
        %v5550 = vpop.f32.mrf.mxu0
        %v5551 = vadd.f32 0.0, %v5550
        %5552 = vmatmul.f32.gmra.mxu0 %v4386
        %v5553 = vpop.f32.mrf.mxu0
        %v5554 = vadd.f32 0.0, %v5553
        %5555 = vdwg.mxu0
        %5556 = vmatpush.msra.mxu0 %v2061
        %5557 = vmatpush.msra.mxu0 %v2059
        %5558 = vmatpush.msra.mxu0 %v2057
        %5559 = vmatpush.msra.mxu0 %v2055
        %5560 = vmatpush.msra.mxu0 %v2053
        %5561 = vmatpush.msra.mxu0 %v2051
        %5562 = vmatpush.msra.mxu0 %v2049
        %5563 = vmatpush.msra.mxu0 %v2047
        %5564 = vmatpush.msra.mxu0 %v2045
        %5565 = vmatpush.msra.mxu0 %v2043
        %5566 = vmatpush.msra.mxu0 %v2041
        %5567 = vmatpush.msra.mxu0 %v2039
        %5568 = vmatpush.msra.mxu0 %v2037
        %5569 = vmatpush.msra.mxu0 %v2035
        %5570 = vmatpush.msra.mxu0 %v2033
        %5571 = vmatpush.msra.mxu0 %v2031
        %5572 = vmatmul.f32.gmra.mxu0 %v4406
        %v5573 = vpop.f32.mrf.mxu0
        %v5574 = vadd.f32 %v5545, %v5573
        %5575 = vmatmul.f32.gmra.mxu0 %v4409
        %v5576 = vpop.f32.mrf.mxu0
        %v5577 = vadd.f32 %v5548, %v5576
        %5578 = vmatmul.f32.gmra.mxu0 %v4412
        %v5579 = vpop.f32.mrf.mxu0
        %v5580 = vadd.f32 %v5551, %v5579
        %5581 = vmatmul.f32.gmra.mxu0 %v4415
        %v5582 = vpop.f32.mrf.mxu0
        %v5583 = vadd.f32 %v5554, %v5582
        %5584 = vdwg.mxu0
        %5585 = vset.pattern.permute.xlu0 3
        %5586 = vperm.xlu0 %5585, %v4421
        %v5587 = vpop.permute.xlu0 %5586
        %5589 = vset.pattern.permute.xlu0 3
        %5590 = vperm.xlu0 %5589, %v4422
        %v5591 = vpop.permute.xlu0 %5590
        %5593 = vset.pattern.permute.xlu0 3
        %5594 = vperm.xlu0 %5593, %v4423
        %v5595 = vpop.permute.xlu0 %5594
        %5597 = vset.pattern.permute.xlu0 3
        %5598 = vperm.xlu0 %5597, %v4424
        %v5599 = vpop.permute.xlu0 %5598
        %v5601 = vmul.f32 %v5587, %v5516
        %v5602 = vmul.f32 %v5587, %v5574
        %v5603 = vmul.f32 %v5591, %v5519
        %v5604 = vmul.f32 %v5591, %v5577
        %v5605 = vmul.f32 %v5595, %v5522
        %v5606 = vmul.f32 %v5595, %v5580
        %v5607 = vmul.f32 %v5599, %v5525
        %v5608 = vmul.f32 %v5599, %v5583
        %v5609 = vadd.f32 %v5461, %v5601
        %v5610 = vadd.f32 %v5462, %v5602
        %v5611 = vadd.f32 %v5463, %v5603
        %v5612 = vadd.f32 %v5464, %v5604
        %v5613 = vadd.f32 %v5465, %v5605
        %v5614 = vadd.f32 %v5466, %v5606
        %v5615 = vadd.f32 %v5467, %v5607
        %v5616 = vadd.f32 %v5468, %v5608
        %5617 = vmatpush.msra.mxu0 %v2201
        %5618 = vmatpush.msra.mxu0 %v2199
        %5619 = vmatpush.msra.mxu0 %v2197
        %5620 = vmatpush.msra.mxu0 %v2195
        %5621 = vmatpush.msra.mxu0 %v2193
        %5622 = vmatpush.msra.mxu0 %v2191
        %5623 = vmatpush.msra.mxu0 %v2189
        %5624 = vmatpush.msra.mxu0 %v2187
        %5625 = vmatpush.msra.mxu0 %v2185
        %5626 = vmatpush.msra.mxu0 %v2183
        %5627 = vmatpush.msra.mxu0 %v2181
        %5628 = vmatpush.msra.mxu0 %v2179
        %5629 = vmatpush.msra.mxu0 %v2177
        %5630 = vmatpush.msra.mxu0 %v2175
        %5631 = vmatpush.msra.mxu0 %v2173
        %5632 = vmatpush.msra.mxu0 %v2171
        %5633 = vmatmul.f32.gmra.mxu0 %v1471
        %v5634 = vpop.f32.mrf.mxu0
        %v5635 = vadd.f32 0.0, %v5634
        %5636 = vmatmul.f32.gmra.mxu0 %v1473
        %v5637 = vpop.f32.mrf.mxu0
        %v5638 = vadd.f32 0.0, %v5637
        %5639 = vmatmul.f32.gmra.mxu0 %v3211
        %v5640 = vpop.f32.mrf.mxu0
        %v5641 = vadd.f32 0.0, %v5640
        %5642 = vmatmul.f32.gmra.mxu0 %v3213
        %v5643 = vpop.f32.mrf.mxu0
        %v5644 = vadd.f32 0.0, %v5643
        %5645 = vdwg.mxu0
        %5646 = vmatpush.msra.mxu0 %v2233
        %5647 = vmatpush.msra.mxu0 %v2231
        %5648 = vmatpush.msra.mxu0 %v2229
        %5649 = vmatpush.msra.mxu0 %v2227
        %5650 = vmatpush.msra.mxu0 %v2225
        %5651 = vmatpush.msra.mxu0 %v2223
        %5652 = vmatpush.msra.mxu0 %v2221
        %5653 = vmatpush.msra.mxu0 %v2219
        %5654 = vmatpush.msra.mxu0 %v2217
        %5655 = vmatpush.msra.mxu0 %v2215
        %5656 = vmatpush.msra.mxu0 %v2213
        %5657 = vmatpush.msra.mxu0 %v2211
        %5658 = vmatpush.msra.mxu0 %v2209
        %5659 = vmatpush.msra.mxu0 %v2207
        %5660 = vmatpush.msra.mxu0 %v2205
        %5661 = vmatpush.msra.mxu0 %v2203
        %5662 = vmatmul.f32.gmra.mxu0 %v1472
        %v5663 = vpop.f32.mrf.mxu0
        %v5664 = vadd.f32 %v5635, %v5663
        %5665 = vmatmul.f32.gmra.mxu0 %v1474
        %v5666 = vpop.f32.mrf.mxu0
        %v5667 = vadd.f32 %v5638, %v5666
        %5668 = vmatmul.f32.gmra.mxu0 %v3212
        %v5669 = vpop.f32.mrf.mxu0
        %v5670 = vadd.f32 %v5641, %v5669
        %5671 = vmatmul.f32.gmra.mxu0 %v3214
        %v5672 = vpop.f32.mrf.mxu0
        %v5673 = vadd.f32 %v5644, %v5672
        %5674 = vdwg.mxu0
        %5675 = vmatpush.msra.mxu0 %v2202
        %5676 = vmatpush.msra.mxu0 %v2200
        %5677 = vmatpush.msra.mxu0 %v2198
        %5678 = vmatpush.msra.mxu0 %v2196
        %5679 = vmatpush.msra.mxu0 %v2194
        %5680 = vmatpush.msra.mxu0 %v2192
        %5681 = vmatpush.msra.mxu0 %v2190
        %5682 = vmatpush.msra.mxu0 %v2188
        %5683 = vmatpush.msra.mxu0 %v2186
        %5684 = vmatpush.msra.mxu0 %v2184
        %5685 = vmatpush.msra.mxu0 %v2182
        %5686 = vmatpush.msra.mxu0 %v2180
        %5687 = vmatpush.msra.mxu0 %v2178
        %5688 = vmatpush.msra.mxu0 %v2176
        %5689 = vmatpush.msra.mxu0 %v2174
        %5690 = vmatpush.msra.mxu0 %v2172
        %5691 = vmatmul.f32.gmra.mxu0 %v1471
        %v5692 = vpop.f32.mrf.mxu0
        %v5693 = vadd.f32 0.0, %v5692
        %5694 = vmatmul.f32.gmra.mxu0 %v1473
        %v5695 = vpop.f32.mrf.mxu0
        %v5696 = vadd.f32 0.0, %v5695
        %5697 = vmatmul.f32.gmra.mxu0 %v3211
        %v5698 = vpop.f32.mrf.mxu0
        %v5699 = vadd.f32 0.0, %v5698
        %5700 = vmatmul.f32.gmra.mxu0 %v3213
        %v5701 = vpop.f32.mrf.mxu0
        %v5702 = vadd.f32 0.0, %v5701
        %5703 = vdwg.mxu0
        %5704 = vmatpush.msra.mxu0 %v2234
        %5705 = vmatpush.msra.mxu0 %v2232
        %5706 = vmatpush.msra.mxu0 %v2230
        %5707 = vmatpush.msra.mxu0 %v2228
        %5708 = vmatpush.msra.mxu0 %v2226
        %5709 = vmatpush.msra.mxu0 %v2224
        %5710 = vmatpush.msra.mxu0 %v2222
        %5711 = vmatpush.msra.mxu0 %v2220
        %5712 = vmatpush.msra.mxu0 %v2218
        %5713 = vmatpush.msra.mxu0 %v2216
        %5714 = vmatpush.msra.mxu0 %v2214
        %5715 = vmatpush.msra.mxu0 %v2212
        %5716 = vmatpush.msra.mxu0 %v2210
        %5717 = vmatpush.msra.mxu0 %v2208
        %5718 = vmatpush.msra.mxu0 %v2206
        %5719 = vmatpush.msra.mxu0 %v2204
        %5720 = vmatmul.f32.gmra.mxu0 %v1472
        %v5721 = vpop.f32.mrf.mxu0
        %v5722 = vadd.f32 %v5693, %v5721
        %5723 = vmatmul.f32.gmra.mxu0 %v1474
        %v5724 = vpop.f32.mrf.mxu0
        %v5725 = vadd.f32 %v5696, %v5724
        %5726 = vmatmul.f32.gmra.mxu0 %v3212
        %v5727 = vpop.f32.mrf.mxu0
        %v5728 = vadd.f32 %v5699, %v5727
        %5729 = vmatmul.f32.gmra.mxu0 %v3214
        %v5730 = vpop.f32.mrf.mxu0
        %v5731 = vadd.f32 %v5702, %v5730
        %5732 = vdwg.mxu0
        %5733 = vset.pattern.permute.xlu0 4
        %5734 = vperm.xlu0 %5733, %v4417
        %v5735 = vpop.permute.xlu0 %5734
        %5737 = vset.pattern.permute.xlu0 4
        %5738 = vperm.xlu0 %5737, %v4418
        %v5739 = vpop.permute.xlu0 %5738
        %5741 = vset.pattern.permute.xlu0 4
        %5742 = vperm.xlu0 %5741, %v4419
        %v5743 = vpop.permute.xlu0 %5742
        %5745 = vset.pattern.permute.xlu0 4
        %5746 = vperm.xlu0 %5745, %v4420
        %v5747 = vpop.permute.xlu0 %5746
        %v5749 = vmul.f32 %v5735, %v5664
        %v5750 = vmul.f32 %v5735, %v5722
        %v5751 = vmul.f32 %v5739, %v5667
        %v5752 = vmul.f32 %v5739, %v5725
        %v5753 = vmul.f32 %v5743, %v5670
        %v5754 = vmul.f32 %v5743, %v5728
        %v5755 = vmul.f32 %v5747, %v5673
        %v5756 = vmul.f32 %v5747, %v5731
        %v5757 = vadd.f32 %v5609, %v5749
        %v5758 = vadd.f32 %v5610, %v5750
        %v5759 = vadd.f32 %v5611, %v5751
        %v5760 = vadd.f32 %v5612, %v5752
        %v5761 = vadd.f32 %v5613, %v5753
        %v5762 = vadd.f32 %v5614, %v5754
        %v5763 = vadd.f32 %v5615, %v5755
        %v5764 = vadd.f32 %v5616, %v5756
        %5765 = vmatpush.msra.mxu0 %v2201
        %5766 = vmatpush.msra.mxu0 %v2199
        %5767 = vmatpush.msra.mxu0 %v2197
        %5768 = vmatpush.msra.mxu0 %v2195
        %5769 = vmatpush.msra.mxu0 %v2193
        %5770 = vmatpush.msra.mxu0 %v2191
        %5771 = vmatpush.msra.mxu0 %v2189
        %5772 = vmatpush.msra.mxu0 %v2187
        %5773 = vmatpush.msra.mxu0 %v2185
        %5774 = vmatpush.msra.mxu0 %v2183
        %5775 = vmatpush.msra.mxu0 %v2181
        %5776 = vmatpush.msra.mxu0 %v2179
        %5777 = vmatpush.msra.mxu0 %v2177
        %5778 = vmatpush.msra.mxu0 %v2175
        %5779 = vmatpush.msra.mxu0 %v2173
        %5780 = vmatpush.msra.mxu0 %v2171
        %5781 = vmatmul.f32.gmra.mxu0 %v4377
        %v5782 = vpop.f32.mrf.mxu0
        %v5783 = vadd.f32 0.0, %v5782
        %5784 = vmatmul.f32.gmra.mxu0 %v4380
        %v5785 = vpop.f32.mrf.mxu0
        %v5786 = vadd.f32 0.0, %v5785
        %5787 = vmatmul.f32.gmra.mxu0 %v4383
        %v5788 = vpop.f32.mrf.mxu0
        %v5789 = vadd.f32 0.0, %v5788
        %5790 = vmatmul.f32.gmra.mxu0 %v4386
        %v5791 = vpop.f32.mrf.mxu0
        %v5792 = vadd.f32 0.0, %v5791
        %5793 = vdwg.mxu0
        %5794 = vmatpush.msra.mxu0 %v2233
        %5795 = vmatpush.msra.mxu0 %v2231
        %5796 = vmatpush.msra.mxu0 %v2229
        %5797 = vmatpush.msra.mxu0 %v2227
        %5798 = vmatpush.msra.mxu0 %v2225
        %5799 = vmatpush.msra.mxu0 %v2223
        %5800 = vmatpush.msra.mxu0 %v2221
        %5801 = vmatpush.msra.mxu0 %v2219
        %5802 = vmatpush.msra.mxu0 %v2217
        %5803 = vmatpush.msra.mxu0 %v2215
        %5804 = vmatpush.msra.mxu0 %v2213
        %5805 = vmatpush.msra.mxu0 %v2211
        %5806 = vmatpush.msra.mxu0 %v2209
        %5807 = vmatpush.msra.mxu0 %v2207
        %5808 = vmatpush.msra.mxu0 %v2205
        %5809 = vmatpush.msra.mxu0 %v2203
        %5810 = vmatmul.f32.gmra.mxu0 %v4406
        %v5811 = vpop.f32.mrf.mxu0
        %v5812 = vadd.f32 %v5783, %v5811
        %5813 = vmatmul.f32.gmra.mxu0 %v4409
        %v5814 = vpop.f32.mrf.mxu0
        %v5815 = vadd.f32 %v5786, %v5814
        %5816 = vmatmul.f32.gmra.mxu0 %v4412
        %v5817 = vpop.f32.mrf.mxu0
        %v5818 = vadd.f32 %v5789, %v5817
        %5819 = vmatmul.f32.gmra.mxu0 %v4415
        %v5820 = vpop.f32.mrf.mxu0
        %v5821 = vadd.f32 %v5792, %v5820
        %5822 = vdwg.mxu0
        %5823 = vmatpush.msra.mxu0 %v2202
        %5824 = vmatpush.msra.mxu0 %v2200
        %5825 = vmatpush.msra.mxu0 %v2198
        %5826 = vmatpush.msra.mxu0 %v2196
        %5827 = vmatpush.msra.mxu0 %v2194
        %5828 = vmatpush.msra.mxu0 %v2192
        %5829 = vmatpush.msra.mxu0 %v2190
        %5830 = vmatpush.msra.mxu0 %v2188
        %5831 = vmatpush.msra.mxu0 %v2186
        %5832 = vmatpush.msra.mxu0 %v2184
        %5833 = vmatpush.msra.mxu0 %v2182
        %5834 = vmatpush.msra.mxu0 %v2180
        %5835 = vmatpush.msra.mxu0 %v2178
        %5836 = vmatpush.msra.mxu0 %v2176
        %5837 = vmatpush.msra.mxu0 %v2174
        %5838 = vmatpush.msra.mxu0 %v2172
        %5839 = vmatmul.f32.gmra.mxu0 %v4377
        %v5840 = vpop.f32.mrf.mxu0
        %v5841 = vadd.f32 0.0, %v5840
        %5842 = vmatmul.f32.gmra.mxu0 %v4380
        %v5843 = vpop.f32.mrf.mxu0
        %v5844 = vadd.f32 0.0, %v5843
        %5845 = vmatmul.f32.gmra.mxu0 %v4383
        %v5846 = vpop.f32.mrf.mxu0
        %v5847 = vadd.f32 0.0, %v5846
        %5848 = vmatmul.f32.gmra.mxu0 %v4386
        %v5849 = vpop.f32.mrf.mxu0
        %v5850 = vadd.f32 0.0, %v5849
        %5851 = vdwg.mxu0
        %5852 = vmatpush.msra.mxu0 %v2234
        %5853 = vmatpush.msra.mxu0 %v2232
        %5854 = vmatpush.msra.mxu0 %v2230
        %5855 = vmatpush.msra.mxu0 %v2228
        %5856 = vmatpush.msra.mxu0 %v2226
        %5857 = vmatpush.msra.mxu0 %v2224
        %5858 = vmatpush.msra.mxu0 %v2222
        %5859 = vmatpush.msra.mxu0 %v2220
        %5860 = vmatpush.msra.mxu0 %v2218
        %5861 = vmatpush.msra.mxu0 %v2216
        %5862 = vmatpush.msra.mxu0 %v2214
        %5863 = vmatpush.msra.mxu0 %v2212
        %5864 = vmatpush.msra.mxu0 %v2210
        %5865 = vmatpush.msra.mxu0 %v2208
        %5866 = vmatpush.msra.mxu0 %v2206
        %5867 = vmatpush.msra.mxu0 %v2204
        %5868 = vmatmul.f32.gmra.mxu0 %v4406
        %v5869 = vpop.f32.mrf.mxu0
        %v5870 = vadd.f32 %v5841, %v5869
        %5871 = vmatmul.f32.gmra.mxu0 %v4409
        %v5872 = vpop.f32.mrf.mxu0
        %v5873 = vadd.f32 %v5844, %v5872
        %5874 = vmatmul.f32.gmra.mxu0 %v4412
        %v5875 = vpop.f32.mrf.mxu0
        %v5876 = vadd.f32 %v5847, %v5875
        %5877 = vmatmul.f32.gmra.mxu0 %v4415
        %v5878 = vpop.f32.mrf.mxu0
        %v5879 = vadd.f32 %v5850, %v5878
        %5880 = vdwg.mxu0
        %5881 = vset.pattern.permute.xlu0 4
        %5882 = vperm.xlu0 %5881, %v4421
        %v5883 = vpop.permute.xlu0 %5882
        %5885 = vset.pattern.permute.xlu0 4
        %5886 = vperm.xlu0 %5885, %v4422
        %v5887 = vpop.permute.xlu0 %5886
        %5889 = vset.pattern.permute.xlu0 4
        %5890 = vperm.xlu0 %5889, %v4423
        %v5891 = vpop.permute.xlu0 %5890
        %5893 = vset.pattern.permute.xlu0 4
        %5894 = vperm.xlu0 %5893, %v4424
        %v5895 = vpop.permute.xlu0 %5894
        %v5897 = vmul.f32 %v5883, %v5812
        %v5898 = vmul.f32 %v5883, %v5870
        %v5899 = vmul.f32 %v5887, %v5815
        %v5900 = vmul.f32 %v5887, %v5873
        %v5901 = vmul.f32 %v5891, %v5818
        %v5902 = vmul.f32 %v5891, %v5876
        %v5903 = vmul.f32 %v5895, %v5821
        %v5904 = vmul.f32 %v5895, %v5879
        %v5905 = vadd.f32 %v5757, %v5897
        %v5906 = vadd.f32 %v5758, %v5898
        %v5907 = vadd.f32 %v5759, %v5899
        %v5908 = vadd.f32 %v5760, %v5900
        %v5909 = vadd.f32 %v5761, %v5901
        %v5910 = vadd.f32 %v5762, %v5902
        %v5911 = vadd.f32 %v5763, %v5903
        %v5912 = vadd.f32 %v5764, %v5904
        %5913 = vmatpush.msra.mxu0 %v2374
        %5914 = vmatpush.msra.mxu0 %v2372
        %5915 = vmatpush.msra.mxu0 %v2370
        %5916 = vmatpush.msra.mxu0 %v2368
        %5917 = vmatpush.msra.mxu0 %v2366
        %5918 = vmatpush.msra.mxu0 %v2364
        %5919 = vmatpush.msra.mxu0 %v2362
        %5920 = vmatpush.msra.mxu0 %v2360
        %5921 = vmatpush.msra.mxu0 %v2358
        %5922 = vmatpush.msra.mxu0 %v2356
        %5923 = vmatpush.msra.mxu0 %v2354
        %5924 = vmatpush.msra.mxu0 %v2352
        %5925 = vmatpush.msra.mxu0 %v2350
        %5926 = vmatpush.msra.mxu0 %v2348
        %5927 = vmatpush.msra.mxu0 %v2346
        %5928 = vmatpush.msra.mxu0 %v2344
        %5929 = vmatmul.f32.gmra.mxu0 %v1471
        %v5930 = vpop.f32.mrf.mxu0
        %v5931 = vadd.f32 0.0, %v5930
        %5932 = vmatmul.f32.gmra.mxu0 %v1473
        %v5933 = vpop.f32.mrf.mxu0
        %v5934 = vadd.f32 0.0, %v5933
        %5935 = vmatmul.f32.gmra.mxu0 %v3211
        %v5936 = vpop.f32.mrf.mxu0
        %v5937 = vadd.f32 0.0, %v5936
        %5938 = vmatmul.f32.gmra.mxu0 %v3213
        %v5939 = vpop.f32.mrf.mxu0
        %v5940 = vadd.f32 0.0, %v5939
        %5941 = vdwg.mxu0
        %5942 = vmatpush.msra.mxu0 %v2406
        %5943 = vmatpush.msra.mxu0 %v2404
        %5944 = vmatpush.msra.mxu0 %v2402
        %5945 = vmatpush.msra.mxu0 %v2400
        %5946 = vmatpush.msra.mxu0 %v2398
        %5947 = vmatpush.msra.mxu0 %v2396
        %5948 = vmatpush.msra.mxu0 %v2394
        %5949 = vmatpush.msra.mxu0 %v2392
        %5950 = vmatpush.msra.mxu0 %v2390
        %5951 = vmatpush.msra.mxu0 %v2388
        %5952 = vmatpush.msra.mxu0 %v2386
        %5953 = vmatpush.msra.mxu0 %v2384
        %5954 = vmatpush.msra.mxu0 %v2382
        %5955 = vmatpush.msra.mxu0 %v2380
        %5956 = vmatpush.msra.mxu0 %v2378
        %5957 = vmatpush.msra.mxu0 %v2376
        %5958 = vmatmul.f32.gmra.mxu0 %v1472
        %v5959 = vpop.f32.mrf.mxu0
        %v5960 = vadd.f32 %v5931, %v5959
        %5961 = vmatmul.f32.gmra.mxu0 %v1474
        %v5962 = vpop.f32.mrf.mxu0
        %v5963 = vadd.f32 %v5934, %v5962
        %5964 = vmatmul.f32.gmra.mxu0 %v3212
        %v5965 = vpop.f32.mrf.mxu0
        %v5966 = vadd.f32 %v5937, %v5965
        %5967 = vmatmul.f32.gmra.mxu0 %v3214
        %v5968 = vpop.f32.mrf.mxu0
        %v5969 = vadd.f32 %v5940, %v5968
        %5970 = vdwg.mxu0
        %5971 = vmatpush.msra.mxu0 %v2375
        %5972 = vmatpush.msra.mxu0 %v2373
        %5973 = vmatpush.msra.mxu0 %v2371
        %5974 = vmatpush.msra.mxu0 %v2369
        %5975 = vmatpush.msra.mxu0 %v2367
        %5976 = vmatpush.msra.mxu0 %v2365
        %5977 = vmatpush.msra.mxu0 %v2363
        %5978 = vmatpush.msra.mxu0 %v2361
        %5979 = vmatpush.msra.mxu0 %v2359
        %5980 = vmatpush.msra.mxu0 %v2357
        %5981 = vmatpush.msra.mxu0 %v2355
        %5982 = vmatpush.msra.mxu0 %v2353
        %5983 = vmatpush.msra.mxu0 %v2351
        %5984 = vmatpush.msra.mxu0 %v2349
        %5985 = vmatpush.msra.mxu0 %v2347
        %5986 = vmatpush.msra.mxu0 %v2345
        %5987 = vmatmul.f32.gmra.mxu0 %v1471
        %v5988 = vpop.f32.mrf.mxu0
        %v5989 = vadd.f32 0.0, %v5988
        %5990 = vmatmul.f32.gmra.mxu0 %v1473
        %v5991 = vpop.f32.mrf.mxu0
        %v5992 = vadd.f32 0.0, %v5991
        %5993 = vmatmul.f32.gmra.mxu0 %v3211
        %v5994 = vpop.f32.mrf.mxu0
        %v5995 = vadd.f32 0.0, %v5994
        %5996 = vmatmul.f32.gmra.mxu0 %v3213
        %v5997 = vpop.f32.mrf.mxu0
        %v5998 = vadd.f32 0.0, %v5997
        %5999 = vdwg.mxu0
        %6000 = vmatpush.msra.mxu0 %v2407
        %6001 = vmatpush.msra.mxu0 %v2405
        %6002 = vmatpush.msra.mxu0 %v2403
        %6003 = vmatpush.msra.mxu0 %v2401
        %6004 = vmatpush.msra.mxu0 %v2399
        %6005 = vmatpush.msra.mxu0 %v2397
        %6006 = vmatpush.msra.mxu0 %v2395
        %6007 = vmatpush.msra.mxu0 %v2393
        %6008 = vmatpush.msra.mxu0 %v2391
        %6009 = vmatpush.msra.mxu0 %v2389
        %6010 = vmatpush.msra.mxu0 %v2387
        %6011 = vmatpush.msra.mxu0 %v2385
        %6012 = vmatpush.msra.mxu0 %v2383
        %6013 = vmatpush.msra.mxu0 %v2381
        %6014 = vmatpush.msra.mxu0 %v2379
        %6015 = vmatpush.msra.mxu0 %v2377
        %6016 = vmatmul.f32.gmra.mxu0 %v1472
        %v6017 = vpop.f32.mrf.mxu0
        %v6018 = vadd.f32 %v5989, %v6017
        %6019 = vmatmul.f32.gmra.mxu0 %v1474
        %v6020 = vpop.f32.mrf.mxu0
        %v6021 = vadd.f32 %v5992, %v6020
        %6022 = vmatmul.f32.gmra.mxu0 %v3212
        %v6023 = vpop.f32.mrf.mxu0
        %v6024 = vadd.f32 %v5995, %v6023
        %6025 = vmatmul.f32.gmra.mxu0 %v3214
        %v6026 = vpop.f32.mrf.mxu0
        %v6027 = vadd.f32 %v5998, %v6026
        %6028 = vdwg.mxu0
        %6029 = vset.pattern.permute.xlu0 5
        %6030 = vperm.xlu0 %6029, %v4417
        %v6031 = vpop.permute.xlu0 %6030
        %6033 = vset.pattern.permute.xlu0 5
        %6034 = vperm.xlu0 %6033, %v4418
        %v6035 = vpop.permute.xlu0 %6034
        %6037 = vset.pattern.permute.xlu0 5
        %6038 = vperm.xlu0 %6037, %v4419
        %v6039 = vpop.permute.xlu0 %6038
        %6041 = vset.pattern.permute.xlu0 5
        %6042 = vperm.xlu0 %6041, %v4420
        %v6043 = vpop.permute.xlu0 %6042
        %v6045 = vmul.f32 %v6031, %v5960
        %v6046 = vmul.f32 %v6031, %v6018
        %v6047 = vmul.f32 %v6035, %v5963
        %v6048 = vmul.f32 %v6035, %v6021
        %v6049 = vmul.f32 %v6039, %v5966
        %v6050 = vmul.f32 %v6039, %v6024
        %v6051 = vmul.f32 %v6043, %v5969
        %v6052 = vmul.f32 %v6043, %v6027
        %v6053 = vadd.f32 %v5905, %v6045
        %v6054 = vadd.f32 %v5906, %v6046
        %v6055 = vadd.f32 %v5907, %v6047
        %v6056 = vadd.f32 %v5908, %v6048
        %v6057 = vadd.f32 %v5909, %v6049
        %v6058 = vadd.f32 %v5910, %v6050
        %v6059 = vadd.f32 %v5911, %v6051
        %v6060 = vadd.f32 %v5912, %v6052
        %6061 = vmatpush.msra.mxu0 %v2374
        %6062 = vmatpush.msra.mxu0 %v2372
        %6063 = vmatpush.msra.mxu0 %v2370
        %6064 = vmatpush.msra.mxu0 %v2368
        %6065 = vmatpush.msra.mxu0 %v2366
        %6066 = vmatpush.msra.mxu0 %v2364
        %6067 = vmatpush.msra.mxu0 %v2362
        %6068 = vmatpush.msra.mxu0 %v2360
        %6069 = vmatpush.msra.mxu0 %v2358
        %6070 = vmatpush.msra.mxu0 %v2356
        %6071 = vmatpush.msra.mxu0 %v2354
        %6072 = vmatpush.msra.mxu0 %v2352
        %6073 = vmatpush.msra.mxu0 %v2350
        %6074 = vmatpush.msra.mxu0 %v2348
        %6075 = vmatpush.msra.mxu0 %v2346
        %6076 = vmatpush.msra.mxu0 %v2344
        %6077 = vmatmul.f32.gmra.mxu0 %v4377
        %v6078 = vpop.f32.mrf.mxu0
        %v6079 = vadd.f32 0.0, %v6078
        %6080 = vmatmul.f32.gmra.mxu0 %v4380
        %v6081 = vpop.f32.mrf.mxu0
        %v6082 = vadd.f32 0.0, %v6081
        %6083 = vmatmul.f32.gmra.mxu0 %v4383
        %v6084 = vpop.f32.mrf.mxu0
        %v6085 = vadd.f32 0.0, %v6084
        %6086 = vmatmul.f32.gmra.mxu0 %v4386
        %v6087 = vpop.f32.mrf.mxu0
        %v6088 = vadd.f32 0.0, %v6087
        %6089 = vdwg.mxu0
        %6090 = vmatpush.msra.mxu0 %v2406
        %6091 = vmatpush.msra.mxu0 %v2404
        %6092 = vmatpush.msra.mxu0 %v2402
        %6093 = vmatpush.msra.mxu0 %v2400
        %6094 = vmatpush.msra.mxu0 %v2398
        %6095 = vmatpush.msra.mxu0 %v2396
        %6096 = vmatpush.msra.mxu0 %v2394
        %6097 = vmatpush.msra.mxu0 %v2392
        %6098 = vmatpush.msra.mxu0 %v2390
        %6099 = vmatpush.msra.mxu0 %v2388
        %6100 = vmatpush.msra.mxu0 %v2386
        %6101 = vmatpush.msra.mxu0 %v2384
        %6102 = vmatpush.msra.mxu0 %v2382
        %6103 = vmatpush.msra.mxu0 %v2380
        %6104 = vmatpush.msra.mxu0 %v2378
        %6105 = vmatpush.msra.mxu0 %v2376
        %6106 = vmatmul.f32.gmra.mxu0 %v4406
        %v6107 = vpop.f32.mrf.mxu0
        %v6108 = vadd.f32 %v6079, %v6107
        %6109 = vmatmul.f32.gmra.mxu0 %v4409
        %v6110 = vpop.f32.mrf.mxu0
        %v6111 = vadd.f32 %v6082, %v6110
        %6112 = vmatmul.f32.gmra.mxu0 %v4412
        %v6113 = vpop.f32.mrf.mxu0
        %v6114 = vadd.f32 %v6085, %v6113
        %6115 = vmatmul.f32.gmra.mxu0 %v4415
        %v6116 = vpop.f32.mrf.mxu0
        %v6117 = vadd.f32 %v6088, %v6116
        %6118 = vdwg.mxu0
        %6119 = vmatpush.msra.mxu0 %v2375
        %6120 = vmatpush.msra.mxu0 %v2373
        %6121 = vmatpush.msra.mxu0 %v2371
        %6122 = vmatpush.msra.mxu0 %v2369
        %6123 = vmatpush.msra.mxu0 %v2367
        %6124 = vmatpush.msra.mxu0 %v2365
        %6125 = vmatpush.msra.mxu0 %v2363
        %6126 = vmatpush.msra.mxu0 %v2361
        %6127 = vmatpush.msra.mxu0 %v2359
        %6128 = vmatpush.msra.mxu0 %v2357
        %6129 = vmatpush.msra.mxu0 %v2355
        %6130 = vmatpush.msra.mxu0 %v2353
        %6131 = vmatpush.msra.mxu0 %v2351
        %6132 = vmatpush.msra.mxu0 %v2349
        %6133 = vmatpush.msra.mxu0 %v2347
        %6134 = vmatpush.msra.mxu0 %v2345
        %6135 = vmatmul.f32.gmra.mxu0 %v4377
        %v6136 = vpop.f32.mrf.mxu0
        %v6137 = vadd.f32 0.0, %v6136
        %6138 = vmatmul.f32.gmra.mxu0 %v4380
        %v6139 = vpop.f32.mrf.mxu0
        %v6140 = vadd.f32 0.0, %v6139
        %6141 = vmatmul.f32.gmra.mxu0 %v4383
        %v6142 = vpop.f32.mrf.mxu0
        %v6143 = vadd.f32 0.0, %v6142
        %6144 = vmatmul.f32.gmra.mxu0 %v4386
        %v6145 = vpop.f32.mrf.mxu0
        %v6146 = vadd.f32 0.0, %v6145
        %6147 = vdwg.mxu0
        %6148 = vmatpush.msra.mxu0 %v2407
        %6149 = vmatpush.msra.mxu0 %v2405
        %6150 = vmatpush.msra.mxu0 %v2403
        %6151 = vmatpush.msra.mxu0 %v2401
        %6152 = vmatpush.msra.mxu0 %v2399
        %6153 = vmatpush.msra.mxu0 %v2397
        %6154 = vmatpush.msra.mxu0 %v2395
        %6155 = vmatpush.msra.mxu0 %v2393
        %6156 = vmatpush.msra.mxu0 %v2391
        %6157 = vmatpush.msra.mxu0 %v2389
        %6158 = vmatpush.msra.mxu0 %v2387
        %6159 = vmatpush.msra.mxu0 %v2385
        %6160 = vmatpush.msra.mxu0 %v2383
        %6161 = vmatpush.msra.mxu0 %v2381
        %6162 = vmatpush.msra.mxu0 %v2379
        %6163 = vmatpush.msra.mxu0 %v2377
        %6164 = vmatmul.f32.gmra.mxu0 %v4406
        %v6165 = vpop.f32.mrf.mxu0
        %v6166 = vadd.f32 %v6137, %v6165
        %6167 = vmatmul.f32.gmra.mxu0 %v4409
        %v6168 = vpop.f32.mrf.mxu0
        %v6169 = vadd.f32 %v6140, %v6168
        %6170 = vmatmul.f32.gmra.mxu0 %v4412
        %v6171 = vpop.f32.mrf.mxu0
        %v6172 = vadd.f32 %v6143, %v6171
        %6173 = vmatmul.f32.gmra.mxu0 %v4415
        %v6174 = vpop.f32.mrf.mxu0
        %v6175 = vadd.f32 %v6146, %v6174
        %6176 = vdwg.mxu0
        %6177 = vset.pattern.permute.xlu0 5
        %6178 = vperm.xlu0 %6177, %v4421
        %v6179 = vpop.permute.xlu0 %6178
        %6181 = vset.pattern.permute.xlu0 5
        %6182 = vperm.xlu0 %6181, %v4422
        %v6183 = vpop.permute.xlu0 %6182
        %6185 = vset.pattern.permute.xlu0 5
        %6186 = vperm.xlu0 %6185, %v4423
        %v6187 = vpop.permute.xlu0 %6186
        %6189 = vset.pattern.permute.xlu0 5
        %6190 = vperm.xlu0 %6189, %v4424
        %v6191 = vpop.permute.xlu0 %6190
        %v6193 = vmul.f32 %v6179, %v6108
        %v6194 = vmul.f32 %v6179, %v6166
        %v6195 = vmul.f32 %v6183, %v6111
        %v6196 = vmul.f32 %v6183, %v6169
        %v6197 = vmul.f32 %v6187, %v6114
        %v6198 = vmul.f32 %v6187, %v6172
        %v6199 = vmul.f32 %v6191, %v6117
        %v6200 = vmul.f32 %v6191, %v6175
        %v6201 = vadd.f32 %v6053, %v6193
        %v6202 = vadd.f32 %v6054, %v6194
        %v6203 = vadd.f32 %v6055, %v6195
        %v6204 = vadd.f32 %v6056, %v6196
        %v6205 = vadd.f32 %v6057, %v6197
        %v6206 = vadd.f32 %v6058, %v6198
        %v6207 = vadd.f32 %v6059, %v6199
        %v6208 = vadd.f32 %v6060, %v6200
        %6209 = vmatpush.msra.mxu0 %v2547
        %6210 = vmatpush.msra.mxu0 %v2545
        %6211 = vmatpush.msra.mxu0 %v2543
        %6212 = vmatpush.msra.mxu0 %v2541
        %6213 = vmatpush.msra.mxu0 %v2539
        %6214 = vmatpush.msra.mxu0 %v2537
        %6215 = vmatpush.msra.mxu0 %v2535
        %6216 = vmatpush.msra.mxu0 %v2533
        %6217 = vmatpush.msra.mxu0 %v2531
        %6218 = vmatpush.msra.mxu0 %v2529
        %6219 = vmatpush.msra.mxu0 %v2527
        %6220 = vmatpush.msra.mxu0 %v2525
        %6221 = vmatpush.msra.mxu0 %v2523
        %6222 = vmatpush.msra.mxu0 %v2521
        %6223 = vmatpush.msra.mxu0 %v2519
        %6224 = vmatpush.msra.mxu0 %v2517
        %6225 = vmatmul.f32.gmra.mxu0 %v1471
        %v6226 = vpop.f32.mrf.mxu0
        %v6227 = vadd.f32 0.0, %v6226
        %6228 = vmatmul.f32.gmra.mxu0 %v1473
        %v6229 = vpop.f32.mrf.mxu0
        %v6230 = vadd.f32 0.0, %v6229
        %6231 = vmatmul.f32.gmra.mxu0 %v3211
        %v6232 = vpop.f32.mrf.mxu0
        %v6233 = vadd.f32 0.0, %v6232
        %6234 = vmatmul.f32.gmra.mxu0 %v3213
        %v6235 = vpop.f32.mrf.mxu0
        %v6236 = vadd.f32 0.0, %v6235
        %6237 = vdwg.mxu0
        %6238 = vmatpush.msra.mxu0 %v2579
        %6239 = vmatpush.msra.mxu0 %v2577
        %6240 = vmatpush.msra.mxu0 %v2575
        %6241 = vmatpush.msra.mxu0 %v2573
        %6242 = vmatpush.msra.mxu0 %v2571
        %6243 = vmatpush.msra.mxu0 %v2569
        %6244 = vmatpush.msra.mxu0 %v2567
        %6245 = vmatpush.msra.mxu0 %v2565
        %6246 = vmatpush.msra.mxu0 %v2563
        %6247 = vmatpush.msra.mxu0 %v2561
        %6248 = vmatpush.msra.mxu0 %v2559
        %6249 = vmatpush.msra.mxu0 %v2557
        %6250 = vmatpush.msra.mxu0 %v2555
        %6251 = vmatpush.msra.mxu0 %v2553
        %6252 = vmatpush.msra.mxu0 %v2551
        %6253 = vmatpush.msra.mxu0 %v2549
        %6254 = vmatmul.f32.gmra.mxu0 %v1472
        %v6255 = vpop.f32.mrf.mxu0
        %v6256 = vadd.f32 %v6227, %v6255
        %6257 = vmatmul.f32.gmra.mxu0 %v1474
        %v6258 = vpop.f32.mrf.mxu0
        %v6259 = vadd.f32 %v6230, %v6258
        %6260 = vmatmul.f32.gmra.mxu0 %v3212
        %v6261 = vpop.f32.mrf.mxu0
        %v6262 = vadd.f32 %v6233, %v6261
        %6263 = vmatmul.f32.gmra.mxu0 %v3214
        %v6264 = vpop.f32.mrf.mxu0
        %v6265 = vadd.f32 %v6236, %v6264
        %6266 = vdwg.mxu0
        %6267 = vmatpush.msra.mxu0 %v2548
        %6268 = vmatpush.msra.mxu0 %v2546
        %6269 = vmatpush.msra.mxu0 %v2544
        %6270 = vmatpush.msra.mxu0 %v2542
        %6271 = vmatpush.msra.mxu0 %v2540
        %6272 = vmatpush.msra.mxu0 %v2538
        %6273 = vmatpush.msra.mxu0 %v2536
        %6274 = vmatpush.msra.mxu0 %v2534
        %6275 = vmatpush.msra.mxu0 %v2532
        %6276 = vmatpush.msra.mxu0 %v2530
        %6277 = vmatpush.msra.mxu0 %v2528
        %6278 = vmatpush.msra.mxu0 %v2526
        %6279 = vmatpush.msra.mxu0 %v2524
        %6280 = vmatpush.msra.mxu0 %v2522
        %6281 = vmatpush.msra.mxu0 %v2520
        %6282 = vmatpush.msra.mxu0 %v2518
        %6283 = vmatmul.f32.gmra.mxu0 %v1471
        %v6284 = vpop.f32.mrf.mxu0
        %v6285 = vadd.f32 0.0, %v6284
        %6286 = vmatmul.f32.gmra.mxu0 %v1473
        %v6287 = vpop.f32.mrf.mxu0
        %v6288 = vadd.f32 0.0, %v6287
        %6289 = vmatmul.f32.gmra.mxu0 %v3211
        %v6290 = vpop.f32.mrf.mxu0
        %v6291 = vadd.f32 0.0, %v6290
        %6292 = vmatmul.f32.gmra.mxu0 %v3213
        %v6293 = vpop.f32.mrf.mxu0
        %v6294 = vadd.f32 0.0, %v6293
        %6295 = vdwg.mxu0
        %6296 = vmatpush.msra.mxu0 %v2580
        %6297 = vmatpush.msra.mxu0 %v2578
        %6298 = vmatpush.msra.mxu0 %v2576
        %6299 = vmatpush.msra.mxu0 %v2574
        %6300 = vmatpush.msra.mxu0 %v2572
        %6301 = vmatpush.msra.mxu0 %v2570
        %6302 = vmatpush.msra.mxu0 %v2568
        %6303 = vmatpush.msra.mxu0 %v2566
        %6304 = vmatpush.msra.mxu0 %v2564
        %6305 = vmatpush.msra.mxu0 %v2562
        %6306 = vmatpush.msra.mxu0 %v2560
        %6307 = vmatpush.msra.mxu0 %v2558
        %6308 = vmatpush.msra.mxu0 %v2556
        %6309 = vmatpush.msra.mxu0 %v2554
        %6310 = vmatpush.msra.mxu0 %v2552
        %6311 = vmatpush.msra.mxu0 %v2550
        %6312 = vmatmul.f32.gmra.mxu0 %v1472
        %v6313 = vpop.f32.mrf.mxu0
        %v6314 = vadd.f32 %v6285, %v6313
        %6315 = vmatmul.f32.gmra.mxu0 %v1474
        %v6316 = vpop.f32.mrf.mxu0
        %v6317 = vadd.f32 %v6288, %v6316
        %6318 = vmatmul.f32.gmra.mxu0 %v3212
        %v6319 = vpop.f32.mrf.mxu0
        %v6320 = vadd.f32 %v6291, %v6319
        %6321 = vmatmul.f32.gmra.mxu0 %v3214
        %v6322 = vpop.f32.mrf.mxu0
        %v6323 = vadd.f32 %v6294, %v6322
        %6324 = vdwg.mxu0
        %6325 = vset.pattern.permute.xlu0 6
        %6326 = vperm.xlu0 %6325, %v4417
        %v6327 = vpop.permute.xlu0 %6326
        %6329 = vset.pattern.permute.xlu0 6
        %6330 = vperm.xlu0 %6329, %v4418
        %v6331 = vpop.permute.xlu0 %6330
        %6333 = vset.pattern.permute.xlu0 6
        %6334 = vperm.xlu0 %6333, %v4419
        %v6335 = vpop.permute.xlu0 %6334
        %6337 = vset.pattern.permute.xlu0 6
        %6338 = vperm.xlu0 %6337, %v4420
        %v6339 = vpop.permute.xlu0 %6338
        %v6341 = vmul.f32 %v6327, %v6256
        %v6342 = vmul.f32 %v6327, %v6314
        %v6343 = vmul.f32 %v6331, %v6259
        %v6344 = vmul.f32 %v6331, %v6317
        %v6345 = vmul.f32 %v6335, %v6262
        %v6346 = vmul.f32 %v6335, %v6320
        %v6347 = vmul.f32 %v6339, %v6265
        %v6348 = vmul.f32 %v6339, %v6323
        %v6349 = vadd.f32 %v6201, %v6341
        %v6350 = vadd.f32 %v6202, %v6342
        %v6351 = vadd.f32 %v6203, %v6343
        %v6352 = vadd.f32 %v6204, %v6344
        %v6353 = vadd.f32 %v6205, %v6345
        %v6354 = vadd.f32 %v6206, %v6346
        %v6355 = vadd.f32 %v6207, %v6347
        %v6356 = vadd.f32 %v6208, %v6348
        %6357 = vmatpush.msra.mxu0 %v2547
        %6358 = vmatpush.msra.mxu0 %v2545
        %6359 = vmatpush.msra.mxu0 %v2543
        %6360 = vmatpush.msra.mxu0 %v2541
        %6361 = vmatpush.msra.mxu0 %v2539
        %6362 = vmatpush.msra.mxu0 %v2537
        %6363 = vmatpush.msra.mxu0 %v2535
        %6364 = vmatpush.msra.mxu0 %v2533
        %6365 = vmatpush.msra.mxu0 %v2531
        %6366 = vmatpush.msra.mxu0 %v2529
        %6367 = vmatpush.msra.mxu0 %v2527
        %6368 = vmatpush.msra.mxu0 %v2525
        %6369 = vmatpush.msra.mxu0 %v2523
        %6370 = vmatpush.msra.mxu0 %v2521
        %6371 = vmatpush.msra.mxu0 %v2519
        %6372 = vmatpush.msra.mxu0 %v2517
        %6373 = vmatmul.f32.gmra.mxu0 %v4377
        %v6374 = vpop.f32.mrf.mxu0
        %v6375 = vadd.f32 0.0, %v6374
        %6376 = vmatmul.f32.gmra.mxu0 %v4380
        %v6377 = vpop.f32.mrf.mxu0
        %v6378 = vadd.f32 0.0, %v6377
        %6379 = vmatmul.f32.gmra.mxu0 %v4383
        %v6380 = vpop.f32.mrf.mxu0
        %v6381 = vadd.f32 0.0, %v6380
        %6382 = vmatmul.f32.gmra.mxu0 %v4386
        %v6383 = vpop.f32.mrf.mxu0
        %v6384 = vadd.f32 0.0, %v6383
        %6385 = vdwg.mxu0
        %6386 = vmatpush.msra.mxu0 %v2579
        %6387 = vmatpush.msra.mxu0 %v2577
        %6388 = vmatpush.msra.mxu0 %v2575
        %6389 = vmatpush.msra.mxu0 %v2573
        %6390 = vmatpush.msra.mxu0 %v2571
        %6391 = vmatpush.msra.mxu0 %v2569
        %6392 = vmatpush.msra.mxu0 %v2567
        %6393 = vmatpush.msra.mxu0 %v2565
        %6394 = vmatpush.msra.mxu0 %v2563
        %6395 = vmatpush.msra.mxu0 %v2561
        %6396 = vmatpush.msra.mxu0 %v2559
        %6397 = vmatpush.msra.mxu0 %v2557
        %6398 = vmatpush.msra.mxu0 %v2555
        %6399 = vmatpush.msra.mxu0 %v2553
        %6400 = vmatpush.msra.mxu0 %v2551
        %6401 = vmatpush.msra.mxu0 %v2549
        %6402 = vmatmul.f32.gmra.mxu0 %v4406
        %v6403 = vpop.f32.mrf.mxu0
        %v6404 = vadd.f32 %v6375, %v6403
        %6405 = vmatmul.f32.gmra.mxu0 %v4409
        %v6406 = vpop.f32.mrf.mxu0
        %v6407 = vadd.f32 %v6378, %v6406
        %6408 = vmatmul.f32.gmra.mxu0 %v4412
        %v6409 = vpop.f32.mrf.mxu0
        %v6410 = vadd.f32 %v6381, %v6409
        %6411 = vmatmul.f32.gmra.mxu0 %v4415
        %v6412 = vpop.f32.mrf.mxu0
        %v6413 = vadd.f32 %v6384, %v6412
        %6414 = vdwg.mxu0
        %6415 = vmatpush.msra.mxu0 %v2548
        %6416 = vmatpush.msra.mxu0 %v2546
        %6417 = vmatpush.msra.mxu0 %v2544
        %6418 = vmatpush.msra.mxu0 %v2542
        %6419 = vmatpush.msra.mxu0 %v2540
        %6420 = vmatpush.msra.mxu0 %v2538
        %6421 = vmatpush.msra.mxu0 %v2536
        %6422 = vmatpush.msra.mxu0 %v2534
        %6423 = vmatpush.msra.mxu0 %v2532
        %6424 = vmatpush.msra.mxu0 %v2530
        %6425 = vmatpush.msra.mxu0 %v2528
        %6426 = vmatpush.msra.mxu0 %v2526
        %6427 = vmatpush.msra.mxu0 %v2524
        %6428 = vmatpush.msra.mxu0 %v2522
        %6429 = vmatpush.msra.mxu0 %v2520
        %6430 = vmatpush.msra.mxu0 %v2518
        %6431 = vmatmul.f32.gmra.mxu0 %v4377
        %v6432 = vpop.f32.mrf.mxu0
        %v6433 = vadd.f32 0.0, %v6432
        %6434 = vmatmul.f32.gmra.mxu0 %v4380
        %v6435 = vpop.f32.mrf.mxu0
        %v6436 = vadd.f32 0.0, %v6435
        %6437 = vmatmul.f32.gmra.mxu0 %v4383
        %v6438 = vpop.f32.mrf.mxu0
        %v6439 = vadd.f32 0.0, %v6438
        %6440 = vmatmul.f32.gmra.mxu0 %v4386
        %v6441 = vpop.f32.mrf.mxu0
        %v6442 = vadd.f32 0.0, %v6441
        %6443 = vdwg.mxu0
        %6444 = vmatpush.msra.mxu0 %v2580
        %6445 = vmatpush.msra.mxu0 %v2578
        %6446 = vmatpush.msra.mxu0 %v2576
        %6447 = vmatpush.msra.mxu0 %v2574
        %6448 = vmatpush.msra.mxu0 %v2572
        %6449 = vmatpush.msra.mxu0 %v2570
        %6450 = vmatpush.msra.mxu0 %v2568
        %6451 = vmatpush.msra.mxu0 %v2566
        %6452 = vmatpush.msra.mxu0 %v2564
        %6453 = vmatpush.msra.mxu0 %v2562
        %6454 = vmatpush.msra.mxu0 %v2560
        %6455 = vmatpush.msra.mxu0 %v2558
        %6456 = vmatpush.msra.mxu0 %v2556
        %6457 = vmatpush.msra.mxu0 %v2554
        %6458 = vmatpush.msra.mxu0 %v2552
        %6459 = vmatpush.msra.mxu0 %v2550
        %6460 = vmatmul.f32.gmra.mxu0 %v4406
        %v6461 = vpop.f32.mrf.mxu0
        %v6462 = vadd.f32 %v6433, %v6461
        %6463 = vmatmul.f32.gmra.mxu0 %v4409
        %v6464 = vpop.f32.mrf.mxu0
        %v6465 = vadd.f32 %v6436, %v6464
        %6466 = vmatmul.f32.gmra.mxu0 %v4412
        %v6467 = vpop.f32.mrf.mxu0
        %v6468 = vadd.f32 %v6439, %v6467
        %6469 = vmatmul.f32.gmra.mxu0 %v4415
        %v6470 = vpop.f32.mrf.mxu0
        %v6471 = vadd.f32 %v6442, %v6470
        %6472 = vdwg.mxu0
        %6473 = vset.pattern.permute.xlu0 6
        %6474 = vperm.xlu0 %6473, %v4421
        %v6475 = vpop.permute.xlu0 %6474
        %6477 = vset.pattern.permute.xlu0 6
        %6478 = vperm.xlu0 %6477, %v4422
        %v6479 = vpop.permute.xlu0 %6478
        %6481 = vset.pattern.permute.xlu0 6
        %6482 = vperm.xlu0 %6481, %v4423
        %v6483 = vpop.permute.xlu0 %6482
        %6485 = vset.pattern.permute.xlu0 6
        %6486 = vperm.xlu0 %6485, %v4424
        %v6487 = vpop.permute.xlu0 %6486
        %v6489 = vmul.f32 %v6475, %v6404
        %v6490 = vmul.f32 %v6475, %v6462
        %v6491 = vmul.f32 %v6479, %v6407
        %v6492 = vmul.f32 %v6479, %v6465
        %v6493 = vmul.f32 %v6483, %v6410
        %v6494 = vmul.f32 %v6483, %v6468
        %v6495 = vmul.f32 %v6487, %v6413
        %v6496 = vmul.f32 %v6487, %v6471
        %v6497 = vadd.f32 %v6349, %v6489
        %v6498 = vadd.f32 %v6350, %v6490
        %v6499 = vadd.f32 %v6351, %v6491
        %v6500 = vadd.f32 %v6352, %v6492
        %v6501 = vadd.f32 %v6353, %v6493
        %v6502 = vadd.f32 %v6354, %v6494
        %v6503 = vadd.f32 %v6355, %v6495
        %v6504 = vadd.f32 %v6356, %v6496
        %6505 = vmatpush.msra.mxu0 %v2720
        %6506 = vmatpush.msra.mxu0 %v2718
        %6507 = vmatpush.msra.mxu0 %v2716
        %6508 = vmatpush.msra.mxu0 %v2714
        %6509 = vmatpush.msra.mxu0 %v2712
        %6510 = vmatpush.msra.mxu0 %v2710
        %6511 = vmatpush.msra.mxu0 %v2708
        %6512 = vmatpush.msra.mxu0 %v2706
        %6513 = vmatpush.msra.mxu0 %v2704
        %6514 = vmatpush.msra.mxu0 %v2702
        %6515 = vmatpush.msra.mxu0 %v2700
        %6516 = vmatpush.msra.mxu0 %v2698
        %6517 = vmatpush.msra.mxu0 %v2696
        %6518 = vmatpush.msra.mxu0 %v2694
        %6519 = vmatpush.msra.mxu0 %v2692
        %6520 = vmatpush.msra.mxu0 %v2690
        %6521 = vmatmul.f32.gmra.mxu0 %v1471
        %v6522 = vpop.f32.mrf.mxu0
        %v6523 = vadd.f32 0.0, %v6522
        %6524 = vmatmul.f32.gmra.mxu0 %v1473
        %v6525 = vpop.f32.mrf.mxu0
        %v6526 = vadd.f32 0.0, %v6525
        %6527 = vmatmul.f32.gmra.mxu0 %v3211
        %v6528 = vpop.f32.mrf.mxu0
        %v6529 = vadd.f32 0.0, %v6528
        %6530 = vmatmul.f32.gmra.mxu0 %v3213
        %v6531 = vpop.f32.mrf.mxu0
        %v6532 = vadd.f32 0.0, %v6531
        %6533 = vdwg.mxu0
        %6534 = vmatpush.msra.mxu0 %v2752
        %6535 = vmatpush.msra.mxu0 %v2750
        %6536 = vmatpush.msra.mxu0 %v2748
        %6537 = vmatpush.msra.mxu0 %v2746
        %6538 = vmatpush.msra.mxu0 %v2744
        %6539 = vmatpush.msra.mxu0 %v2742
        %6540 = vmatpush.msra.mxu0 %v2740
        %6541 = vmatpush.msra.mxu0 %v2738
        %6542 = vmatpush.msra.mxu0 %v2736
        %6543 = vmatpush.msra.mxu0 %v2734
        %6544 = vmatpush.msra.mxu0 %v2732
        %6545 = vmatpush.msra.mxu0 %v2730
        %6546 = vmatpush.msra.mxu0 %v2728
        %6547 = vmatpush.msra.mxu0 %v2726
        %6548 = vmatpush.msra.mxu0 %v2724
        %6549 = vmatpush.msra.mxu0 %v2722
        %6550 = vmatmul.f32.gmra.mxu0 %v1472
        %v6551 = vpop.f32.mrf.mxu0
        %v6552 = vadd.f32 %v6523, %v6551
        %6553 = vmatmul.f32.gmra.mxu0 %v1474
        %v6554 = vpop.f32.mrf.mxu0
        %v6555 = vadd.f32 %v6526, %v6554
        %6556 = vmatmul.f32.gmra.mxu0 %v3212
        %v6557 = vpop.f32.mrf.mxu0
        %v6558 = vadd.f32 %v6529, %v6557
        %6559 = vmatmul.f32.gmra.mxu0 %v3214
        %v6560 = vpop.f32.mrf.mxu0
        %v6561 = vadd.f32 %v6532, %v6560
        %6562 = vdwg.mxu0
        %6563 = vmatpush.msra.mxu0 %v2721
        %6564 = vmatpush.msra.mxu0 %v2719
        %6565 = vmatpush.msra.mxu0 %v2717
        %6566 = vmatpush.msra.mxu0 %v2715
        %6567 = vmatpush.msra.mxu0 %v2713
        %6568 = vmatpush.msra.mxu0 %v2711
        %6569 = vmatpush.msra.mxu0 %v2709
        %6570 = vmatpush.msra.mxu0 %v2707
        %6571 = vmatpush.msra.mxu0 %v2705
        %6572 = vmatpush.msra.mxu0 %v2703
        %6573 = vmatpush.msra.mxu0 %v2701
        %6574 = vmatpush.msra.mxu0 %v2699
        %6575 = vmatpush.msra.mxu0 %v2697
        %6576 = vmatpush.msra.mxu0 %v2695
        %6577 = vmatpush.msra.mxu0 %v2693
        %6578 = vmatpush.msra.mxu0 %v2691
        %6579 = vmatmul.f32.gmra.mxu0 %v1471
        %v6580 = vpop.f32.mrf.mxu0
        %v6581 = vadd.f32 0.0, %v6580
        %6582 = vmatmul.f32.gmra.mxu0 %v1473
        %v6583 = vpop.f32.mrf.mxu0
        %v6584 = vadd.f32 0.0, %v6583
        %6585 = vmatmul.f32.gmra.mxu0 %v3211
        %v6586 = vpop.f32.mrf.mxu0
        %v6587 = vadd.f32 0.0, %v6586
        %6588 = vmatmul.f32.gmra.mxu0 %v3213
        %v6589 = vpop.f32.mrf.mxu0
        %v6590 = vadd.f32 0.0, %v6589
        %6591 = vdwg.mxu0
        %6592 = vmatpush.msra.mxu0 %v2753
        %6593 = vmatpush.msra.mxu0 %v2751
        %6594 = vmatpush.msra.mxu0 %v2749
        %6595 = vmatpush.msra.mxu0 %v2747
        %6596 = vmatpush.msra.mxu0 %v2745
        %6597 = vmatpush.msra.mxu0 %v2743
        %6598 = vmatpush.msra.mxu0 %v2741
        %6599 = vmatpush.msra.mxu0 %v2739
        %6600 = vmatpush.msra.mxu0 %v2737
        %6601 = vmatpush.msra.mxu0 %v2735
        %6602 = vmatpush.msra.mxu0 %v2733
        %6603 = vmatpush.msra.mxu0 %v2731
        %6604 = vmatpush.msra.mxu0 %v2729
        %6605 = vmatpush.msra.mxu0 %v2727
        %6606 = vmatpush.msra.mxu0 %v2725
        %6607 = vmatpush.msra.mxu0 %v2723
        %6608 = vmatmul.f32.gmra.mxu0 %v1472
        %v6609 = vpop.f32.mrf.mxu0
        %v6610 = vadd.f32 %v6581, %v6609
        %6611 = vmatmul.f32.gmra.mxu0 %v1474
        %v6612 = vpop.f32.mrf.mxu0
        %v6613 = vadd.f32 %v6584, %v6612
        %6614 = vmatmul.f32.gmra.mxu0 %v3212
        %v6615 = vpop.f32.mrf.mxu0
        %v6616 = vadd.f32 %v6587, %v6615
        %6617 = vmatmul.f32.gmra.mxu0 %v3214
        %v6618 = vpop.f32.mrf.mxu0
        %v6619 = vadd.f32 %v6590, %v6618
        %6620 = vdwg.mxu0
        %6621 = vset.pattern.permute.xlu0 7
        %6622 = vperm.xlu0 %6621, %v4417
        %v6623 = vpop.permute.xlu0 %6622
        %6625 = vset.pattern.permute.xlu0 7
        %6626 = vperm.xlu0 %6625, %v4418
        %v6627 = vpop.permute.xlu0 %6626
        %6629 = vset.pattern.permute.xlu0 7
        %6630 = vperm.xlu0 %6629, %v4419
        %v6631 = vpop.permute.xlu0 %6630
        %6633 = vset.pattern.permute.xlu0 7
        %6634 = vperm.xlu0 %6633, %v4420
        %v6635 = vpop.permute.xlu0 %6634
        %v6637 = vmul.f32 %v6623, %v6552
        %v6638 = vmul.f32 %v6623, %v6610
        %v6639 = vmul.f32 %v6627, %v6555
        %v6640 = vmul.f32 %v6627, %v6613
        %v6641 = vmul.f32 %v6631, %v6558
        %v6642 = vmul.f32 %v6631, %v6616
        %v6643 = vmul.f32 %v6635, %v6561
        %v6644 = vmul.f32 %v6635, %v6619
        %v6645 = vadd.f32 %v6497, %v6637
        %v6646 = vadd.f32 %v6498, %v6638
        %v6647 = vadd.f32 %v6499, %v6639
        %v6648 = vadd.f32 %v6500, %v6640
        %v6649 = vadd.f32 %v6501, %v6641
        %v6650 = vadd.f32 %v6502, %v6642
        %v6651 = vadd.f32 %v6503, %v6643
        %v6652 = vadd.f32 %v6504, %v6644
        %6653 = vmatpush.msra.mxu0 %v2720
        %6654 = vmatpush.msra.mxu0 %v2718
        %6655 = vmatpush.msra.mxu0 %v2716
        %6656 = vmatpush.msra.mxu0 %v2714
        %6657 = vmatpush.msra.mxu0 %v2712
        %6658 = vmatpush.msra.mxu0 %v2710
        %6659 = vmatpush.msra.mxu0 %v2708
        %6660 = vmatpush.msra.mxu0 %v2706
        %6661 = vmatpush.msra.mxu0 %v2704
        %6662 = vmatpush.msra.mxu0 %v2702
        %6663 = vmatpush.msra.mxu0 %v2700
        %6664 = vmatpush.msra.mxu0 %v2698
        %6665 = vmatpush.msra.mxu0 %v2696
        %6666 = vmatpush.msra.mxu0 %v2694
        %6667 = vmatpush.msra.mxu0 %v2692
        %6668 = vmatpush.msra.mxu0 %v2690
        %6669 = vmatmul.f32.gmra.mxu0 %v4377
        %v6670 = vpop.f32.mrf.mxu0
        %v6671 = vadd.f32 0.0, %v6670
        %6672 = vmatmul.f32.gmra.mxu0 %v4380
        %v6673 = vpop.f32.mrf.mxu0
        %v6674 = vadd.f32 0.0, %v6673
        %6675 = vmatmul.f32.gmra.mxu0 %v4383
        %v6676 = vpop.f32.mrf.mxu0
        %v6677 = vadd.f32 0.0, %v6676
        %6678 = vmatmul.f32.gmra.mxu0 %v4386
        %v6679 = vpop.f32.mrf.mxu0
        %v6680 = vadd.f32 0.0, %v6679
        %6681 = vdwg.mxu0
        %6682 = vmatpush.msra.mxu0 %v2752
        %6683 = vmatpush.msra.mxu0 %v2750
        %6684 = vmatpush.msra.mxu0 %v2748
        %6685 = vmatpush.msra.mxu0 %v2746
        %6686 = vmatpush.msra.mxu0 %v2744
        %6687 = vmatpush.msra.mxu0 %v2742
        %6688 = vmatpush.msra.mxu0 %v2740
        %6689 = vmatpush.msra.mxu0 %v2738
        %6690 = vmatpush.msra.mxu0 %v2736
        %6691 = vmatpush.msra.mxu0 %v2734
        %6692 = vmatpush.msra.mxu0 %v2732
        %6693 = vmatpush.msra.mxu0 %v2730
        %6694 = vmatpush.msra.mxu0 %v2728
        %6695 = vmatpush.msra.mxu0 %v2726
        %6696 = vmatpush.msra.mxu0 %v2724
        %6697 = vmatpush.msra.mxu0 %v2722
        %6698 = vmatmul.f32.gmra.mxu0 %v4406
        %v6699 = vpop.f32.mrf.mxu0
        %v6700 = vadd.f32 %v6671, %v6699
        %6701 = vmatmul.f32.gmra.mxu0 %v4409
        %v6702 = vpop.f32.mrf.mxu0
        %v6703 = vadd.f32 %v6674, %v6702
        %6704 = vmatmul.f32.gmra.mxu0 %v4412
        %v6705 = vpop.f32.mrf.mxu0
        %v6706 = vadd.f32 %v6677, %v6705
        %6707 = vmatmul.f32.gmra.mxu0 %v4415
        %v6708 = vpop.f32.mrf.mxu0
        %v6709 = vadd.f32 %v6680, %v6708
        %6710 = vdwg.mxu0
        %6711 = vmatpush.msra.mxu0 %v2721
        %6712 = vmatpush.msra.mxu0 %v2719
        %6713 = vmatpush.msra.mxu0 %v2717
        %6714 = vmatpush.msra.mxu0 %v2715
        %6715 = vmatpush.msra.mxu0 %v2713
        %6716 = vmatpush.msra.mxu0 %v2711
        %6717 = vmatpush.msra.mxu0 %v2709
        %6718 = vmatpush.msra.mxu0 %v2707
        %6719 = vmatpush.msra.mxu0 %v2705
        %6720 = vmatpush.msra.mxu0 %v2703
        %6721 = vmatpush.msra.mxu0 %v2701
        %6722 = vmatpush.msra.mxu0 %v2699
        %6723 = vmatpush.msra.mxu0 %v2697
        %6724 = vmatpush.msra.mxu0 %v2695
        %6725 = vmatpush.msra.mxu0 %v2693
        %6726 = vmatpush.msra.mxu0 %v2691
        %6727 = vmatmul.f32.gmra.mxu0 %v4377
        %v6728 = vpop.f32.mrf.mxu0
        %v6729 = vadd.f32 0.0, %v6728
        %6730 = vmatmul.f32.gmra.mxu0 %v4380
        %v6731 = vpop.f32.mrf.mxu0
        %v6732 = vadd.f32 0.0, %v6731
        %6733 = vmatmul.f32.gmra.mxu0 %v4383
        %v6734 = vpop.f32.mrf.mxu0
        %v6735 = vadd.f32 0.0, %v6734
        %6736 = vmatmul.f32.gmra.mxu0 %v4386
        %v6737 = vpop.f32.mrf.mxu0
        %v6738 = vadd.f32 0.0, %v6737
        %6739 = vdwg.mxu0
        %6740 = vmatpush.msra.mxu0 %v2753
        %6741 = vmatpush.msra.mxu0 %v2751
        %6742 = vmatpush.msra.mxu0 %v2749
        %6743 = vmatpush.msra.mxu0 %v2747
        %6744 = vmatpush.msra.mxu0 %v2745
        %6745 = vmatpush.msra.mxu0 %v2743
        %6746 = vmatpush.msra.mxu0 %v2741
        %6747 = vmatpush.msra.mxu0 %v2739
        %6748 = vmatpush.msra.mxu0 %v2737
        %6749 = vmatpush.msra.mxu0 %v2735
        %6750 = vmatpush.msra.mxu0 %v2733
        %6751 = vmatpush.msra.mxu0 %v2731
        %6752 = vmatpush.msra.mxu0 %v2729
        %6753 = vmatpush.msra.mxu0 %v2727
        %6754 = vmatpush.msra.mxu0 %v2725
        %6755 = vmatpush.msra.mxu0 %v2723
        %6756 = vmatmul.f32.gmra.mxu0 %v4406
        %v6757 = vpop.f32.mrf.mxu0
        %v6758 = vadd.f32 %v6729, %v6757
        %6759 = vmatmul.f32.gmra.mxu0 %v4409
        %v6760 = vpop.f32.mrf.mxu0
        %v6761 = vadd.f32 %v6732, %v6760
        %6762 = vmatmul.f32.gmra.mxu0 %v4412
        %v6763 = vpop.f32.mrf.mxu0
        %v6764 = vadd.f32 %v6735, %v6763
        %6765 = vmatmul.f32.gmra.mxu0 %v4415
        %v6766 = vpop.f32.mrf.mxu0
        %v6767 = vadd.f32 %v6738, %v6766
        %6768 = vdwg.mxu0
        %6769 = vset.pattern.permute.xlu0 7
        %6770 = vperm.xlu0 %6769, %v4421
        %v6771 = vpop.permute.xlu0 %6770
        %6773 = vset.pattern.permute.xlu0 7
        %6774 = vperm.xlu0 %6773, %v4422
        %v6775 = vpop.permute.xlu0 %6774
        %6777 = vset.pattern.permute.xlu0 7
        %6778 = vperm.xlu0 %6777, %v4423
        %v6779 = vpop.permute.xlu0 %6778
        %6781 = vset.pattern.permute.xlu0 7
        %6782 = vperm.xlu0 %6781, %v4424
        %v6783 = vpop.permute.xlu0 %6782
        %v6785 = vmul.f32 %v6771, %v6700
        %v6786 = vmul.f32 %v6771, %v6758
        %v6787 = vmul.f32 %v6775, %v6703
        %v6788 = vmul.f32 %v6775, %v6761
        %v6789 = vmul.f32 %v6779, %v6706
        %v6790 = vmul.f32 %v6779, %v6764
        %v6791 = vmul.f32 %v6783, %v6709
        %v6792 = vmul.f32 %v6783, %v6767
        %v6793 = vadd.f32 %v6645, %v6785
        %v6794 = vadd.f32 %v6646, %v6786
        %v6795 = vadd.f32 %v6647, %v6787
        %v6796 = vadd.f32 %v6648, %v6788
        %v6797 = vadd.f32 %v6649, %v6789
        %v6798 = vadd.f32 %v6650, %v6790
        %v6799 = vadd.f32 %v6651, %v6791
        %v6800 = vadd.f32 %v6652, %v6792
        %6801 = vmatpush.msra.mxu0 %v2893
        %6802 = vmatpush.msra.mxu0 %v2891
        %6803 = vmatpush.msra.mxu0 %v2889
        %6804 = vmatpush.msra.mxu0 %v2887
        %6805 = vmatpush.msra.mxu0 %v2885
        %6806 = vmatpush.msra.mxu0 %v2883
        %6807 = vmatpush.msra.mxu0 %v2881
        %6808 = vmatpush.msra.mxu0 %v2879
        %6809 = vmatpush.msra.mxu0 %v2877
        %6810 = vmatpush.msra.mxu0 %v2875
        %6811 = vmatpush.msra.mxu0 %v2873
        %6812 = vmatpush.msra.mxu0 %v2871
        %6813 = vmatpush.msra.mxu0 %v2869
        %6814 = vmatpush.msra.mxu0 %v2867
        %6815 = vmatpush.msra.mxu0 %v2865
        %6816 = vmatpush.msra.mxu0 %v2863
        %6817 = vmatmul.f32.gmra.mxu0 %v1471
        %v6818 = vpop.f32.mrf.mxu0
        %v6819 = vadd.f32 0.0, %v6818
        %6820 = vmatmul.f32.gmra.mxu0 %v1473
        %v6821 = vpop.f32.mrf.mxu0
        %v6822 = vadd.f32 0.0, %v6821
        %6823 = vmatmul.f32.gmra.mxu0 %v3211
        %v6824 = vpop.f32.mrf.mxu0
        %v6825 = vadd.f32 0.0, %v6824
        %6826 = vmatmul.f32.gmra.mxu0 %v3213
        %v6827 = vpop.f32.mrf.mxu0
        %v6828 = vadd.f32 0.0, %v6827
        %6829 = vdwg.mxu0
        %6830 = vmatpush.msra.mxu0 %v2925
        %6831 = vmatpush.msra.mxu0 %v2923
        %6832 = vmatpush.msra.mxu0 %v2921
        %6833 = vmatpush.msra.mxu0 %v2919
        %6834 = vmatpush.msra.mxu0 %v2917
        %6835 = vmatpush.msra.mxu0 %v2915
        %6836 = vmatpush.msra.mxu0 %v2913
        %6837 = vmatpush.msra.mxu0 %v2911
        %6838 = vmatpush.msra.mxu0 %v2909
        %6839 = vmatpush.msra.mxu0 %v2907
        %6840 = vmatpush.msra.mxu0 %v2905
        %6841 = vmatpush.msra.mxu0 %v2903
        %6842 = vmatpush.msra.mxu0 %v2901
        %6843 = vmatpush.msra.mxu0 %v2899
        %6844 = vmatpush.msra.mxu0 %v2897
        %6845 = vmatpush.msra.mxu0 %v2895
        %6846 = vmatmul.f32.gmra.mxu0 %v1472
        %v6847 = vpop.f32.mrf.mxu0
        %v6848 = vadd.f32 %v6819, %v6847
        %6849 = vmatmul.f32.gmra.mxu0 %v1474
        %v6850 = vpop.f32.mrf.mxu0
        %v6851 = vadd.f32 %v6822, %v6850
        %6852 = vmatmul.f32.gmra.mxu0 %v3212
        %v6853 = vpop.f32.mrf.mxu0
        %v6854 = vadd.f32 %v6825, %v6853
        %6855 = vmatmul.f32.gmra.mxu0 %v3214
        %v6856 = vpop.f32.mrf.mxu0
        %v6857 = vadd.f32 %v6828, %v6856
        %6858 = vdwg.mxu0
        %6859 = vmatpush.msra.mxu0 %v2894
        %6860 = vmatpush.msra.mxu0 %v2892
        %6861 = vmatpush.msra.mxu0 %v2890
        %6862 = vmatpush.msra.mxu0 %v2888
        %6863 = vmatpush.msra.mxu0 %v2886
        %6864 = vmatpush.msra.mxu0 %v2884
        %6865 = vmatpush.msra.mxu0 %v2882
        %6866 = vmatpush.msra.mxu0 %v2880
        %6867 = vmatpush.msra.mxu0 %v2878
        %6868 = vmatpush.msra.mxu0 %v2876
        %6869 = vmatpush.msra.mxu0 %v2874
        %6870 = vmatpush.msra.mxu0 %v2872
        %6871 = vmatpush.msra.mxu0 %v2870
        %6872 = vmatpush.msra.mxu0 %v2868
        %6873 = vmatpush.msra.mxu0 %v2866
        %6874 = vmatpush.msra.mxu0 %v2864
        %6875 = vmatmul.f32.gmra.mxu0 %v1471
        %v6876 = vpop.f32.mrf.mxu0
        %v6877 = vadd.f32 0.0, %v6876
        %6878 = vmatmul.f32.gmra.mxu0 %v1473
        %v6879 = vpop.f32.mrf.mxu0
        %v6880 = vadd.f32 0.0, %v6879
        %6881 = vmatmul.f32.gmra.mxu0 %v3211
        %v6882 = vpop.f32.mrf.mxu0
        %v6883 = vadd.f32 0.0, %v6882
        %6884 = vmatmul.f32.gmra.mxu0 %v3213
        %v6885 = vpop.f32.mrf.mxu0
        %v6886 = vadd.f32 0.0, %v6885
        %6887 = vdwg.mxu0
        %6888 = vmatpush.msra.mxu0 %v2926
        %6889 = vmatpush.msra.mxu0 %v2924
        %6890 = vmatpush.msra.mxu0 %v2922
        %6891 = vmatpush.msra.mxu0 %v2920
        %6892 = vmatpush.msra.mxu0 %v2918
        %6893 = vmatpush.msra.mxu0 %v2916
        %6894 = vmatpush.msra.mxu0 %v2914
        %6895 = vmatpush.msra.mxu0 %v2912
        %6896 = vmatpush.msra.mxu0 %v2910
        %6897 = vmatpush.msra.mxu0 %v2908
        %6898 = vmatpush.msra.mxu0 %v2906
        %6899 = vmatpush.msra.mxu0 %v2904
        %6900 = vmatpush.msra.mxu0 %v2902
        %6901 = vmatpush.msra.mxu0 %v2900
        %6902 = vmatpush.msra.mxu0 %v2898
        %6903 = vmatpush.msra.mxu0 %v2896
        %6904 = vmatmul.f32.gmra.mxu0 %v1472
        %v6905 = vpop.f32.mrf.mxu0
        %v6906 = vadd.f32 %v6877, %v6905
        %6907 = vmatmul.f32.gmra.mxu0 %v1474
        %v6908 = vpop.f32.mrf.mxu0
        %v6909 = vadd.f32 %v6880, %v6908
        %6910 = vmatmul.f32.gmra.mxu0 %v3212
        %v6911 = vpop.f32.mrf.mxu0
        %v6912 = vadd.f32 %v6883, %v6911
        %6913 = vmatmul.f32.gmra.mxu0 %v3214
        %v6914 = vpop.f32.mrf.mxu0
        %v6915 = vadd.f32 %v6886, %v6914
        %6916 = vdwg.mxu0
        %6917 = vset.pattern.permute.xlu0 8
        %6918 = vperm.xlu0 %6917, %v4417
        %v6919 = vpop.permute.xlu0 %6918
        %6921 = vset.pattern.permute.xlu0 8
        %6922 = vperm.xlu0 %6921, %v4418
        %v6923 = vpop.permute.xlu0 %6922
        %6925 = vset.pattern.permute.xlu0 8
        %6926 = vperm.xlu0 %6925, %v4419
        %v6927 = vpop.permute.xlu0 %6926
        %6929 = vset.pattern.permute.xlu0 8
        %6930 = vperm.xlu0 %6929, %v4420
        %v6931 = vpop.permute.xlu0 %6930
        %v6933 = vmul.f32 %v6919, %v6848
        %v6934 = vmul.f32 %v6919, %v6906
        %v6935 = vmul.f32 %v6923, %v6851
        %v6936 = vmul.f32 %v6923, %v6909
        %v6937 = vmul.f32 %v6927, %v6854
        %v6938 = vmul.f32 %v6927, %v6912
        %v6939 = vmul.f32 %v6931, %v6857
        %v6940 = vmul.f32 %v6931, %v6915
        %v6941 = vadd.f32 %v6793, %v6933
        %v6942 = vadd.f32 %v6794, %v6934
        %v6943 = vadd.f32 %v6795, %v6935
        %v6944 = vadd.f32 %v6796, %v6936
        %v6945 = vadd.f32 %v6797, %v6937
        %v6946 = vadd.f32 %v6798, %v6938
        %v6947 = vadd.f32 %v6799, %v6939
        %v6948 = vadd.f32 %v6800, %v6940
        %6949 = vmatpush.msra.mxu0 %v2893
        %6950 = vmatpush.msra.mxu0 %v2891
        %6951 = vmatpush.msra.mxu0 %v2889
        %6952 = vmatpush.msra.mxu0 %v2887
        %6953 = vmatpush.msra.mxu0 %v2885
        %6954 = vmatpush.msra.mxu0 %v2883
        %6955 = vmatpush.msra.mxu0 %v2881
        %6956 = vmatpush.msra.mxu0 %v2879
        %6957 = vmatpush.msra.mxu0 %v2877
        %6958 = vmatpush.msra.mxu0 %v2875
        %6959 = vmatpush.msra.mxu0 %v2873
        %6960 = vmatpush.msra.mxu0 %v2871
        %6961 = vmatpush.msra.mxu0 %v2869
        %6962 = vmatpush.msra.mxu0 %v2867
        %6963 = vmatpush.msra.mxu0 %v2865
        %6964 = vmatpush.msra.mxu0 %v2863
        %6965 = vmatmul.f32.gmra.mxu0 %v4377
        %v6966 = vpop.f32.mrf.mxu0
        %v6967 = vadd.f32 0.0, %v6966
        %6968 = vmatmul.f32.gmra.mxu0 %v4380
        %v6969 = vpop.f32.mrf.mxu0
        %v6970 = vadd.f32 0.0, %v6969
        %6971 = vmatmul.f32.gmra.mxu0 %v4383
        %v6972 = vpop.f32.mrf.mxu0
        %v6973 = vadd.f32 0.0, %v6972
        %6974 = vmatmul.f32.gmra.mxu0 %v4386
        %v6975 = vpop.f32.mrf.mxu0
        %v6976 = vadd.f32 0.0, %v6975
        %6977 = vdwg.mxu0
        %6978 = vmatpush.msra.mxu0 %v2925
        %6979 = vmatpush.msra.mxu0 %v2923
        %6980 = vmatpush.msra.mxu0 %v2921
        %6981 = vmatpush.msra.mxu0 %v2919
        %6982 = vmatpush.msra.mxu0 %v2917
        %6983 = vmatpush.msra.mxu0 %v2915
        %6984 = vmatpush.msra.mxu0 %v2913
        %6985 = vmatpush.msra.mxu0 %v2911
        %6986 = vmatpush.msra.mxu0 %v2909
        %6987 = vmatpush.msra.mxu0 %v2907
        %6988 = vmatpush.msra.mxu0 %v2905
        %6989 = vmatpush.msra.mxu0 %v2903
        %6990 = vmatpush.msra.mxu0 %v2901
        %6991 = vmatpush.msra.mxu0 %v2899
        %6992 = vmatpush.msra.mxu0 %v2897
        %6993 = vmatpush.msra.mxu0 %v2895
        %6994 = vmatmul.f32.gmra.mxu0 %v4406
        %v6995 = vpop.f32.mrf.mxu0
        %v6996 = vadd.f32 %v6967, %v6995
        %6997 = vmatmul.f32.gmra.mxu0 %v4409
        %v6998 = vpop.f32.mrf.mxu0
        %v6999 = vadd.f32 %v6970, %v6998
        %7000 = vmatmul.f32.gmra.mxu0 %v4412
        %v7001 = vpop.f32.mrf.mxu0
        %v7002 = vadd.f32 %v6973, %v7001
        %7003 = vmatmul.f32.gmra.mxu0 %v4415
        %v7004 = vpop.f32.mrf.mxu0
        %v7005 = vadd.f32 %v6976, %v7004
        %7006 = vdwg.mxu0
        %7007 = vmatpush.msra.mxu0 %v2894
        %7008 = vmatpush.msra.mxu0 %v2892
        %7009 = vmatpush.msra.mxu0 %v2890
        %7010 = vmatpush.msra.mxu0 %v2888
        %7011 = vmatpush.msra.mxu0 %v2886
        %7012 = vmatpush.msra.mxu0 %v2884
        %7013 = vmatpush.msra.mxu0 %v2882
        %7014 = vmatpush.msra.mxu0 %v2880
        %7015 = vmatpush.msra.mxu0 %v2878
        %7016 = vmatpush.msra.mxu0 %v2876
        %7017 = vmatpush.msra.mxu0 %v2874
        %7018 = vmatpush.msra.mxu0 %v2872
        %7019 = vmatpush.msra.mxu0 %v2870
        %7020 = vmatpush.msra.mxu0 %v2868
        %7021 = vmatpush.msra.mxu0 %v2866
        %7022 = vmatpush.msra.mxu0 %v2864
        %7023 = vmatmul.f32.gmra.mxu0 %v4377
        %v7024 = vpop.f32.mrf.mxu0
        %v7025 = vadd.f32 0.0, %v7024
        %7026 = vmatmul.f32.gmra.mxu0 %v4380
        %v7027 = vpop.f32.mrf.mxu0
        %v7028 = vadd.f32 0.0, %v7027
        %7029 = vmatmul.f32.gmra.mxu0 %v4383
        %v7030 = vpop.f32.mrf.mxu0
        %v7031 = vadd.f32 0.0, %v7030
        %7032 = vmatmul.f32.gmra.mxu0 %v4386
        %v7033 = vpop.f32.mrf.mxu0
        %v7034 = vadd.f32 0.0, %v7033
        %7035 = vdwg.mxu0
        %7036 = vmatpush.msra.mxu0 %v2926
        %7037 = vmatpush.msra.mxu0 %v2924
        %7038 = vmatpush.msra.mxu0 %v2922
        %7039 = vmatpush.msra.mxu0 %v2920
        %7040 = vmatpush.msra.mxu0 %v2918
        %7041 = vmatpush.msra.mxu0 %v2916
        %7042 = vmatpush.msra.mxu0 %v2914
        %7043 = vmatpush.msra.mxu0 %v2912
        %7044 = vmatpush.msra.mxu0 %v2910
        %7045 = vmatpush.msra.mxu0 %v2908
        %7046 = vmatpush.msra.mxu0 %v2906
        %7047 = vmatpush.msra.mxu0 %v2904
        %7048 = vmatpush.msra.mxu0 %v2902
        %7049 = vmatpush.msra.mxu0 %v2900
        %7050 = vmatpush.msra.mxu0 %v2898
        %7051 = vmatpush.msra.mxu0 %v2896
        %7052 = vmatmul.f32.gmra.mxu0 %v4406
        %v7053 = vpop.f32.mrf.mxu0
        %v7054 = vadd.f32 %v7025, %v7053
        %7055 = vmatmul.f32.gmra.mxu0 %v4409
        %v7056 = vpop.f32.mrf.mxu0
        %v7057 = vadd.f32 %v7028, %v7056
        %7058 = vmatmul.f32.gmra.mxu0 %v4412
        %v7059 = vpop.f32.mrf.mxu0
        %v7060 = vadd.f32 %v7031, %v7059
        %7061 = vmatmul.f32.gmra.mxu0 %v4415
        %v7062 = vpop.f32.mrf.mxu0
        %v7063 = vadd.f32 %v7034, %v7062
        %7064 = vdwg.mxu0
        %7065 = vset.pattern.permute.xlu0 8
        %7066 = vperm.xlu0 %7065, %v4421
        %v7067 = vpop.permute.xlu0 %7066
        %7069 = vset.pattern.permute.xlu0 8
        %7070 = vperm.xlu0 %7069, %v4422
        %v7071 = vpop.permute.xlu0 %7070
        %7073 = vset.pattern.permute.xlu0 8
        %7074 = vperm.xlu0 %7073, %v4423
        %v7075 = vpop.permute.xlu0 %7074
        %7077 = vset.pattern.permute.xlu0 8
        %7078 = vperm.xlu0 %7077, %v4424
        %v7079 = vpop.permute.xlu0 %7078
        %v7081 = vmul.f32 %v7067, %v6996
        %v7082 = vmul.f32 %v7067, %v7054
        %v7083 = vmul.f32 %v7071, %v6999
        %v7084 = vmul.f32 %v7071, %v7057
        %v7085 = vmul.f32 %v7075, %v7002
        %v7086 = vmul.f32 %v7075, %v7060
        %v7087 = vmul.f32 %v7079, %v7005
        %v7088 = vmul.f32 %v7079, %v7063
        %v7089 = vadd.f32 %v6941, %v7081
        %v7090 = vadd.f32 %v6942, %v7082
        %v7091 = vadd.f32 %v6943, %v7083
        %v7092 = vadd.f32 %v6944, %v7084
        %v7093 = vadd.f32 %v6945, %v7085
        %v7094 = vadd.f32 %v6946, %v7086
        %v7095 = vadd.f32 %v6947, %v7087
        %v7096 = vadd.f32 %v6948, %v7088
        %v7097 = vld [vmem:[%s9] sm:$0xff]
        %v7098 = vld [vmem:[%s9 + $0x8] sm:$0xff]
        %v7099 = vld [vmem:[%s9 + $0x10] sm:$0xff]
        %v7100 = vld [vmem:[%s9 + $0x18] sm:$0xff]
        %7102 = vset.pattern.permute.xlu0 0
        %7103 = vperm.xlu0 %7102, %v7097
        %v7104 = vpop.permute.xlu0 %7103
        %7107 = vset.pattern.permute.xlu0 0
        %7108 = vperm.xlu0 %7107, %v7098
        %v7109 = vpop.permute.xlu0 %7108
        %7112 = vset.pattern.permute.xlu0 0
        %7113 = vperm.xlu0 %7112, %v7099
        %v7114 = vpop.permute.xlu0 %7113
        %7117 = vset.pattern.permute.xlu0 0
        %7118 = vperm.xlu0 %7117, %v7100
        %v7119 = vpop.permute.xlu0 %7118
        %v7121 = vadd.f32 %v7089, %v7104
        %v7122 = vadd.f32 %v7090, %v7104
        %v7123 = vadd.f32 %v7091, %v7109
        %v7124 = vadd.f32 %v7092, %v7109
        %v7125 = vadd.f32 %v7093, %v7114
        %v7126 = vadd.f32 %v7094, %v7114
        %v7127 = vadd.f32 %v7095, %v7119
        %v7128 = vadd.f32 %v7096, %v7119
        %v7129 = vld [vmem:[#allocation15] sm:$0xff]
        %v7130 = vld [vmem:[#allocation15 + $0x8] sm:$0xff]
        %v7131 = vld [vmem:[%s19] sm:$0xff]
        %v7132 = vld [vmem:[%s19 + $0x8] sm:$0xff]
        %7134 = vset.pattern.permute.xlu0 0
        %7135 = vperm.xlu0 %7134, %v7131
        %v7136 = vpop.permute.xlu0 %7135
        %7139 = vset.pattern.permute.xlu0 0
        %7140 = vperm.xlu0 %7139, %v7132
        %v7141 = vpop.permute.xlu0 %7140
        %vm7143 = vcmask 523264
        %v7145 = vsel %vm7143, %v7129, 0
        %v7148 = vsel %vm7143, %v7130, 0
        %7150 = vmatpush.msra.mxu0 0.0
        %7151 = vmatpush.msra.mxu0 0.0
        %7152 = vmatpush.msra.mxu0 0.0
        %7153 = vmatpush.msra.mxu0 0.0
        %7154 = vmatpush.msra.mxu0 0.0
        %7155 = vmatpush.msra.mxu0 0.0
        %7156 = vmatpush.msra.mxu0 0.0
        %7157 = vmatpush.msra.mxu0 0.0
        %7158 = vmatpush.msra.mxu0 %v7127
        %7159 = vmatpush.msra.mxu0 %v7125
        %7160 = vmatpush.msra.mxu0 %v7123
        %7161 = vmatpush.msra.mxu0 %v7121
        %7162 = vmatpush.msra.mxu0 %v4341
        %7163 = vmatpush.msra.mxu0 %v4339
        %7164 = vmatpush.msra.mxu0 %v4337
        %7165 = vmatpush.msra.mxu0 %v4335
        %7166 = vmatmul.f32.gmra.mxu0 %v7145
        %v7167 = vpop.f32.mrf.mxu0
        %v7168 = vadd.f32 %v7136, %v7167
        %7169 = vmatmul.f32.gmra.mxu0 %v7148
        %v7170 = vpop.f32.mrf.mxu0
        %v7171 = vadd.f32 %v7141, %v7170
        %7172 = vdwg.mxu0
        %7173 = vmatpush.msra.mxu0 0.0
        %7174 = vmatpush.msra.mxu0 0.0
        %7175 = vmatpush.msra.mxu0 0.0
        %7176 = vmatpush.msra.mxu0 0.0
        %7177 = vmatpush.msra.mxu0 0.0
        %7178 = vmatpush.msra.mxu0 0.0
        %7179 = vmatpush.msra.mxu0 0.0
        %7180 = vmatpush.msra.mxu0 0.0
        %7181 = vmatpush.msra.mxu0 %v7128
        %7182 = vmatpush.msra.mxu0 %v7126
        %7183 = vmatpush.msra.mxu0 %v7124
        %7184 = vmatpush.msra.mxu0 %v7122
        %7185 = vmatpush.msra.mxu0 %v4342
        %7186 = vmatpush.msra.mxu0 %v4340
        %7187 = vmatpush.msra.mxu0 %v4338
        %7188 = vmatpush.msra.mxu0 %v4336
        %7189 = vmatmul.f32.gmra.mxu0 %v7145
        %v7190 = vpop.f32.mrf.mxu0
        %v7191 = vadd.f32 %v7136, %v7190
        %7192 = vmatmul.f32.gmra.mxu0 %v7148
        %v7193 = vpop.f32.mrf.mxu0
        %v7194 = vadd.f32 %v7141, %v7193
        %7195 = vdwg.mxu0
        %7196 = vst [vmem:[%s762] sm:$0xff] %v7168
        %7197 = vst [vmem:[%s762 + $0x8] sm:$0xff] %v7191
        %7198 = vst [vmem:[%s762 + $0x10] sm:$0xff] %v7171
        %7199 = vst [vmem:[%s762 + $0x18] sm:$0xff] %v7194
        %p7200 = scmp.lt.s32.totalorder %s40, 1
        %s7201 = scalar_select %p7200, %s40, 1
        %s7202 = smul.addr %s7201, 4
        %s7203 = smul.addr %s7202, 8
        %s7204 = scalar_lea.vmem %s20, %s7203
        // Predicated region
        $region133: #{feedforward_forward.1} parent=99 // pred_check
          %p7205 = pneg %p483
        $region134: #{feedforward_forward.1} parent=99 // pred_check_branch
          %7207 = sbr.rel (%p7205) target = $region136
        $region135: #{feedforward_forward.1} parent=99 // pred_region
          _
        $region136: #{feedforward_forward.1} parent=99 // pred_fallthru
          _
      $region100: #{feedforward_forward.1} parent=5 // pred_fallthru
        _
      %p7208 = scmp.le.s32.totalorder 2, %s35
      // Predicated region
      $region137: #{feedforward_forward.1} parent=5 // pred_check
        %p7209 = pneg %p7208
      $region138: #{feedforward_forward.1} parent=5 // pred_check_branch
        %7211 = sbr.rel (%p7209) target = $region140
      $region139: #{feedforward_forward.1} parent=5 // pred_region
        %s7212 = ssub.s32 %s35, 2
        // Predicated region
        $region141: #{feedforward_forward.1} parent=139 // pred_check
          %p7213 = pneg %p489
        $region142: #{feedforward_forward.1} parent=139 // pred_check_branch
          %7215 = sbr.rel (%p7213) target = $region144
        $region143: #{feedforward_forward.1} parent=139 // pred_region
          %p7216 = scmp.lt.s32.totalorder %s41, 1
          %s7217 = scalar_select %p7216, %s41, 1
          %s7218 = smul.addr %s7217, 4
          %s7219 = smul.addr %s7218, 8
          %s7220 = scalar_lea.vmem %s20, %s7219
        $region144: #{feedforward_forward.1} parent=139 // pred_fallthru
          _
      $region140: #{feedforward_forward.1} parent=5 // pred_fallthru
        _
    $region6: #{feedforward_forward.1} parent=1 // loop_footer
      %s39 = sadd.s32 1, %s35
    $region7: #{feedforward_forward.1} parent=1 // loop_footer_branch
      %34 = sbr.rel target = $region3
    $region8: #{feedforward_forward.1} parent=1 // loop_exit
      _
    %7221 = vsyncpa [#allocation5], 1
    %s7222 = scalar_lea.sflag [#allocation5], 1
    %7223 = vsyncpa %s7222, 1
    %7224 = vsyncpa [#allocation7], 1
    %7225 = vsyncpa [#allocation10], 1
    %7226 = vsyncpa [#allocation13], 1
    %7227 = vsyncpa [#allocation16], 1

</llo_original>
